<compile_context>
chip_gen: v6e
topology: v6e:2x2x1
jax: 0.10.0
libtpu: 0.0.40
codegen_flags: <defaults>
</compile_context>

<pallas_src>
import functools
import numpy as np
import jax
import jax.numpy as jnp
from jax.experimental import pallas as pl
from jax.experimental.pallas import tpu as pltpu

EEG_H = 23            # electrode rows (module hard-codes LSTM input_size = 32 * 23)
C1, C2 = 16, 32       # conv channel counts
N1 = C1 * EEG_H       # 368: conv1 features per time step (col = c1*23 + h)
N2 = C2 * EEG_H       # 736: conv2 features per time step (col = c2*23 + h) == LSTM input size
N1P = 384             # lane-padded conv1 feature width (3 * 128)
N2P = 768             # lane-padded conv2 / LSTM feature width (6 * 128)
HD = 64               # LSTM hidden size
HP = 128              # lane-padded hidden size (gate blocks 128-aligned)
GP = 4 * HP           # padded gate width (i, f, g, o)
BN_EPS = 1e-5
HALO = 16             # tile-aligned sublane offset of the valid region in halo'd scratch


# ----------------------------------------------------------------------------
# Kernel 1: fused CNN  (conv3x3+BN+ReLU+pool) x 2, one batch element per grid step.
# Input is phase-split by 4 along time; each conv is 3 band-matrix matmuls per phase,
# each MaxPool is an element-wise max of the two phase values before a single lane-dense store.
# ----------------------------------------------------------------------------
def cnn_kernel(x_ref, w1_ref, s1_ref, sh1_ref, w2_ref, s2_ref, sh2_ref,
               out_ref, xpad_ref, mid_ref):
    # x_ref:   (1, 4, K, 23)  bf16  phase-split time-major input, plane p holds times 4k+p
    # w1_ref:  (3, 23, N1P)   bf16  conv1 band weights per time tap (t-1, t, t+1), cols zero-padded
    # s1/sh1:  (1, N1P)       f32   folded BN1 scale/shift per output column (zeros in padding)
    # w2_ref:  (3, N1P, N2P)  bf16  conv2 band weights (rows/cols zero-padded)
    # s2/sh2:  (1, N2P)       f32
    # out_ref: (1, K, N2P)    bf16  final sequence block for this batch element
    # xpad_ref:(4, K+2H, 23)  bf16  conv1 input with zero time-halo per phase plane (VMEM scratch)
    # mid_ref: (2, K+2H, N1P) bf16  pooled conv1 output (= conv2 input) with zero time-halo
    K = out_ref.shape[1]

    # ---- stage conv1 input with zero time-halo (padding done in-kernel, not in HBM) ----
    zx = jnp.zeros((1, xpad_ref.shape[2]), xpad_ref.dtype)
    for p in range(4):
        xpad_ref[p, HALO - 1:HALO, :] = zx
        xpad_ref[p, HALO + K:HALO + K + 1, :] = zx
        xpad_ref[p, HALO:HALO + K, :] = x_ref[0, p]

    def conv_acc(src_ref, w_ref, taps):
        # taps = ((plane, k_shift), ...) for time offsets (-1, 0, +1); valid rows start at HALO.
        acc = None
        for tap_i, (plane, shift) in enumerate(taps):
            lhs = src_ref[plane, HALO + shift:HALO + shift + K, :]
            term = jnp.dot(lhs, w_ref[tap_i], preferred_element_type=jnp.float32)
            acc = term if acc is None else acc + term
        return acc

    def conv_pool_pair(src_ref, w_ref, s_ref, sh_ref, taps_a, taps_b):
        # conv + folded(bias+BN) + ReLU for both phases of a MaxPool2d((1,2)) pair, then max.
        # Dropout = identity in eval.  Single store at the call site (no store/reload/max).
        ya = jnp.maximum(conv_acc(src_ref, w_ref, taps_a) * s_ref[...] + sh_ref[...], 0.0)
        yb = jnp.maximum(conv_acc(src_ref, w_ref, taps_b) * s_ref[...] + sh_ref[...], 0.0)
        return jnp.maximum(ya, yb)

    # ---- conv1 on the 4 time phases; MaxPool2d((1,2)) pairs phases (0,1) and (2,3) ----
    zm = jnp.zeros((1, mid_ref.shape[2]), mid_ref.dtype)
    for q in range(2):
        mid_ref[q, HALO - 1:HALO, :] = zm
        mid_ref[q, HALO + K:HALO + K + 1, :] = zm

    mid_ref[0, HALO:HALO + K, :] = conv_pool_pair(
        xpad_ref, w1_ref, s1_ref, sh1_ref,
        ((3, -1), (0, 0), (1, 0)), ((0, 0), (1, 0), (2, 0))).astype(mid_ref.dtype)
    mid_ref[1, HALO:HALO + K, :] = conv_pool_pair(
        xpad_ref, w1_ref, s1_ref, sh1_ref,
        ((1, 0), (2, 0), (3, 0)), ((2, 0), (3, 0), (0, 1))).astype(mid_ref.dtype)

    # ---- conv2 on the 2 pooled phases; MaxPool2d((1,2)) -> final sequence (one lane-dense store)
    # TODO(synk): optionally fuse the 3 conv2 taps into one (K, 3*N1P) x (3*N1P, N2P) matmul.
    out_ref[0] = conv_pool_pair(
        mid_ref, w2_ref, s2_ref, sh2_ref,
        ((1, -1), (0, 0), (1, 0)), ((0, 0), (1, 0), (0, 1))).astype(out_ref.dtype)


# ----------------------------------------------------------------------------
# Kernel 2: forward-direction LSTM over sequence chunks (only h at t = T-1 is needed downstream).
# Hoisted input projection (contiguous slab stores), unrolled fori_loop recurrence.
# ----------------------------------------------------------------------------
def lstm_kernel(x_ref, wih_ref, whh_ref, bf_ref, out_ref, h_ref, c_ref, proj_ref,
                *, t_total, tc):
    # x_ref:   (B, Tc, N2P) bf16  sequence chunk (feature = c*23 + h, zero-padded cols)
    # wih_ref: (N2P, GP)    bf16  input->gate weights, gate blocks 128-lane aligned (i,f,g,o)
    # whh_ref: (HP, GP)     f32   hidden->gate weights (rows >= 64 zero)
    # bf_ref:  (1, GP)      f32   b_ih + b_hh (zeros in gate padding)
    # out_ref: (B, HP)      f32   final forward hidden state
    # h/c_ref: (B, HP)      f32   carried state;  proj_ref: (B, Tc, GP) f32 hoisted projection
    chunk = pl.program_id(0)
    B = x_ref.shape[0]
    hp = h_ref.shape[1]

    @pl.when(chunk == 0)
    def _init():
        h_ref[...] = jnp.zeros_like(h_ref)
        c_ref[...] = jnp.zeros_like(c_ref)

    # Hoisted input projection: one (Tc, N2P) x (N2P, GP) matmul per batch row, outside the
    # recurrence; each result is a contiguous (Tc, GP) slab store (no strided masked stores).
    for b in range(B):
        proj_ref[b] = (jnp.dot(x_ref[b], wih_ref[...], preferred_element_type=jnp.float32)
                       + bf_ref[...])

    def step(t, carry):
        h, c = carry
        p = proj_ref[:, pl.ds(t, 1), :].reshape(B, 4 * hp)
        g = p + jnp.dot(h, whh_ref[...], preferred_element_type=jnp.float32)
        i = jax.nn.sigmoid(g[:, 0 * hp:1 * hp])      # PyTorch gate order: i, f, g, o
        f = jax.nn.sigmoid(g[:, 1 * hp:2 * hp])
        gc = jnp.tanh(g[:, 2 * hp:3 * hp])
        o = jax.nn.sigmoid(g[:, 3 * hp:4 * hp])
        c = f * c + i * gc
        h = o * jnp.tanh(c)
        return h, c

    h0, c0 = h_ref[...], c_ref[...]
    if t_total % tc == 0:
        # Full chunks: static trip-count, unrolled for LLO overlap across the serial dependence.
        h, c = jax.lax.fori_loop(0, tc, step, (h0, c0), unroll=min(4, tc))
    else:
        # Ragged tail chunk: dynamic valid-step count (padded time steps are never read).
        n_valid = jnp.minimum(tc, t_total - chunk * tc)
        h, c = jax.lax.fori_loop(0, n_valid, step, (h0, c0))

    h_ref[...] = h
    c_ref[...] = c
    out_ref[...] = h
    # TODO(synk): add a leading batch-tile "parallel" grid axis for v7x's second TensorCore.


# ----------------------------------------------------------------------------
# Kernel 3: backward-direction single step at t = T-1 (zero initial state) + Linear+ReLU+Linear.
# Kept out of the recurrent kernel so wih_b / head weights don't occupy VMEM every chunk.
# ----------------------------------------------------------------------------
def head_kernel(x_last_ref, h_fwd_ref, wih_b_ref, bb_ref, w1f_ref, w1b_ref,
                b1_ref, w2_ref, b2_ref, out_ref):
    hp = h_fwd_ref.shape[1]
    gb = (jnp.dot(x_last_ref[...], wih_b_ref[...], preferred_element_type=jnp.float32)
          + bb_ref[...])
    ib = jax.nn.sigmoid(gb[:, 0 * hp:1 * hp])
    gcb = jnp.tanh(gb[:, 2 * hp:3 * hp])
    ob = jax.nn.sigmoid(gb[:, 3 * hp:4 * hp])
    h_bwd = ob * jnp.tanh(ib * gcb)                  # c0 = 0  ->  c = i * g
    hid = jnp.maximum(
        jnp.dot(h_fwd_ref[...], w1f_ref[...], preferred_element_type=jnp.float32)
        + jnp.dot(h_bwd, w1b_ref[...], preferred_element_type=jnp.float32)
        + b1_ref[...], 0.0)
    out_ref[...] = (jnp.dot(hid, w2_ref[...], preferred_element_type=jnp.float32)
                    + b2_ref[...])


# ----------------------------------------------------------------------------
# Host-side parameter preparation (band conv weights, folded BN, padded LSTM gates)
# ----------------------------------------------------------------------------
def _band_conv_weights(w_oihw, H, rows_pad, cols_pad):
    """3x3 conv (padding=1) over (electrode, time) -> 3 per-time-tap dense matrices, zero-padded.

    Wb[b, ci*H + y, co*H + ho] = w[co, ci, a, b] with a = y - ho + 1 (zero outside |y-ho|<=1), so
      conv_out[t, co*H + ho] = sum_b  x_tm[t + b - 1, :] @ Wb[b]
    with x_tm[t, ci*H + y] = x[ci, y, t] and zero rows for t outside [0, W).
    """
    w = np.asarray(w_oihw, np.float32)
    Co, Ci = w.shape[0], w.shape[1]
    Wb = np.zeros((3, Ci, H, Co, H), np.float32)
    for b in range(3):
        for a in range(3):
            for ho in range(H):
                y = ho + a - 1
                if 0 <= y < H:
                    Wb[b, :, y, :, ho] = w[:, :, a, b].T
    Wb = Wb.reshape(3, Ci * H, Co * H)
    out = np.zeros((3, rows_pad, cols_pad), np.float32)
    out[:, :Ci * H, :Co * H] = Wb
    return out


def _pad_gate_cols(w, hd=HD, hp=HP):
    """Re-lay (..., 4*hd) gate columns into 128-lane-aligned blocks (..., 4*hp), zero padded."""
    w = np.asarray(w, np.float32)
    out = np.zeros(w.shape[:-1] + (4 * hp,), np.float32)
    for g in range(4):
        out[..., g * hp:g * hp + hd] = w[..., g * hd:(g + 1) * hd]
    return out


def _pad_row(v, n):
    v = np.asarray(v, np.float32).reshape(-1)
    out = np.zeros((1, n), np.float32)
    out[0, :v.shape[0]] = v
    return out


def prepare_params(p):
    def fold(gamma, beta, mean, var, bias):
        gamma, beta, mean, var, bias = (np.asarray(a, np.float32)
                                        for a in (gamma, beta, mean, var, bias))
        scale = gamma / np.sqrt(var + BN_EPS)
        shift = beta + (bias - mean) * scale
        return scale, shift

    s1, sh1 = fold(p["bn1_gamma"], p["bn1_beta"], p["bn1_mean"], p["bn1_var"], p["conv1_b"])
    s2, sh2 = fold(p["bn2_gamma"], p["bn2_beta"], p["bn2_mean"], p["bn2_var"], p["conv2_b"])

    # Forward LSTM input/hidden weights (gate-column + feature-row padded).
    wih_f = np.zeros((N2P, GP), np.float32); wih_f[:N2] = _pad_gate_cols(p["wih_f"])
    wih_b = np.zeros((N2P, GP), np.float32); wih_b[:N2] = _pad_gate_cols(p["wih_b"])
    whh_f = np.concatenate(
        [_pad_gate_cols(p["whh_f"]), np.zeros((HP - HD, GP), np.float32)], axis=0)
    fc1_w = np.asarray(p["fc1_w"], np.float32)
    w1f = np.zeros((HP, 64), np.float32); w1f[:HD] = fc1_w[:HD]
    w1b = np.zeros((HP, 64), np.float32); w1b[:HD] = fc1_w[HD:]

    kp = {
        # bf16 matmul operands (MXU-native; accumulation stays f32)
        "w1_band": jnp.asarray(_band_conv_weights(p["conv1_w"], EEG_H, EEG_H, N1P), jnp.bfloat16),
        "w2_band": jnp.asarray(_band_conv_weights(p["conv2_w"], EEG_H, N1P, N2P), jnp.bfloat16),
        "wih_f": jnp.asarray(wih_f, jnp.bfloat16),
        "wih_b": jnp.asarray(wih_b, jnp.bfloat16),
        # f32 affine / recurrent / head parameters
        "s1_col": jnp.asarray(_pad_row(np.repeat(s1, EEG_H), N1P)),
        "sh1_col": jnp.asarray(_pad_row(np.repeat(sh1, EEG_H), N1P)),
        "s2_col": jnp.asarray(_pad_row(np.repeat(s2, EEG_H), N2P)),
        "sh2_col": jnp.asarray(_pad_row(np.repeat(sh2, EEG_H), N2P)),
        "whh_f": jnp.asarray(whh_f),
        "b_f": jnp.asarray(_pad_gate_cols(p["b_f"])),
        "b_b": jnp.asarray(_pad_gate_cols(p["b_b"])),
        "w1f": jnp.asarray(w1f), "w1b": jnp.asarray(w1b),
        "fc1_b": jnp.asarray(np.asarray(p["fc1_b"], np.float32)),
        "fc2_w": jnp.asarray(np.asarray(p["fc2_w"], np.float32)),
        "fc2_b": jnp.asarray(np.asarray(p["fc2_b"], np.float32)),
    }
    return kp


def _pick_time_chunk(T, cap=256):
    if T <= cap:
        return T
    for tc in range(cap, 63, -1):
        if T % tc == 0 and tc % 8 == 0:
            return tc
    return cap   # ragged: wrapper pads T, kernel runs a dynamic-bound tail loop


def _cnn_vmem_limit(K):
    weights = 3 * EEG_H * N1P * 2 + 3 * N1P * N2P * 2 + 8 * (N1P + N2P) * 4
    blocks = 2 * (4 * K * EEG_H * 2 + K * N2P * 2)             # double-buffered in/out blocks
    scratch = (4 * (K + 2 * HALO) * EEG_H + 2 * (K + 2 * HALO) * N1P) * 2
    temps = 10 * K * N2P * 4                                   # f32 matmul / elementwise temps
    need = weights + blocks + scratch + temps + (2 << 20)
    return int(min(64 << 20, max(24 << 20, need)))


def _lstm_vmem_limit(B, Tc):
    weights = N2P * GP * 2 + HP * GP * 4 + GP * 4
    blocks = 2 * B * Tc * N2P * 2 + 2 * B * HP * 4
    scratch = 2 * B * HP * 4 + B * Tc * GP * 4
    temps = 4 * B * Tc * GP * 4
    need = weights + blocks + scratch + temps + (2 << 20)
    return int(min(64 << 20, max(16 << 20, need)))


# ----------------------------------------------------------------------------
# Full forward
# ----------------------------------------------------------------------------
def eeg_dwt_cnn_lstm_forward(x_nchw, kp):
    B, Cin, H, W = x_nchw.shape
    assert Cin == 1 and H == EEG_H, "module expects (B, 1, 23, W) input"
    assert W % 4 == 0, "time length must be divisible by 4 (two MaxPool2d((1,2)) stages)"
    K = W // 4                                                 # final sequence length T

    # Boundary layout conversion of the raw input: time-major + phase-split by 4 (bf16 for MXU).
    x = x_nchw.astype(jnp.float32)[:, 0]                       # (B, 23, W)
    x_tm = jnp.transpose(x, (0, 2, 1))                         # (B, W, 23)
    x_ph = jnp.transpose(x_tm.reshape(B, K, 4, EEG_H), (0, 2, 1, 3)).astype(jnp.bfloat16)

    x_seq = pl.pallas_call(
        cnn_kernel,
        out_shape=jax.ShapeDtypeStruct((B, K, N2P), jnp.bfloat16),
        grid=(B,),
        in_specs=[
            pl.BlockSpec((1, 4, K, EEG_H), lambda b: (b, 0, 0, 0)),
            pl.BlockSpec((3, EEG_H, N1P), lambda b: (0, 0, 0)),
            pl.BlockSpec((1, N1P), lambda b: (0, 0)),
            pl.BlockSpec((1, N1P), lambda b: (0, 0)),
            pl.BlockSpec((3, N1P, N2P), lambda b: (0, 0, 0)),
            pl.BlockSpec((1, N2P), lambda b: (0, 0)),
            pl.BlockSpec((1, N2P), lambda b: (0, 0)),
        ],
        out_specs=pl.BlockSpec((1, K, N2P), lambda b: (b, 0, 0)),
        scratch_shapes=[
            pltpu.VMEM((4, K + 2 * HALO, EEG_H), jnp.bfloat16),
            pltpu.VMEM((2, K + 2 * HALO, N1P), jnp.bfloat16),
        ],
        compiler_params=pltpu.CompilerParams(
            dimension_semantics=("parallel",),
            vmem_limit_bytes=_cnn_vmem_limit(K)),
    )(x_ph, kp["w1_band"], kp["s1_col"], kp["sh1_col"],
      kp["w2_band"], kp["s2_col"], kp["sh2_col"])

    # ---- forward LSTM over sequence chunks ----
    T = K
    Tc = _pick_time_chunk(T)
    n_chunks = -(-T // Tc)
    T_pad = n_chunks * Tc
    x_lstm = x_seq if T_pad == T else jnp.pad(x_seq, ((0, 0), (0, T_pad - T), (0, 0)))

    h_fwd = pl.pallas_call(
        functools.partial(lstm_kernel, t_total=T, tc=Tc),
        out_shape=jax.ShapeDtypeStruct((B, HP), jnp.float32),
        grid=(n_chunks,),
        in_specs=[
            pl.BlockSpec((B, Tc, N2P), lambda i: (0, i, 0)),
            pl.BlockSpec((N2P, GP), lambda i: (0, 0)),
            pl.BlockSpec((HP, GP), lambda i: (0, 0)),
            pl.BlockSpec((1, GP), lambda i: (0, 0)),
        ],
        out_specs=pl.BlockSpec((B, HP), lambda i: (0, 0)),
        scratch_shapes=[
            pltpu.VMEM((B, HP), jnp.float32),
            pltpu.VMEM((B, HP), jnp.float32),
            pltpu.VMEM((B, Tc, GP), jnp.float32),
        ],
        compiler_params=pltpu.CompilerParams(
            dimension_semantics=("arbitrary",),
            vmem_limit_bytes=_lstm_vmem_limit(B, Tc)),
    )(x_lstm, kp["wih_f"], kp["whh_f"], kp["b_f"])

    # ---- backward single step at t = T-1 (module only reads output[:, -1, :]) + FC head ----
    x_last = x_seq[:, T - 1, :]                                # (B, N2P) bf16
    out = pl.pallas_call(
        head_kernel,
        out_shape=jax.ShapeDtypeStruct((B, 1), jnp.float32),
    )(x_last, h_fwd, kp["wih_b"], kp["b_b"], kp["w1f"], kp["w1b"],
      kp["fc1_b"], kp["fc2_w"], kp["fc2_b"])

    return jnp.squeeze(out)   # matches torch .squeeze()


# ----------------------------------------------------------------------------
# Deterministic in-script parameters + plain-JAX reference of the PyTorch forward
# ----------------------------------------------------------------------------
def init_params(key):
    ks = jax.random.split(key, 18)
    p = {}
    p["conv1_w"] = 0.3 * jax.random.normal(ks[0], (C1, 1, 3, 3), jnp.float32)   # OIHW
    p["conv1_b"] = 0.1 * jax.random.normal(ks[1], (C1,), jnp.float32)
    p["bn1_gamma"] = 1.0 + 0.1 * jax.random.normal(ks[2], (C1,), jnp.float32)
    p["bn1_beta"] = 0.1 * jax.random.normal(ks[3], (C1,), jnp.float32)
    p["bn1_mean"] = jnp.zeros((C1,), jnp.float32)
    p["bn1_var"] = jnp.ones((C1,), jnp.float32)
    p["conv2_w"] = 0.1 * jax.random.normal(ks[4], (C2, C1, 3, 3), jnp.float32)
    p["conv2_b"] = 0.1 * jax.random.normal(ks[5], (C2,), jnp.float32)
    p["bn2_gamma"] = 1.0 + 0.1 * jax.random.normal(ks[6], (C2,), jnp.float32)
    p["bn2_beta"] = 0.1 * jax.random.normal(ks[7], (C2,), jnp.float32)
    p["bn2_mean"] = jnp.zeros((C2,), jnp.float32)
    p["bn2_var"] = jnp.ones((C2,), jnp.float32)
    # LSTM weights stored pre-transposed: W_ih^T (736, 256), W_hh^T (64, 256), b = b_ih + b_hh.
    p["wih_f"] = 0.05 * jax.random.normal(ks[8], (N2, 4 * HD), jnp.float32)
    p["whh_f"] = 0.05 * jax.random.normal(ks[9], (HD, 4 * HD), jnp.float32)
    p["b_f"] = 0.1 * jax.random.normal(ks[10], (1, 4 * HD), jnp.float32)
    p["wih_b"] = 0.05 * jax.random.normal(ks[11], (N2, 4 * HD), jnp.float32)
    p["whh_b"] = 0.05 * jax.random.normal(ks[12], (HD, 4 * HD), jnp.float32)  # cannot affect out[:, -1]
    p["b_b"] = 0.1 * jax.random.normal(ks[13], (1, 4 * HD), jnp.float32)
    # fc: Linear(128,64) stored as weight^T (128, 64); Linear(64,1) as (64, 1).
    p["fc1_w"] = 0.1 * jax.random.normal(ks[14], (2 * HD, 64), jnp.float32)
    p["fc1_b"] = 0.1 * jax.random.normal(ks[15], (1, 64), jnp.float32)
    p["fc2_w"] = 0.1 * jax.random.normal(ks[16], (64, 1), jnp.float32)
    p["fc2_b"] = 0.1 * jax.random.normal(ks[17], (1, 1), jnp.float32)
    return p


def reference_forward(x_nchw, p):
    hi = jax.lax.Precision.HIGHEST

    def conv_block(x, w, bias, gamma, beta, mean, var):
        y = jax.lax.conv_general_dilated(
            x, w, window_strides=(1, 1), padding=((1, 1), (1, 1)),
            dimension_numbers=("NCHW", "OIHW", "NCHW"), precision=hi)
        y = y + bias[None, :, None, None]
        y = ((y - mean[None, :, None, None])
             * (gamma / jnp.sqrt(var + BN_EPS))[None, :, None, None]
             + beta[None, :, None, None])
        y = jnp.maximum(y, 0.0)
        Wd = y.shape[-1]
        y = y[..., :2 * (Wd // 2)].reshape(y.shape[0], y.shape[1], y.shape[2], Wd // 2, 2)
        return jnp.max(y, axis=-1)

    x = conv_block(x_nchw, p["conv1_w"], p["conv1_b"], p["bn1_gamma"], p["bn1_beta"],
                   p["bn1_mean"], p["bn1_var"])
    x = conv_block(x, p["conv2_w"], p["conv2_b"], p["bn2_gamma"], p["bn2_beta"],
                   p["bn2_mean"], p["bn2_var"])
    B, C, H, T = x.shape
    xs = jnp.transpose(x, (0, 3, 1, 2)).reshape(B, T, C * H)

    def cell(h, c, xt, wih, whh, b):
        g = jnp.dot(xt, wih, precision=hi) + jnp.dot(h, whh, precision=hi) + b
        i = jax.nn.sigmoid(g[:, :HD]); f = jax.nn.sigmoid(g[:, HD:2 * HD])
        gg = jnp.tanh(g[:, 2 * HD:3 * HD]); o = jax.nn.sigmoid(g[:, 3 * HD:])
        c = f * c + i * gg
        return o * jnp.tanh(c), c

    h = jnp.zeros((B, HD), jnp.float32); c = jnp.zeros((B, HD), jnp.float32)
    for t in range(T):
        h, c = cell(h, c, xs[:, t, :], p["wih_f"], p["whh_f"], p["b_f"])
    hb, _ = cell(jnp.zeros((B, HD), jnp.float32), jnp.zeros((B, HD), jnp.float32),
                 xs[:, T - 1, :], p["wih_b"], p["whh_b"], p["b_b"])

    hid = jnp.maximum(
        jnp.dot(jnp.concatenate([h, hb], axis=-1), p["fc1_w"], precision=hi) + p["fc1_b"], 0.0)
    out = jnp.dot(hid, p["fc2_w"], precision=hi) + p["fc2_b"]
    return jnp.squeeze(out)


if __name__ == "__main__":
    key = jax.random.PRNGKey(0)
    pkey, xkey = jax.random.split(key)
    params = init_params(pkey)
    kparams = prepare_params(params)

    # Small but module-consistent input: H must be 23 (LSTM input_size = 32*23); W=16 -> T=4.
    x = jax.random.normal(xkey, (2, 1, 23, 16), jnp.float32)

    fwd = jax.jit(eeg_dwt_cnn_lstm_forward)
    y = jax.block_until_ready(fwd(x, kparams))

    assert y.shape == (2,), y.shape
    assert bool(jnp.all(jnp.isfinite(y)))

    # Numerical check against a plain-JAX reference of the PyTorch forward.
    y_ref = jax.block_until_ready(jax.jit(reference_forward)(x, params))
    np.testing.assert_allclose(np.asarray(y), np.asarray(y_ref), rtol=5e-3, atol=5e-3)

    print("KERNEL_OK")
</pallas_src>

<mosaic_0001>
module attributes {stable_mosaic.version = 11 : i64} {
  func.func @lstm_kernel(%arg0: i32, %arg1: memref<2x4x768xbf16, #tpu.memory_space<vmem>>, %arg2: memref<768x512xbf16, #tpu.memory_space<vmem>>, %arg3: memref<128x512xf32, #tpu.memory_space<vmem>>, %arg4: memref<1x512xf32, #tpu.memory_space<vmem>>, %arg5: memref<2x128xf32, #tpu.memory_space<vmem>>, %arg6: memref<2x128xf32, #tpu.memory_space<vmem>>, %arg7: memref<2x128xf32, #tpu.memory_space<vmem>>, %arg8: memref<2x4x512xf32, #tpu.memory_space<vmem>>) attributes {dimension_semantics = [#tpu.dimension_semantics<arbitrary>], iteration_bounds = array<i64: 1>, scalar_prefetch = 0 : i64, scratch_operands = 3 : i64, tpu.core_type = #tpu.core_type<tc>, window_params = [{transform_indices = @transform_0, window_bounds = array<i64: 2, 4, 768>}, {pipeline_mode = #tpu.pipeline_mode<synchronous>, transform_indices = @transform_1, window_bounds = array<i64: 768, 512>}, {pipeline_mode = #tpu.pipeline_mode<synchronous>, transform_indices = @transform_2, window_bounds = array<i64: 128, 512>}, {pipeline_mode = #tpu.pipeline_mode<synchronous>, transform_indices = @transform_3, window_bounds = array<i64: 1, 512>}, {pipeline_mode = #tpu.pipeline_mode<synchronous>, transform_indices = @transform_4, window_bounds = array<i64: 2, 128>}]} {
    %c0_i32 = arith.constant 0 : i32
    %0 = arith.cmpi eq, %arg0, %c0_i32 : i32
    %1 = arith.extui %0 : i1 to i32
    %c0_i32_0 = arith.constant 0 : i32
    %2 = arith.cmpi ne, %1, %c0_i32_0 : i32
    scf.if %2 {
      %cst_63 = arith.constant 0.000000e+00 : f32
      %152 = vector.broadcast %cst_63 : f32 to vector<2x128xf32>
      %c0_64 = arith.constant 0 : index
      %c0_65 = arith.constant 0 : index
      %153 = vector.load %arg6[%c0_64, %c0_65] : memref<2x128xf32, #tpu.memory_space<vmem>>, vector<2x128xf32>
      tpu.vector_store %arg6[%c0_64, %c0_65], %152 {strides = array<i32>} : memref<2x128xf32, #tpu.memory_space<vmem>>, vector<2x128xf32>,
      %cst_66 = arith.constant 0.000000e+00 : f32
      %154 = vector.broadcast %cst_66 : f32 to vector<2x128xf32>
      %c0_67 = arith.constant 0 : index
      %c0_68 = arith.constant 0 : index
      %155 = vector.load %arg7[%c0_67, %c0_68] : memref<2x128xf32, #tpu.memory_space<vmem>>, vector<2x128xf32>
      tpu.vector_store %arg7[%c0_67, %c0_68], %154 {strides = array<i32>} : memref<2x128xf32, #tpu.memory_space<vmem>>, vector<2x128xf32>,
    } else {
    }
    %c0 = arith.constant 0 : index
    %c0_1 = arith.constant 0 : index
    %c0_2 = arith.constant 0 : index
    %3 = vector.load %arg1[%c0, %c0_1, %c0_2] : memref<2x4x768xbf16, #tpu.memory_space<vmem>>, vector<1x4x768xbf16>
    %4 = vector.shape_cast %3 : vector<1x4x768xbf16> to vector<4x768xbf16>
    %c0_3 = arith.constant 0 : index
    %c0_4 = arith.constant 0 : index
    %5 = vector.load %arg2[%c0_3, %c0_4] : memref<768x512xbf16, #tpu.memory_space<vmem>>, vector<768x512xbf16>
    %cst = arith.constant dense<0.000000e+00> : vector<4x512xf32>
    %6 = tpu.matmul %4, %5, %cst {dimension_numbers = #tpu.dot_dimension_numbers<[1], [0], [0], [1], [0, 0, 1, 1], [], []>} : vector<4x768xbf16>, vector<768x512xbf16>, vector<4x512xf32> -> vector<4x512xf32>
    %c0_5 = arith.constant 0 : index
    %c0_6 = arith.constant 0 : index
    %7 = vector.load %arg4[%c0_5, %c0_6] : memref<1x512xf32, #tpu.memory_space<vmem>>, vector<1x512xf32>
    %8 = vector.broadcast %7 : vector<1x512xf32> to vector<4x512xf32>
    %9 = arith.addf %6, %8 : vector<4x512xf32>
    %c0_7 = arith.constant 0 : index
    %c0_8 = arith.constant 0 : index
    %c0_9 = arith.constant 0 : index
    %10 = vector.load %arg8[%c0_7, %c0_8, %c0_9] : memref<2x4x512xf32, #tpu.memory_space<vmem>>, vector<1x4x512xf32>
    %11 = vector.shape_cast %10 : vector<1x4x512xf32> to vector<4x512xf32>
    %12 = vector.shape_cast %9 : vector<4x512xf32> to vector<1x4x512xf32>
    tpu.vector_store %arg8[%c0_7, %c0_8, %c0_9], %12 {strides = array<i32>} : memref<2x4x512xf32, #tpu.memory_space<vmem>>, vector<1x4x512xf32>,
    %c1 = arith.constant 1 : index
    %c0_10 = arith.constant 0 : index
    %c0_11 = arith.constant 0 : index
    %13 = vector.load %arg1[%c1, %c0_10, %c0_11] : memref<2x4x768xbf16, #tpu.memory_space<vmem>>, vector<1x4x768xbf16>
    %14 = vector.shape_cast %13 : vector<1x4x768xbf16> to vector<4x768xbf16>
    %c0_12 = arith.constant 0 : index
    %c0_13 = arith.constant 0 : index
    %15 = vector.load %arg2[%c0_12, %c0_13] : memref<768x512xbf16, #tpu.memory_space<vmem>>, vector<768x512xbf16>
    %cst_14 = arith.constant dense<0.000000e+00> : vector<4x512xf32>
    %16 = tpu.matmul %14, %15, %cst_14 {dimension_numbers = #tpu.dot_dimension_numbers<[1], [0], [0], [1], [0, 0, 1, 1], [], []>} : vector<4x768xbf16>, vector<768x512xbf16>, vector<4x512xf32> -> vector<4x512xf32>
    %c0_15 = arith.constant 0 : index
    %c0_16 = arith.constant 0 : index
    %17 = vector.load %arg4[%c0_15, %c0_16] : memref<1x512xf32, #tpu.memory_space<vmem>>, vector<1x512xf32>
    %18 = vector.broadcast %17 : vector<1x512xf32> to vector<4x512xf32>
    %19 = arith.addf %16, %18 : vector<4x512xf32>
    %c1_17 = arith.constant 1 : index
    %c0_18 = arith.constant 0 : index
    %c0_19 = arith.constant 0 : index
    %20 = vector.load %arg8[%c1_17, %c0_18, %c0_19] : memref<2x4x512xf32, #tpu.memory_space<vmem>>, vector<1x4x512xf32>
    %21 = vector.shape_cast %20 : vector<1x4x512xf32> to vector<4x512xf32>
    %22 = vector.shape_cast %19 : vector<4x512xf32> to vector<1x4x512xf32>
    tpu.vector_store %arg8[%c1_17, %c0_18, %c0_19], %22 {strides = array<i32>} : memref<2x4x512xf32, #tpu.memory_space<vmem>>, vector<1x4x512xf32>,
    %c0_20 = arith.constant 0 : index
    %c0_21 = arith.constant 0 : index
    %23 = vector.load %arg6[%c0_20, %c0_21] : memref<2x128xf32, #tpu.memory_space<vmem>>, vector<2x128xf32>
    %c0_22 = arith.constant 0 : index
    %c0_23 = arith.constant 0 : index
    %24 = vector.load %arg7[%c0_22, %c0_23] : memref<2x128xf32, #tpu.memory_space<vmem>>, vector<2x128xf32>
    %c0_i32_24 = arith.constant 0 : i32
    %c0_25 = arith.constant 0 : index
    %25 = arith.index_cast %c0_i32_24 : i32 to index
    %c0_26 = arith.constant 0 : index
    %26 = vector.load %arg8[%c0_25, %25, %c0_26] : memref<2x4x512xf32, #tpu.memory_space<vmem>>, vector<2x1x512xf32>
    %27 = vector.shape_cast %26 : vector<2x1x512xf32> to vector<2x512xf32>
    %c0_27 = arith.constant 0 : index
    %c0_28 = arith.constant 0 : index
    %28 = vector.load %arg3[%c0_27, %c0_28] : memref<128x512xf32, #tpu.memory_space<vmem>>, vector<128x512xf32>
    %cst_29 = arith.constant dense<0.000000e+00> : vector<2x512xf32>
    %29 = tpu.matmul %23, %28, %cst_29 {dimension_numbers = #tpu.dot_dimension_numbers<[1], [0], [0], [1], [0, 0, 1, 1], [], []>} : vector<2x128xf32>, vector<128x512xf32>, vector<2x512xf32> -> vector<2x512xf32>
    %30 = arith.addf %27, %29 : vector<2x512xf32>
    %31 = vector.extract_strided_slice %30 {offsets = [0, 0], sizes = [2, 128], strides = [1, 1]} : vector<2x512xf32> to vector<2x128xf32>
    %32 = arith.negf %31 : vector<2x128xf32>
    %33 = math.exp %32 : vector<2x128xf32>
    %cst_30 = arith.constant 1.000000e+00 : f32
    %34 = vector.broadcast %cst_30 : f32 to vector<2x128xf32>
    %35 = arith.addf %34, %33 : vector<2x128xf32>
    %36 = arith.divf %34, %35 : vector<2x128xf32>
    %37 = vector.extract_strided_slice %30 {offsets = [0, 128], sizes = [2, 128], strides = [1, 1]} : vector<2x512xf32> to vector<2x128xf32>
    %38 = arith.negf %37 : vector<2x128xf32>
    %39 = math.exp %38 : vector<2x128xf32>
    %cst_31 = arith.constant 1.000000e+00 : f32
    %40 = vector.broadcast %cst_31 : f32 to vector<2x128xf32>
    %41 = arith.addf %40, %39 : vector<2x128xf32>
    %42 = arith.divf %40, %41 : vector<2x128xf32>
    %43 = vector.extract_strided_slice %30 {offsets = [0, 256], sizes = [2, 128], strides = [1, 1]} : vector<2x512xf32> to vector<2x128xf32>
    %44 = math.tanh %43 : vector<2x128xf32>
    %45 = vector.extract_strided_slice %30 {offsets = [0, 384], sizes = [2, 128], strides = [1, 1]} : vector<2x512xf32> to vector<2x128xf32>
    %46 = arith.negf %45 : vector<2x128xf32>
    %47 = math.exp %46 : vector<2x128xf32>
    %cst_32 = arith.constant 1.000000e+00 : f32
    %48 = vector.broadcast %cst_32 : f32 to vector<2x128xf32>
    %49 = arith.addf %48, %47 : vector<2x128xf32>
    %50 = arith.divf %48, %49 : vector<2x128xf32>
    %51 = arith.mulf %42, %24 : vector<2x128xf32>
    %52 = arith.mulf %36, %44 : vector<2x128xf32>
    %53 = arith.addf %51, %52 : vector<2x128xf32>
    %54 = math.tanh %53 : vector<2x128xf32>
    %55 = arith.mulf %50, %54 : vector<2x128xf32>
    %c1_i32 = arith.constant 1 : i32
    %c0_33 = arith.constant 0 : index
    %56 = arith.index_cast %c1_i32 : i32 to index
    %c0_34 = arith.constant 0 : index
    %57 = vector.load %arg8[%c0_33, %56, %c0_34] : memref<2x4x512xf32, #tpu.memory_space<vmem>>, vector<2x1x512xf32>
    %58 = vector.shape_cast %57 : vector<2x1x512xf32> to vector<2x512xf32>
    %c0_35 = arith.constant 0 : index
    %c0_36 = arith.constant 0 : index
    %59 = vector.load %arg3[%c0_35, %c0_36] : memref<128x512xf32, #tpu.memory_space<vmem>>, vector<128x512xf32>
    %cst_37 = arith.constant dense<0.000000e+00> : vector<2x512xf32>
    %60 = tpu.matmul %55, %59, %cst_37 {dimension_numbers = #tpu.dot_dimension_numbers<[1], [0], [0], [1], [0, 0, 1, 1], [], []>} : vector<2x128xf32>, vector<128x512xf32>, vector<2x512xf32> -> vector<2x512xf32>
    %61 = arith.addf %58, %60 : vector<2x512xf32>
    %62 = vector.extract_strided_slice %61 {offsets = [0, 0], sizes = [2, 128], strides = [1, 1]} : vector<2x512xf32> to vector<2x128xf32>
    %63 = arith.negf %62 : vector<2x128xf32>
    %64 = math.exp %63 : vector<2x128xf32>
    %cst_38 = arith.constant 1.000000e+00 : f32
    %65 = vector.broadcast %cst_38 : f32 to vector<2x128xf32>
    %66 = arith.addf %65, %64 : vector<2x128xf32>
    %67 = arith.divf %65, %66 : vector<2x128xf32>
    %68 = vector.extract_strided_slice %61 {offsets = [0, 128], sizes = [2, 128], strides = [1, 1]} : vector<2x512xf32> to vector<2x128xf32>
    %69 = arith.negf %68 : vector<2x128xf32>
    %70 = math.exp %69 : vector<2x128xf32>
    %cst_39 = arith.constant 1.000000e+00 : f32
    %71 = vector.broadcast %cst_39 : f32 to vector<2x128xf32>
    %72 = arith.addf %71, %70 : vector<2x128xf32>
    %73 = arith.divf %71, %72 : vector<2x128xf32>
    %74 = vector.extract_strided_slice %61 {offsets = [0, 256], sizes = [2, 128], strides = [1, 1]} : vector<2x512xf32> to vector<2x128xf32>
    %75 = math.tanh %74 : vector<2x128xf32>
    %76 = vector.extract_strided_slice %61 {offsets = [0, 384], sizes = [2, 128], strides = [1, 1]} : vector<2x512xf32> to vector<2x128xf32>
    %77 = arith.negf %76 : vector<2x128xf32>
    %78 = math.exp %77 : vector<2x128xf32>
    %cst_40 = arith.constant 1.000000e+00 : f32
    %79 = vector.broadcast %cst_40 : f32 to vector<2x128xf32>
    %80 = arith.addf %79, %78 : vector<2x128xf32>
    %81 = arith.divf %79, %80 : vector<2x128xf32>
    %82 = arith.mulf %73, %53 : vector<2x128xf32>
    %83 = arith.mulf %67, %75 : vector<2x128xf32>
    %84 = arith.addf %82, %83 : vector<2x128xf32>
    %85 = math.tanh %84 : vector<2x128xf32>
    %86 = arith.mulf %81, %85 : vector<2x128xf32>
    %c2_i32 = arith.constant 2 : i32
    %c0_41 = arith.constant 0 : index
    %87 = arith.index_cast %c2_i32 : i32 to index
    %c0_42 = arith.constant 0 : index
    %88 = vector.load %arg8[%c0_41, %87, %c0_42] : memref<2x4x512xf32, #tpu.memory_space<vmem>>, vector<2x1x512xf32>
    %89 = vector.shape_cast %88 : vector<2x1x512xf32> to vector<2x512xf32>
    %c0_43 = arith.constant 0 : index
    %c0_44 = arith.constant 0 : index
    %90 = vector.load %arg3[%c0_43, %c0_44] : memref<128x512xf32, #tpu.memory_space<vmem>>, vector<128x512xf32>
    %cst_45 = arith.constant dense<0.000000e+00> : vector<2x512xf32>
    %91 = tpu.matmul %86, %90, %cst_45 {dimension_numbers = #tpu.dot_dimension_numbers<[1], [0], [0], [1], [0, 0, 1, 1], [], []>} : vector<2x128xf32>, vector<128x512xf32>, vector<2x512xf32> -> vector<2x512xf32>
    %92 = arith.addf %89, %91 : vector<2x512xf32>
    %93 = vector.extract_strided_slice %92 {offsets = [0, 0], sizes = [2, 128], strides = [1, 1]} : vector<2x512xf32> to vector<2x128xf32>
    %94 = arith.negf %93 : vector<2x128xf32>
    %95 = math.exp %94 : vector<2x128xf32>
    %cst_46 = arith.constant 1.000000e+00 : f32
    %96 = vector.broadcast %cst_46 : f32 to vector<2x128xf32>
    %97 = arith.addf %96, %95 : vector<2x128xf32>
    %98 = arith.divf %96, %97 : vector<2x128xf32>
    %99 = vector.extract_strided_slice %92 {offsets = [0, 128], sizes = [2, 128], strides = [1, 1]} : vector<2x512xf32> to vector<2x128xf32>
    %100 = arith.negf %99 : vector<2x128xf32>
    %101 = math.exp %100 : vector<2x128xf32>
    %cst_47 = arith.constant 1.000000e+00 : f32
    %102 = vector.broadcast %cst_47 : f32 to vector<2x128xf32>
    %103 = arith.addf %102, %101 : vector<2x128xf32>
    %104 = arith.divf %102, %103 : vector<2x128xf32>
    %105 = vector.extract_strided_slice %92 {offsets = [0, 256], sizes = [2, 128], strides = [1, 1]} : vector<2x512xf32> to vector<2x128xf32>
    %106 = math.tanh %105 : vector<2x128xf32>
    %107 = vector.extract_strided_slice %92 {offsets = [0, 384], sizes = [2, 128], strides = [1, 1]} : vector<2x512xf32> to vector<2x128xf32>
    %108 = arith.negf %107 : vector<2x128xf32>
    %109 = math.exp %108 : vector<2x128xf32>
    %cst_48 = arith.constant 1.000000e+00 : f32
    %110 = vector.broadcast %cst_48 : f32 to vector<2x128xf32>
    %111 = arith.addf %110, %109 : vector<2x128xf32>
    %112 = arith.divf %110, %111 : vector<2x128xf32>
    %113 = arith.mulf %104, %84 : vector<2x128xf32>
    %114 = arith.mulf %98, %106 : vector<2x128xf32>
    %115 = arith.addf %113, %114 : vector<2x128xf32>
    %116 = math.tanh %115 : vector<2x128xf32>
    %117 = arith.mulf %112, %116 : vector<2x128xf32>
    %c3_i32 = arith.constant 3 : i32
    %c0_49 = arith.constant 0 : index
    %118 = arith.index_cast %c3_i32 : i32 to index
    %c0_50 = arith.constant 0 : index
    %119 = vector.load %arg8[%c0_49, %118, %c0_50] : memref<2x4x512xf32, #tpu.memory_space<vmem>>, vector<2x1x512xf32>
    %120 = vector.shape_cast %119 : vector<2x1x512xf32> to vector<2x512xf32>
    %c0_51 = arith.constant 0 : index
    %c0_52 = arith.constant 0 : index
    %121 = vector.load %arg3[%c0_51, %c0_52] : memref<128x512xf32, #tpu.memory_space<vmem>>, vector<128x512xf32>
    %cst_53 = arith.constant dense<0.000000e+00> : vector<2x512xf32>
    %122 = tpu.matmul %117, %121, %cst_53 {dimension_numbers = #tpu.dot_dimension_numbers<[1], [0], [0], [1], [0, 0, 1, 1], [], []>} : vector<2x128xf32>, vector<128x512xf32>, vector<2x512xf32> -> vector<2x512xf32>
    %123 = arith.addf %120, %122 : vector<2x512xf32>
    %124 = vector.extract_strided_slice %123 {offsets = [0, 0], sizes = [2, 128], strides = [1, 1]} : vector<2x512xf32> to vector<2x128xf32>
    %125 = arith.negf %124 : vector<2x128xf32>
    %126 = math.exp %125 : vector<2x128xf32>
    %cst_54 = arith.constant 1.000000e+00 : f32
    %127 = vector.broadcast %cst_54 : f32 to vector<2x128xf32>
    %128 = arith.addf %127, %126 : vector<2x128xf32>
    %129 = arith.divf %127, %128 : vector<2x128xf32>
    %130 = vector.extract_strided_slice %123 {offsets = [0, 128], sizes = [2, 128], strides = [1, 1]} : vector<2x512xf32> to vector<2x128xf32>
    %131 = arith.negf %130 : vector<2x128xf32>
    %132 = math.exp %131 : vector<2x128xf32>
    %cst_55 = arith.constant 1.000000e+00 : f32
    %133 = vector.broadcast %cst_55 : f32 to vector<2x128xf32>
    %134 = arith.addf %133, %132 : vector<2x128xf32>
    %135 = arith.divf %133, %134 : vector<2x128xf32>
    %136 = vector.extract_strided_slice %123 {offsets = [0, 256], sizes = [2, 128], strides = [1, 1]} : vector<2x512xf32> to vector<2x128xf32>
    %137 = math.tanh %136 : vector<2x128xf32>
    %138 = vector.extract_strided_slice %123 {offsets = [0, 384], sizes = [2, 128], strides = [1, 1]} : vector<2x512xf32> to vector<2x128xf32>
    %139 = arith.negf %138 : vector<2x128xf32>
    %140 = math.exp %139 : vector<2x128xf32>
    %cst_56 = arith.constant 1.000000e+00 : f32
    %141 = vector.broadcast %cst_56 : f32 to vector<2x128xf32>
    %142 = arith.addf %141, %140 : vector<2x128xf32>
    %143 = arith.divf %141, %142 : vector<2x128xf32>
    %144 = arith.mulf %135, %115 : vector<2x128xf32>
    %145 = arith.mulf %129, %137 : vector<2x128xf32>
    %146 = arith.addf %144, %145 : vector<2x128xf32>
    %147 = math.tanh %146 : vector<2x128xf32>
    %148 = arith.mulf %143, %147 : vector<2x128xf32>
    %c4_i32 = arith.constant 4 : i32
    %c0_57 = arith.constant 0 : index
    %c0_58 = arith.constant 0 : index
    %149 = vector.load %arg6[%c0_57, %c0_58] : memref<2x128xf32, #tpu.memory_space<vmem>>, vector<2x128xf32>
    tpu.vector_store %arg6[%c0_57, %c0_58], %148 {strides = array<i32>} : memref<2x128xf32, #tpu.memory_space<vmem>>, vector<2x128xf32>,
    %c0_59 = arith.constant 0 : index
    %c0_60 = arith.constant 0 : index
    %150 = vector.load %arg7[%c0_59, %c0_60] : memref<2x128xf32, #tpu.memory_space<vmem>>, vector<2x128xf32>
    tpu.vector_store %arg7[%c0_59, %c0_60], %146 {strides = array<i32>} : memref<2x128xf32, #tpu.memory_space<vmem>>, vector<2x128xf32>,
    %c0_61 = arith.constant 0 : index
    %c0_62 = arith.constant 0 : index
    %151 = vector.load %arg5[%c0_61, %c0_62] : memref<2x128xf32, #tpu.memory_space<vmem>>, vector<2x128xf32>
    tpu.vector_store %arg5[%c0_61, %c0_62], %148 {strides = array<i32>} : memref<2x128xf32, #tpu.memory_space<vmem>>, vector<2x128xf32>,
    return
  }
  func.func @transform_0(%arg0: i32) -> (i32, i32, i32) {
    %c0_i32 = arith.constant 0 : i32
    %c0_i32_0 = arith.constant 0 : i32
    %c0_i32_1 = arith.constant 0 : i32
    return %c0_i32, %arg0, %c0_i32_0 : i32, i32, i32
  }
  func.func @transform_1(%arg0: i32) -> (i32, i32) {
    %c0_i32 = arith.constant 0 : i32
    %c0_i32_0 = arith.constant 0 : i32
    %c0_i32_1 = arith.constant 0 : i32
    return %c0_i32, %c0_i32_0 : i32, i32
  }
  func.func @transform_2(%arg0: i32) -> (i32, i32) {
    %c0_i32 = arith.constant 0 : i32
    %c0_i32_0 = arith.constant 0 : i32
    %c0_i32_1 = arith.constant 0 : i32
    return %c0_i32, %c0_i32_0 : i32, i32
  }
  func.func @transform_3(%arg0: i32) -> (i32, i32) {
    %c0_i32 = arith.constant 0 : i32
    %c0_i32_0 = arith.constant 0 : i32
    %c0_i32_1 = arith.constant 0 : i32
    return %c0_i32, %c0_i32_0 : i32, i32
  }
  func.func @transform_4(%arg0: i32) -> (i32, i32) {
    %c0_i32 = arith.constant 0 : i32
    %c0_i32_0 = arith.constant 0 : i32
    %c0_i32_1 = arith.constant 0 : i32
    return %c0_i32, %c0_i32_0 : i32, i32
  }
}

module attributes {stable_mosaic.version = 11 : i64} {
  func.func @cnn_kernel(%arg0: i32, %arg1: memref<1x4x4x23xbf16, #tpu.memory_space<vmem>>, %arg2: memref<3x23x384xbf16, #tpu.memory_space<vmem>>, %arg3: memref<1x384xf32, #tpu.memory_space<vmem>>, %arg4: memref<1x384xf32, #tpu.memory_space<vmem>>, %arg5: memref<3x384x768xbf16, #tpu.memory_space<vmem>>, %arg6: memref<1x768xf32, #tpu.memory_space<vmem>>, %arg7: memref<1x768xf32, #tpu.memory_space<vmem>>, %arg8: memref<1x4x768xbf16, #tpu.memory_space<vmem>>, %arg9: memref<4x36x23xbf16, #tpu.memory_space<vmem>>, %arg10: memref<2x36x384xbf16, #tpu.memory_space<vmem>>) attributes {dimension_semantics = [#tpu.dimension_semantics<parallel>], iteration_bounds = array<i64: 2>, scalar_prefetch = 0 : i64, scratch_operands = 2 : i64, tpu.core_type = #tpu.core_type<tc>, window_params = [{transform_indices = @transform_0, window_bounds = array<i64: 1, 4, 4, 23>}, {pipeline_mode = #tpu.pipeline_mode<synchronous>, transform_indices = @transform_1, window_bounds = array<i64: 3, 23, 384>}, {pipeline_mode = #tpu.pipeline_mode<synchronous>, transform_indices = @transform_2, window_bounds = array<i64: 1, 384>}, {pipeline_mode = #tpu.pipeline_mode<synchronous>, transform_indices = @transform_3, window_bounds = array<i64: 1, 384>}, {pipeline_mode = #tpu.pipeline_mode<synchronous>, transform_indices = @transform_4, window_bounds = array<i64: 3, 384, 768>}, {pipeline_mode = #tpu.pipeline_mode<synchronous>, transform_indices = @transform_5, window_bounds = array<i64: 1, 768>}, {pipeline_mode = #tpu.pipeline_mode<synchronous>, transform_indices = @transform_6, window_bounds = array<i64: 1, 768>}, {transform_indices = @transform_7, window_bounds = array<i64: 1, 4, 768>}]} {
    %cst = arith.constant 0.000000e+00 : bf16
    %0 = vector.broadcast %cst : bf16 to vector<1x23xbf16>
    %c0 = arith.constant 0 : index
    %c15 = arith.constant 15 : index
    %c0_0 = arith.constant 0 : index
    %1 = vector.load %arg9[%c0, %c15, %c0_0] : memref<4x36x23xbf16, #tpu.memory_space<vmem>>, vector<1x1x23xbf16>
    %2 = vector.shape_cast %1 : vector<1x1x23xbf16> to vector<1x23xbf16>
    %3 = vector.shape_cast %0 : vector<1x23xbf16> to vector<1x1x23xbf16>
    tpu.vector_store %arg9[%c0, %c15, %c0_0], %3 {strides = array<i32>} : memref<4x36x23xbf16, #tpu.memory_space<vmem>>, vector<1x1x23xbf16>,
    %c0_1 = arith.constant 0 : index
    %c20 = arith.constant 20 : index
    %c0_2 = arith.constant 0 : index
    %4 = vector.load %arg9[%c0_1, %c20, %c0_2] : memref<4x36x23xbf16, #tpu.memory_space<vmem>>, vector<1x1x23xbf16>
    %5 = vector.shape_cast %4 : vector<1x1x23xbf16> to vector<1x23xbf16>
    %6 = vector.shape_cast %0 : vector<1x23xbf16> to vector<1x1x23xbf16>
    tpu.vector_store %arg9[%c0_1, %c20, %c0_2], %6 {strides = array<i32>} : memref<4x36x23xbf16, #tpu.memory_space<vmem>>, vector<1x1x23xbf16>,
    %c0_3 = arith.constant 0 : index
    %c0_4 = arith.constant 0 : index
    %c0_5 = arith.constant 0 : index
    %c0_6 = arith.constant 0 : index
    %7 = vector.load %arg1[%c0_3, %c0_4, %c0_5, %c0_6] : memref<1x4x4x23xbf16, #tpu.memory_space<vmem>>, vector<1x1x4x23xbf16>
    %8 = vector.shape_cast %7 : vector<1x1x4x23xbf16> to vector<4x23xbf16>
    %c0_7 = arith.constant 0 : index
    %c16 = arith.constant 16 : index
    %c0_8 = arith.constant 0 : index
    %9 = vector.load %arg9[%c0_7, %c16, %c0_8] : memref<4x36x23xbf16, #tpu.memory_space<vmem>>, vector<1x4x23xbf16>
    %10 = vector.shape_cast %9 : vector<1x4x23xbf16> to vector<4x23xbf16>
    %11 = vector.shape_cast %8 : vector<4x23xbf16> to vector<1x4x23xbf16>
    tpu.vector_store %arg9[%c0_7, %c16, %c0_8], %11 {strides = array<i32>} : memref<4x36x23xbf16, #tpu.memory_space<vmem>>, vector<1x4x23xbf16>,
    %c1 = arith.constant 1 : index
    %c15_9 = arith.constant 15 : index
    %c0_10 = arith.constant 0 : index
    %12 = vector.load %arg9[%c1, %c15_9, %c0_10] : memref<4x36x23xbf16, #tpu.memory_space<vmem>>, vector<1x1x23xbf16>
    %13 = vector.shape_cast %12 : vector<1x1x23xbf16> to vector<1x23xbf16>
    %14 = vector.shape_cast %0 : vector<1x23xbf16> to vector<1x1x23xbf16>
    tpu.vector_store %arg9[%c1, %c15_9, %c0_10], %14 {strides = array<i32>} : memref<4x36x23xbf16, #tpu.memory_space<vmem>>, vector<1x1x23xbf16>,
    %c1_11 = arith.constant 1 : index
    %c20_12 = arith.constant 20 : index
    %c0_13 = arith.constant 0 : index
    %15 = vector.load %arg9[%c1_11, %c20_12, %c0_13] : memref<4x36x23xbf16, #tpu.memory_space<vmem>>, vector<1x1x23xbf16>
    %16 = vector.shape_cast %15 : vector<1x1x23xbf16> to vector<1x23xbf16>
    %17 = vector.shape_cast %0 : vector<1x23xbf16> to vector<1x1x23xbf16>
    tpu.vector_store %arg9[%c1_11, %c20_12, %c0_13], %17 {strides = array<i32>} : memref<4x36x23xbf16, #tpu.memory_space<vmem>>, vector<1x1x23xbf16>,
    %c0_14 = arith.constant 0 : index
    %c1_15 = arith.constant 1 : index
    %c0_16 = arith.constant 0 : index
    %c0_17 = arith.constant 0 : index
    %18 = vector.load %arg1[%c0_14, %c1_15, %c0_16, %c0_17] : memref<1x4x4x23xbf16, #tpu.memory_space<vmem>>, vector<1x1x4x23xbf16>
    %19 = vector.shape_cast %18 : vector<1x1x4x23xbf16> to vector<4x23xbf16>
    %c1_18 = arith.constant 1 : index
    %c16_19 = arith.constant 16 : index
    %c0_20 = arith.constant 0 : index
    %20 = vector.load %arg9[%c1_18, %c16_19, %c0_20] : memref<4x36x23xbf16, #tpu.memory_space<vmem>>, vector<1x4x23xbf16>
    %21 = vector.shape_cast %20 : vector<1x4x23xbf16> to vector<4x23xbf16>
    %22 = vector.shape_cast %19 : vector<4x23xbf16> to vector<1x4x23xbf16>
    tpu.vector_store %arg9[%c1_18, %c16_19, %c0_20], %22 {strides = array<i32>} : memref<4x36x23xbf16, #tpu.memory_space<vmem>>, vector<1x4x23xbf16>,
    %c2 = arith.constant 2 : index
    %c15_21 = arith.constant 15 : index
    %c0_22 = arith.constant 0 : index
    %23 = vector.load %arg9[%c2, %c15_21, %c0_22] : memref<4x36x23xbf16, #tpu.memory_space<vmem>>, vector<1x1x23xbf16>
    %24 = vector.shape_cast %23 : vector<1x1x23xbf16> to vector<1x23xbf16>
    %25 = vector.shape_cast %0 : vector<1x23xbf16> to vector<1x1x23xbf16>
    tpu.vector_store %arg9[%c2, %c15_21, %c0_22], %25 {strides = array<i32>} : memref<4x36x23xbf16, #tpu.memory_space<vmem>>, vector<1x1x23xbf16>,
    %c2_23 = arith.constant 2 : index
    %c20_24 = arith.constant 20 : index
    %c0_25 = arith.constant 0 : index
    %26 = vector.load %arg9[%c2_23, %c20_24, %c0_25] : memref<4x36x23xbf16, #tpu.memory_space<vmem>>, vector<1x1x23xbf16>
    %27 = vector.shape_cast %26 : vector<1x1x23xbf16> to vector<1x23xbf16>
    %28 = vector.shape_cast %0 : vector<1x23xbf16> to vector<1x1x23xbf16>
    tpu.vector_store %arg9[%c2_23, %c20_24, %c0_25], %28 {strides = array<i32>} : memref<4x36x23xbf16, #tpu.memory_space<vmem>>, vector<1x1x23xbf16>,
    %c0_26 = arith.constant 0 : index
    %c2_27 = arith.constant 2 : index
    %c0_28 = arith.constant 0 : index
    %c0_29 = arith.constant 0 : index
    %29 = vector.load %arg1[%c0_26, %c2_27, %c0_28, %c0_29] : memref<1x4x4x23xbf16, #tpu.memory_space<vmem>>, vector<1x1x4x23xbf16>
    %30 = vector.shape_cast %29 : vector<1x1x4x23xbf16> to vector<4x23xbf16>
    %c2_30 = arith.constant 2 : index
    %c16_31 = arith.constant 16 : index
    %c0_32 = arith.constant 0 : index
    %31 = vector.load %arg9[%c2_30, %c16_31, %c0_32] : memref<4x36x23xbf16, #tpu.memory_space<vmem>>, vector<1x4x23xbf16>
    %32 = vector.shape_cast %31 : vector<1x4x23xbf16> to vector<4x23xbf16>
    %33 = vector.shape_cast %30 : vector<4x23xbf16> to vector<1x4x23xbf16>
    tpu.vector_store %arg9[%c2_30, %c16_31, %c0_32], %33 {strides = array<i32>} : memref<4x36x23xbf16, #tpu.memory_space<vmem>>, vector<1x4x23xbf16>,
    %c3 = arith.constant 3 : index
    %c15_33 = arith.constant 15 : index
    %c0_34 = arith.constant 0 : index
    %34 = vector.load %arg9[%c3, %c15_33, %c0_34] : memref<4x36x23xbf16, #tpu.memory_space<vmem>>, vector<1x1x23xbf16>
    %35 = vector.shape_cast %34 : vector<1x1x23xbf16> to vector<1x23xbf16>
    %36 = vector.shape_cast %0 : vector<1x23xbf16> to vector<1x1x23xbf16>
    tpu.vector_store %arg9[%c3, %c15_33, %c0_34], %36 {strides = array<i32>} : memref<4x36x23xbf16, #tpu.memory_space<vmem>>, vector<1x1x23xbf16>,
    %c3_35 = arith.constant 3 : index
    %c20_36 = arith.constant 20 : index
    %c0_37 = arith.constant 0 : index
    %37 = vector.load %arg9[%c3_35, %c20_36, %c0_37] : memref<4x36x23xbf16, #tpu.memory_space<vmem>>, vector<1x1x23xbf16>
    %38 = vector.shape_cast %37 : vector<1x1x23xbf16> to vector<1x23xbf16>
    %39 = vector.shape_cast %0 : vector<1x23xbf16> to vector<1x1x23xbf16>
    tpu.vector_store %arg9[%c3_35, %c20_36, %c0_37], %39 {strides = array<i32>} : memref<4x36x23xbf16, #tpu.memory_space<vmem>>, vector<1x1x23xbf16>,
    %c0_38 = arith.constant 0 : index
    %c3_39 = arith.constant 3 : index
    %c0_40 = arith.constant 0 : index
    %c0_41 = arith.constant 0 : index
    %40 = vector.load %arg1[%c0_38, %c3_39, %c0_40, %c0_41] : memref<1x4x4x23xbf16, #tpu.memory_space<vmem>>, vector<1x1x4x23xbf16>
    %41 = vector.shape_cast %40 : vector<1x1x4x23xbf16> to vector<4x23xbf16>
    %c3_42 = arith.constant 3 : index
    %c16_43 = arith.constant 16 : index
    %c0_44 = arith.constant 0 : index
    %42 = vector.load %arg9[%c3_42, %c16_43, %c0_44] : memref<4x36x23xbf16, #tpu.memory_space<vmem>>, vector<1x4x23xbf16>
    %43 = vector.shape_cast %42 : vector<1x4x23xbf16> to vector<4x23xbf16>
    %44 = vector.shape_cast %41 : vector<4x23xbf16> to vector<1x4x23xbf16>
    tpu.vector_store %arg9[%c3_42, %c16_43, %c0_44], %44 {strides = array<i32>} : memref<4x36x23xbf16, #tpu.memory_space<vmem>>, vector<1x4x23xbf16>,
    %cst_45 = arith.constant 0.000000e+00 : bf16
    %45 = vector.broadcast %cst_45 : bf16 to vector<1x384xbf16>
    %c0_46 = arith.constant 0 : index
    %c15_47 = arith.constant 15 : index
    %c0_48 = arith.constant 0 : index
    %46 = vector.load %arg10[%c0_46, %c15_47, %c0_48] : memref<2x36x384xbf16, #tpu.memory_space<vmem>>, vector<1x1x384xbf16>
    %47 = vector.shape_cast %46 : vector<1x1x384xbf16> to vector<1x384xbf16>
    %48 = vector.shape_cast %45 : vector<1x384xbf16> to vector<1x1x384xbf16>
    tpu.vector_store %arg10[%c0_46, %c15_47, %c0_48], %48 {strides = array<i32>} : memref<2x36x384xbf16, #tpu.memory_space<vmem>>, vector<1x1x384xbf16>,
    %c0_49 = arith.constant 0 : index
    %c20_50 = arith.constant 20 : index
    %c0_51 = arith.constant 0 : index
    %49 = vector.load %arg10[%c0_49, %c20_50, %c0_51] : memref<2x36x384xbf16, #tpu.memory_space<vmem>>, vector<1x1x384xbf16>
    %50 = vector.shape_cast %49 : vector<1x1x384xbf16> to vector<1x384xbf16>
    %51 = vector.shape_cast %45 : vector<1x384xbf16> to vector<1x1x384xbf16>
    tpu.vector_store %arg10[%c0_49, %c20_50, %c0_51], %51 {strides = array<i32>} : memref<2x36x384xbf16, #tpu.memory_space<vmem>>, vector<1x1x384xbf16>,
    %c1_52 = arith.constant 1 : index
    %c15_53 = arith.constant 15 : index
    %c0_54 = arith.constant 0 : index
    %52 = vector.load %arg10[%c1_52, %c15_53, %c0_54] : memref<2x36x384xbf16, #tpu.memory_space<vmem>>, vector<1x1x384xbf16>
    %53 = vector.shape_cast %52 : vector<1x1x384xbf16> to vector<1x384xbf16>
    %54 = vector.shape_cast %45 : vector<1x384xbf16> to vector<1x1x384xbf16>
    tpu.vector_store %arg10[%c1_52, %c15_53, %c0_54], %54 {strides = array<i32>} : memref<2x36x384xbf16, #tpu.memory_space<vmem>>, vector<1x1x384xbf16>,
    %c1_55 = arith.constant 1 : index
    %c20_56 = arith.constant 20 : index
    %c0_57 = arith.constant 0 : index
    %55 = vector.load %arg10[%c1_55, %c20_56, %c0_57] : memref<2x36x384xbf16, #tpu.memory_space<vmem>>, vector<1x1x384xbf16>
    %56 = vector.shape_cast %55 : vector<1x1x384xbf16> to vector<1x384xbf16>
    %57 = vector.shape_cast %45 : vector<1x384xbf16> to vector<1x1x384xbf16>
    tpu.vector_store %arg10[%c1_55, %c20_56, %c0_57], %57 {strides = array<i32>} : memref<2x36x384xbf16, #tpu.memory_space<vmem>>, vector<1x1x384xbf16>,
    %c3_58 = arith.constant 3 : index
    %c15_59 = arith.constant 15 : index
    %c0_60 = arith.constant 0 : index
    %58 = vector.load %arg9[%c3_58, %c15_59, %c0_60] : memref<4x36x23xbf16, #tpu.memory_space<vmem>>, vector<1x4x23xbf16>
    %59 = vector.shape_cast %58 : vector<1x4x23xbf16> to vector<4x23xbf16>
    %c0_61 = arith.constant 0 : index
    %c0_62 = arith.constant 0 : index
    %c0_63 = arith.constant 0 : index
    %60 = vector.load %arg2[%c0_61, %c0_62, %c0_63] : memref<3x23x384xbf16, #tpu.memory_space<vmem>>, vector<1x23x384xbf16>
    %61 = vector.shape_cast %60 : vector<1x23x384xbf16> to vector<23x384xbf16>
    %cst_64 = arith.constant dense<0.000000e+00> : vector<4x384xf32>
    %62 = tpu.matmul %59, %61, %cst_64 {dimension_numbers = #tpu.dot_dimension_numbers<[1], [0], [0], [1], [0, 0, 1, 1], [], []>} : vector<4x23xbf16>, vector<23x384xbf16>, vector<4x384xf32> -> vector<4x384xf32>
    %c0_65 = arith.constant 0 : index
    %c16_66 = arith.constant 16 : index
    %c0_67 = arith.constant 0 : index
    %63 = vector.load %arg9[%c0_65, %c16_66, %c0_67] : memref<4x36x23xbf16, #tpu.memory_space<vmem>>, vector<1x4x23xbf16>
    %64 = vector.shape_cast %63 : vector<1x4x23xbf16> to vector<4x23xbf16>
    %c1_68 = arith.constant 1 : index
    %c0_69 = arith.constant 0 : index
    %c0_70 = arith.constant 0 : index
    %65 = vector.load %arg2[%c1_68, %c0_69, %c0_70] : memref<3x23x384xbf16, #tpu.memory_space<vmem>>, vector<1x23x384xbf16>
    %66 = vector.shape_cast %65 : vector<1x23x384xbf16> to vector<23x384xbf16>
    %cst_71 = arith.constant dense<0.000000e+00> : vector<4x384xf32>
    %67 = tpu.matmul %64, %66, %cst_71 {dimension_numbers = #tpu.dot_dimension_numbers<[1], [0], [0], [1], [0, 0, 1, 1], [], []>} : vector<4x23xbf16>, vector<23x384xbf16>, vector<4x384xf32> -> vector<4x384xf32>
    %68 = arith.addf %62, %67 : vector<4x384xf32>
    %c1_72 = arith.constant 1 : index
    %c16_73 = arith.constant 16 : index
    %c0_74 = arith.constant 0 : index
    %69 = vector.load %arg9[%c1_72, %c16_73, %c0_74] : memref<4x36x23xbf16, #tpu.memory_space<vmem>>, vector<1x4x23xbf16>
    %70 = vector.shape_cast %69 : vector<1x4x23xbf16> to vector<4x23xbf16>
    %c2_75 = arith.constant 2 : index
    %c0_76 = arith.constant 0 : index
    %c0_77 = arith.constant 0 : index
    %71 = vector.load %arg2[%c2_75, %c0_76, %c0_77] : memref<3x23x384xbf16, #tpu.memory_space<vmem>>, vector<1x23x384xbf16>
    %72 = vector.shape_cast %71 : vector<1x23x384xbf16> to vector<23x384xbf16>
    %cst_78 = arith.constant dense<0.000000e+00> : vector<4x384xf32>
    %73 = tpu.matmul %70, %72, %cst_78 {dimension_numbers = #tpu.dot_dimension_numbers<[1], [0], [0], [1], [0, 0, 1, 1], [], []>} : vector<4x23xbf16>, vector<23x384xbf16>, vector<4x384xf32> -> vector<4x384xf32>
    %74 = arith.addf %68, %73 : vector<4x384xf32>
    %c0_79 = arith.constant 0 : index
    %c0_80 = arith.constant 0 : index
    %75 = vector.load %arg3[%c0_79, %c0_80] : memref<1x384xf32, #tpu.memory_space<vmem>>, vector<1x384xf32>
    %76 = vector.broadcast %75 : vector<1x384xf32> to vector<4x384xf32>
    %77 = arith.mulf %74, %76 : vector<4x384xf32>
    %c0_81 = arith.constant 0 : index
    %c0_82 = arith.constant 0 : index
    %78 = vector.load %arg4[%c0_81, %c0_82] : memref<1x384xf32, #tpu.memory_space<vmem>>, vector<1x384xf32>
    %79 = vector.broadcast %78 : vector<1x384xf32> to vector<4x384xf32>
    %80 = arith.addf %77, %79 : vector<4x384xf32>
    %cst_83 = arith.constant 0.000000e+00 : f32
    %81 = vector.broadcast %cst_83 : f32 to vector<4x384xf32>
    %82 = arith.maximumf %80, %81 : vector<4x384xf32>
    %c0_84 = arith.constant 0 : index
    %c16_85 = arith.constant 16 : index
    %c0_86 = arith.constant 0 : index
    %83 = vector.load %arg9[%c0_84, %c16_85, %c0_86] : memref<4x36x23xbf16, #tpu.memory_space<vmem>>, vector<1x4x23xbf16>
    %84 = vector.shape_cast %83 : vector<1x4x23xbf16> to vector<4x23xbf16>
    %c0_87 = arith.constant 0 : index
    %c0_88 = arith.constant 0 : index
    %c0_89 = arith.constant 0 : index
    %85 = vector.load %arg2[%c0_87, %c0_88, %c0_89] : memref<3x23x384xbf16, #tpu.memory_space<vmem>>, vector<1x23x384xbf16>
    %86 = vector.shape_cast %85 : vector<1x23x384xbf16> to vector<23x384xbf16>
    %cst_90 = arith.constant dense<0.000000e+00> : vector<4x384xf32>
    %87 = tpu.matmul %84, %86, %cst_90 {dimension_numbers = #tpu.dot_dimension_numbers<[1], [0], [0], [1], [0, 0, 1, 1], [], []>} : vector<4x23xbf16>, vector<23x384xbf16>, vector<4x384xf32> -> vector<4x384xf32>
    %c1_91 = arith.constant 1 : index
    %c16_92 = arith.constant 16 : index
    %c0_93 = arith.constant 0 : index
    %88 = vector.load %arg9[%c1_91, %c16_92, %c0_93] : memref<4x36x23xbf16, #tpu.memory_space<vmem>>, vector<1x4x23xbf16>
    %89 = vector.shape_cast %88 : vector<1x4x23xbf16> to vector<4x23xbf16>
    %c1_94 = arith.constant 1 : index
    %c0_95 = arith.constant 0 : index
    %c0_96 = arith.constant 0 : index
    %90 = vector.load %arg2[%c1_94, %c0_95, %c0_96] : memref<3x23x384xbf16, #tpu.memory_space<vmem>>, vector<1x23x384xbf16>
    %91 = vector.shape_cast %90 : vector<1x23x384xbf16> to vector<23x384xbf16>
    %cst_97 = arith.constant dense<0.000000e+00> : vector<4x384xf32>
    %92 = tpu.matmul %89, %91, %cst_97 {dimension_numbers = #tpu.dot_dimension_numbers<[1], [0], [0], [1], [0, 0, 1, 1], [], []>} : vector<4x23xbf16>, vector<23x384xbf16>, vector<4x384xf32> -> vector<4x384xf32>
    %93 = arith.addf %87, %92 : vector<4x384xf32>
    %c2_98 = arith.constant 2 : index
    %c16_99 = arith.constant 16 : index
    %c0_100 = arith.constant 0 : index
    %94 = vector.load %arg9[%c2_98, %c16_99, %c0_100] : memref<4x36x23xbf16, #tpu.memory_space<vmem>>, vector<1x4x23xbf16>
    %95 = vector.shape_cast %94 : vector<1x4x23xbf16> to vector<4x23xbf16>
    %c2_101 = arith.constant 2 : index
    %c0_102 = arith.constant 0 : index
    %c0_103 = arith.constant 0 : index
    %96 = vector.load %arg2[%c2_101, %c0_102, %c0_103] : memref<3x23x384xbf16, #tpu.memory_space<vmem>>, vector<1x23x384xbf16>
    %97 = vector.shape_cast %96 : vector<1x23x384xbf16> to vector<23x384xbf16>
    %cst_104 = arith.constant dense<0.000000e+00> : vector<4x384xf32>
    %98 = tpu.matmul %95, %97, %cst_104 {dimension_numbers = #tpu.dot_dimension_numbers<[1], [0], [0], [1], [0, 0, 1, 1], [], []>} : vector<4x23xbf16>, vector<23x384xbf16>, vector<4x384xf32> -> vector<4x384xf32>
    %99 = arith.addf %93, %98 : vector<4x384xf32>
    %c0_105 = arith.constant 0 : index
    %c0_106 = arith.constant 0 : index
    %100 = vector.load %arg3[%c0_105, %c0_106] : memref<1x384xf32, #tpu.memory_space<vmem>>, vector<1x384xf32>
    %101 = vector.broadcast %100 : vector<1x384xf32> to vector<4x384xf32>
    %102 = arith.mulf %99, %101 : vector<4x384xf32>
    %c0_107 = arith.constant 0 : index
    %c0_108 = arith.constant 0 : index
    %103 = vector.load %arg4[%c0_107, %c0_108] : memref<1x384xf32, #tpu.memory_space<vmem>>, vector<1x384xf32>
    %104 = vector.broadcast %103 : vector<1x384xf32> to vector<4x384xf32>
    %105 = arith.addf %102, %104 : vector<4x384xf32>
    %cst_109 = arith.constant 0.000000e+00 : f32
    %106 = vector.broadcast %cst_109 : f32 to vector<4x384xf32>
    %107 = arith.maximumf %105, %106 : vector<4x384xf32>
    %108 = arith.maximumf %82, %107 : vector<4x384xf32>
    %109 = arith.truncf %108 : vector<4x384xf32> to vector<4x384xbf16>
    %c0_110 = arith.constant 0 : index
    %c16_111 = arith.constant 16 : index
    %c0_112 = arith.constant 0 : index
    %110 = vector.load %arg10[%c0_110, %c16_111, %c0_112] : memref<2x36x384xbf16, #tpu.memory_space<vmem>>, vector<1x4x384xbf16>
    %111 = vector.shape_cast %110 : vector<1x4x384xbf16> to vector<4x384xbf16>
    %112 = vector.shape_cast %109 : vector<4x384xbf16> to vector<1x4x384xbf16>
    tpu.vector_store %arg10[%c0_110, %c16_111, %c0_112], %112 {strides = array<i32>} : memref<2x36x384xbf16, #tpu.memory_space<vmem>>, vector<1x4x384xbf16>,
    %c1_113 = arith.constant 1 : index
    %c16_114 = arith.constant 16 : index
    %c0_115 = arith.constant 0 : index
    %113 = vector.load %arg9[%c1_113, %c16_114, %c0_115] : memref<4x36x23xbf16, #tpu.memory_space<vmem>>, vector<1x4x23xbf16>
    %114 = vector.shape_cast %113 : vector<1x4x23xbf16> to vector<4x23xbf16>
    %c0_116 = arith.constant 0 : index
    %c0_117 = arith.constant 0 : index
    %c0_118 = arith.constant 0 : index
    %115 = vector.load %arg2[%c0_116, %c0_117, %c0_118] : memref<3x23x384xbf16, #tpu.memory_space<vmem>>, vector<1x23x384xbf16>
    %116 = vector.shape_cast %115 : vector<1x23x384xbf16> to vector<23x384xbf16>
    %cst_119 = arith.constant dense<0.000000e+00> : vector<4x384xf32>
    %117 = tpu.matmul %114, %116, %cst_119 {dimension_numbers = #tpu.dot_dimension_numbers<[1], [0], [0], [1], [0, 0, 1, 1], [], []>} : vector<4x23xbf16>, vector<23x384xbf16>, vector<4x384xf32> -> vector<4x384xf32>
    %c2_120 = arith.constant 2 : index
    %c16_121 = arith.constant 16 : index
    %c0_122 = arith.constant 0 : index
    %118 = vector.load %arg9[%c2_120, %c16_121, %c0_122] : memref<4x36x23xbf16, #tpu.memory_space<vmem>>, vector<1x4x23xbf16>
    %119 = vector.shape_cast %118 : vector<1x4x23xbf16> to vector<4x23xbf16>
    %c1_123 = arith.constant 1 : index
    %c0_124 = arith.constant 0 : index
    %c0_125 = arith.constant 0 : index
    %120 = vector.load %arg2[%c1_123, %c0_124, %c0_125] : memref<3x23x384xbf16, #tpu.memory_space<vmem>>, vector<1x23x384xbf16>
    %121 = vector.shape_cast %120 : vector<1x23x384xbf16> to vector<23x384xbf16>
    %cst_126 = arith.constant dense<0.000000e+00> : vector<4x384xf32>
    %122 = tpu.matmul %119, %121, %cst_126 {dimension_numbers = #tpu.dot_dimension_numbers<[1], [0], [0], [1], [0, 0, 1, 1], [], []>} : vector<4x23xbf16>, vector<23x384xbf16>, vector<4x384xf32> -> vector<4x384xf32>
    %123 = arith.addf %117, %122 : vector<4x384xf32>
    %c3_127 = arith.constant 3 : index
    %c16_128 = arith.constant 16 : index
    %c0_129 = arith.constant 0 : index
    %124 = vector.load %arg9[%c3_127, %c16_128, %c0_129] : memref<4x36x23xbf16, #tpu.memory_space<vmem>>, vector<1x4x23xbf16>
    %125 = vector.shape_cast %124 : vector<1x4x23xbf16> to vector<4x23xbf16>
    %c2_130 = arith.constant 2 : index
    %c0_131 = arith.constant 0 : index
    %c0_132 = arith.constant 0 : index
    %126 = vector.load %arg2[%c2_130, %c0_131, %c0_132] : memref<3x23x384xbf16, #tpu.memory_space<vmem>>, vector<1x23x384xbf16>
    %127 = vector.shape_cast %126 : vector<1x23x384xbf16> to vector<23x384xbf16>
    %cst_133 = arith.constant dense<0.000000e+00> : vector<4x384xf32>
    %128 = tpu.matmul %125, %127, %cst_133 {dimension_numbers = #tpu.dot_dimension_numbers<[1], [0], [0], [1], [0, 0, 1, 1], [], []>} : vector<4x23xbf16>, vector<23x384xbf16>, vector<4x384xf32> -> vector<4x384xf32>
    %129 = arith.addf %123, %128 : vector<4x384xf32>
    %c0_134 = arith.constant 0 : index
    %c0_135 = arith.constant 0 : index
    %130 = vector.load %arg3[%c0_134, %c0_135] : memref<1x384xf32, #tpu.memory_space<vmem>>, vector<1x384xf32>
    %131 = vector.broadcast %130 : vector<1x384xf32> to vector<4x384xf32>
    %132 = arith.mulf %129, %131 : vector<4x384xf32>
    %c0_136 = arith.constant 0 : index
    %c0_137 = arith.constant 0 : index
    %133 = vector.load %arg4[%c0_136, %c0_137] : memref<1x384xf32, #tpu.memory_space<vmem>>, vector<1x384xf32>
    %134 = vector.broadcast %133 : vector<1x384xf32> to vector<4x384xf32>
    %135 = arith.addf %132, %134 : vector<4x384xf32>
    %cst_138 = arith.constant 0.000000e+00 : f32
    %136 = vector.broadcast %cst_138 : f32 to vector<4x384xf32>
    %137 = arith.maximumf %135, %136 : vector<4x384xf32>
    %c2_139 = arith.constant 2 : index
    %c16_140 = arith.constant 16 : index
    %c0_141 = arith.constant 0 : index
    %138 = vector.load %arg9[%c2_139, %c16_140, %c0_141] : memref<4x36x23xbf16, #tpu.memory_space<vmem>>, vector<1x4x23xbf16>
    %139 = vector.shape_cast %138 : vector<1x4x23xbf16> to vector<4x23xbf16>
    %c0_142 = arith.constant 0 : index
    %c0_143 = arith.constant 0 : index
    %c0_144 = arith.constant 0 : index
    %140 = vector.load %arg2[%c0_142, %c0_143, %c0_144] : memref<3x23x384xbf16, #tpu.memory_space<vmem>>, vector<1x23x384xbf16>
    %141 = vector.shape_cast %140 : vector<1x23x384xbf16> to vector<23x384xbf16>
    %cst_145 = arith.constant dense<0.000000e+00> : vector<4x384xf32>
    %142 = tpu.matmul %139, %141, %cst_145 {dimension_numbers = #tpu.dot_dimension_numbers<[1], [0], [0], [1], [0, 0, 1, 1], [], []>} : vector<4x23xbf16>, vector<23x384xbf16>, vector<4x384xf32> -> vector<4x384xf32>
    %c3_146 = arith.constant 3 : index
    %c16_147 = arith.constant 16 : index
    %c0_148 = arith.constant 0 : index
    %143 = vector.load %arg9[%c3_146, %c16_147, %c0_148] : memref<4x36x23xbf16, #tpu.memory_space<vmem>>, vector<1x4x23xbf16>
    %144 = vector.shape_cast %143 : vector<1x4x23xbf16> to vector<4x23xbf16>
    %c1_149 = arith.constant 1 : index
    %c0_150 = arith.constant 0 : index
    %c0_151 = arith.constant 0 : index
    %145 = vector.load %arg2[%c1_149, %c0_150, %c0_151] : memref<3x23x384xbf16, #tpu.memory_space<vmem>>, vector<1x23x384xbf16>
    %146 = vector.shape_cast %145 : vector<1x23x384xbf16> to vector<23x384xbf16>
    %cst_152 = arith.constant dense<0.000000e+00> : vector<4x384xf32>
    %147 = tpu.matmul %144, %146, %cst_152 {dimension_numbers = #tpu.dot_dimension_numbers<[1], [0], [0], [1], [0, 0, 1, 1], [], []>} : vector<4x23xbf16>, vector<23x384xbf16>, vector<4x384xf32> -> vector<4x384xf32>
    %148 = arith.addf %142, %147 : vector<4x384xf32>
    %c0_153 = arith.constant 0 : index
    %c17 = arith.constant 17 : index
    %c0_154 = arith.constant 0 : index
    %149 = vector.load %arg9[%c0_153, %c17, %c0_154] : memref<4x36x23xbf16, #tpu.memory_space<vmem>>, vector<1x4x23xbf16>
    %150 = vector.shape_cast %149 : vector<1x4x23xbf16> to vector<4x23xbf16>
    %c2_155 = arith.constant 2 : index
    %c0_156 = arith.constant 0 : index
    %c0_157 = arith.constant 0 : index
    %151 = vector.load %arg2[%c2_155, %c0_156, %c0_157] : memref<3x23x384xbf16, #tpu.memory_space<vmem>>, vector<1x23x384xbf16>
    %152 = vector.shape_cast %151 : vector<1x23x384xbf16> to vector<23x384xbf16>
    %cst_158 = arith.constant dense<0.000000e+00> : vector<4x384xf32>
    %153 = tpu.matmul %150, %152, %cst_158 {dimension_numbers = #tpu.dot_dimension_numbers<[1], [0], [0], [1], [0, 0, 1, 1], [], []>} : vector<4x23xbf16>, vector<23x384xbf16>, vector<4x384xf32> -> vector<4x384xf32>
    %154 = arith.addf %148, %153 : vector<4x384xf32>
    %c0_159 = arith.constant 0 : index
    %c0_160 = arith.constant 0 : index
    %155 = vector.load %arg3[%c0_159, %c0_160] : memref<1x384xf32, #tpu.memory_space<vmem>>, vector<1x384xf32>
    %156 = vector.broadcast %155 : vector<1x384xf32> to vector<4x384xf32>
    %157 = arith.mulf %154, %156 : vector<4x384xf32>
    %c0_161 = arith.constant 0 : index
    %c0_162 = arith.constant 0 : index
    %158 = vector.load %arg4[%c0_161, %c0_162] : memref<1x384xf32, #tpu.memory_space<vmem>>, vector<1x384xf32>
    %159 = vector.broadcast %158 : vector<1x384xf32> to vector<4x384xf32>
    %160 = arith.addf %157, %159 : vector<4x384xf32>
    %cst_163 = arith.constant 0.000000e+00 : f32
    %161 = vector.broadcast %cst_163 : f32 to vector<4x384xf32>
    %162 = arith.maximumf %160, %161 : vector<4x384xf32>
    %163 = arith.maximumf %137, %162 : vector<4x384xf32>
    %164 = arith.truncf %163 : vector<4x384xf32> to vector<4x384xbf16>
    %c1_164 = arith.constant 1 : index
    %c16_165 = arith.constant 16 : index
    %c0_166 = arith.constant 0 : index
    %165 = vector.load %arg10[%c1_164, %c16_165, %c0_166] : memref<2x36x384xbf16, #tpu.memory_space<vmem>>, vector<1x4x384xbf16>
    %166 = vector.shape_cast %165 : vector<1x4x384xbf16> to vector<4x384xbf16>
    %167 = vector.shape_cast %164 : vector<4x384xbf16> to vector<1x4x384xbf16>
    tpu.vector_store %arg10[%c1_164, %c16_165, %c0_166], %167 {strides = array<i32>} : memref<2x36x384xbf16, #tpu.memory_space<vmem>>, vector<1x4x384xbf16>,
    %c1_167 = arith.constant 1 : index
    %c15_168 = arith.constant 15 : index
    %c0_169 = arith.constant 0 : index
    %168 = vector.load %arg10[%c1_167, %c15_168, %c0_169] : memref<2x36x384xbf16, #tpu.memory_space<vmem>>, vector<1x4x384xbf16>
    %169 = vector.shape_cast %168 : vector<1x4x384xbf16> to vector<4x384xbf16>
    %c0_170 = arith.constant 0 : index
    %c0_171 = arith.constant 0 : index
    %c0_172 = arith.constant 0 : index
    %170 = vector.load %arg5[%c0_170, %c0_171, %c0_172] : memref<3x384x768xbf16, #tpu.memory_space<vmem>>, vector<1x384x768xbf16>
    %171 = vector.shape_cast %170 : vector<1x384x768xbf16> to vector<384x768xbf16>
    %cst_173 = arith.constant dense<0.000000e+00> : vector<4x768xf32>
    %172 = tpu.matmul %169, %171, %cst_173 {dimension_numbers = #tpu.dot_dimension_numbers<[1], [0], [0], [1], [0, 0, 1, 1], [], []>} : vector<4x384xbf16>, vector<384x768xbf16>, vector<4x768xf32> -> vector<4x768xf32>
    %c0_174 = arith.constant 0 : index
    %c16_175 = arith.constant 16 : index
    %c0_176 = arith.constant 0 : index
    %173 = vector.load %arg10[%c0_174, %c16_175, %c0_176] : memref<2x36x384xbf16, #tpu.memory_space<vmem>>, vector<1x4x384xbf16>
    %174 = vector.shape_cast %173 : vector<1x4x384xbf16> to vector<4x384xbf16>
    %c1_177 = arith.constant 1 : index
    %c0_178 = arith.constant 0 : index
    %c0_179 = arith.constant 0 : index
    %175 = vector.load %arg5[%c1_177, %c0_178, %c0_179] : memref<3x384x768xbf16, #tpu.memory_space<vmem>>, vector<1x384x768xbf16>
    %176 = vector.shape_cast %175 : vector<1x384x768xbf16> to vector<384x768xbf16>
    %cst_180 = arith.constant dense<0.000000e+00> : vector<4x768xf32>
    %177 = tpu.matmul %174, %176, %cst_180 {dimension_numbers = #tpu.dot_dimension_numbers<[1], [0], [0], [1], [0, 0, 1, 1], [], []>} : vector<4x384xbf16>, vector<384x768xbf16>, vector<4x768xf32> -> vector<4x768xf32>
    %178 = arith.addf %172, %177 : vector<4x768xf32>
    %c1_181 = arith.constant 1 : index
    %c16_182 = arith.constant 16 : index
    %c0_183 = arith.constant 0 : index
    %179 = vector.load %arg10[%c1_181, %c16_182, %c0_183] : memref<2x36x384xbf16, #tpu.memory_space<vmem>>, vector<1x4x384xbf16>
    %180 = vector.shape_cast %179 : vector<1x4x384xbf16> to vector<4x384xbf16>
    %c2_184 = arith.constant 2 : index
    %c0_185 = arith.constant 0 : index
    %c0_186 = arith.constant 0 : index
    %181 = vector.load %arg5[%c2_184, %c0_185, %c0_186] : memref<3x384x768xbf16, #tpu.memory_space<vmem>>, vector<1x384x768xbf16>
    %182 = vector.shape_cast %181 : vector<1x384x768xbf16> to vector<384x768xbf16>
    %cst_187 = arith.constant dense<0.000000e+00> : vector<4x768xf32>
    %183 = tpu.matmul %180, %182, %cst_187 {dimension_numbers = #tpu.dot_dimension_numbers<[1], [0], [0], [1], [0, 0, 1, 1], [], []>} : vector<4x384xbf16>, vector<384x768xbf16>, vector<4x768xf32> -> vector<4x768xf32>
    %184 = arith.addf %178, %183 : vector<4x768xf32>
    %c0_188 = arith.constant 0 : index
    %c0_189 = arith.constant 0 : index
    %185 = vector.load %arg6[%c0_188, %c0_189] : memref<1x768xf32, #tpu.memory_space<vmem>>, vector<1x768xf32>
    %186 = vector.broadcast %185 : vector<1x768xf32> to vector<4x768xf32>
    %187 = arith.mulf %184, %186 : vector<4x768xf32>
    %c0_190 = arith.constant 0 : index
    %c0_191 = arith.constant 0 : index
    %188 = vector.load %arg7[%c0_190, %c0_191] : memref<1x768xf32, #tpu.memory_space<vmem>>, vector<1x768xf32>
    %189 = vector.broadcast %188 : vector<1x768xf32> to vector<4x768xf32>
    %190 = arith.addf %187, %189 : vector<4x768xf32>
    %cst_192 = arith.constant 0.000000e+00 : f32
    %191 = vector.broadcast %cst_192 : f32 to vector<4x768xf32>
    %192 = arith.maximumf %190, %191 : vector<4x768xf32>
    %c0_193 = arith.constant 0 : index
    %c16_194 = arith.constant 16 : index
    %c0_195 = arith.constant 0 : index
    %193 = vector.load %arg10[%c0_193, %c16_194, %c0_195] : memref<2x36x384xbf16, #tpu.memory_space<vmem>>, vector<1x4x384xbf16>
    %194 = vector.shape_cast %193 : vector<1x4x384xbf16> to vector<4x384xbf16>
    %c0_196 = arith.constant 0 : index
    %c0_197 = arith.constant 0 : index
    %c0_198 = arith.constant 0 : index
    %195 = vector.load %arg5[%c0_196, %c0_197, %c0_198] : memref<3x384x768xbf16, #tpu.memory_space<vmem>>, vector<1x384x768xbf16>
    %196 = vector.shape_cast %195 : vector<1x384x768xbf16> to vector<384x768xbf16>
    %cst_199 = arith.constant dense<0.000000e+00> : vector<4x768xf32>
    %197 = tpu.matmul %194, %196, %cst_199 {dimension_numbers = #tpu.dot_dimension_numbers<[1], [0], [0], [1], [0, 0, 1, 1], [], []>} : vector<4x384xbf16>, vector<384x768xbf16>, vector<4x768xf32> -> vector<4x768xf32>
    %c1_200 = arith.constant 1 : index
    %c16_201 = arith.constant 16 : index
    %c0_202 = arith.constant 0 : index
    %198 = vector.load %arg10[%c1_200, %c16_201, %c0_202] : memref<2x36x384xbf16, #tpu.memory_space<vmem>>, vector<1x4x384xbf16>
    %199 = vector.shape_cast %198 : vector<1x4x384xbf16> to vector<4x384xbf16>
    %c1_203 = arith.constant 1 : index
    %c0_204 = arith.constant 0 : index
    %c0_205 = arith.constant 0 : index
    %200 = vector.load %arg5[%c1_203, %c0_204, %c0_205] : memref<3x384x768xbf16, #tpu.memory_space<vmem>>, vector<1x384x768xbf16>
    %201 = vector.shape_cast %200 : vector<1x384x768xbf16> to vector<384x768xbf16>
    %cst_206 = arith.constant dense<0.000000e+00> : vector<4x768xf32>
    %202 = tpu.matmul %199, %201, %cst_206 {dimension_numbers = #tpu.dot_dimension_numbers<[1], [0], [0], [1], [0, 0, 1, 1], [], []>} : vector<4x384xbf16>, vector<384x768xbf16>, vector<4x768xf32> -> vector<4x768xf32>
    %203 = arith.addf %197, %202 : vector<4x768xf32>
    %c0_207 = arith.constant 0 : index
    %c17_208 = arith.constant 17 : index
    %c0_209 = arith.constant 0 : index
    %204 = vector.load %arg10[%c0_207, %c17_208, %c0_209] : memref<2x36x384xbf16, #tpu.memory_space<vmem>>, vector<1x4x384xbf16>
    %205 = vector.shape_cast %204 : vector<1x4x384xbf16> to vector<4x384xbf16>
    %c2_210 = arith.constant 2 : index
    %c0_211 = arith.constant 0 : index
    %c0_212 = arith.constant 0 : index
    %206 = vector.load %arg5[%c2_210, %c0_211, %c0_212] : memref<3x384x768xbf16, #tpu.memory_space<vmem>>, vector<1x384x768xbf16>
    %207 = vector.shape_cast %206 : vector<1x384x768xbf16> to vector<384x768xbf16>
    %cst_213 = arith.constant dense<0.000000e+00> : vector<4x768xf32>
    %208 = tpu.matmul %205, %207, %cst_213 {dimension_numbers = #tpu.dot_dimension_numbers<[1], [0], [0], [1], [0, 0, 1, 1], [], []>} : vector<4x384xbf16>, vector<384x768xbf16>, vector<4x768xf32> -> vector<4x768xf32>
    %209 = arith.addf %203, %208 : vector<4x768xf32>
    %c0_214 = arith.constant 0 : index
    %c0_215 = arith.constant 0 : index
    %210 = vector.load %arg6[%c0_214, %c0_215] : memref<1x768xf32, #tpu.memory_space<vmem>>, vector<1x768xf32>
    %211 = vector.broadcast %210 : vector<1x768xf32> to vector<4x768xf32>
    %212 = arith.mulf %209, %211 : vector<4x768xf32>
    %c0_216 = arith.constant 0 : index
    %c0_217 = arith.constant 0 : index
    %213 = vector.load %arg7[%c0_216, %c0_217] : memref<1x768xf32, #tpu.memory_space<vmem>>, vector<1x768xf32>
    %214 = vector.broadcast %213 : vector<1x768xf32> to vector<4x768xf32>
    %215 = arith.addf %212, %214 : vector<4x768xf32>
    %cst_218 = arith.constant 0.000000e+00 : f32
    %216 = vector.broadcast %cst_218 : f32 to vector<4x768xf32>
    %217 = arith.maximumf %215, %216 : vector<4x768xf32>
    %218 = arith.maximumf %192, %217 : vector<4x768xf32>
    %219 = arith.truncf %218 : vector<4x768xf32> to vector<4x768xbf16>
    %c0_219 = arith.constant 0 : index
    %c0_220 = arith.constant 0 : index
    %c0_221 = arith.constant 0 : index
    %220 = vector.load %arg8[%c0_219, %c0_220, %c0_221] : memref<1x4x768xbf16, #tpu.memory_space<vmem>>, vector<1x4x768xbf16>
    %221 = vector.shape_cast %220 : vector<1x4x768xbf16> to vector<4x768xbf16>
    %222 = vector.shape_cast %219 : vector<4x768xbf16> to vector<1x4x768xbf16>
    tpu.vector_store %arg8[%c0_219, %c0_220, %c0_221], %222 {strides = array<i32>} : memref<1x4x768xbf16, #tpu.memory_space<vmem>>, vector<1x4x768xbf16>,
    return
  }
  func.func @transform_0(%arg0: i32) -> (i32, i32, i32, i32) {
    %c0_i32 = arith.constant 0 : i32
    %c0_i32_0 = arith.constant 0 : i32
    %c0_i32_1 = arith.constant 0 : i32
    %c0_i32_2 = arith.constant 0 : i32
    return %arg0, %c0_i32, %c0_i32_0, %c0_i32_1 : i32, i32, i32, i32
  }
  func.func @transform_1(%arg0: i32) -> (i32, i32, i32) {
    %c0_i32 = arith.constant 0 : i32
    %c0_i32_0 = arith.constant 0 : i32
    %c0_i32_1 = arith.constant 0 : i32
    %c0_i32_2 = arith.constant 0 : i32
    return %c0_i32, %c0_i32_0, %c0_i32_1 : i32, i32, i32
  }
  func.func @transform_2(%arg0: i32) -> (i32, i32) {
    %c0_i32 = arith.constant 0 : i32
    %c0_i32_0 = arith.constant 0 : i32
    %c0_i32_1 = arith.constant 0 : i32
    return %c0_i32, %c0_i32_0 : i32, i32
  }
  func.func @transform_3(%arg0: i32) -> (i32, i32) {
    %c0_i32 = arith.constant 0 : i32
    %c0_i32_0 = arith.constant 0 : i32
    %c0_i32_1 = arith.constant 0 : i32
    return %c0_i32, %c0_i32_0 : i32, i32
  }
  func.func @transform_4(%arg0: i32) -> (i32, i32, i32) {
    %c0_i32 = arith.constant 0 : i32
    %c0_i32_0 = arith.constant 0 : i32
    %c0_i32_1 = arith.constant 0 : i32
    %c0_i32_2 = arith.constant 0 : i32
    return %c0_i32, %c0_i32_0, %c0_i32_1 : i32, i32, i32
  }
  func.func @transform_5(%arg0: i32) -> (i32, i32) {
    %c0_i32 = arith.constant 0 : i32
    %c0_i32_0 = arith.constant 0 : i32
    %c0_i32_1 = arith.constant 0 : i32
    return %c0_i32, %c0_i32_0 : i32, i32
  }
  func.func @transform_6(%arg0: i32) -> (i32, i32) {
    %c0_i32 = arith.constant 0 : i32
    %c0_i32_0 = arith.constant 0 : i32
    %c0_i32_1 = arith.constant 0 : i32
    return %c0_i32, %c0_i32_0 : i32, i32
  }
  func.func @transform_7(%arg0: i32) -> (i32, i32, i32) {
    %c0_i32 = arith.constant 0 : i32
    %c0_i32_0 = arith.constant 0 : i32
    %c0_i32_1 = arith.constant 0 : i32
    return %arg0, %c0_i32, %c0_i32_0 : i32, i32, i32
  }
}

module attributes {stable_mosaic.version = 11 : i64} {
  func.func @head_kernel(%arg0: memref<2x768xbf16, #tpu.memory_space<vmem>>, %arg1: memref<2x128xf32, #tpu.memory_space<vmem>>, %arg2: memref<768x512xbf16, #tpu.memory_space<vmem>>, %arg3: memref<1x512xf32, #tpu.memory_space<vmem>>, %arg4: memref<128x64xf32, #tpu.memory_space<vmem>>, %arg5: memref<128x64xf32, #tpu.memory_space<vmem>>, %arg6: memref<1x64xf32, #tpu.memory_space<vmem>>, %arg7: memref<64x1xf32, #tpu.memory_space<vmem>>, %arg8: memref<1x1xf32, #tpu.memory_space<vmem>>, %arg9: memref<2x1xf32, #tpu.memory_space<vmem>>) attributes {dimension_semantics = [], scalar_prefetch = 0 : i64, scratch_operands = 0 : i64, tpu.core_type = #tpu.core_type<tc>} {
    %c0 = arith.constant 0 : index
    %c0_0 = arith.constant 0 : index
    %0 = vector.load %arg0[%c0, %c0_0] : memref<2x768xbf16, #tpu.memory_space<vmem>>, vector<2x768xbf16>
    %c0_1 = arith.constant 0 : index
    %c0_2 = arith.constant 0 : index
    %1 = vector.load %arg2[%c0_1, %c0_2] : memref<768x512xbf16, #tpu.memory_space<vmem>>, vector<768x512xbf16>
    %cst = arith.constant dense<0.000000e+00> : vector<2x512xf32>
    %2 = tpu.matmul %0, %1, %cst {dimension_numbers = #tpu.dot_dimension_numbers<[1], [0], [0], [1], [0, 0, 1, 1], [], []>} : vector<2x768xbf16>, vector<768x512xbf16>, vector<2x512xf32> -> vector<2x512xf32>
    %c0_3 = arith.constant 0 : index
    %c0_4 = arith.constant 0 : index
    %3 = vector.load %arg3[%c0_3, %c0_4] : memref<1x512xf32, #tpu.memory_space<vmem>>, vector<1x512xf32>
    %4 = vector.broadcast %3 : vector<1x512xf32> to vector<2x512xf32>
    %5 = arith.addf %2, %4 : vector<2x512xf32>
    %6 = vector.extract_strided_slice %5 {offsets = [0, 0], sizes = [2, 128], strides = [1, 1]} : vector<2x512xf32> to vector<2x128xf32>
    %7 = arith.negf %6 : vector<2x128xf32>
    %8 = math.exp %7 : vector<2x128xf32>
    %cst_5 = arith.constant 1.000000e+00 : f32
    %9 = vector.broadcast %cst_5 : f32 to vector<2x128xf32>
    %10 = arith.addf %9, %8 : vector<2x128xf32>
    %11 = arith.divf %9, %10 : vector<2x128xf32>
    %12 = vector.extract_strided_slice %5 {offsets = [0, 256], sizes = [2, 128], strides = [1, 1]} : vector<2x512xf32> to vector<2x128xf32>
    %13 = math.tanh %12 : vector<2x128xf32>
    %14 = vector.extract_strided_slice %5 {offsets = [0, 384], sizes = [2, 128], strides = [1, 1]} : vector<2x512xf32> to vector<2x128xf32>
    %15 = arith.negf %14 : vector<2x128xf32>
    %16 = math.exp %15 : vector<2x128xf32>
    %cst_6 = arith.constant 1.000000e+00 : f32
    %17 = vector.broadcast %cst_6 : f32 to vector<2x128xf32>
    %18 = arith.addf %17, %16 : vector<2x128xf32>
    %19 = arith.divf %17, %18 : vector<2x128xf32>
    %20 = arith.mulf %11, %13 : vector<2x128xf32>
    %21 = math.tanh %20 : vector<2x128xf32>
    %22 = arith.mulf %19, %21 : vector<2x128xf32>
    %c0_7 = arith.constant 0 : index
    %c0_8 = arith.constant 0 : index
    %23 = vector.load %arg1[%c0_7, %c0_8] : memref<2x128xf32, #tpu.memory_space<vmem>>, vector<2x128xf32>
    %c0_9 = arith.constant 0 : index
    %c0_10 = arith.constant 0 : index
    %24 = vector.load %arg4[%c0_9, %c0_10] : memref<128x64xf32, #tpu.memory_space<vmem>>, vector<128x64xf32>
    %cst_11 = arith.constant dense<0.000000e+00> : vector<2x64xf32>
    %25 = tpu.matmul %23, %24, %cst_11 {dimension_numbers = #tpu.dot_dimension_numbers<[1], [0], [0], [1], [0, 0, 1, 1], [], []>} : vector<2x128xf32>, vector<128x64xf32>, vector<2x64xf32> -> vector<2x64xf32>
    %c0_12 = arith.constant 0 : index
    %c0_13 = arith.constant 0 : index
    %26 = vector.load %arg5[%c0_12, %c0_13] : memref<128x64xf32, #tpu.memory_space<vmem>>, vector<128x64xf32>
    %cst_14 = arith.constant dense<0.000000e+00> : vector<2x64xf32>
    %27 = tpu.matmul %22, %26, %cst_14 {dimension_numbers = #tpu.dot_dimension_numbers<[1], [0], [0], [1], [0, 0, 1, 1], [], []>} : vector<2x128xf32>, vector<128x64xf32>, vector<2x64xf32> -> vector<2x64xf32>
    %28 = arith.addf %25, %27 : vector<2x64xf32>
    %c0_15 = arith.constant 0 : index
    %c0_16 = arith.constant 0 : index
    %29 = vector.load %arg6[%c0_15, %c0_16] : memref<1x64xf32, #tpu.memory_space<vmem>>, vector<1x64xf32>
    %30 = vector.broadcast %29 : vector<1x64xf32> to vector<2x64xf32>
    %31 = arith.addf %28, %30 : vector<2x64xf32>
    %cst_17 = arith.constant 0.000000e+00 : f32
    %32 = vector.broadcast %cst_17 : f32 to vector<2x64xf32>
    %33 = arith.maximumf %31, %32 : vector<2x64xf32>
    %c0_18 = arith.constant 0 : index
    %c0_19 = arith.constant 0 : index
    %34 = vector.load %arg7[%c0_18, %c0_19] : memref<64x1xf32, #tpu.memory_space<vmem>>, vector<64x1xf32>
    %cst_20 = arith.constant dense<0.000000e+00> : vector<2x1xf32>
    %35 = tpu.matmul %33, %34, %cst_20 {dimension_numbers = #tpu.dot_dimension_numbers<[1], [0], [0], [1], [0, 0, 1, 1], [], []>} : vector<2x64xf32>, vector<64x1xf32>, vector<2x1xf32> -> vector<2x1xf32>
    %c0_21 = arith.constant 0 : index
    %c0_22 = arith.constant 0 : index
    %36 = vector.load %arg8[%c0_21, %c0_22] : memref<1x1xf32, #tpu.memory_space<vmem>>, vector<1x1xf32>
    %37 = vector.broadcast %36 : vector<1x1xf32> to vector<2x1xf32>
    %38 = arith.addf %35, %37 : vector<2x1xf32>
    %c0_23 = arith.constant 0 : index
    %c0_24 = arith.constant 0 : index
    %39 = vector.load %arg9[%c0_23, %c0_24] : memref<2x1xf32, #tpu.memory_space<vmem>>, vector<2x1xf32>
    tpu.vector_store %arg9[%c0_23, %c0_24], %38 {strides = array<i32>} : memref<2x1xf32, #tpu.memory_space<vmem>>, vector<2x1xf32>,
    return
  }
}

</mosaic_0001>

<llo_original>
// kernel: eeg_dwt_cnn_lstm_forward.5
$region0: #{eeg_dwt_cnn_lstm_forward.5}
  #allocation0 [shape = 'u32[]', space=smem, size = 0x4, offset = 0x4, fixed_abs, tag = 'smem constant byte address 0x4 - core index']
  #allocation1 [shape = 'u32[144,128]{1,0:T(1,128)}', space=vmem, size = 0x12000, scoped, tag = 'internal scratch']
  #allocation2 [shape = 'f32[1,1]{1,0:T(1,128)S(1)}', space=vmem, size = 0x200, scoped, tag = 'scoped memory for eeg_dwt_cnn_lstm_forward.5']
  %s0 = inlined_call_operand.vmem [shape: bf16[2,768], index: 0, kind: input, shape index: {}]
  %s1 = inlined_call_operand.vmem [shape: f32[2,128], index: 1, kind: input, shape index: {}]
  %s2 = inlined_call_operand.vmem [shape: bf16[768,512], index: 2, kind: input, shape index: {}]
  %s3 = inlined_call_operand.vmem [shape: f32[1,512], index: 3, kind: input, shape index: {}]
  %s4 = inlined_call_operand.vmem [shape: f32[128,64], index: 4, kind: input, shape index: {}]
  %s5 = inlined_call_operand.vmem [shape: f32[128,64], index: 5, kind: input, shape index: {}]
  %s6 = inlined_call_operand.vmem [shape: f32[1,64], index: 6, kind: input, shape index: {}]
  %s7 = inlined_call_operand.vmem [shape: f32[64,1], index: 7, kind: input, shape index: {}]
  %s8 = inlined_call_operand.<no memory space> [shape: f32[1,1], index: 8, kind: input, shape index: {}]
  %s9 = inlined_call_operand.vmem [shape: f32[2,1], index: 9, kind: output, shape index: {}]
  %s10 = sld [smem:[#allocation0]]
  $region46: #{eeg_dwt_cnn_lstm_forward.5} parent=0
    _
  %s12 = ssub.s32 1, %s10
  %s13 = scalar_select 0, %s12, %s10
  %v14 = vstv %s8
  %15 = vst [vmem:[#allocation2] sm:$0x1] %v14
  // Predicated region
  $region2: #{eeg_dwt_cnn_lstm_forward.5} parent=0 // pred_check
    _
  $region3: #{eeg_dwt_cnn_lstm_forward.5} parent=0 // pred_check_branch
    %17 = sbr.rel (0) target = $region5
  $region4: #{eeg_dwt_cnn_lstm_forward.5} parent=0 // pred_region
    _
  $region5: #{eeg_dwt_cnn_lstm_forward.5} parent=0 // pred_fallthru
    _
  // Predicated region
  $region6: #{eeg_dwt_cnn_lstm_forward.5} parent=0 // pred_check
    _
  $region7: #{eeg_dwt_cnn_lstm_forward.5} parent=0 // pred_check_branch
    %19 = sbr.rel (0) target = $region9
  $region8: #{eeg_dwt_cnn_lstm_forward.5} parent=0 // pred_region
    _
  $region9: #{eeg_dwt_cnn_lstm_forward.5} parent=0 // pred_fallthru
    _
  // Predicated region
  $region10: #{eeg_dwt_cnn_lstm_forward.5} parent=0 // pred_check
    _
  $region11: #{eeg_dwt_cnn_lstm_forward.5} parent=0 // pred_check_branch
    %21 = sbr.rel (0) target = $region13
  $region12: #{eeg_dwt_cnn_lstm_forward.5} parent=0 // pred_region
    _
  $region13: #{eeg_dwt_cnn_lstm_forward.5} parent=0 // pred_fallthru
    _
  // Predicated region
  $region14: #{eeg_dwt_cnn_lstm_forward.5} parent=0 // pred_check
    _
  $region15: #{eeg_dwt_cnn_lstm_forward.5} parent=0 // pred_check_branch
    %23 = sbr.rel (0) target = $region17
  $region16: #{eeg_dwt_cnn_lstm_forward.5} parent=0 // pred_region
    _
  $region17: #{eeg_dwt_cnn_lstm_forward.5} parent=0 // pred_fallthru
    _
  // Predicated region
  $region18: #{eeg_dwt_cnn_lstm_forward.5} parent=0 // pred_check
    _
  $region19: #{eeg_dwt_cnn_lstm_forward.5} parent=0 // pred_check_branch
    %25 = sbr.rel (0) target = $region21
  $region20: #{eeg_dwt_cnn_lstm_forward.5} parent=0 // pred_region
    _
  $region21: #{eeg_dwt_cnn_lstm_forward.5} parent=0 // pred_fallthru
    _
  // Predicated region
  $region22: #{eeg_dwt_cnn_lstm_forward.5} parent=0 // pred_check
    _
  $region23: #{eeg_dwt_cnn_lstm_forward.5} parent=0 // pred_check_branch
    %27 = sbr.rel (0) target = $region25
  $region24: #{eeg_dwt_cnn_lstm_forward.5} parent=0 // pred_region
    _
  $region25: #{eeg_dwt_cnn_lstm_forward.5} parent=0 // pred_fallthru
    _
  // Predicated region
  $region26: #{eeg_dwt_cnn_lstm_forward.5} parent=0 // pred_check
    _
  $region27: #{eeg_dwt_cnn_lstm_forward.5} parent=0 // pred_check_branch
    %29 = sbr.rel (0) target = $region29
  $region28: #{eeg_dwt_cnn_lstm_forward.5} parent=0 // pred_region
    _
  $region29: #{eeg_dwt_cnn_lstm_forward.5} parent=0 // pred_fallthru
    _
  // Predicated region
  $region30: #{eeg_dwt_cnn_lstm_forward.5} parent=0 // pred_check
    _
  $region31: #{eeg_dwt_cnn_lstm_forward.5} parent=0 // pred_check_branch
    %31 = sbr.rel (0) target = $region33
  $region32: #{eeg_dwt_cnn_lstm_forward.5} parent=0 // pred_region
    _
  $region33: #{eeg_dwt_cnn_lstm_forward.5} parent=0 // pred_fallthru
    _
  // Predicated region
  $region34: #{eeg_dwt_cnn_lstm_forward.5} parent=0 // pred_check
    _
  $region35: #{eeg_dwt_cnn_lstm_forward.5} parent=0 // pred_check_branch
    %33 = sbr.rel (0) target = $region37
  $region36: #{eeg_dwt_cnn_lstm_forward.5} parent=0 // pred_region
    _
  $region37: #{eeg_dwt_cnn_lstm_forward.5} parent=0 // pred_fallthru
    _
  %v34 = vld [vmem:[%s0] sm:$0x3f]
  %v35 = vld [vmem:[%s2] sm:$0xff]
  %v36 = vld [vmem:[%s2 + $0x8] sm:$0xff]
  %v37 = vld [vmem:[%s2 + $0x10] sm:$0xff]
  %v38 = vld [vmem:[%s2 + $0x18] sm:$0xff]
  %v39 = vld [vmem:[%s2 + $0x20] sm:$0xff]
  %v40 = vld [vmem:[%s2 + $0x28] sm:$0xff]
  %v41 = vld [vmem:[%s2 + $0x30] sm:$0xff]
  %v42 = vld [vmem:[%s2 + $0x38] sm:$0xff]
  %v43 = vld [vmem:[%s2 + $0x40] sm:$0xff]
  %v44 = vld [vmem:[%s2 + $0x48] sm:$0xff]
  %v45 = vld [vmem:[%s2 + $0x50] sm:$0xff]
  %v46 = vld [vmem:[%s2 + $0x58] sm:$0xff]
  %v47 = vld [vmem:[%s2 + $0x60] sm:$0xff]
  %v48 = vld [vmem:[%s2 + $0x68] sm:$0xff]
  %v49 = vld [vmem:[%s2 + $0x70] sm:$0xff]
  %v50 = vld [vmem:[%s2 + $0x78] sm:$0xff]
  %v51 = vld [vmem:[%s2 + $0x80] sm:$0xff]
  %v52 = vld [vmem:[%s2 + $0x88] sm:$0xff]
  %v53 = vld [vmem:[%s2 + $0x90] sm:$0xff]
  %v54 = vld [vmem:[%s2 + $0x98] sm:$0xff]
  %v55 = vld [vmem:[%s2 + $0xa0] sm:$0xff]
  %v56 = vld [vmem:[%s2 + $0xa8] sm:$0xff]
  %v57 = vld [vmem:[%s2 + $0xb0] sm:$0xff]
  %v58 = vld [vmem:[%s2 + $0xb8] sm:$0xff]
  %v59 = vld [vmem:[%s2 + $0xc0] sm:$0xff]
  %v60 = vld [vmem:[%s2 + $0xc8] sm:$0xff]
  %v61 = vld [vmem:[%s2 + $0xd0] sm:$0xff]
  %v62 = vld [vmem:[%s2 + $0xd8] sm:$0xff]
  %v63 = vld [vmem:[%s2 + $0xe0] sm:$0xff]
  %v64 = vld [vmem:[%s2 + $0xe8] sm:$0xff]
  %v65 = vld [vmem:[%s2 + $0xf0] sm:$0xff]
  %v66 = vld [vmem:[%s2 + $0xf8] sm:$0xff]
  %v67 = vld [vmem:[%s2 + $0x100] sm:$0xff]
  %v68 = vld [vmem:[%s2 + $0x108] sm:$0xff]
  %v69 = vld [vmem:[%s2 + $0x110] sm:$0xff]
  %v70 = vld [vmem:[%s2 + $0x118] sm:$0xff]
  %v71 = vld [vmem:[%s2 + $0x120] sm:$0xff]
  %v72 = vld [vmem:[%s2 + $0x128] sm:$0xff]
  %v73 = vld [vmem:[%s2 + $0x130] sm:$0xff]
  %v74 = vld [vmem:[%s2 + $0x138] sm:$0xff]
  %v75 = vld [vmem:[%s2 + $0x140] sm:$0xff]
  %v76 = vld [vmem:[%s2 + $0x148] sm:$0xff]
  %v77 = vld [vmem:[%s2 + $0x150] sm:$0xff]
  %v78 = vld [vmem:[%s2 + $0x158] sm:$0xff]
  %v79 = vld [vmem:[%s2 + $0x160] sm:$0xff]
  %v80 = vld [vmem:[%s2 + $0x168] sm:$0xff]
  %v81 = vld [vmem:[%s2 + $0x170] sm:$0xff]
  %v82 = vld [vmem:[%s2 + $0x178] sm:$0xff]
  %v83 = vld [vmem:[%s2 + $0x180] sm:$0xff]
  %v84 = vld [vmem:[%s2 + $0x188] sm:$0xff]
  %v85 = vld [vmem:[%s2 + $0x190] sm:$0xff]
  %v86 = vld [vmem:[%s2 + $0x198] sm:$0xff]
  %v87 = vld [vmem:[%s2 + $0x1a0] sm:$0xff]
  %v88 = vld [vmem:[%s2 + $0x1a8] sm:$0xff]
  %v89 = vld [vmem:[%s2 + $0x1b0] sm:$0xff]
  %v90 = vld [vmem:[%s2 + $0x1b8] sm:$0xff]
  %v91 = vld [vmem:[%s2 + $0x1c0] sm:$0xff]
  %v92 = vld [vmem:[%s2 + $0x1c8] sm:$0xff]
  %v93 = vld [vmem:[%s2 + $0x1d0] sm:$0xff]
  %v94 = vld [vmem:[%s2 + $0x1d8] sm:$0xff]
  %v95 = vld [vmem:[%s2 + $0x1e0] sm:$0xff]
  %v96 = vld [vmem:[%s2 + $0x1e8] sm:$0xff]
  %v97 = vld [vmem:[%s2 + $0x1f0] sm:$0xff]
  %v98 = vld [vmem:[%s2 + $0x1f8] sm:$0xff]
  %v99 = vld [vmem:[%s2 + $0x200] sm:$0xff]
  %v100 = vld [vmem:[%s2 + $0x208] sm:$0xff]
  %v101 = vld [vmem:[%s2 + $0x210] sm:$0xff]
  %v102 = vld [vmem:[%s2 + $0x218] sm:$0xff]
  %v103 = vld [vmem:[%s2 + $0x220] sm:$0xff]
  %v104 = vld [vmem:[%s2 + $0x228] sm:$0xff]
  %v105 = vld [vmem:[%s2 + $0x230] sm:$0xff]
  %v106 = vld [vmem:[%s2 + $0x238] sm:$0xff]
  %v107 = vld [vmem:[%s2 + $0x240] sm:$0xff]
  %v108 = vld [vmem:[%s2 + $0x248] sm:$0xff]
  %v109 = vld [vmem:[%s2 + $0x250] sm:$0xff]
  %v110 = vld [vmem:[%s2 + $0x258] sm:$0xff]
  %v111 = vld [vmem:[%s2 + $0x260] sm:$0xff]
  %v112 = vld [vmem:[%s2 + $0x268] sm:$0xff]
  %v113 = vld [vmem:[%s2 + $0x270] sm:$0xff]
  %v114 = vld [vmem:[%s2 + $0x278] sm:$0xff]
  %v115 = vld [vmem:[%s2 + $0x280] sm:$0xff]
  %v116 = vld [vmem:[%s2 + $0x288] sm:$0xff]
  %v117 = vld [vmem:[%s2 + $0x290] sm:$0xff]
  %v118 = vld [vmem:[%s2 + $0x298] sm:$0xff]
  %v119 = vld [vmem:[%s2 + $0x2a0] sm:$0xff]
  %v120 = vld [vmem:[%s2 + $0x2a8] sm:$0xff]
  %v121 = vld [vmem:[%s2 + $0x2b0] sm:$0xff]
  %v122 = vld [vmem:[%s2 + $0x2b8] sm:$0xff]
  %v123 = vld [vmem:[%s2 + $0x2c0] sm:$0xff]
  %v124 = vld [vmem:[%s2 + $0x2c8] sm:$0xff]
  %v125 = vld [vmem:[%s2 + $0x2d0] sm:$0xff]
  %v126 = vld [vmem:[%s2 + $0x2d8] sm:$0xff]
  %v127 = vld [vmem:[%s2 + $0x2e0] sm:$0xff]
  %v128 = vld [vmem:[%s2 + $0x2e8] sm:$0xff]
  %v129 = vld [vmem:[%s2 + $0x2f0] sm:$0xff]
  %v130 = vld [vmem:[%s2 + $0x2f8] sm:$0xff]
  %v131 = vld [vmem:[%s2 + $0x300] sm:$0xff]
  %v132 = vld [vmem:[%s2 + $0x308] sm:$0xff]
  %v133 = vld [vmem:[%s2 + $0x310] sm:$0xff]
  %v134 = vld [vmem:[%s2 + $0x318] sm:$0xff]
  %v135 = vld [vmem:[%s2 + $0x320] sm:$0xff]
  %v136 = vld [vmem:[%s2 + $0x328] sm:$0xff]
  %v137 = vld [vmem:[%s2 + $0x330] sm:$0xff]
  %v138 = vld [vmem:[%s2 + $0x338] sm:$0xff]
  %v139 = vld [vmem:[%s2 + $0x340] sm:$0xff]
  %v140 = vld [vmem:[%s2 + $0x348] sm:$0xff]
  %v141 = vld [vmem:[%s2 + $0x350] sm:$0xff]
  %v142 = vld [vmem:[%s2 + $0x358] sm:$0xff]
  %v143 = vld [vmem:[%s2 + $0x360] sm:$0xff]
  %v144 = vld [vmem:[%s2 + $0x368] sm:$0xff]
  %v145 = vld [vmem:[%s2 + $0x370] sm:$0xff]
  %v146 = vld [vmem:[%s2 + $0x378] sm:$0xff]
  %v147 = vld [vmem:[%s2 + $0x380] sm:$0xff]
  %v148 = vld [vmem:[%s2 + $0x388] sm:$0xff]
  %v149 = vld [vmem:[%s2 + $0x390] sm:$0xff]
  %v150 = vld [vmem:[%s2 + $0x398] sm:$0xff]
  %v151 = vld [vmem:[%s2 + $0x3a0] sm:$0xff]
  %v152 = vld [vmem:[%s2 + $0x3a8] sm:$0xff]
  %v153 = vld [vmem:[%s2 + $0x3b0] sm:$0xff]
  %v154 = vld [vmem:[%s2 + $0x3b8] sm:$0xff]
  %v155 = vld [vmem:[%s2 + $0x3c0] sm:$0xff]
  %v156 = vld [vmem:[%s2 + $0x3c8] sm:$0xff]
  %v157 = vld [vmem:[%s2 + $0x3d0] sm:$0xff]
  %v158 = vld [vmem:[%s2 + $0x3d8] sm:$0xff]
  %v159 = vld [vmem:[%s2 + $0x3e0] sm:$0xff]
  %v160 = vld [vmem:[%s2 + $0x3e8] sm:$0xff]
  %v161 = vld [vmem:[%s2 + $0x3f0] sm:$0xff]
  %v162 = vld [vmem:[%s2 + $0x3f8] sm:$0xff]
  %v163 = vld [vmem:[%s2 + $0x400] sm:$0xff]
  %v164 = vld [vmem:[%s2 + $0x408] sm:$0xff]
  %v165 = vld [vmem:[%s2 + $0x410] sm:$0xff]
  %v166 = vld [vmem:[%s2 + $0x418] sm:$0xff]
  %v167 = vld [vmem:[%s2 + $0x420] sm:$0xff]
  %v168 = vld [vmem:[%s2 + $0x428] sm:$0xff]
  %v169 = vld [vmem:[%s2 + $0x430] sm:$0xff]
  %v170 = vld [vmem:[%s2 + $0x438] sm:$0xff]
  %v171 = vld [vmem:[%s2 + $0x440] sm:$0xff]
  %v172 = vld [vmem:[%s2 + $0x448] sm:$0xff]
  %v173 = vld [vmem:[%s2 + $0x450] sm:$0xff]
  %v174 = vld [vmem:[%s2 + $0x458] sm:$0xff]
  %v175 = vld [vmem:[%s2 + $0x460] sm:$0xff]
  %v176 = vld [vmem:[%s2 + $0x468] sm:$0xff]
  %v177 = vld [vmem:[%s2 + $0x470] sm:$0xff]
  %v178 = vld [vmem:[%s2 + $0x478] sm:$0xff]
  %v179 = vld [vmem:[%s2 + $0x480] sm:$0xff]
  %v180 = vld [vmem:[%s2 + $0x488] sm:$0xff]
  %v181 = vld [vmem:[%s2 + $0x490] sm:$0xff]
  %v182 = vld [vmem:[%s2 + $0x498] sm:$0xff]
  %v183 = vld [vmem:[%s2 + $0x4a0] sm:$0xff]
  %v184 = vld [vmem:[%s2 + $0x4a8] sm:$0xff]
  %v185 = vld [vmem:[%s2 + $0x4b0] sm:$0xff]
  %v186 = vld [vmem:[%s2 + $0x4b8] sm:$0xff]
  %v187 = vld [vmem:[%s2 + $0x4c0] sm:$0xff]
  %v188 = vld [vmem:[%s2 + $0x4c8] sm:$0xff]
  %v189 = vld [vmem:[%s2 + $0x4d0] sm:$0xff]
  %v190 = vld [vmem:[%s2 + $0x4d8] sm:$0xff]
  %v191 = vld [vmem:[%s2 + $0x4e0] sm:$0xff]
  %v192 = vld [vmem:[%s2 + $0x4e8] sm:$0xff]
  %v193 = vld [vmem:[%s2 + $0x4f0] sm:$0xff]
  %v194 = vld [vmem:[%s2 + $0x4f8] sm:$0xff]
  %v195 = vld [vmem:[%s2 + $0x500] sm:$0xff]
  %v196 = vld [vmem:[%s2 + $0x508] sm:$0xff]
  %v197 = vld [vmem:[%s2 + $0x510] sm:$0xff]
  %v198 = vld [vmem:[%s2 + $0x518] sm:$0xff]
  %v199 = vld [vmem:[%s2 + $0x520] sm:$0xff]
  %v200 = vld [vmem:[%s2 + $0x528] sm:$0xff]
  %v201 = vld [vmem:[%s2 + $0x530] sm:$0xff]
  %v202 = vld [vmem:[%s2 + $0x538] sm:$0xff]
  %v203 = vld [vmem:[%s2 + $0x540] sm:$0xff]
  %v204 = vld [vmem:[%s2 + $0x548] sm:$0xff]
  %v205 = vld [vmem:[%s2 + $0x550] sm:$0xff]
  %v206 = vld [vmem:[%s2 + $0x558] sm:$0xff]
  %v207 = vld [vmem:[%s2 + $0x560] sm:$0xff]
  %v208 = vld [vmem:[%s2 + $0x568] sm:$0xff]
  %v209 = vld [vmem:[%s2 + $0x570] sm:$0xff]
  %v210 = vld [vmem:[%s2 + $0x578] sm:$0xff]
  %v211 = vld [vmem:[%s2 + $0x580] sm:$0xff]
  %v212 = vld [vmem:[%s2 + $0x588] sm:$0xff]
  %v213 = vld [vmem:[%s2 + $0x590] sm:$0xff]
  %v214 = vld [vmem:[%s2 + $0x598] sm:$0xff]
  %v215 = vld [vmem:[%s2 + $0x5a0] sm:$0xff]
  %v216 = vld [vmem:[%s2 + $0x5a8] sm:$0xff]
  %v217 = vld [vmem:[%s2 + $0x5b0] sm:$0xff]
  %v218 = vld [vmem:[%s2 + $0x5b8] sm:$0xff]
  %v219 = vld [vmem:[%s2 + $0x5c0] sm:$0xff]
  %v220 = vld [vmem:[%s2 + $0x5c8] sm:$0xff]
  %v221 = vld [vmem:[%s2 + $0x5d0] sm:$0xff]
  %v222 = vld [vmem:[%s2 + $0x5d8] sm:$0xff]
  %v223 = vld [vmem:[%s2 + $0x5e0] sm:$0xff]
  %v224 = vld [vmem:[%s2 + $0x5e8] sm:$0xff]
  %v225 = vld [vmem:[%s2 + $0x5f0] sm:$0xff]
  %v226 = vld [vmem:[%s2 + $0x5f8] sm:$0xff]
  %v227 = vld [vmem:[%s3] sm:$0xf]
  %v229 = vlaneseq
  %v230 = vshrl.u32 %v229, 7
  %v231 = vsub.s32 0, %v230
  %v232 = vrot.slane %v227, %v231
  %v233 = vlaneseq
  %v234 = vshrl.u32 %v233, 7
  %v235 = vsub.s32 2, %v234
  %v236 = vrot.slane %v227, %v235
  %v237 = vlaneseq
  %v238 = vshrl.u32 %v237, 7
  %v239 = vsub.s32 3, %v238
  %v240 = vrot.slane %v227, %v239
  %v245 = vcombine.high %v34, %v34
  %v247 = vunpack.c.l.s4 1966171168
  %v248 = vunpack.c.0.s8 %v247
  %v249 = vlaneseq
  %v250 = vshrl.u32 %v249, 7
  %v251 = vsub.s32 %v248, %v250
  %v252 = vrot.slane %v34, %v251
  %v254 = vunpack.c.l.s4 1966171168
  %v255 = vunpack.c.0.s8 %v254
  %v256 = vlaneseq
  %v257 = vshrl.u32 %v256, 7
  %v258 = vsub.s32 %v255, %v257
  %v259 = vrot.slane %v245, %v258
  %v260 = vcombine.high %v252, %v252
  %v261 = vcombine.high %v259, %v259
  %v263 = vunpack.c.l.s4 1966171168
  %v264 = vunpack.c.0.s8 %v263
  %v265 = vlaneseq
  %v266 = vshrl.u32 %v265, 7
  %v267 = vsub.s32 %v264, %v266
  %v268 = vrot.slane %v252, %v267
  %v270 = vunpack.c.l.s4 1966171168
  %v271 = vunpack.c.0.s8 %v270
  %v272 = vlaneseq
  %v273 = vshrl.u32 %v272, 7
  %v274 = vsub.s32 %v271, %v273
  %v275 = vrot.slane %v259, %v274
  %v277 = vunpack.c.l.s4 1966171168
  %v278 = vunpack.c.0.s8 %v277
  %v279 = vlaneseq
  %v280 = vshrl.u32 %v279, 7
  %v281 = vsub.s32 %v278, %v280
  %v282 = vrot.slane %v260, %v281
  %v284 = vunpack.c.l.s4 1966171168
  %v285 = vunpack.c.0.s8 %v284
  %v286 = vlaneseq
  %v287 = vshrl.u32 %v286, 7
  %v288 = vsub.s32 %v285, %v287
  %v289 = vrot.slane %v261, %v288
  %v290 = vcombine.high %v268, %v268
  %v291 = vcombine.high %v282, %v282
  %v490 = vunpack.c.l.b16 %v35
  %v491 = vunpack.c.h.b16 %v35
  %v492 = vunpack.c.l.b16 %v36
  %v493 = vunpack.c.h.b16 %v36
  %v494 = vunpack.c.l.b16 %v37
  %v495 = vunpack.c.h.b16 %v37
  %v496 = vunpack.c.l.b16 %v38
  %v497 = vunpack.c.h.b16 %v38
  %v498 = vunpack.c.l.b16 %v39
  %v499 = vunpack.c.h.b16 %v39
  %v500 = vunpack.c.l.b16 %v40
  %v501 = vunpack.c.h.b16 %v40
  %v502 = vunpack.c.l.b16 %v41
  %v503 = vunpack.c.h.b16 %v41
  %v504 = vunpack.c.l.b16 %v42
  %v505 = vunpack.c.h.b16 %v42
  %v506 = vunpack.c.l.b16 %v43
  %v507 = vunpack.c.h.b16 %v43
  %v508 = vunpack.c.l.b16 %v44
  %v509 = vunpack.c.h.b16 %v44
  %v510 = vunpack.c.l.b16 %v45
  %v511 = vunpack.c.h.b16 %v45
  %v512 = vunpack.c.l.b16 %v46
  %v513 = vunpack.c.h.b16 %v46
  %v514 = vunpack.c.l.b16 %v47
  %v515 = vunpack.c.h.b16 %v47
  %v516 = vunpack.c.l.b16 %v48
  %v517 = vunpack.c.h.b16 %v48
  %v518 = vunpack.c.l.b16 %v49
  %v519 = vunpack.c.h.b16 %v49
  %v520 = vunpack.c.l.b16 %v50
  %v521 = vunpack.c.h.b16 %v50
  %v522 = vunpack.c.l.b16 %v51
  %v523 = vunpack.c.h.b16 %v51
  %v524 = vunpack.c.l.b16 %v52
  %v525 = vunpack.c.h.b16 %v52
  %v526 = vunpack.c.l.b16 %v53
  %v527 = vunpack.c.h.b16 %v53
  %v528 = vunpack.c.l.b16 %v54
  %v529 = vunpack.c.h.b16 %v54
  %v530 = vunpack.c.l.b16 %v55
  %v531 = vunpack.c.h.b16 %v55
  %v532 = vunpack.c.l.b16 %v56
  %v533 = vunpack.c.h.b16 %v56
  %v534 = vunpack.c.l.b16 %v57
  %v535 = vunpack.c.h.b16 %v57
  %v536 = vunpack.c.l.b16 %v58
  %v537 = vunpack.c.h.b16 %v58
  %v538 = vunpack.c.l.b16 %v59
  %v539 = vunpack.c.h.b16 %v59
  %v540 = vunpack.c.l.b16 %v60
  %v541 = vunpack.c.h.b16 %v60
  %v542 = vunpack.c.l.b16 %v61
  %v543 = vunpack.c.h.b16 %v61
  %v544 = vunpack.c.l.b16 %v62
  %v545 = vunpack.c.h.b16 %v62
  %v546 = vunpack.c.l.b16 %v63
  %v547 = vunpack.c.h.b16 %v63
  %v548 = vunpack.c.l.b16 %v64
  %v549 = vunpack.c.h.b16 %v64
  %v550 = vunpack.c.l.b16 %v65
  %v551 = vunpack.c.h.b16 %v65
  %v552 = vunpack.c.l.b16 %v66
  %v553 = vunpack.c.h.b16 %v66
  %v554 = vunpack.c.l.b16 %v67
  %v555 = vunpack.c.h.b16 %v67
  %v556 = vunpack.c.l.b16 %v68
  %v557 = vunpack.c.h.b16 %v68
  %v558 = vunpack.c.l.b16 %v69
  %v559 = vunpack.c.h.b16 %v69
  %v560 = vunpack.c.l.b16 %v70
  %v561 = vunpack.c.h.b16 %v70
  %v562 = vunpack.c.l.b16 %v71
  %v563 = vunpack.c.h.b16 %v71
  %v564 = vunpack.c.l.b16 %v72
  %v565 = vunpack.c.h.b16 %v72
  %v566 = vunpack.c.l.b16 %v73
  %v567 = vunpack.c.h.b16 %v73
  %v568 = vunpack.c.l.b16 %v74
  %v569 = vunpack.c.h.b16 %v74
  %v570 = vunpack.c.l.b16 %v75
  %v571 = vunpack.c.h.b16 %v75
  %v572 = vunpack.c.l.b16 %v76
  %v573 = vunpack.c.h.b16 %v76
  %v574 = vunpack.c.l.b16 %v77
  %v575 = vunpack.c.h.b16 %v77
  %v576 = vunpack.c.l.b16 %v78
  %v577 = vunpack.c.h.b16 %v78
  %v578 = vunpack.c.l.b16 %v79
  %v579 = vunpack.c.h.b16 %v79
  %v580 = vunpack.c.l.b16 %v80
  %v581 = vunpack.c.h.b16 %v80
  %v582 = vunpack.c.l.b16 %v81
  %v583 = vunpack.c.h.b16 %v81
  %v584 = vunpack.c.l.b16 %v82
  %v585 = vunpack.c.h.b16 %v82
  %v586 = vunpack.c.l.b16 %v83
  %v587 = vunpack.c.h.b16 %v83
  %v588 = vunpack.c.l.b16 %v84
  %v589 = vunpack.c.h.b16 %v84
  %v590 = vunpack.c.l.b16 %v85
  %v591 = vunpack.c.h.b16 %v85
  %v592 = vunpack.c.l.b16 %v86
  %v593 = vunpack.c.h.b16 %v86
  %v594 = vunpack.c.l.b16 %v87
  %v595 = vunpack.c.h.b16 %v87
  %v596 = vunpack.c.l.b16 %v88
  %v597 = vunpack.c.h.b16 %v88
  %v598 = vunpack.c.l.b16 %v89
  %v599 = vunpack.c.h.b16 %v89
  %v600 = vunpack.c.l.b16 %v90
  %v601 = vunpack.c.h.b16 %v90
  %v602 = vunpack.c.l.b16 %v91
  %v603 = vunpack.c.h.b16 %v91
  %v604 = vunpack.c.l.b16 %v92
  %v605 = vunpack.c.h.b16 %v92
  %v606 = vunpack.c.l.b16 %v93
  %v607 = vunpack.c.h.b16 %v93
  %v608 = vunpack.c.l.b16 %v94
  %v609 = vunpack.c.h.b16 %v94
  %v610 = vunpack.c.l.b16 %v95
  %v611 = vunpack.c.h.b16 %v95
  %v612 = vunpack.c.l.b16 %v96
  %v613 = vunpack.c.h.b16 %v96
  %v614 = vunpack.c.l.b16 %v97
  %v615 = vunpack.c.h.b16 %v97
  %v616 = vunpack.c.l.b16 %v98
  %v617 = vunpack.c.h.b16 %v98
  %v618 = vunpack.c.l.b16 %v99
  %v619 = vunpack.c.h.b16 %v99
  %v620 = vunpack.c.l.b16 %v100
  %v621 = vunpack.c.h.b16 %v100
  %v622 = vunpack.c.l.b16 %v101
  %v623 = vunpack.c.h.b16 %v101
  %v624 = vunpack.c.l.b16 %v102
  %v625 = vunpack.c.h.b16 %v102
  %v626 = vunpack.c.l.b16 %v103
  %v627 = vunpack.c.h.b16 %v103
  %v628 = vunpack.c.l.b16 %v104
  %v629 = vunpack.c.h.b16 %v104
  %v630 = vunpack.c.l.b16 %v105
  %v631 = vunpack.c.h.b16 %v105
  %v632 = vunpack.c.l.b16 %v106
  %v633 = vunpack.c.h.b16 %v106
  %v634 = vunpack.c.l.b16 %v107
  %v635 = vunpack.c.h.b16 %v107
  %v636 = vunpack.c.l.b16 %v108
  %v637 = vunpack.c.h.b16 %v108
  %v638 = vunpack.c.l.b16 %v109
  %v639 = vunpack.c.h.b16 %v109
  %v640 = vunpack.c.l.b16 %v110
  %v641 = vunpack.c.h.b16 %v110
  %v642 = vunpack.c.l.b16 %v111
  %v643 = vunpack.c.h.b16 %v111
  %v644 = vunpack.c.l.b16 %v112
  %v645 = vunpack.c.h.b16 %v112
  %v646 = vunpack.c.l.b16 %v113
  %v647 = vunpack.c.h.b16 %v113
  %v648 = vunpack.c.l.b16 %v114
  %v649 = vunpack.c.h.b16 %v114
  %v650 = vunpack.c.l.b16 %v115
  %v651 = vunpack.c.h.b16 %v115
  %v652 = vunpack.c.l.b16 %v116
  %v653 = vunpack.c.h.b16 %v116
  %v654 = vunpack.c.l.b16 %v117
  %v655 = vunpack.c.h.b16 %v117
  %v656 = vunpack.c.l.b16 %v118
  %v657 = vunpack.c.h.b16 %v118
  %v658 = vunpack.c.l.b16 %v119
  %v659 = vunpack.c.h.b16 %v119
  %v660 = vunpack.c.l.b16 %v120
  %v661 = vunpack.c.h.b16 %v120
  %v662 = vunpack.c.l.b16 %v121
  %v663 = vunpack.c.h.b16 %v121
  %v664 = vunpack.c.l.b16 %v122
  %v665 = vunpack.c.h.b16 %v122
  %v666 = vunpack.c.l.b16 %v123
  %v667 = vunpack.c.h.b16 %v123
  %v668 = vunpack.c.l.b16 %v124
  %v669 = vunpack.c.h.b16 %v124
  %v670 = vunpack.c.l.b16 %v125
  %v671 = vunpack.c.h.b16 %v125
  %v672 = vunpack.c.l.b16 %v126
  %v673 = vunpack.c.h.b16 %v126
  %v674 = vunpack.c.l.b16 %v127
  %v675 = vunpack.c.h.b16 %v127
  %v676 = vunpack.c.l.b16 %v128
  %v677 = vunpack.c.h.b16 %v128
  %v678 = vunpack.c.l.b16 %v129
  %v679 = vunpack.c.h.b16 %v129
  %v680 = vunpack.c.l.b16 %v130
  %v681 = vunpack.c.h.b16 %v130
  %v682 = vunpack.c.l.b16 %v131
  %v683 = vunpack.c.h.b16 %v131
  %v684 = vunpack.c.l.b16 %v132
  %v685 = vunpack.c.h.b16 %v132
  %v686 = vunpack.c.l.b16 %v133
  %v687 = vunpack.c.h.b16 %v133
  %v688 = vunpack.c.l.b16 %v134
  %v689 = vunpack.c.h.b16 %v134
  %v690 = vunpack.c.l.b16 %v135
  %v691 = vunpack.c.h.b16 %v135
  %v692 = vunpack.c.l.b16 %v136
  %v693 = vunpack.c.h.b16 %v136
  %v694 = vunpack.c.l.b16 %v137
  %v695 = vunpack.c.h.b16 %v137
  %v696 = vunpack.c.l.b16 %v138
  %v697 = vunpack.c.h.b16 %v138
  %v698 = vunpack.c.l.b16 %v139
  %v699 = vunpack.c.h.b16 %v139
  %v700 = vunpack.c.l.b16 %v140
  %v701 = vunpack.c.h.b16 %v140
  %v702 = vunpack.c.l.b16 %v141
  %v703 = vunpack.c.h.b16 %v141
  %v704 = vunpack.c.l.b16 %v142
  %v705 = vunpack.c.h.b16 %v142
  %v706 = vunpack.c.l.b16 %v143
  %v707 = vunpack.c.h.b16 %v143
  %v708 = vunpack.c.l.b16 %v144
  %v709 = vunpack.c.h.b16 %v144
  %v710 = vunpack.c.l.b16 %v145
  %v711 = vunpack.c.h.b16 %v145
  %v712 = vunpack.c.l.b16 %v146
  %v713 = vunpack.c.h.b16 %v146
  %v714 = vunpack.c.l.b16 %v147
  %v715 = vunpack.c.h.b16 %v147
  %v716 = vunpack.c.l.b16 %v148
  %v717 = vunpack.c.h.b16 %v148
  %v718 = vunpack.c.l.b16 %v149
  %v719 = vunpack.c.h.b16 %v149
  %v720 = vunpack.c.l.b16 %v150
  %v721 = vunpack.c.h.b16 %v150
  %v722 = vunpack.c.l.b16 %v151
  %v723 = vunpack.c.h.b16 %v151
  %v724 = vunpack.c.l.b16 %v152
  %v725 = vunpack.c.h.b16 %v152
  %v726 = vunpack.c.l.b16 %v153
  %v727 = vunpack.c.h.b16 %v153
  %v728 = vunpack.c.l.b16 %v154
  %v729 = vunpack.c.h.b16 %v154
  %v730 = vunpack.c.l.b16 %v155
  %v731 = vunpack.c.h.b16 %v155
  %v732 = vunpack.c.l.b16 %v156
  %v733 = vunpack.c.h.b16 %v156
  %v734 = vunpack.c.l.b16 %v157
  %v735 = vunpack.c.h.b16 %v157
  %v736 = vunpack.c.l.b16 %v158
  %v737 = vunpack.c.h.b16 %v158
  %v738 = vunpack.c.l.b16 %v159
  %v739 = vunpack.c.h.b16 %v159
  %v740 = vunpack.c.l.b16 %v160
  %v741 = vunpack.c.h.b16 %v160
  %v742 = vunpack.c.l.b16 %v161
  %v743 = vunpack.c.h.b16 %v161
  %v744 = vunpack.c.l.b16 %v162
  %v745 = vunpack.c.h.b16 %v162
  %v746 = vunpack.c.l.b16 %v163
  %v747 = vunpack.c.h.b16 %v163
  %v748 = vunpack.c.l.b16 %v164
  %v749 = vunpack.c.h.b16 %v164
  %v750 = vunpack.c.l.b16 %v165
  %v751 = vunpack.c.h.b16 %v165
  %v752 = vunpack.c.l.b16 %v166
  %v753 = vunpack.c.h.b16 %v166
  %v754 = vunpack.c.l.b16 %v167
  %v755 = vunpack.c.h.b16 %v167
  %v756 = vunpack.c.l.b16 %v168
  %v757 = vunpack.c.h.b16 %v168
  %v758 = vunpack.c.l.b16 %v169
  %v759 = vunpack.c.h.b16 %v169
  %v760 = vunpack.c.l.b16 %v170
  %v761 = vunpack.c.h.b16 %v170
  %v762 = vunpack.c.l.b16 %v171
  %v763 = vunpack.c.h.b16 %v171
  %v764 = vunpack.c.l.b16 %v172
  %v765 = vunpack.c.h.b16 %v172
  %v766 = vunpack.c.l.b16 %v173
  %v767 = vunpack.c.h.b16 %v173
  %v768 = vunpack.c.l.b16 %v174
  %v769 = vunpack.c.h.b16 %v174
  %v770 = vunpack.c.l.b16 %v175
  %v771 = vunpack.c.h.b16 %v175
  %v772 = vunpack.c.l.b16 %v176
  %v773 = vunpack.c.h.b16 %v176
  %v774 = vunpack.c.l.b16 %v177
  %v775 = vunpack.c.h.b16 %v177
  %v776 = vunpack.c.l.b16 %v178
  %v777 = vunpack.c.h.b16 %v178
  %v778 = vunpack.c.l.b16 %v179
  %v779 = vunpack.c.h.b16 %v179
  %v780 = vunpack.c.l.b16 %v180
  %v781 = vunpack.c.h.b16 %v180
  %v782 = vunpack.c.l.b16 %v181
  %v783 = vunpack.c.h.b16 %v181
  %v784 = vunpack.c.l.b16 %v182
  %v785 = vunpack.c.h.b16 %v182
  %v786 = vunpack.c.l.b16 %v183
  %v787 = vunpack.c.h.b16 %v183
  %v788 = vunpack.c.l.b16 %v184
  %v789 = vunpack.c.h.b16 %v184
  %v790 = vunpack.c.l.b16 %v185
  %v791 = vunpack.c.h.b16 %v185
  %v792 = vunpack.c.l.b16 %v186
  %v793 = vunpack.c.h.b16 %v186
  %v794 = vunpack.c.l.b16 %v187
  %v795 = vunpack.c.h.b16 %v187
  %v796 = vunpack.c.l.b16 %v188
  %v797 = vunpack.c.h.b16 %v188
  %v798 = vunpack.c.l.b16 %v189
  %v799 = vunpack.c.h.b16 %v189
  %v800 = vunpack.c.l.b16 %v190
  %v801 = vunpack.c.h.b16 %v190
  %v802 = vunpack.c.l.b16 %v191
  %v803 = vunpack.c.h.b16 %v191
  %v804 = vunpack.c.l.b16 %v192
  %v805 = vunpack.c.h.b16 %v192
  %v806 = vunpack.c.l.b16 %v193
  %v807 = vunpack.c.h.b16 %v193
  %v808 = vunpack.c.l.b16 %v194
  %v809 = vunpack.c.h.b16 %v194
  %v810 = vunpack.c.l.b16 %v195
  %v811 = vunpack.c.h.b16 %v195
  %v812 = vunpack.c.l.b16 %v196
  %v813 = vunpack.c.h.b16 %v196
  %v814 = vunpack.c.l.b16 %v197
  %v815 = vunpack.c.h.b16 %v197
  %v816 = vunpack.c.l.b16 %v198
  %v817 = vunpack.c.h.b16 %v198
  %v818 = vunpack.c.l.b16 %v199
  %v819 = vunpack.c.h.b16 %v199
  %v820 = vunpack.c.l.b16 %v200
  %v821 = vunpack.c.h.b16 %v200
  %v822 = vunpack.c.l.b16 %v201
  %v823 = vunpack.c.h.b16 %v201
  %v824 = vunpack.c.l.b16 %v202
  %v825 = vunpack.c.h.b16 %v202
  %v826 = vunpack.c.l.b16 %v203
  %v827 = vunpack.c.h.b16 %v203
  %v828 = vunpack.c.l.b16 %v204
  %v829 = vunpack.c.h.b16 %v204
  %v830 = vunpack.c.l.b16 %v205
  %v831 = vunpack.c.h.b16 %v205
  %v832 = vunpack.c.l.b16 %v206
  %v833 = vunpack.c.h.b16 %v206
  %v834 = vunpack.c.l.b16 %v207
  %v835 = vunpack.c.h.b16 %v207
  %v836 = vunpack.c.l.b16 %v208
  %v837 = vunpack.c.h.b16 %v208
  %v838 = vunpack.c.l.b16 %v209
  %v839 = vunpack.c.h.b16 %v209
  %v840 = vunpack.c.l.b16 %v210
  %v841 = vunpack.c.h.b16 %v210
  %v842 = vunpack.c.l.b16 %v211
  %v843 = vunpack.c.h.b16 %v211
  %v844 = vunpack.c.l.b16 %v212
  %v845 = vunpack.c.h.b16 %v212
  %v846 = vunpack.c.l.b16 %v213
  %v847 = vunpack.c.h.b16 %v213
  %v848 = vunpack.c.l.b16 %v214
  %v849 = vunpack.c.h.b16 %v214
  %v850 = vunpack.c.l.b16 %v215
  %v851 = vunpack.c.h.b16 %v215
  %v852 = vunpack.c.l.b16 %v216
  %v853 = vunpack.c.h.b16 %v216
  %v854 = vunpack.c.l.b16 %v217
  %v855 = vunpack.c.h.b16 %v217
  %v856 = vunpack.c.l.b16 %v218
  %v857 = vunpack.c.h.b16 %v218
  %v858 = vunpack.c.l.b16 %v219
  %v859 = vunpack.c.h.b16 %v219
  %v860 = vunpack.c.l.b16 %v220
  %v861 = vunpack.c.h.b16 %v220
  %v862 = vunpack.c.l.b16 %v221
  %v863 = vunpack.c.h.b16 %v221
  %v864 = vunpack.c.l.b16 %v222
  %v865 = vunpack.c.h.b16 %v222
  %v866 = vunpack.c.l.b16 %v223
  %v867 = vunpack.c.h.b16 %v223
  %v868 = vunpack.c.l.b16 %v224
  %v869 = vunpack.c.h.b16 %v224
  %v870 = vunpack.c.l.b16 %v225
  %v871 = vunpack.c.h.b16 %v225
  %v872 = vunpack.c.l.b16 %v226
  %v873 = vunpack.c.h.b16 %v226
  %v874 = vpack.c.b16 %v494, %v490
  %v875 = vpack.c.b16 %v495, %v491
  %v876 = vpack.c.b16 %v496, %v492
  %v877 = vpack.c.b16 %v497, %v493
  %v878 = vpack.c.b16 %v502, %v498
  %v879 = vpack.c.b16 %v503, %v499
  %v880 = vpack.c.b16 %v504, %v500
  %v881 = vpack.c.b16 %v505, %v501
  %v882 = vpack.c.b16 %v510, %v506
  %v883 = vpack.c.b16 %v511, %v507
  %v884 = vpack.c.b16 %v512, %v508
  %v885 = vpack.c.b16 %v513, %v509
  %v886 = vpack.c.b16 %v518, %v514
  %v887 = vpack.c.b16 %v519, %v515
  %v888 = vpack.c.b16 %v520, %v516
  %v889 = vpack.c.b16 %v521, %v517
  %v890 = vpack.c.b16 %v526, %v522
  %v891 = vpack.c.b16 %v527, %v523
  %v892 = vpack.c.b16 %v528, %v524
  %v893 = vpack.c.b16 %v529, %v525
  %v894 = vpack.c.b16 %v534, %v530
  %v895 = vpack.c.b16 %v535, %v531
  %v896 = vpack.c.b16 %v536, %v532
  %v897 = vpack.c.b16 %v537, %v533
  %v898 = vpack.c.b16 %v542, %v538
  %v899 = vpack.c.b16 %v543, %v539
  %v900 = vpack.c.b16 %v544, %v540
  %v901 = vpack.c.b16 %v545, %v541
  %v902 = vpack.c.b16 %v550, %v546
  %v903 = vpack.c.b16 %v551, %v547
  %v904 = vpack.c.b16 %v552, %v548
  %v905 = vpack.c.b16 %v553, %v549
  %v906 = vpack.c.b16 %v558, %v554
  %v907 = vpack.c.b16 %v559, %v555
  %v908 = vpack.c.b16 %v560, %v556
  %v909 = vpack.c.b16 %v561, %v557
  %v910 = vpack.c.b16 %v566, %v562
  %v911 = vpack.c.b16 %v567, %v563
  %v912 = vpack.c.b16 %v568, %v564
  %v913 = vpack.c.b16 %v569, %v565
  %v914 = vpack.c.b16 %v574, %v570
  %v915 = vpack.c.b16 %v575, %v571
  %v916 = vpack.c.b16 %v576, %v572
  %v917 = vpack.c.b16 %v577, %v573
  %v918 = vpack.c.b16 %v582, %v578
  %v919 = vpack.c.b16 %v583, %v579
  %v920 = vpack.c.b16 %v584, %v580
  %v921 = vpack.c.b16 %v585, %v581
  %v922 = vpack.c.b16 %v590, %v586
  %v923 = vpack.c.b16 %v591, %v587
  %v924 = vpack.c.b16 %v592, %v588
  %v925 = vpack.c.b16 %v593, %v589
  %v926 = vpack.c.b16 %v598, %v594
  %v927 = vpack.c.b16 %v599, %v595
  %v928 = vpack.c.b16 %v600, %v596
  %v929 = vpack.c.b16 %v601, %v597
  %v930 = vpack.c.b16 %v606, %v602
  %v931 = vpack.c.b16 %v607, %v603
  %v932 = vpack.c.b16 %v608, %v604
  %v933 = vpack.c.b16 %v609, %v605
  %v934 = vpack.c.b16 %v614, %v610
  %v935 = vpack.c.b16 %v615, %v611
  %v936 = vpack.c.b16 %v616, %v612
  %v937 = vpack.c.b16 %v617, %v613
  %v938 = vpack.c.b16 %v622, %v618
  %v939 = vpack.c.b16 %v623, %v619
  %v940 = vpack.c.b16 %v624, %v620
  %v941 = vpack.c.b16 %v625, %v621
  %v942 = vpack.c.b16 %v630, %v626
  %v943 = vpack.c.b16 %v631, %v627
  %v944 = vpack.c.b16 %v632, %v628
  %v945 = vpack.c.b16 %v633, %v629
  %v946 = vpack.c.b16 %v638, %v634
  %v947 = vpack.c.b16 %v639, %v635
  %v948 = vpack.c.b16 %v640, %v636
  %v949 = vpack.c.b16 %v641, %v637
  %v950 = vpack.c.b16 %v646, %v642
  %v951 = vpack.c.b16 %v647, %v643
  %v952 = vpack.c.b16 %v648, %v644
  %v953 = vpack.c.b16 %v649, %v645
  %v954 = vpack.c.b16 %v654, %v650
  %v955 = vpack.c.b16 %v655, %v651
  %v956 = vpack.c.b16 %v656, %v652
  %v957 = vpack.c.b16 %v657, %v653
  %v958 = vpack.c.b16 %v662, %v658
  %v959 = vpack.c.b16 %v663, %v659
  %v960 = vpack.c.b16 %v664, %v660
  %v961 = vpack.c.b16 %v665, %v661
  %v962 = vpack.c.b16 %v670, %v666
  %v963 = vpack.c.b16 %v671, %v667
  %v964 = vpack.c.b16 %v672, %v668
  %v965 = vpack.c.b16 %v673, %v669
  %v966 = vpack.c.b16 %v678, %v674
  %v967 = vpack.c.b16 %v679, %v675
  %v968 = vpack.c.b16 %v680, %v676
  %v969 = vpack.c.b16 %v681, %v677
  %v970 = vpack.c.b16 %v686, %v682
  %v971 = vpack.c.b16 %v687, %v683
  %v972 = vpack.c.b16 %v688, %v684
  %v973 = vpack.c.b16 %v689, %v685
  %v974 = vpack.c.b16 %v694, %v690
  %v975 = vpack.c.b16 %v695, %v691
  %v976 = vpack.c.b16 %v696, %v692
  %v977 = vpack.c.b16 %v697, %v693
  %v978 = vpack.c.b16 %v702, %v698
  %v979 = vpack.c.b16 %v703, %v699
  %v980 = vpack.c.b16 %v704, %v700
  %v981 = vpack.c.b16 %v705, %v701
  %v982 = vpack.c.b16 %v710, %v706
  %v983 = vpack.c.b16 %v711, %v707
  %v984 = vpack.c.b16 %v712, %v708
  %v985 = vpack.c.b16 %v713, %v709
  %v986 = vpack.c.b16 %v718, %v714
  %v987 = vpack.c.b16 %v719, %v715
  %v988 = vpack.c.b16 %v720, %v716
  %v989 = vpack.c.b16 %v721, %v717
  %v990 = vpack.c.b16 %v726, %v722
  %v991 = vpack.c.b16 %v727, %v723
  %v992 = vpack.c.b16 %v728, %v724
  %v993 = vpack.c.b16 %v729, %v725
  %v994 = vpack.c.b16 %v734, %v730
  %v995 = vpack.c.b16 %v735, %v731
  %v996 = vpack.c.b16 %v736, %v732
  %v997 = vpack.c.b16 %v737, %v733
  %v998 = vpack.c.b16 %v742, %v738
  %v999 = vpack.c.b16 %v743, %v739
  %v1000 = vpack.c.b16 %v744, %v740
  %v1001 = vpack.c.b16 %v745, %v741
  %v1002 = vpack.c.b16 %v750, %v746
  %v1003 = vpack.c.b16 %v751, %v747
  %v1004 = vpack.c.b16 %v752, %v748
  %v1005 = vpack.c.b16 %v753, %v749
  %v1006 = vpack.c.b16 %v758, %v754
  %v1007 = vpack.c.b16 %v759, %v755
  %v1008 = vpack.c.b16 %v760, %v756
  %v1009 = vpack.c.b16 %v761, %v757
  %v1010 = vpack.c.b16 %v766, %v762
  %v1011 = vpack.c.b16 %v767, %v763
  %v1012 = vpack.c.b16 %v768, %v764
  %v1013 = vpack.c.b16 %v769, %v765
  %v1014 = vpack.c.b16 %v774, %v770
  %v1015 = vpack.c.b16 %v775, %v771
  %v1016 = vpack.c.b16 %v776, %v772
  %v1017 = vpack.c.b16 %v777, %v773
  %v1018 = vpack.c.b16 %v782, %v778
  %v1019 = vpack.c.b16 %v783, %v779
  %v1020 = vpack.c.b16 %v784, %v780
  %v1021 = vpack.c.b16 %v785, %v781
  %v1022 = vpack.c.b16 %v790, %v786
  %v1023 = vpack.c.b16 %v791, %v787
  %v1024 = vpack.c.b16 %v792, %v788
  %v1025 = vpack.c.b16 %v793, %v789
  %v1026 = vpack.c.b16 %v798, %v794
  %v1027 = vpack.c.b16 %v799, %v795
  %v1028 = vpack.c.b16 %v800, %v796
  %v1029 = vpack.c.b16 %v801, %v797
  %v1030 = vpack.c.b16 %v806, %v802
  %v1031 = vpack.c.b16 %v807, %v803
  %v1032 = vpack.c.b16 %v808, %v804
  %v1033 = vpack.c.b16 %v809, %v805
  %v1034 = vpack.c.b16 %v814, %v810
  %v1035 = vpack.c.b16 %v815, %v811
  %v1036 = vpack.c.b16 %v816, %v812
  %v1037 = vpack.c.b16 %v817, %v813
  %v1038 = vpack.c.b16 %v822, %v818
  %v1039 = vpack.c.b16 %v823, %v819
  %v1040 = vpack.c.b16 %v824, %v820
  %v1041 = vpack.c.b16 %v825, %v821
  %v1042 = vpack.c.b16 %v830, %v826
  %v1043 = vpack.c.b16 %v831, %v827
  %v1044 = vpack.c.b16 %v832, %v828
  %v1045 = vpack.c.b16 %v833, %v829
  %v1046 = vpack.c.b16 %v838, %v834
  %v1047 = vpack.c.b16 %v839, %v835
  %v1048 = vpack.c.b16 %v840, %v836
  %v1049 = vpack.c.b16 %v841, %v837
  %v1050 = vpack.c.b16 %v846, %v842
  %v1051 = vpack.c.b16 %v847, %v843
  %v1052 = vpack.c.b16 %v848, %v844
  %v1053 = vpack.c.b16 %v849, %v845
  %v1054 = vpack.c.b16 %v854, %v850
  %v1055 = vpack.c.b16 %v855, %v851
  %v1056 = vpack.c.b16 %v856, %v852
  %v1057 = vpack.c.b16 %v857, %v853
  %v1058 = vpack.c.b16 %v862, %v858
  %v1059 = vpack.c.b16 %v863, %v859
  %v1060 = vpack.c.b16 %v864, %v860
  %v1061 = vpack.c.b16 %v865, %v861
  %v1062 = vpack.c.b16 %v870, %v866
  %v1063 = vpack.c.b16 %v871, %v867
  %v1064 = vpack.c.b16 %v872, %v868
  %v1065 = vpack.c.b16 %v873, %v869
  %1258 = vmatprep.subr.bf16.mxu0 %v903
  %1259 = vmatpush1.bf16.msra.mxu0 %v902
  %1260 = vmatprep.subr.bf16.mxu0 %v899
  %1261 = vmatpush1.bf16.msra.mxu0 %v898
  %1262 = vmatprep.subr.bf16.mxu0 %v895
  %1263 = vmatpush1.bf16.msra.mxu0 %v894
  %1264 = vmatprep.subr.bf16.mxu0 %v891
  %1265 = vmatpush1.bf16.msra.mxu0 %v890
  %1266 = vmatprep.subr.bf16.mxu0 %v887
  %1267 = vmatpush1.bf16.msra.mxu0 %v886
  %1268 = vmatprep.subr.bf16.mxu0 %v883
  %1269 = vmatpush1.bf16.msra.mxu0 %v882
  %1270 = vmatprep.subr.bf16.mxu0 %v879
  %1271 = vmatpush1.bf16.msra.mxu0 %v878
  %1272 = vmatprep.subr.bf16.mxu0 %v875
  %1273 = vmatpush1.bf16.msra.mxu0 %v874
  %1274 = vmatprep.subr.bf16.mxu0 %v935
  %1275 = vmatpush2.bf16.msra.mxu0 %v934
  %1276 = vmatprep.subr.bf16.mxu0 %v931
  %1277 = vmatpush2.bf16.msra.mxu0 %v930
  %1278 = vmatprep.subr.bf16.mxu0 %v927
  %1279 = vmatpush2.bf16.msra.mxu0 %v926
  %1280 = vmatprep.subr.bf16.mxu0 %v923
  %1281 = vmatpush2.bf16.msra.mxu0 %v922
  %1282 = vmatprep.subr.bf16.mxu0 %v919
  %1283 = vmatpush2.bf16.msra.mxu0 %v918
  %1284 = vmatprep.subr.bf16.mxu0 %v915
  %1285 = vmatpush2.bf16.msra.mxu0 %v914
  %1286 = vmatprep.subr.bf16.mxu0 %v911
  %1287 = vmatpush2.bf16.msra.mxu0 %v910
  %1288 = vmatprep.subr.bf16.mxu0 %v907
  %1289 = vmatpush2.bf16.msra.mxu0 %v906
  %1290 = vmatprep.mubr.bf16.mxu0 %v282
  %1291 = vmatmul.mubr.bf16.gmra.mxu0 %v268
  %v1292 = vpop.f32.mrf.mxu0
  %v1293 = vadd.f32 %v232, %v1292
  %v1294 = vpop.f32.mrf.mxu0
  %v1295 = vpop.f32.mrf.mxu0
  %v1296 = vpop.f32.mrf.mxu0
  %1297 = vdwg.mxu0
  %1298 = vmatprep.subr.bf16.mxu0 %v967
  %1299 = vmatpush1.bf16.msra.mxu0 %v966
  %1300 = vmatprep.subr.bf16.mxu0 %v963
  %1301 = vmatpush1.bf16.msra.mxu0 %v962
  %1302 = vmatprep.subr.bf16.mxu0 %v959
  %1303 = vmatpush1.bf16.msra.mxu0 %v958
  %1304 = vmatprep.subr.bf16.mxu0 %v955
  %1305 = vmatpush1.bf16.msra.mxu0 %v954
  %1306 = vmatprep.subr.bf16.mxu0 %v951
  %1307 = vmatpush1.bf16.msra.mxu0 %v950
  %1308 = vmatprep.subr.bf16.mxu0 %v947
  %1309 = vmatpush1.bf16.msra.mxu0 %v946
  %1310 = vmatprep.subr.bf16.mxu0 %v943
  %1311 = vmatpush1.bf16.msra.mxu0 %v942
  %1312 = vmatprep.subr.bf16.mxu0 %v939
  %1313 = vmatpush1.bf16.msra.mxu0 %v938
  %1314 = vmatprep.subr.bf16.mxu0 %v999
  %1315 = vmatpush2.bf16.msra.mxu0 %v998
  %1316 = vmatprep.subr.bf16.mxu0 %v995
  %1317 = vmatpush2.bf16.msra.mxu0 %v994
  %1318 = vmatprep.subr.bf16.mxu0 %v991
  %1319 = vmatpush2.bf16.msra.mxu0 %v990
  %1320 = vmatprep.subr.bf16.mxu0 %v987
  %1321 = vmatpush2.bf16.msra.mxu0 %v986
  %1322 = vmatprep.subr.bf16.mxu0 %v983
  %1323 = vmatpush2.bf16.msra.mxu0 %v982
  %1324 = vmatprep.subr.bf16.mxu0 %v979
  %1325 = vmatpush2.bf16.msra.mxu0 %v978
  %1326 = vmatprep.subr.bf16.mxu0 %v975
  %1327 = vmatpush2.bf16.msra.mxu0 %v974
  %1328 = vmatprep.subr.bf16.mxu0 %v971
  %1329 = vmatpush2.bf16.msra.mxu0 %v970
  %1330 = vmatprep.mubr.bf16.mxu0 %v291
  %1331 = vmatmul.mubr.bf16.gmra.mxu0 %v290
  %v1332 = vpop.f32.mrf.mxu0
  %v1333 = vadd.f32 %v1293, %v1332
  %v1334 = vpop.f32.mrf.mxu0
  %v1335 = vpop.f32.mrf.mxu0
  %v1336 = vpop.f32.mrf.mxu0
  %1337 = vdwg.mxu0
  %1338 = vmatprep.subr.bf16.mxu0 %v1031
  %1339 = vmatpush1.bf16.msra.mxu0 %v1030
  %1340 = vmatprep.subr.bf16.mxu0 %v1027
  %1341 = vmatpush1.bf16.msra.mxu0 %v1026
  %1342 = vmatprep.subr.bf16.mxu0 %v1023
  %1343 = vmatpush1.bf16.msra.mxu0 %v1022
  %1344 = vmatprep.subr.bf16.mxu0 %v1019
  %1345 = vmatpush1.bf16.msra.mxu0 %v1018
  %1346 = vmatprep.subr.bf16.mxu0 %v1015
  %1347 = vmatpush1.bf16.msra.mxu0 %v1014
  %1348 = vmatprep.subr.bf16.mxu0 %v1011
  %1349 = vmatpush1.bf16.msra.mxu0 %v1010
  %1350 = vmatprep.subr.bf16.mxu0 %v1007
  %1351 = vmatpush1.bf16.msra.mxu0 %v1006
  %1352 = vmatprep.subr.bf16.mxu0 %v1003
  %1353 = vmatpush1.bf16.msra.mxu0 %v1002
  %1354 = vmatprep.subr.bf16.mxu0 %v1063
  %1355 = vmatpush2.bf16.msra.mxu0 %v1062
  %1356 = vmatprep.subr.bf16.mxu0 %v1059
  %1357 = vmatpush2.bf16.msra.mxu0 %v1058
  %1358 = vmatprep.subr.bf16.mxu0 %v1055
  %1359 = vmatpush2.bf16.msra.mxu0 %v1054
  %1360 = vmatprep.subr.bf16.mxu0 %v1051
  %1361 = vmatpush2.bf16.msra.mxu0 %v1050
  %1362 = vmatprep.subr.bf16.mxu0 %v1047
  %1363 = vmatpush2.bf16.msra.mxu0 %v1046
  %1364 = vmatprep.subr.bf16.mxu0 %v1043
  %1365 = vmatpush2.bf16.msra.mxu0 %v1042
  %1366 = vmatprep.subr.bf16.mxu0 %v1039
  %1367 = vmatpush2.bf16.msra.mxu0 %v1038
  %1368 = vmatprep.subr.bf16.mxu0 %v1035
  %1369 = vmatpush2.bf16.msra.mxu0 %v1034
  %1370 = vmatprep.mubr.bf16.mxu0 %v289
  %1371 = vmatmul.mubr.bf16.gmra.mxu0 %v275
  %v1372 = vpop.f32.mrf.mxu0
  %v1373 = vadd.f32 %v1333, %v1372
  %v1374 = vpop.f32.mrf.mxu0
  %v1375 = vpop.f32.mrf.mxu0
  %v1376 = vpop.f32.mrf.mxu0
  %1377 = vdwg.mxu0
  %1378 = vmatprep.subr.bf16.mxu0 %v905
  %1379 = vmatpush1.bf16.msra.mxu0 %v904
  %1380 = vmatprep.subr.bf16.mxu0 %v901
  %1381 = vmatpush1.bf16.msra.mxu0 %v900
  %1382 = vmatprep.subr.bf16.mxu0 %v897
  %1383 = vmatpush1.bf16.msra.mxu0 %v896
  %1384 = vmatprep.subr.bf16.mxu0 %v893
  %1385 = vmatpush1.bf16.msra.mxu0 %v892
  %1386 = vmatprep.subr.bf16.mxu0 %v889
  %1387 = vmatpush1.bf16.msra.mxu0 %v888
  %1388 = vmatprep.subr.bf16.mxu0 %v885
  %1389 = vmatpush1.bf16.msra.mxu0 %v884
  %1390 = vmatprep.subr.bf16.mxu0 %v881
  %1391 = vmatpush1.bf16.msra.mxu0 %v880
  %1392 = vmatprep.subr.bf16.mxu0 %v877
  %1393 = vmatpush1.bf16.msra.mxu0 %v876
  %1394 = vmatprep.subr.bf16.mxu0 %v937
  %1395 = vmatpush2.bf16.msra.mxu0 %v936
  %1396 = vmatprep.subr.bf16.mxu0 %v933
  %1397 = vmatpush2.bf16.msra.mxu0 %v932
  %1398 = vmatprep.subr.bf16.mxu0 %v929
  %1399 = vmatpush2.bf16.msra.mxu0 %v928
  %1400 = vmatprep.subr.bf16.mxu0 %v925
  %1401 = vmatpush2.bf16.msra.mxu0 %v924
  %1402 = vmatprep.subr.bf16.mxu0 %v921
  %1403 = vmatpush2.bf16.msra.mxu0 %v920
  %1404 = vmatprep.subr.bf16.mxu0 %v917
  %1405 = vmatpush2.bf16.msra.mxu0 %v916
  %1406 = vmatprep.subr.bf16.mxu0 %v913
  %1407 = vmatpush2.bf16.msra.mxu0 %v912
  %1408 = vmatprep.subr.bf16.mxu0 %v909
  %1409 = vmatpush2.bf16.msra.mxu0 %v908
  %1410 = vmatprep.mubr.bf16.mxu0 %v282
  %1411 = vmatmul.mubr.bf16.gmra.mxu0 %v268
  %v1412 = vpop.f32.mrf.mxu0
  %v1413 = vadd.f32 %v236, %v1412
  %v1414 = vpop.f32.mrf.mxu0
  %v1415 = vadd.f32 %v240, %v1414
  %v1416 = vpop.f32.mrf.mxu0
  %v1417 = vpop.f32.mrf.mxu0
  %1418 = vdwg.mxu0
  %1419 = vmatprep.subr.bf16.mxu0 %v969
  %1420 = vmatpush1.bf16.msra.mxu0 %v968
  %1421 = vmatprep.subr.bf16.mxu0 %v965
  %1422 = vmatpush1.bf16.msra.mxu0 %v964
  %1423 = vmatprep.subr.bf16.mxu0 %v961
  %1424 = vmatpush1.bf16.msra.mxu0 %v960
  %1425 = vmatprep.subr.bf16.mxu0 %v957
  %1426 = vmatpush1.bf16.msra.mxu0 %v956
  %1427 = vmatprep.subr.bf16.mxu0 %v953
  %1428 = vmatpush1.bf16.msra.mxu0 %v952
  %1429 = vmatprep.subr.bf16.mxu0 %v949
  %1430 = vmatpush1.bf16.msra.mxu0 %v948
  %1431 = vmatprep.subr.bf16.mxu0 %v945
  %1432 = vmatpush1.bf16.msra.mxu0 %v944
  %1433 = vmatprep.subr.bf16.mxu0 %v941
  %1434 = vmatpush1.bf16.msra.mxu0 %v940
  %1435 = vmatprep.subr.bf16.mxu0 %v1001
  %1436 = vmatpush2.bf16.msra.mxu0 %v1000
  %1437 = vmatprep.subr.bf16.mxu0 %v997
  %1438 = vmatpush2.bf16.msra.mxu0 %v996
  %1439 = vmatprep.subr.bf16.mxu0 %v993
  %1440 = vmatpush2.bf16.msra.mxu0 %v992
  %1441 = vmatprep.subr.bf16.mxu0 %v989
  %1442 = vmatpush2.bf16.msra.mxu0 %v988
  %1443 = vmatprep.subr.bf16.mxu0 %v985
  %1444 = vmatpush2.bf16.msra.mxu0 %v984
  %1445 = vmatprep.subr.bf16.mxu0 %v981
  %1446 = vmatpush2.bf16.msra.mxu0 %v980
  %1447 = vmatprep.subr.bf16.mxu0 %v977
  %1448 = vmatpush2.bf16.msra.mxu0 %v976
  %1449 = vmatprep.subr.bf16.mxu0 %v973
  %1450 = vmatpush2.bf16.msra.mxu0 %v972
  %1451 = vmatprep.mubr.bf16.mxu0 %v291
  %1452 = vmatmul.mubr.bf16.gmra.mxu0 %v290
  %v1453 = vpop.f32.mrf.mxu0
  %v1454 = vadd.f32 %v1413, %v1453
  %v1455 = vpop.f32.mrf.mxu0
  %v1456 = vadd.f32 %v1415, %v1455
  %v1457 = vpop.f32.mrf.mxu0
  %v1458 = vpop.f32.mrf.mxu0
  %1459 = vdwg.mxu0
  %1460 = vmatprep.subr.bf16.mxu0 %v1033
  %1461 = vmatpush1.bf16.msra.mxu0 %v1032
  %1462 = vmatprep.subr.bf16.mxu0 %v1029
  %1463 = vmatpush1.bf16.msra.mxu0 %v1028
  %1464 = vmatprep.subr.bf16.mxu0 %v1025
  %1465 = vmatpush1.bf16.msra.mxu0 %v1024
  %1466 = vmatprep.subr.bf16.mxu0 %v1021
  %1467 = vmatpush1.bf16.msra.mxu0 %v1020
  %1468 = vmatprep.subr.bf16.mxu0 %v1017
  %1469 = vmatpush1.bf16.msra.mxu0 %v1016
  %1470 = vmatprep.subr.bf16.mxu0 %v1013
  %1471 = vmatpush1.bf16.msra.mxu0 %v1012
  %1472 = vmatprep.subr.bf16.mxu0 %v1009
  %1473 = vmatpush1.bf16.msra.mxu0 %v1008
  %1474 = vmatprep.subr.bf16.mxu0 %v1005
  %1475 = vmatpush1.bf16.msra.mxu0 %v1004
  %1476 = vmatprep.subr.bf16.mxu0 %v1065
  %1477 = vmatpush2.bf16.msra.mxu0 %v1064
  %1478 = vmatprep.subr.bf16.mxu0 %v1061
  %1479 = vmatpush2.bf16.msra.mxu0 %v1060
  %1480 = vmatprep.subr.bf16.mxu0 %v1057
  %1481 = vmatpush2.bf16.msra.mxu0 %v1056
  %1482 = vmatprep.subr.bf16.mxu0 %v1053
  %1483 = vmatpush2.bf16.msra.mxu0 %v1052
  %1484 = vmatprep.subr.bf16.mxu0 %v1049
  %1485 = vmatpush2.bf16.msra.mxu0 %v1048
  %1486 = vmatprep.subr.bf16.mxu0 %v1045
  %1487 = vmatpush2.bf16.msra.mxu0 %v1044
  %1488 = vmatprep.subr.bf16.mxu0 %v1041
  %1489 = vmatpush2.bf16.msra.mxu0 %v1040
  %1490 = vmatprep.subr.bf16.mxu0 %v1037
  %1491 = vmatpush2.bf16.msra.mxu0 %v1036
  %1492 = vmatprep.mubr.bf16.mxu0 %v289
  %1493 = vmatmul.mubr.bf16.gmra.mxu0 %v275
  %v1494 = vpop.f32.mrf.mxu0
  %v1495 = vadd.f32 %v1454, %v1494
  %v1496 = vpop.f32.mrf.mxu0
  %v1497 = vadd.f32 %v1456, %v1496
  %v1498 = vpop.f32.mrf.mxu0
  %v1499 = vpop.f32.mrf.mxu0
  %1500 = vdwg.mxu0
  %v1501 = vxor.u32 %v1373, 2147483648
  %v1502 = vmul.f32 %v1501, 1.442695
  %v1503 = vpow.pop %v1502
  %v1504 = vadd.f32 %v1503, 1.0
  %v1505 = vrcp.pop %v1504
  %v1506 = vmul.f32 1.0, %v1505
  %v1507 = vtanh.pop %v1495
  %v1508 = vxor.u32 %v1497, 2147483648
  %v1509 = vmul.f32 %v1508, 1.442695
  %v1510 = vpow.pop %v1509
  %v1511 = vadd.f32 %v1510, 1.0
  %v1512 = vrcp.pop %v1511
  %v1513 = vmul.f32 1.0, %v1512
  %v1514 = vmul.f32 %v1506, %v1507
  %v1515 = vtanh.pop %v1514
  %v1516 = vmul.f32 %v1513, %v1515
  %v1517 = vld [vmem:[%s1] sm:$0x3]
  %v1518 = vld [vmem:[%s4] sm:$0xff]
  %v1519 = vld [vmem:[%s4 + $0x8] sm:$0xff]
  %v1520 = vld [vmem:[%s4 + $0x10] sm:$0xff]
  %v1521 = vld [vmem:[%s4 + $0x18] sm:$0xff]
  %v1522 = vld [vmem:[%s4 + $0x20] sm:$0xff]
  %v1523 = vld [vmem:[%s4 + $0x28] sm:$0xff]
  %v1524 = vld [vmem:[%s4 + $0x30] sm:$0xff]
  %v1525 = vld [vmem:[%s4 + $0x38] sm:$0xff]
  %v1526 = vld [vmem:[%s4 + $0x40] sm:$0xff]
  %v1527 = vld [vmem:[%s4 + $0x48] sm:$0xff]
  %v1528 = vld [vmem:[%s4 + $0x50] sm:$0xff]
  %v1529 = vld [vmem:[%s4 + $0x58] sm:$0xff]
  %v1530 = vld [vmem:[%s4 + $0x60] sm:$0xff]
  %v1531 = vld [vmem:[%s4 + $0x68] sm:$0xff]
  %v1532 = vld [vmem:[%s4 + $0x70] sm:$0xff]
  %v1533 = vld [vmem:[%s4 + $0x78] sm:$0xff]
  %v1534 = vld [vmem:[%s5] sm:$0xff]
  %v1535 = vld [vmem:[%s5 + $0x8] sm:$0xff]
  %v1536 = vld [vmem:[%s5 + $0x10] sm:$0xff]
  %v1537 = vld [vmem:[%s5 + $0x18] sm:$0xff]
  %v1538 = vld [vmem:[%s5 + $0x20] sm:$0xff]
  %v1539 = vld [vmem:[%s5 + $0x28] sm:$0xff]
  %v1540 = vld [vmem:[%s5 + $0x30] sm:$0xff]
  %v1541 = vld [vmem:[%s5 + $0x38] sm:$0xff]
  %v1542 = vld [vmem:[%s5 + $0x40] sm:$0xff]
  %v1543 = vld [vmem:[%s5 + $0x48] sm:$0xff]
  %v1544 = vld [vmem:[%s5 + $0x50] sm:$0xff]
  %v1545 = vld [vmem:[%s5 + $0x58] sm:$0xff]
  %v1546 = vld [vmem:[%s5 + $0x60] sm:$0xff]
  %v1547 = vld [vmem:[%s5 + $0x68] sm:$0xff]
  %v1548 = vld [vmem:[%s5 + $0x70] sm:$0xff]
  %v1549 = vld [vmem:[%s5 + $0x78] sm:$0xff]
  %1550 = vmatprep.subr.mxu0 0.0
  %1551 = vmatpush1.msra.mxu0 %v1549
  %1552 = vmatprep.subr.mxu0 0.0
  %1553 = vmatpush1.msra.mxu0 %v1548
  %1554 = vmatprep.subr.mxu0 0.0
  %1555 = vmatpush1.msra.mxu0 %v1547
  %1556 = vmatprep.subr.mxu0 0.0
  %1557 = vmatpush1.msra.mxu0 %v1546
  %1558 = vmatprep.subr.mxu0 0.0
  %1559 = vmatpush1.msra.mxu0 %v1545
  %1560 = vmatprep.subr.mxu0 0.0
  %1561 = vmatpush1.msra.mxu0 %v1544
  %1562 = vmatprep.subr.mxu0 0.0
  %1563 = vmatpush1.msra.mxu0 %v1543
  %1564 = vmatprep.subr.mxu0 0.0
  %1565 = vmatpush1.msra.mxu0 %v1542
  %1566 = vmatprep.subr.mxu0 0.0
  %1567 = vmatpush1.msra.mxu0 %v1541
  %1568 = vmatprep.subr.mxu0 0.0
  %1569 = vmatpush1.msra.mxu0 %v1540
  %1570 = vmatprep.subr.mxu0 0.0
  %1571 = vmatpush1.msra.mxu0 %v1539
  %1572 = vmatprep.subr.mxu0 0.0
  %1573 = vmatpush1.msra.mxu0 %v1538
  %1574 = vmatprep.subr.mxu0 0.0
  %1575 = vmatpush1.msra.mxu0 %v1537
  %1576 = vmatprep.subr.mxu0 0.0
  %1577 = vmatpush1.msra.mxu0 %v1536
  %1578 = vmatprep.subr.mxu0 0.0
  %1579 = vmatpush1.msra.mxu0 %v1535
  %1580 = vmatprep.subr.mxu0 0.0
  %1581 = vmatpush1.msra.mxu0 %v1534
  %1582 = vmatprep.subr.mxu0 0.0
  %1583 = vmatpush2.msra.mxu0 0.0
  %1584 = vmatprep.subr.mxu0 0.0
  %1585 = vmatpush2.msra.mxu0 0.0
  %1586 = vmatprep.subr.mxu0 0.0
  %1587 = vmatpush2.msra.mxu0 0.0
  %1588 = vmatprep.subr.mxu0 0.0
  %1589 = vmatpush2.msra.mxu0 0.0
  %1590 = vmatprep.subr.mxu0 0.0
  %1591 = vmatpush2.msra.mxu0 0.0
  %1592 = vmatprep.subr.mxu0 0.0
  %1593 = vmatpush2.msra.mxu0 0.0
  %1594 = vmatprep.subr.mxu0 0.0
  %1595 = vmatpush2.msra.mxu0 0.0
  %1596 = vmatprep.subr.mxu0 0.0
  %1597 = vmatpush2.msra.mxu0 0.0
  %1598 = vmatprep.subr.mxu0 0.0
  %1599 = vmatpush2.msra.mxu0 0.0
  %1600 = vmatprep.subr.mxu0 0.0
  %1601 = vmatpush2.msra.mxu0 0.0
  %1602 = vmatprep.subr.mxu0 0.0
  %1603 = vmatpush2.msra.mxu0 0.0
  %1604 = vmatprep.subr.mxu0 0.0
  %1605 = vmatpush2.msra.mxu0 0.0
  %1606 = vmatprep.subr.mxu0 0.0
  %1607 = vmatpush2.msra.mxu0 0.0
  %1608 = vmatprep.subr.mxu0 0.0
  %1609 = vmatpush2.msra.mxu0 0.0
  %1610 = vmatprep.subr.mxu0 0.0
  %1611 = vmatpush2.msra.mxu0 0.0
  %1612 = vmatprep.subr.mxu0 0.0
  %1613 = vmatpush2.msra.mxu0 0.0
  %1614 = vmatprep.mubr.f32.mxu0 0.0
  %1615 = vmatmul.mubr.f32.gmra.mxu0 %v1516
  %v1616 = vpop.f32.mrf.mxu0
  %v1617 = vadd.f32 0.0, %v1616
  %v1618 = vpop.f32.mrf.mxu0
  %1619 = vdwg.mxu0
  %1620 = vmatprep.subr.mxu0 0.0
  %1621 = vmatpush1.msra.mxu0 %v1533
  %1622 = vmatprep.subr.mxu0 0.0
  %1623 = vmatpush1.msra.mxu0 %v1532
  %1624 = vmatprep.subr.mxu0 0.0
  %1625 = vmatpush1.msra.mxu0 %v1531
  %1626 = vmatprep.subr.mxu0 0.0
  %1627 = vmatpush1.msra.mxu0 %v1530
  %1628 = vmatprep.subr.mxu0 0.0
  %1629 = vmatpush1.msra.mxu0 %v1529
  %1630 = vmatprep.subr.mxu0 0.0
  %1631 = vmatpush1.msra.mxu0 %v1528
  %1632 = vmatprep.subr.mxu0 0.0
  %1633 = vmatpush1.msra.mxu0 %v1527
  %1634 = vmatprep.subr.mxu0 0.0
  %1635 = vmatpush1.msra.mxu0 %v1526
  %1636 = vmatprep.subr.mxu0 0.0
  %1637 = vmatpush1.msra.mxu0 %v1525
  %1638 = vmatprep.subr.mxu0 0.0
  %1639 = vmatpush1.msra.mxu0 %v1524
  %1640 = vmatprep.subr.mxu0 0.0
  %1641 = vmatpush1.msra.mxu0 %v1523
  %1642 = vmatprep.subr.mxu0 0.0
  %1643 = vmatpush1.msra.mxu0 %v1522
  %1644 = vmatprep.subr.mxu0 0.0
  %1645 = vmatpush1.msra.mxu0 %v1521
  %1646 = vmatprep.subr.mxu0 0.0
  %1647 = vmatpush1.msra.mxu0 %v1520
  %1648 = vmatprep.subr.mxu0 0.0
  %1649 = vmatpush1.msra.mxu0 %v1519
  %1650 = vmatprep.subr.mxu0 0.0
  %1651 = vmatpush1.msra.mxu0 %v1518
  %1652 = vmatprep.subr.mxu0 0.0
  %1653 = vmatpush2.msra.mxu0 0.0
  %1654 = vmatprep.subr.mxu0 0.0
  %1655 = vmatpush2.msra.mxu0 0.0
  %1656 = vmatprep.subr.mxu0 0.0
  %1657 = vmatpush2.msra.mxu0 0.0
  %1658 = vmatprep.subr.mxu0 0.0
  %1659 = vmatpush2.msra.mxu0 0.0
  %1660 = vmatprep.subr.mxu0 0.0
  %1661 = vmatpush2.msra.mxu0 0.0
  %1662 = vmatprep.subr.mxu0 0.0
  %1663 = vmatpush2.msra.mxu0 0.0
  %1664 = vmatprep.subr.mxu0 0.0
  %1665 = vmatpush2.msra.mxu0 0.0
  %1666 = vmatprep.subr.mxu0 0.0
  %1667 = vmatpush2.msra.mxu0 0.0
  %1668 = vmatprep.subr.mxu0 0.0
  %1669 = vmatpush2.msra.mxu0 0.0
  %1670 = vmatprep.subr.mxu0 0.0
  %1671 = vmatpush2.msra.mxu0 0.0
  %1672 = vmatprep.subr.mxu0 0.0
  %1673 = vmatpush2.msra.mxu0 0.0
  %1674 = vmatprep.subr.mxu0 0.0
  %1675 = vmatpush2.msra.mxu0 0.0
  %1676 = vmatprep.subr.mxu0 0.0
  %1677 = vmatpush2.msra.mxu0 0.0
  %1678 = vmatprep.subr.mxu0 0.0
  %1679 = vmatpush2.msra.mxu0 0.0
  %1680 = vmatprep.subr.mxu0 0.0
  %1681 = vmatpush2.msra.mxu0 0.0
  %1682 = vmatprep.subr.mxu0 0.0
  %1683 = vmatpush2.msra.mxu0 0.0
  %1684 = vmatprep.mubr.f32.mxu0 0.0
  %1685 = vmatmul.mubr.f32.gmra.mxu0 %v1517
  %v1686 = vpop.f32.mrf.mxu0
  %v1687 = vadd.f32 %v1617, %v1686
  %v1688 = vpop.f32.mrf.mxu0
  %1689 = vdwg.mxu0
  %v1690 = vld [vmem:[%s6] sm:$0x1]
  %v1692 = vlaneseq
  %v1693 = vshrl.u32 %v1692, 7
  %v1694 = vsub.s32 0, %v1693
  %v1695 = vrot.slane %v1690, %v1694
  %v1697 = vadd.f32 %v1687, %v1695
  %v1698 = vmax.f32 %v1697, 0.0
  %v1699 = vld [vmem:[%s7] sm:$0xff]
  %v1700 = vld [vmem:[%s7 + $0x8] sm:$0xff]
  %v1701 = vld [vmem:[%s7 + $0x10] sm:$0xff]
  %v1702 = vld [vmem:[%s7 + $0x18] sm:$0xff]
  %v1703 = vld [vmem:[%s7 + $0x20] sm:$0xff]
  %v1704 = vld [vmem:[%s7 + $0x28] sm:$0xff]
  %v1705 = vld [vmem:[%s7 + $0x30] sm:$0xff]
  %v1706 = vld [vmem:[%s7 + $0x38] sm:$0xff]
  %v1707 = vld [vmem:[#allocation2] sm:$0x1]
  %v1709 = vlaneseq
  %v1710 = vshrl.u32 %v1709, 7
  %v1711 = vsub.s32 0, %v1710
  %v1712 = vrot.slane %v1707, %v1711
  %vm1714 = vcmask 523264
  %v1716 = vsel %vm1714, %v1698, 0
  %1718 = vmatprep.subr.mxu0 0.0
  %1719 = vmatpush1.msra.mxu0 0.0
  %1720 = vmatprep.subr.mxu0 0.0
  %1721 = vmatpush1.msra.mxu0 0.0
  %1722 = vmatprep.subr.mxu0 0.0
  %1723 = vmatpush1.msra.mxu0 0.0
  %1724 = vmatprep.subr.mxu0 0.0
  %1725 = vmatpush1.msra.mxu0 0.0
  %1726 = vmatprep.subr.mxu0 0.0
  %1727 = vmatpush1.msra.mxu0 0.0
  %1728 = vmatprep.subr.mxu0 0.0
  %1729 = vmatpush1.msra.mxu0 0.0
  %1730 = vmatprep.subr.mxu0 0.0
  %1731 = vmatpush1.msra.mxu0 0.0
  %1732 = vmatprep.subr.mxu0 0.0
  %1733 = vmatpush1.msra.mxu0 0.0
  %1734 = vmatprep.subr.mxu0 0.0
  %1735 = vmatpush1.msra.mxu0 %v1706
  %1736 = vmatprep.subr.mxu0 0.0
  %1737 = vmatpush1.msra.mxu0 %v1705
  %1738 = vmatprep.subr.mxu0 0.0
  %1739 = vmatpush1.msra.mxu0 %v1704
  %1740 = vmatprep.subr.mxu0 0.0
  %1741 = vmatpush1.msra.mxu0 %v1703
  %1742 = vmatprep.subr.mxu0 0.0
  %1743 = vmatpush1.msra.mxu0 %v1702
  %1744 = vmatprep.subr.mxu0 0.0
  %1745 = vmatpush1.msra.mxu0 %v1701
  %1746 = vmatprep.subr.mxu0 0.0
  %1747 = vmatpush1.msra.mxu0 %v1700
  %1748 = vmatprep.subr.mxu0 0.0
  %1749 = vmatpush1.msra.mxu0 %v1699
  %1750 = vmatprep.subr.mxu0 0.0
  %1751 = vmatpush2.msra.mxu0 0.0
  %1752 = vmatprep.subr.mxu0 0.0
  %1753 = vmatpush2.msra.mxu0 0.0
  %1754 = vmatprep.subr.mxu0 0.0
  %1755 = vmatpush2.msra.mxu0 0.0
  %1756 = vmatprep.subr.mxu0 0.0
  %1757 = vmatpush2.msra.mxu0 0.0
  %1758 = vmatprep.subr.mxu0 0.0
  %1759 = vmatpush2.msra.mxu0 0.0
  %1760 = vmatprep.subr.mxu0 0.0
  %1761 = vmatpush2.msra.mxu0 0.0
  %1762 = vmatprep.subr.mxu0 0.0
  %1763 = vmatpush2.msra.mxu0 0.0
  %1764 = vmatprep.subr.mxu0 0.0
  %1765 = vmatpush2.msra.mxu0 0.0
  %1766 = vmatprep.subr.mxu0 0.0
  %1767 = vmatpush2.msra.mxu0 0.0
  %1768 = vmatprep.subr.mxu0 0.0
  %1769 = vmatpush2.msra.mxu0 0.0
  %1770 = vmatprep.subr.mxu0 0.0
  %1771 = vmatpush2.msra.mxu0 0.0
  %1772 = vmatprep.subr.mxu0 0.0
  %1773 = vmatpush2.msra.mxu0 0.0
  %1774 = vmatprep.subr.mxu0 0.0
  %1775 = vmatpush2.msra.mxu0 0.0
  %1776 = vmatprep.subr.mxu0 0.0
  %1777 = vmatpush2.msra.mxu0 0.0
  %1778 = vmatprep.subr.mxu0 0.0
  %1779 = vmatpush2.msra.mxu0 0.0
  %1780 = vmatprep.subr.mxu0 0.0
  %1781 = vmatpush2.msra.mxu0 0.0
  %1782 = vmatprep.mubr.f32.mxu0 0.0
  %1783 = vmatmul.mubr.f32.gmra.mxu0 %v1716
  %v1784 = vpop.f32.mrf.mxu0
  %v1785 = vadd.f32 %v1712, %v1784
  %v1786 = vpop.f32.mrf.mxu0
  %1787 = vdwg.mxu0
  %vm1788 = vcmask 1024
  %1789 = vst.msk [vmem:[%s9] sm:$0x3] %vm1788, %v1785
  // Predicated region
  $region38: #{eeg_dwt_cnn_lstm_forward.5} parent=0 // pred_check
    _
  $region39: #{eeg_dwt_cnn_lstm_forward.5} parent=0 // pred_check_branch
    %1791 = sbr.rel (0) target = $region41
  $region40: #{eeg_dwt_cnn_lstm_forward.5} parent=0 // pred_region
    _
  $region41: #{eeg_dwt_cnn_lstm_forward.5} parent=0 // pred_fallthru
    _
  // Predicated region
  $region42: #{eeg_dwt_cnn_lstm_forward.5} parent=0 // pred_check
    _
  $region43: #{eeg_dwt_cnn_lstm_forward.5} parent=0 // pred_check_branch
    %1793 = sbr.rel (0) target = $region45
  $region44: #{eeg_dwt_cnn_lstm_forward.5} parent=0 // pred_region
    _
  $region45: #{eeg_dwt_cnn_lstm_forward.5} parent=0 // pred_fallthru
    _

// kernel: eeg_dwt_cnn_lstm_forward.4
$region0: #{eeg_dwt_cnn_lstm_forward.4}
  #allocation0 [shape = 'u32[]', space=smem, size = 0x4, offset = 0x4, fixed_abs, tag = 'smem constant byte address 0x4 - core index']
  #allocation1 [shape = 'u32[144,128]{1,0:T(1,128)}', space=vmem, size = 0x12000, scoped, tag = 'internal scratch']
  #allocation2 [shape = 'f32[2,128]{1,0:T(2,128)}', space=vmem, size = 0x400, scoped, tag = 'scratch operand']
  #allocation3 [shape = 'f32[2,128]{1,0:T(2,128)}', space=vmem, size = 0x400, scoped, tag = 'scratch operand']
  #allocation4 [shape = 'f32[2,4,512]{2,1,0:T(4,128)}', space=vmem, size = 0x4000, scoped, tag = 'scratch operand']
  %s0 = inlined_call_operand.vmem [shape: bf16[2,4,768], index: 0, kind: input, shape index: {}]
  %s1 = inlined_call_operand.vmem [shape: bf16[768,512], index: 1, kind: input, shape index: {}]
  %s2 = inlined_call_operand.vmem [shape: f32[128,512], index: 2, kind: input, shape index: {}]
  %s3 = inlined_call_operand.vmem [shape: f32[1,512], index: 3, kind: input, shape index: {}]
  %s4 = inlined_call_operand.vmem [shape: f32[2,128], index: 4, kind: output, shape index: {}]
  %s5 = sld [smem:[#allocation0]]
  $region30: #{eeg_dwt_cnn_lstm_forward.4} parent=0
    _
  %s7 = ssub.s32 1, %s5
  %s8 = scalar_select 0, %s7, %s5
  // Predicated region
  $region2: #{eeg_dwt_cnn_lstm_forward.4} parent=0 // pred_check
    _
  $region3: #{eeg_dwt_cnn_lstm_forward.4} parent=0 // pred_check_branch
    %10 = sbr.rel (0) target = $region5
  $region4: #{eeg_dwt_cnn_lstm_forward.4} parent=0 // pred_region
    _
  $region5: #{eeg_dwt_cnn_lstm_forward.4} parent=0 // pred_fallthru
    _
  // Predicated region
  $region6: #{eeg_dwt_cnn_lstm_forward.4} parent=0 // pred_check
    _
  $region7: #{eeg_dwt_cnn_lstm_forward.4} parent=0 // pred_check_branch
    %12 = sbr.rel (0) target = $region9
  $region8: #{eeg_dwt_cnn_lstm_forward.4} parent=0 // pred_region
    _
  $region9: #{eeg_dwt_cnn_lstm_forward.4} parent=0 // pred_fallthru
    _
  // Predicated region
  $region10: #{eeg_dwt_cnn_lstm_forward.4} parent=0 // pred_check
    _
  $region11: #{eeg_dwt_cnn_lstm_forward.4} parent=0 // pred_check_branch
    %14 = sbr.rel (0) target = $region13
  $region12: #{eeg_dwt_cnn_lstm_forward.4} parent=0 // pred_region
    _
  $region13: #{eeg_dwt_cnn_lstm_forward.4} parent=0 // pred_fallthru
    _
  // Predicated region
  $region14: #{eeg_dwt_cnn_lstm_forward.4} parent=0 // pred_check
    _
  $region15: #{eeg_dwt_cnn_lstm_forward.4} parent=0 // pred_check_branch
    %16 = sbr.rel (0) target = $region17
  $region16: #{eeg_dwt_cnn_lstm_forward.4} parent=0 // pred_region
    _
  $region17: #{eeg_dwt_cnn_lstm_forward.4} parent=0 // pred_fallthru
    _
  %p17 = scmp.eq.s32.totalorder 0, 0
  // Predicated region
  $region18: #{eeg_dwt_cnn_lstm_forward.4} parent=0 // pred_check
    %p18 = pneg %p17
  $region19: #{eeg_dwt_cnn_lstm_forward.4} parent=0 // pred_check_branch
    %20 = sbr.rel (%p18) target = $region21
  $region20: #{eeg_dwt_cnn_lstm_forward.4} parent=0 // pred_region
    %21 = vst [vmem:[#allocation2] sm:$0x3] 0.0
    %22 = vst [vmem:[#allocation3] sm:$0x3] 0.0
  $region21: #{eeg_dwt_cnn_lstm_forward.4} parent=0 // pred_fallthru
    _
  %v23 = vld [vmem:[%s0] sm:$0xff]
  %v24 = vld [vmem:[%s0 + $0x8] sm:$0xf]
  %v25 = vld [vmem:[%s1] sm:$0xff]
  %v26 = vld [vmem:[%s1 + $0x8] sm:$0xff]
  %v27 = vld [vmem:[%s1 + $0x10] sm:$0xff]
  %v28 = vld [vmem:[%s1 + $0x18] sm:$0xff]
  %v29 = vld [vmem:[%s1 + $0x20] sm:$0xff]
  %v30 = vld [vmem:[%s1 + $0x28] sm:$0xff]
  %v31 = vld [vmem:[%s1 + $0x30] sm:$0xff]
  %v32 = vld [vmem:[%s1 + $0x38] sm:$0xff]
  %v33 = vld [vmem:[%s1 + $0x40] sm:$0xff]
  %v34 = vld [vmem:[%s1 + $0x48] sm:$0xff]
  %v35 = vld [vmem:[%s1 + $0x50] sm:$0xff]
  %v36 = vld [vmem:[%s1 + $0x58] sm:$0xff]
  %v37 = vld [vmem:[%s1 + $0x60] sm:$0xff]
  %v38 = vld [vmem:[%s1 + $0x68] sm:$0xff]
  %v39 = vld [vmem:[%s1 + $0x70] sm:$0xff]
  %v40 = vld [vmem:[%s1 + $0x78] sm:$0xff]
  %v41 = vld [vmem:[%s1 + $0x80] sm:$0xff]
  %v42 = vld [vmem:[%s1 + $0x88] sm:$0xff]
  %v43 = vld [vmem:[%s1 + $0x90] sm:$0xff]
  %v44 = vld [vmem:[%s1 + $0x98] sm:$0xff]
  %v45 = vld [vmem:[%s1 + $0xa0] sm:$0xff]
  %v46 = vld [vmem:[%s1 + $0xa8] sm:$0xff]
  %v47 = vld [vmem:[%s1 + $0xb0] sm:$0xff]
  %v48 = vld [vmem:[%s1 + $0xb8] sm:$0xff]
  %v49 = vld [vmem:[%s1 + $0xc0] sm:$0xff]
  %v50 = vld [vmem:[%s1 + $0xc8] sm:$0xff]
  %v51 = vld [vmem:[%s1 + $0xd0] sm:$0xff]
  %v52 = vld [vmem:[%s1 + $0xd8] sm:$0xff]
  %v53 = vld [vmem:[%s1 + $0xe0] sm:$0xff]
  %v54 = vld [vmem:[%s1 + $0xe8] sm:$0xff]
  %v55 = vld [vmem:[%s1 + $0xf0] sm:$0xff]
  %v56 = vld [vmem:[%s1 + $0xf8] sm:$0xff]
  %v57 = vld [vmem:[%s1 + $0x100] sm:$0xff]
  %v58 = vld [vmem:[%s1 + $0x108] sm:$0xff]
  %v59 = vld [vmem:[%s1 + $0x110] sm:$0xff]
  %v60 = vld [vmem:[%s1 + $0x118] sm:$0xff]
  %v61 = vld [vmem:[%s1 + $0x120] sm:$0xff]
  %v62 = vld [vmem:[%s1 + $0x128] sm:$0xff]
  %v63 = vld [vmem:[%s1 + $0x130] sm:$0xff]
  %v64 = vld [vmem:[%s1 + $0x138] sm:$0xff]
  %v65 = vld [vmem:[%s1 + $0x140] sm:$0xff]
  %v66 = vld [vmem:[%s1 + $0x148] sm:$0xff]
  %v67 = vld [vmem:[%s1 + $0x150] sm:$0xff]
  %v68 = vld [vmem:[%s1 + $0x158] sm:$0xff]
  %v69 = vld [vmem:[%s1 + $0x160] sm:$0xff]
  %v70 = vld [vmem:[%s1 + $0x168] sm:$0xff]
  %v71 = vld [vmem:[%s1 + $0x170] sm:$0xff]
  %v72 = vld [vmem:[%s1 + $0x178] sm:$0xff]
  %v73 = vld [vmem:[%s1 + $0x180] sm:$0xff]
  %v74 = vld [vmem:[%s1 + $0x188] sm:$0xff]
  %v75 = vld [vmem:[%s1 + $0x190] sm:$0xff]
  %v76 = vld [vmem:[%s1 + $0x198] sm:$0xff]
  %v77 = vld [vmem:[%s1 + $0x1a0] sm:$0xff]
  %v78 = vld [vmem:[%s1 + $0x1a8] sm:$0xff]
  %v79 = vld [vmem:[%s1 + $0x1b0] sm:$0xff]
  %v80 = vld [vmem:[%s1 + $0x1b8] sm:$0xff]
  %v81 = vld [vmem:[%s1 + $0x1c0] sm:$0xff]
  %v82 = vld [vmem:[%s1 + $0x1c8] sm:$0xff]
  %v83 = vld [vmem:[%s1 + $0x1d0] sm:$0xff]
  %v84 = vld [vmem:[%s1 + $0x1d8] sm:$0xff]
  %v85 = vld [vmem:[%s1 + $0x1e0] sm:$0xff]
  %v86 = vld [vmem:[%s1 + $0x1e8] sm:$0xff]
  %v87 = vld [vmem:[%s1 + $0x1f0] sm:$0xff]
  %v88 = vld [vmem:[%s1 + $0x1f8] sm:$0xff]
  %v89 = vld [vmem:[%s1 + $0x200] sm:$0xff]
  %v90 = vld [vmem:[%s1 + $0x208] sm:$0xff]
  %v91 = vld [vmem:[%s1 + $0x210] sm:$0xff]
  %v92 = vld [vmem:[%s1 + $0x218] sm:$0xff]
  %v93 = vld [vmem:[%s1 + $0x220] sm:$0xff]
  %v94 = vld [vmem:[%s1 + $0x228] sm:$0xff]
  %v95 = vld [vmem:[%s1 + $0x230] sm:$0xff]
  %v96 = vld [vmem:[%s1 + $0x238] sm:$0xff]
  %v97 = vld [vmem:[%s1 + $0x240] sm:$0xff]
  %v98 = vld [vmem:[%s1 + $0x248] sm:$0xff]
  %v99 = vld [vmem:[%s1 + $0x250] sm:$0xff]
  %v100 = vld [vmem:[%s1 + $0x258] sm:$0xff]
  %v101 = vld [vmem:[%s1 + $0x260] sm:$0xff]
  %v102 = vld [vmem:[%s1 + $0x268] sm:$0xff]
  %v103 = vld [vmem:[%s1 + $0x270] sm:$0xff]
  %v104 = vld [vmem:[%s1 + $0x278] sm:$0xff]
  %v105 = vld [vmem:[%s1 + $0x280] sm:$0xff]
  %v106 = vld [vmem:[%s1 + $0x288] sm:$0xff]
  %v107 = vld [vmem:[%s1 + $0x290] sm:$0xff]
  %v108 = vld [vmem:[%s1 + $0x298] sm:$0xff]
  %v109 = vld [vmem:[%s1 + $0x2a0] sm:$0xff]
  %v110 = vld [vmem:[%s1 + $0x2a8] sm:$0xff]
  %v111 = vld [vmem:[%s1 + $0x2b0] sm:$0xff]
  %v112 = vld [vmem:[%s1 + $0x2b8] sm:$0xff]
  %v113 = vld [vmem:[%s1 + $0x2c0] sm:$0xff]
  %v114 = vld [vmem:[%s1 + $0x2c8] sm:$0xff]
  %v115 = vld [vmem:[%s1 + $0x2d0] sm:$0xff]
  %v116 = vld [vmem:[%s1 + $0x2d8] sm:$0xff]
  %v117 = vld [vmem:[%s1 + $0x2e0] sm:$0xff]
  %v118 = vld [vmem:[%s1 + $0x2e8] sm:$0xff]
  %v119 = vld [vmem:[%s1 + $0x2f0] sm:$0xff]
  %v120 = vld [vmem:[%s1 + $0x2f8] sm:$0xff]
  %v121 = vld [vmem:[%s1 + $0x300] sm:$0xff]
  %v122 = vld [vmem:[%s1 + $0x308] sm:$0xff]
  %v123 = vld [vmem:[%s1 + $0x310] sm:$0xff]
  %v124 = vld [vmem:[%s1 + $0x318] sm:$0xff]
  %v125 = vld [vmem:[%s1 + $0x320] sm:$0xff]
  %v126 = vld [vmem:[%s1 + $0x328] sm:$0xff]
  %v127 = vld [vmem:[%s1 + $0x330] sm:$0xff]
  %v128 = vld [vmem:[%s1 + $0x338] sm:$0xff]
  %v129 = vld [vmem:[%s1 + $0x340] sm:$0xff]
  %v130 = vld [vmem:[%s1 + $0x348] sm:$0xff]
  %v131 = vld [vmem:[%s1 + $0x350] sm:$0xff]
  %v132 = vld [vmem:[%s1 + $0x358] sm:$0xff]
  %v133 = vld [vmem:[%s1 + $0x360] sm:$0xff]
  %v134 = vld [vmem:[%s1 + $0x368] sm:$0xff]
  %v135 = vld [vmem:[%s1 + $0x370] sm:$0xff]
  %v136 = vld [vmem:[%s1 + $0x378] sm:$0xff]
  %v137 = vld [vmem:[%s1 + $0x380] sm:$0xff]
  %v138 = vld [vmem:[%s1 + $0x388] sm:$0xff]
  %v139 = vld [vmem:[%s1 + $0x390] sm:$0xff]
  %v140 = vld [vmem:[%s1 + $0x398] sm:$0xff]
  %v141 = vld [vmem:[%s1 + $0x3a0] sm:$0xff]
  %v142 = vld [vmem:[%s1 + $0x3a8] sm:$0xff]
  %v143 = vld [vmem:[%s1 + $0x3b0] sm:$0xff]
  %v144 = vld [vmem:[%s1 + $0x3b8] sm:$0xff]
  %v145 = vld [vmem:[%s1 + $0x3c0] sm:$0xff]
  %v146 = vld [vmem:[%s1 + $0x3c8] sm:$0xff]
  %v147 = vld [vmem:[%s1 + $0x3d0] sm:$0xff]
  %v148 = vld [vmem:[%s1 + $0x3d8] sm:$0xff]
  %v149 = vld [vmem:[%s1 + $0x3e0] sm:$0xff]
  %v150 = vld [vmem:[%s1 + $0x3e8] sm:$0xff]
  %v151 = vld [vmem:[%s1 + $0x3f0] sm:$0xff]
  %v152 = vld [vmem:[%s1 + $0x3f8] sm:$0xff]
  %v153 = vld [vmem:[%s1 + $0x400] sm:$0xff]
  %v154 = vld [vmem:[%s1 + $0x408] sm:$0xff]
  %v155 = vld [vmem:[%s1 + $0x410] sm:$0xff]
  %v156 = vld [vmem:[%s1 + $0x418] sm:$0xff]
  %v157 = vld [vmem:[%s1 + $0x420] sm:$0xff]
  %v158 = vld [vmem:[%s1 + $0x428] sm:$0xff]
  %v159 = vld [vmem:[%s1 + $0x430] sm:$0xff]
  %v160 = vld [vmem:[%s1 + $0x438] sm:$0xff]
  %v161 = vld [vmem:[%s1 + $0x440] sm:$0xff]
  %v162 = vld [vmem:[%s1 + $0x448] sm:$0xff]
  %v163 = vld [vmem:[%s1 + $0x450] sm:$0xff]
  %v164 = vld [vmem:[%s1 + $0x458] sm:$0xff]
  %v165 = vld [vmem:[%s1 + $0x460] sm:$0xff]
  %v166 = vld [vmem:[%s1 + $0x468] sm:$0xff]
  %v167 = vld [vmem:[%s1 + $0x470] sm:$0xff]
  %v168 = vld [vmem:[%s1 + $0x478] sm:$0xff]
  %v169 = vld [vmem:[%s1 + $0x480] sm:$0xff]
  %v170 = vld [vmem:[%s1 + $0x488] sm:$0xff]
  %v171 = vld [vmem:[%s1 + $0x490] sm:$0xff]
  %v172 = vld [vmem:[%s1 + $0x498] sm:$0xff]
  %v173 = vld [vmem:[%s1 + $0x4a0] sm:$0xff]
  %v174 = vld [vmem:[%s1 + $0x4a8] sm:$0xff]
  %v175 = vld [vmem:[%s1 + $0x4b0] sm:$0xff]
  %v176 = vld [vmem:[%s1 + $0x4b8] sm:$0xff]
  %v177 = vld [vmem:[%s1 + $0x4c0] sm:$0xff]
  %v178 = vld [vmem:[%s1 + $0x4c8] sm:$0xff]
  %v179 = vld [vmem:[%s1 + $0x4d0] sm:$0xff]
  %v180 = vld [vmem:[%s1 + $0x4d8] sm:$0xff]
  %v181 = vld [vmem:[%s1 + $0x4e0] sm:$0xff]
  %v182 = vld [vmem:[%s1 + $0x4e8] sm:$0xff]
  %v183 = vld [vmem:[%s1 + $0x4f0] sm:$0xff]
  %v184 = vld [vmem:[%s1 + $0x4f8] sm:$0xff]
  %v185 = vld [vmem:[%s1 + $0x500] sm:$0xff]
  %v186 = vld [vmem:[%s1 + $0x508] sm:$0xff]
  %v187 = vld [vmem:[%s1 + $0x510] sm:$0xff]
  %v188 = vld [vmem:[%s1 + $0x518] sm:$0xff]
  %v189 = vld [vmem:[%s1 + $0x520] sm:$0xff]
  %v190 = vld [vmem:[%s1 + $0x528] sm:$0xff]
  %v191 = vld [vmem:[%s1 + $0x530] sm:$0xff]
  %v192 = vld [vmem:[%s1 + $0x538] sm:$0xff]
  %v193 = vld [vmem:[%s1 + $0x540] sm:$0xff]
  %v194 = vld [vmem:[%s1 + $0x548] sm:$0xff]
  %v195 = vld [vmem:[%s1 + $0x550] sm:$0xff]
  %v196 = vld [vmem:[%s1 + $0x558] sm:$0xff]
  %v197 = vld [vmem:[%s1 + $0x560] sm:$0xff]
  %v198 = vld [vmem:[%s1 + $0x568] sm:$0xff]
  %v199 = vld [vmem:[%s1 + $0x570] sm:$0xff]
  %v200 = vld [vmem:[%s1 + $0x578] sm:$0xff]
  %v201 = vld [vmem:[%s1 + $0x580] sm:$0xff]
  %v202 = vld [vmem:[%s1 + $0x588] sm:$0xff]
  %v203 = vld [vmem:[%s1 + $0x590] sm:$0xff]
  %v204 = vld [vmem:[%s1 + $0x598] sm:$0xff]
  %v205 = vld [vmem:[%s1 + $0x5a0] sm:$0xff]
  %v206 = vld [vmem:[%s1 + $0x5a8] sm:$0xff]
  %v207 = vld [vmem:[%s1 + $0x5b0] sm:$0xff]
  %v208 = vld [vmem:[%s1 + $0x5b8] sm:$0xff]
  %v209 = vld [vmem:[%s1 + $0x5c0] sm:$0xff]
  %v210 = vld [vmem:[%s1 + $0x5c8] sm:$0xff]
  %v211 = vld [vmem:[%s1 + $0x5d0] sm:$0xff]
  %v212 = vld [vmem:[%s1 + $0x5d8] sm:$0xff]
  %v213 = vld [vmem:[%s1 + $0x5e0] sm:$0xff]
  %v214 = vld [vmem:[%s1 + $0x5e8] sm:$0xff]
  %v215 = vld [vmem:[%s1 + $0x5f0] sm:$0xff]
  %v216 = vld [vmem:[%s1 + $0x5f8] sm:$0xff]
  %v217 = vld [vmem:[%s3] sm:$0xf]
  %v219 = vlaneseq
  %v220 = vshrl.u32 %v219, 7
  %v221 = vsub.s32 0, %v220
  %v222 = vrot.slane %v217, %v221
  %v223 = vlaneseq
  %v224 = vshrl.u32 %v223, 7
  %v225 = vsub.s32 1, %v224
  %v226 = vrot.slane %v217, %v225
  %v227 = vlaneseq
  %v228 = vshrl.u32 %v227, 7
  %v229 = vsub.s32 2, %v228
  %v230 = vrot.slane %v217, %v229
  %v231 = vlaneseq
  %v232 = vshrl.u32 %v231, 7
  %v233 = vsub.s32 3, %v232
  %v234 = vrot.slane %v217, %v233
  %v241 = vcombine.high %v23, %v23
  %v243 = vunpack.c.l.s4 1983009808
  %v244 = vunpack.c.0.s8 %v243
  %v245 = vlaneseq
  %v246 = vshrl.u32 %v245, 7
  %v247 = vsub.s32 %v244, %v246
  %v248 = vrot.slane %v23, %v247
  %v250 = vunpack.c.l.s4 1983009808
  %v251 = vunpack.c.0.s8 %v250
  %v252 = vlaneseq
  %v253 = vshrl.u32 %v252, 7
  %v254 = vsub.s32 %v251, %v253
  %v255 = vrot.slane %v241, %v254
  %v256 = vcombine.high %v248, %v248
  %v257 = vcombine.high %v255, %v255
  %v259 = vunpack.c.l.s4 1983009808
  %v260 = vunpack.c.0.s8 %v259
  %v261 = vlaneseq
  %v262 = vshrl.u32 %v261, 7
  %v263 = vsub.s32 %v260, %v262
  %v264 = vrot.slane %v24, %v263
  %v265 = vcombine.high %v264, %v264
  %v464 = vunpack.c.l.b16 %v25
  %v465 = vunpack.c.h.b16 %v25
  %v466 = vunpack.c.l.b16 %v26
  %v467 = vunpack.c.h.b16 %v26
  %v468 = vunpack.c.l.b16 %v27
  %v469 = vunpack.c.h.b16 %v27
  %v470 = vunpack.c.l.b16 %v28
  %v471 = vunpack.c.h.b16 %v28
  %v472 = vunpack.c.l.b16 %v29
  %v473 = vunpack.c.h.b16 %v29
  %v474 = vunpack.c.l.b16 %v30
  %v475 = vunpack.c.h.b16 %v30
  %v476 = vunpack.c.l.b16 %v31
  %v477 = vunpack.c.h.b16 %v31
  %v478 = vunpack.c.l.b16 %v32
  %v479 = vunpack.c.h.b16 %v32
  %v480 = vunpack.c.l.b16 %v33
  %v481 = vunpack.c.h.b16 %v33
  %v482 = vunpack.c.l.b16 %v34
  %v483 = vunpack.c.h.b16 %v34
  %v484 = vunpack.c.l.b16 %v35
  %v485 = vunpack.c.h.b16 %v35
  %v486 = vunpack.c.l.b16 %v36
  %v487 = vunpack.c.h.b16 %v36
  %v488 = vunpack.c.l.b16 %v37
  %v489 = vunpack.c.h.b16 %v37
  %v490 = vunpack.c.l.b16 %v38
  %v491 = vunpack.c.h.b16 %v38
  %v492 = vunpack.c.l.b16 %v39
  %v493 = vunpack.c.h.b16 %v39
  %v494 = vunpack.c.l.b16 %v40
  %v495 = vunpack.c.h.b16 %v40
  %v496 = vunpack.c.l.b16 %v41
  %v497 = vunpack.c.h.b16 %v41
  %v498 = vunpack.c.l.b16 %v42
  %v499 = vunpack.c.h.b16 %v42
  %v500 = vunpack.c.l.b16 %v43
  %v501 = vunpack.c.h.b16 %v43
  %v502 = vunpack.c.l.b16 %v44
  %v503 = vunpack.c.h.b16 %v44
  %v504 = vunpack.c.l.b16 %v45
  %v505 = vunpack.c.h.b16 %v45
  %v506 = vunpack.c.l.b16 %v46
  %v507 = vunpack.c.h.b16 %v46
  %v508 = vunpack.c.l.b16 %v47
  %v509 = vunpack.c.h.b16 %v47
  %v510 = vunpack.c.l.b16 %v48
  %v511 = vunpack.c.h.b16 %v48
  %v512 = vunpack.c.l.b16 %v49
  %v513 = vunpack.c.h.b16 %v49
  %v514 = vunpack.c.l.b16 %v50
  %v515 = vunpack.c.h.b16 %v50
  %v516 = vunpack.c.l.b16 %v51
  %v517 = vunpack.c.h.b16 %v51
  %v518 = vunpack.c.l.b16 %v52
  %v519 = vunpack.c.h.b16 %v52
  %v520 = vunpack.c.l.b16 %v53
  %v521 = vunpack.c.h.b16 %v53
  %v522 = vunpack.c.l.b16 %v54
  %v523 = vunpack.c.h.b16 %v54
  %v524 = vunpack.c.l.b16 %v55
  %v525 = vunpack.c.h.b16 %v55
  %v526 = vunpack.c.l.b16 %v56
  %v527 = vunpack.c.h.b16 %v56
  %v528 = vunpack.c.l.b16 %v57
  %v529 = vunpack.c.h.b16 %v57
  %v530 = vunpack.c.l.b16 %v58
  %v531 = vunpack.c.h.b16 %v58
  %v532 = vunpack.c.l.b16 %v59
  %v533 = vunpack.c.h.b16 %v59
  %v534 = vunpack.c.l.b16 %v60
  %v535 = vunpack.c.h.b16 %v60
  %v536 = vunpack.c.l.b16 %v61
  %v537 = vunpack.c.h.b16 %v61
  %v538 = vunpack.c.l.b16 %v62
  %v539 = vunpack.c.h.b16 %v62
  %v540 = vunpack.c.l.b16 %v63
  %v541 = vunpack.c.h.b16 %v63
  %v542 = vunpack.c.l.b16 %v64
  %v543 = vunpack.c.h.b16 %v64
  %v544 = vunpack.c.l.b16 %v65
  %v545 = vunpack.c.h.b16 %v65
  %v546 = vunpack.c.l.b16 %v66
  %v547 = vunpack.c.h.b16 %v66
  %v548 = vunpack.c.l.b16 %v67
  %v549 = vunpack.c.h.b16 %v67
  %v550 = vunpack.c.l.b16 %v68
  %v551 = vunpack.c.h.b16 %v68
  %v552 = vunpack.c.l.b16 %v69
  %v553 = vunpack.c.h.b16 %v69
  %v554 = vunpack.c.l.b16 %v70
  %v555 = vunpack.c.h.b16 %v70
  %v556 = vunpack.c.l.b16 %v71
  %v557 = vunpack.c.h.b16 %v71
  %v558 = vunpack.c.l.b16 %v72
  %v559 = vunpack.c.h.b16 %v72
  %v560 = vunpack.c.l.b16 %v73
  %v561 = vunpack.c.h.b16 %v73
  %v562 = vunpack.c.l.b16 %v74
  %v563 = vunpack.c.h.b16 %v74
  %v564 = vunpack.c.l.b16 %v75
  %v565 = vunpack.c.h.b16 %v75
  %v566 = vunpack.c.l.b16 %v76
  %v567 = vunpack.c.h.b16 %v76
  %v568 = vunpack.c.l.b16 %v77
  %v569 = vunpack.c.h.b16 %v77
  %v570 = vunpack.c.l.b16 %v78
  %v571 = vunpack.c.h.b16 %v78
  %v572 = vunpack.c.l.b16 %v79
  %v573 = vunpack.c.h.b16 %v79
  %v574 = vunpack.c.l.b16 %v80
  %v575 = vunpack.c.h.b16 %v80
  %v576 = vunpack.c.l.b16 %v81
  %v577 = vunpack.c.h.b16 %v81
  %v578 = vunpack.c.l.b16 %v82
  %v579 = vunpack.c.h.b16 %v82
  %v580 = vunpack.c.l.b16 %v83
  %v581 = vunpack.c.h.b16 %v83
  %v582 = vunpack.c.l.b16 %v84
  %v583 = vunpack.c.h.b16 %v84
  %v584 = vunpack.c.l.b16 %v85
  %v585 = vunpack.c.h.b16 %v85
  %v586 = vunpack.c.l.b16 %v86
  %v587 = vunpack.c.h.b16 %v86
  %v588 = vunpack.c.l.b16 %v87
  %v589 = vunpack.c.h.b16 %v87
  %v590 = vunpack.c.l.b16 %v88
  %v591 = vunpack.c.h.b16 %v88
  %v592 = vunpack.c.l.b16 %v89
  %v593 = vunpack.c.h.b16 %v89
  %v594 = vunpack.c.l.b16 %v90
  %v595 = vunpack.c.h.b16 %v90
  %v596 = vunpack.c.l.b16 %v91
  %v597 = vunpack.c.h.b16 %v91
  %v598 = vunpack.c.l.b16 %v92
  %v599 = vunpack.c.h.b16 %v92
  %v600 = vunpack.c.l.b16 %v93
  %v601 = vunpack.c.h.b16 %v93
  %v602 = vunpack.c.l.b16 %v94
  %v603 = vunpack.c.h.b16 %v94
  %v604 = vunpack.c.l.b16 %v95
  %v605 = vunpack.c.h.b16 %v95
  %v606 = vunpack.c.l.b16 %v96
  %v607 = vunpack.c.h.b16 %v96
  %v608 = vunpack.c.l.b16 %v97
  %v609 = vunpack.c.h.b16 %v97
  %v610 = vunpack.c.l.b16 %v98
  %v611 = vunpack.c.h.b16 %v98
  %v612 = vunpack.c.l.b16 %v99
  %v613 = vunpack.c.h.b16 %v99
  %v614 = vunpack.c.l.b16 %v100
  %v615 = vunpack.c.h.b16 %v100
  %v616 = vunpack.c.l.b16 %v101
  %v617 = vunpack.c.h.b16 %v101
  %v618 = vunpack.c.l.b16 %v102
  %v619 = vunpack.c.h.b16 %v102
  %v620 = vunpack.c.l.b16 %v103
  %v621 = vunpack.c.h.b16 %v103
  %v622 = vunpack.c.l.b16 %v104
  %v623 = vunpack.c.h.b16 %v104
  %v624 = vunpack.c.l.b16 %v105
  %v625 = vunpack.c.h.b16 %v105
  %v626 = vunpack.c.l.b16 %v106
  %v627 = vunpack.c.h.b16 %v106
  %v628 = vunpack.c.l.b16 %v107
  %v629 = vunpack.c.h.b16 %v107
  %v630 = vunpack.c.l.b16 %v108
  %v631 = vunpack.c.h.b16 %v108
  %v632 = vunpack.c.l.b16 %v109
  %v633 = vunpack.c.h.b16 %v109
  %v634 = vunpack.c.l.b16 %v110
  %v635 = vunpack.c.h.b16 %v110
  %v636 = vunpack.c.l.b16 %v111
  %v637 = vunpack.c.h.b16 %v111
  %v638 = vunpack.c.l.b16 %v112
  %v639 = vunpack.c.h.b16 %v112
  %v640 = vunpack.c.l.b16 %v113
  %v641 = vunpack.c.h.b16 %v113
  %v642 = vunpack.c.l.b16 %v114
  %v643 = vunpack.c.h.b16 %v114
  %v644 = vunpack.c.l.b16 %v115
  %v645 = vunpack.c.h.b16 %v115
  %v646 = vunpack.c.l.b16 %v116
  %v647 = vunpack.c.h.b16 %v116
  %v648 = vunpack.c.l.b16 %v117
  %v649 = vunpack.c.h.b16 %v117
  %v650 = vunpack.c.l.b16 %v118
  %v651 = vunpack.c.h.b16 %v118
  %v652 = vunpack.c.l.b16 %v119
  %v653 = vunpack.c.h.b16 %v119
  %v654 = vunpack.c.l.b16 %v120
  %v655 = vunpack.c.h.b16 %v120
  %v656 = vunpack.c.l.b16 %v121
  %v657 = vunpack.c.h.b16 %v121
  %v658 = vunpack.c.l.b16 %v122
  %v659 = vunpack.c.h.b16 %v122
  %v660 = vunpack.c.l.b16 %v123
  %v661 = vunpack.c.h.b16 %v123
  %v662 = vunpack.c.l.b16 %v124
  %v663 = vunpack.c.h.b16 %v124
  %v664 = vunpack.c.l.b16 %v125
  %v665 = vunpack.c.h.b16 %v125
  %v666 = vunpack.c.l.b16 %v126
  %v667 = vunpack.c.h.b16 %v126
  %v668 = vunpack.c.l.b16 %v127
  %v669 = vunpack.c.h.b16 %v127
  %v670 = vunpack.c.l.b16 %v128
  %v671 = vunpack.c.h.b16 %v128
  %v672 = vunpack.c.l.b16 %v129
  %v673 = vunpack.c.h.b16 %v129
  %v674 = vunpack.c.l.b16 %v130
  %v675 = vunpack.c.h.b16 %v130
  %v676 = vunpack.c.l.b16 %v131
  %v677 = vunpack.c.h.b16 %v131
  %v678 = vunpack.c.l.b16 %v132
  %v679 = vunpack.c.h.b16 %v132
  %v680 = vunpack.c.l.b16 %v133
  %v681 = vunpack.c.h.b16 %v133
  %v682 = vunpack.c.l.b16 %v134
  %v683 = vunpack.c.h.b16 %v134
  %v684 = vunpack.c.l.b16 %v135
  %v685 = vunpack.c.h.b16 %v135
  %v686 = vunpack.c.l.b16 %v136
  %v687 = vunpack.c.h.b16 %v136
  %v688 = vunpack.c.l.b16 %v137
  %v689 = vunpack.c.h.b16 %v137
  %v690 = vunpack.c.l.b16 %v138
  %v691 = vunpack.c.h.b16 %v138
  %v692 = vunpack.c.l.b16 %v139
  %v693 = vunpack.c.h.b16 %v139
  %v694 = vunpack.c.l.b16 %v140
  %v695 = vunpack.c.h.b16 %v140
  %v696 = vunpack.c.l.b16 %v141
  %v697 = vunpack.c.h.b16 %v141
  %v698 = vunpack.c.l.b16 %v142
  %v699 = vunpack.c.h.b16 %v142
  %v700 = vunpack.c.l.b16 %v143
  %v701 = vunpack.c.h.b16 %v143
  %v702 = vunpack.c.l.b16 %v144
  %v703 = vunpack.c.h.b16 %v144
  %v704 = vunpack.c.l.b16 %v145
  %v705 = vunpack.c.h.b16 %v145
  %v706 = vunpack.c.l.b16 %v146
  %v707 = vunpack.c.h.b16 %v146
  %v708 = vunpack.c.l.b16 %v147
  %v709 = vunpack.c.h.b16 %v147
  %v710 = vunpack.c.l.b16 %v148
  %v711 = vunpack.c.h.b16 %v148
  %v712 = vunpack.c.l.b16 %v149
  %v713 = vunpack.c.h.b16 %v149
  %v714 = vunpack.c.l.b16 %v150
  %v715 = vunpack.c.h.b16 %v150
  %v716 = vunpack.c.l.b16 %v151
  %v717 = vunpack.c.h.b16 %v151
  %v718 = vunpack.c.l.b16 %v152
  %v719 = vunpack.c.h.b16 %v152
  %v720 = vunpack.c.l.b16 %v153
  %v721 = vunpack.c.h.b16 %v153
  %v722 = vunpack.c.l.b16 %v154
  %v723 = vunpack.c.h.b16 %v154
  %v724 = vunpack.c.l.b16 %v155
  %v725 = vunpack.c.h.b16 %v155
  %v726 = vunpack.c.l.b16 %v156
  %v727 = vunpack.c.h.b16 %v156
  %v728 = vunpack.c.l.b16 %v157
  %v729 = vunpack.c.h.b16 %v157
  %v730 = vunpack.c.l.b16 %v158
  %v731 = vunpack.c.h.b16 %v158
  %v732 = vunpack.c.l.b16 %v159
  %v733 = vunpack.c.h.b16 %v159
  %v734 = vunpack.c.l.b16 %v160
  %v735 = vunpack.c.h.b16 %v160
  %v736 = vunpack.c.l.b16 %v161
  %v737 = vunpack.c.h.b16 %v161
  %v738 = vunpack.c.l.b16 %v162
  %v739 = vunpack.c.h.b16 %v162
  %v740 = vunpack.c.l.b16 %v163
  %v741 = vunpack.c.h.b16 %v163
  %v742 = vunpack.c.l.b16 %v164
  %v743 = vunpack.c.h.b16 %v164
  %v744 = vunpack.c.l.b16 %v165
  %v745 = vunpack.c.h.b16 %v165
  %v746 = vunpack.c.l.b16 %v166
  %v747 = vunpack.c.h.b16 %v166
  %v748 = vunpack.c.l.b16 %v167
  %v749 = vunpack.c.h.b16 %v167
  %v750 = vunpack.c.l.b16 %v168
  %v751 = vunpack.c.h.b16 %v168
  %v752 = vunpack.c.l.b16 %v169
  %v753 = vunpack.c.h.b16 %v169
  %v754 = vunpack.c.l.b16 %v170
  %v755 = vunpack.c.h.b16 %v170
  %v756 = vunpack.c.l.b16 %v171
  %v757 = vunpack.c.h.b16 %v171
  %v758 = vunpack.c.l.b16 %v172
  %v759 = vunpack.c.h.b16 %v172
  %v760 = vunpack.c.l.b16 %v173
  %v761 = vunpack.c.h.b16 %v173
  %v762 = vunpack.c.l.b16 %v174
  %v763 = vunpack.c.h.b16 %v174
  %v764 = vunpack.c.l.b16 %v175
  %v765 = vunpack.c.h.b16 %v175
  %v766 = vunpack.c.l.b16 %v176
  %v767 = vunpack.c.h.b16 %v176
  %v768 = vunpack.c.l.b16 %v177
  %v769 = vunpack.c.h.b16 %v177
  %v770 = vunpack.c.l.b16 %v178
  %v771 = vunpack.c.h.b16 %v178
  %v772 = vunpack.c.l.b16 %v179
  %v773 = vunpack.c.h.b16 %v179
  %v774 = vunpack.c.l.b16 %v180
  %v775 = vunpack.c.h.b16 %v180
  %v776 = vunpack.c.l.b16 %v181
  %v777 = vunpack.c.h.b16 %v181
  %v778 = vunpack.c.l.b16 %v182
  %v779 = vunpack.c.h.b16 %v182
  %v780 = vunpack.c.l.b16 %v183
  %v781 = vunpack.c.h.b16 %v183
  %v782 = vunpack.c.l.b16 %v184
  %v783 = vunpack.c.h.b16 %v184
  %v784 = vunpack.c.l.b16 %v185
  %v785 = vunpack.c.h.b16 %v185
  %v786 = vunpack.c.l.b16 %v186
  %v787 = vunpack.c.h.b16 %v186
  %v788 = vunpack.c.l.b16 %v187
  %v789 = vunpack.c.h.b16 %v187
  %v790 = vunpack.c.l.b16 %v188
  %v791 = vunpack.c.h.b16 %v188
  %v792 = vunpack.c.l.b16 %v189
  %v793 = vunpack.c.h.b16 %v189
  %v794 = vunpack.c.l.b16 %v190
  %v795 = vunpack.c.h.b16 %v190
  %v796 = vunpack.c.l.b16 %v191
  %v797 = vunpack.c.h.b16 %v191
  %v798 = vunpack.c.l.b16 %v192
  %v799 = vunpack.c.h.b16 %v192
  %v800 = vunpack.c.l.b16 %v193
  %v801 = vunpack.c.h.b16 %v193
  %v802 = vunpack.c.l.b16 %v194
  %v803 = vunpack.c.h.b16 %v194
  %v804 = vunpack.c.l.b16 %v195
  %v805 = vunpack.c.h.b16 %v195
  %v806 = vunpack.c.l.b16 %v196
  %v807 = vunpack.c.h.b16 %v196
  %v808 = vunpack.c.l.b16 %v197
  %v809 = vunpack.c.h.b16 %v197
  %v810 = vunpack.c.l.b16 %v198
  %v811 = vunpack.c.h.b16 %v198
  %v812 = vunpack.c.l.b16 %v199
  %v813 = vunpack.c.h.b16 %v199
  %v814 = vunpack.c.l.b16 %v200
  %v815 = vunpack.c.h.b16 %v200
  %v816 = vunpack.c.l.b16 %v201
  %v817 = vunpack.c.h.b16 %v201
  %v818 = vunpack.c.l.b16 %v202
  %v819 = vunpack.c.h.b16 %v202
  %v820 = vunpack.c.l.b16 %v203
  %v821 = vunpack.c.h.b16 %v203
  %v822 = vunpack.c.l.b16 %v204
  %v823 = vunpack.c.h.b16 %v204
  %v824 = vunpack.c.l.b16 %v205
  %v825 = vunpack.c.h.b16 %v205
  %v826 = vunpack.c.l.b16 %v206
  %v827 = vunpack.c.h.b16 %v206
  %v828 = vunpack.c.l.b16 %v207
  %v829 = vunpack.c.h.b16 %v207
  %v830 = vunpack.c.l.b16 %v208
  %v831 = vunpack.c.h.b16 %v208
  %v832 = vunpack.c.l.b16 %v209
  %v833 = vunpack.c.h.b16 %v209
  %v834 = vunpack.c.l.b16 %v210
  %v835 = vunpack.c.h.b16 %v210
  %v836 = vunpack.c.l.b16 %v211
  %v837 = vunpack.c.h.b16 %v211
  %v838 = vunpack.c.l.b16 %v212
  %v839 = vunpack.c.h.b16 %v212
  %v840 = vunpack.c.l.b16 %v213
  %v841 = vunpack.c.h.b16 %v213
  %v842 = vunpack.c.l.b16 %v214
  %v843 = vunpack.c.h.b16 %v214
  %v844 = vunpack.c.l.b16 %v215
  %v845 = vunpack.c.h.b16 %v215
  %v846 = vunpack.c.l.b16 %v216
  %v847 = vunpack.c.h.b16 %v216
  %v848 = vpack.c.b16 %v468, %v464
  %v849 = vpack.c.b16 %v469, %v465
  %v850 = vpack.c.b16 %v470, %v466
  %v851 = vpack.c.b16 %v471, %v467
  %v852 = vpack.c.b16 %v476, %v472
  %v853 = vpack.c.b16 %v477, %v473
  %v854 = vpack.c.b16 %v478, %v474
  %v855 = vpack.c.b16 %v479, %v475
  %v856 = vpack.c.b16 %v484, %v480
  %v857 = vpack.c.b16 %v485, %v481
  %v858 = vpack.c.b16 %v486, %v482
  %v859 = vpack.c.b16 %v487, %v483
  %v860 = vpack.c.b16 %v492, %v488
  %v861 = vpack.c.b16 %v493, %v489
  %v862 = vpack.c.b16 %v494, %v490
  %v863 = vpack.c.b16 %v495, %v491
  %v864 = vpack.c.b16 %v500, %v496
  %v865 = vpack.c.b16 %v501, %v497
  %v866 = vpack.c.b16 %v502, %v498
  %v867 = vpack.c.b16 %v503, %v499
  %v868 = vpack.c.b16 %v508, %v504
  %v869 = vpack.c.b16 %v509, %v505
  %v870 = vpack.c.b16 %v510, %v506
  %v871 = vpack.c.b16 %v511, %v507
  %v872 = vpack.c.b16 %v516, %v512
  %v873 = vpack.c.b16 %v517, %v513
  %v874 = vpack.c.b16 %v518, %v514
  %v875 = vpack.c.b16 %v519, %v515
  %v876 = vpack.c.b16 %v524, %v520
  %v877 = vpack.c.b16 %v525, %v521
  %v878 = vpack.c.b16 %v526, %v522
  %v879 = vpack.c.b16 %v527, %v523
  %v880 = vpack.c.b16 %v532, %v528
  %v881 = vpack.c.b16 %v533, %v529
  %v882 = vpack.c.b16 %v534, %v530
  %v883 = vpack.c.b16 %v535, %v531
  %v884 = vpack.c.b16 %v540, %v536
  %v885 = vpack.c.b16 %v541, %v537
  %v886 = vpack.c.b16 %v542, %v538
  %v887 = vpack.c.b16 %v543, %v539
  %v888 = vpack.c.b16 %v548, %v544
  %v889 = vpack.c.b16 %v549, %v545
  %v890 = vpack.c.b16 %v550, %v546
  %v891 = vpack.c.b16 %v551, %v547
  %v892 = vpack.c.b16 %v556, %v552
  %v893 = vpack.c.b16 %v557, %v553
  %v894 = vpack.c.b16 %v558, %v554
  %v895 = vpack.c.b16 %v559, %v555
  %v896 = vpack.c.b16 %v564, %v560
  %v897 = vpack.c.b16 %v565, %v561
  %v898 = vpack.c.b16 %v566, %v562
  %v899 = vpack.c.b16 %v567, %v563
  %v900 = vpack.c.b16 %v572, %v568
  %v901 = vpack.c.b16 %v573, %v569
  %v902 = vpack.c.b16 %v574, %v570
  %v903 = vpack.c.b16 %v575, %v571
  %v904 = vpack.c.b16 %v580, %v576
  %v905 = vpack.c.b16 %v581, %v577
  %v906 = vpack.c.b16 %v582, %v578
  %v907 = vpack.c.b16 %v583, %v579
  %v908 = vpack.c.b16 %v588, %v584
  %v909 = vpack.c.b16 %v589, %v585
  %v910 = vpack.c.b16 %v590, %v586
  %v911 = vpack.c.b16 %v591, %v587
  %v912 = vpack.c.b16 %v596, %v592
  %v913 = vpack.c.b16 %v597, %v593
  %v914 = vpack.c.b16 %v598, %v594
  %v915 = vpack.c.b16 %v599, %v595
  %v916 = vpack.c.b16 %v604, %v600
  %v917 = vpack.c.b16 %v605, %v601
  %v918 = vpack.c.b16 %v606, %v602
  %v919 = vpack.c.b16 %v607, %v603
  %v920 = vpack.c.b16 %v612, %v608
  %v921 = vpack.c.b16 %v613, %v609
  %v922 = vpack.c.b16 %v614, %v610
  %v923 = vpack.c.b16 %v615, %v611
  %v924 = vpack.c.b16 %v620, %v616
  %v925 = vpack.c.b16 %v621, %v617
  %v926 = vpack.c.b16 %v622, %v618
  %v927 = vpack.c.b16 %v623, %v619
  %v928 = vpack.c.b16 %v628, %v624
  %v929 = vpack.c.b16 %v629, %v625
  %v930 = vpack.c.b16 %v630, %v626
  %v931 = vpack.c.b16 %v631, %v627
  %v932 = vpack.c.b16 %v636, %v632
  %v933 = vpack.c.b16 %v637, %v633
  %v934 = vpack.c.b16 %v638, %v634
  %v935 = vpack.c.b16 %v639, %v635
  %v936 = vpack.c.b16 %v644, %v640
  %v937 = vpack.c.b16 %v645, %v641
  %v938 = vpack.c.b16 %v646, %v642
  %v939 = vpack.c.b16 %v647, %v643
  %v940 = vpack.c.b16 %v652, %v648
  %v941 = vpack.c.b16 %v653, %v649
  %v942 = vpack.c.b16 %v654, %v650
  %v943 = vpack.c.b16 %v655, %v651
  %v944 = vpack.c.b16 %v660, %v656
  %v945 = vpack.c.b16 %v661, %v657
  %v946 = vpack.c.b16 %v662, %v658
  %v947 = vpack.c.b16 %v663, %v659
  %v948 = vpack.c.b16 %v668, %v664
  %v949 = vpack.c.b16 %v669, %v665
  %v950 = vpack.c.b16 %v670, %v666
  %v951 = vpack.c.b16 %v671, %v667
  %v952 = vpack.c.b16 %v676, %v672
  %v953 = vpack.c.b16 %v677, %v673
  %v954 = vpack.c.b16 %v678, %v674
  %v955 = vpack.c.b16 %v679, %v675
  %v956 = vpack.c.b16 %v684, %v680
  %v957 = vpack.c.b16 %v685, %v681
  %v958 = vpack.c.b16 %v686, %v682
  %v959 = vpack.c.b16 %v687, %v683
  %v960 = vpack.c.b16 %v692, %v688
  %v961 = vpack.c.b16 %v693, %v689
  %v962 = vpack.c.b16 %v694, %v690
  %v963 = vpack.c.b16 %v695, %v691
  %v964 = vpack.c.b16 %v700, %v696
  %v965 = vpack.c.b16 %v701, %v697
  %v966 = vpack.c.b16 %v702, %v698
  %v967 = vpack.c.b16 %v703, %v699
  %v968 = vpack.c.b16 %v708, %v704
  %v969 = vpack.c.b16 %v709, %v705
  %v970 = vpack.c.b16 %v710, %v706
  %v971 = vpack.c.b16 %v711, %v707
  %v972 = vpack.c.b16 %v716, %v712
  %v973 = vpack.c.b16 %v717, %v713
  %v974 = vpack.c.b16 %v718, %v714
  %v975 = vpack.c.b16 %v719, %v715
  %v976 = vpack.c.b16 %v724, %v720
  %v977 = vpack.c.b16 %v725, %v721
  %v978 = vpack.c.b16 %v726, %v722
  %v979 = vpack.c.b16 %v727, %v723
  %v980 = vpack.c.b16 %v732, %v728
  %v981 = vpack.c.b16 %v733, %v729
  %v982 = vpack.c.b16 %v734, %v730
  %v983 = vpack.c.b16 %v735, %v731
  %v984 = vpack.c.b16 %v740, %v736
  %v985 = vpack.c.b16 %v741, %v737
  %v986 = vpack.c.b16 %v742, %v738
  %v987 = vpack.c.b16 %v743, %v739
  %v988 = vpack.c.b16 %v748, %v744
  %v989 = vpack.c.b16 %v749, %v745
  %v990 = vpack.c.b16 %v750, %v746
  %v991 = vpack.c.b16 %v751, %v747
  %v992 = vpack.c.b16 %v756, %v752
  %v993 = vpack.c.b16 %v757, %v753
  %v994 = vpack.c.b16 %v758, %v754
  %v995 = vpack.c.b16 %v759, %v755
  %v996 = vpack.c.b16 %v764, %v760
  %v997 = vpack.c.b16 %v765, %v761
  %v998 = vpack.c.b16 %v766, %v762
  %v999 = vpack.c.b16 %v767, %v763
  %v1000 = vpack.c.b16 %v772, %v768
  %v1001 = vpack.c.b16 %v773, %v769
  %v1002 = vpack.c.b16 %v774, %v770
  %v1003 = vpack.c.b16 %v775, %v771
  %v1004 = vpack.c.b16 %v780, %v776
  %v1005 = vpack.c.b16 %v781, %v777
  %v1006 = vpack.c.b16 %v782, %v778
  %v1007 = vpack.c.b16 %v783, %v779
  %v1008 = vpack.c.b16 %v788, %v784
  %v1009 = vpack.c.b16 %v789, %v785
  %v1010 = vpack.c.b16 %v790, %v786
  %v1011 = vpack.c.b16 %v791, %v787
  %v1012 = vpack.c.b16 %v796, %v792
  %v1013 = vpack.c.b16 %v797, %v793
  %v1014 = vpack.c.b16 %v798, %v794
  %v1015 = vpack.c.b16 %v799, %v795
  %v1016 = vpack.c.b16 %v804, %v800
  %v1017 = vpack.c.b16 %v805, %v801
  %v1018 = vpack.c.b16 %v806, %v802
  %v1019 = vpack.c.b16 %v807, %v803
  %v1020 = vpack.c.b16 %v812, %v808
  %v1021 = vpack.c.b16 %v813, %v809
  %v1022 = vpack.c.b16 %v814, %v810
  %v1023 = vpack.c.b16 %v815, %v811
  %v1024 = vpack.c.b16 %v820, %v816
  %v1025 = vpack.c.b16 %v821, %v817
  %v1026 = vpack.c.b16 %v822, %v818
  %v1027 = vpack.c.b16 %v823, %v819
  %v1028 = vpack.c.b16 %v828, %v824
  %v1029 = vpack.c.b16 %v829, %v825
  %v1030 = vpack.c.b16 %v830, %v826
  %v1031 = vpack.c.b16 %v831, %v827
  %v1032 = vpack.c.b16 %v836, %v832
  %v1033 = vpack.c.b16 %v837, %v833
  %v1034 = vpack.c.b16 %v838, %v834
  %v1035 = vpack.c.b16 %v839, %v835
  %v1036 = vpack.c.b16 %v844, %v840
  %v1037 = vpack.c.b16 %v845, %v841
  %v1038 = vpack.c.b16 %v846, %v842
  %v1039 = vpack.c.b16 %v847, %v843
  %1232 = vmatprep.subr.bf16.mxu0 %v877
  %1233 = vmatpush1.bf16.msra.mxu0 %v876
  %1234 = vmatprep.subr.bf16.mxu0 %v873
  %1235 = vmatpush1.bf16.msra.mxu0 %v872
  %1236 = vmatprep.subr.bf16.mxu0 %v869
  %1237 = vmatpush1.bf16.msra.mxu0 %v868
  %1238 = vmatprep.subr.bf16.mxu0 %v865
  %1239 = vmatpush1.bf16.msra.mxu0 %v864
  %1240 = vmatprep.subr.bf16.mxu0 %v861
  %1241 = vmatpush1.bf16.msra.mxu0 %v860
  %1242 = vmatprep.subr.bf16.mxu0 %v857
  %1243 = vmatpush1.bf16.msra.mxu0 %v856
  %1244 = vmatprep.subr.bf16.mxu0 %v853
  %1245 = vmatpush1.bf16.msra.mxu0 %v852
  %1246 = vmatprep.subr.bf16.mxu0 %v849
  %1247 = vmatpush1.bf16.msra.mxu0 %v848
  %1248 = vmatprep.subr.bf16.mxu0 %v909
  %1249 = vmatpush2.bf16.msra.mxu0 %v908
  %1250 = vmatprep.subr.bf16.mxu0 %v905
  %1251 = vmatpush2.bf16.msra.mxu0 %v904
  %1252 = vmatprep.subr.bf16.mxu0 %v901
  %1253 = vmatpush2.bf16.msra.mxu0 %v900
  %1254 = vmatprep.subr.bf16.mxu0 %v897
  %1255 = vmatpush2.bf16.msra.mxu0 %v896
  %1256 = vmatprep.subr.bf16.mxu0 %v893
  %1257 = vmatpush2.bf16.msra.mxu0 %v892
  %1258 = vmatprep.subr.bf16.mxu0 %v889
  %1259 = vmatpush2.bf16.msra.mxu0 %v888
  %1260 = vmatprep.subr.bf16.mxu0 %v885
  %1261 = vmatpush2.bf16.msra.mxu0 %v884
  %1262 = vmatprep.subr.bf16.mxu0 %v881
  %1263 = vmatpush2.bf16.msra.mxu0 %v880
  %1264 = vmatprep.mubr.bf16.mxu0 %v256
  %1265 = vmatmul.mubr.bf16.gmra.mxu0 %v248
  %v1266 = vpop.f32.mrf.mxu0
  %v1267 = vadd.f32 %v222, %v1266
  %v1268 = vpop.f32.mrf.mxu0
  %v1269 = vadd.f32 %v226, %v1268
  %v1270 = vpop.f32.mrf.mxu0
  %v1271 = vpop.f32.mrf.mxu0
  %1272 = vdwg.mxu0
  %1273 = vmatprep.subr.bf16.mxu0 %v941
  %1274 = vmatpush1.bf16.msra.mxu0 %v940
  %1275 = vmatprep.subr.bf16.mxu0 %v937
  %1276 = vmatpush1.bf16.msra.mxu0 %v936
  %1277 = vmatprep.subr.bf16.mxu0 %v933
  %1278 = vmatpush1.bf16.msra.mxu0 %v932
  %1279 = vmatprep.subr.bf16.mxu0 %v929
  %1280 = vmatpush1.bf16.msra.mxu0 %v928
  %1281 = vmatprep.subr.bf16.mxu0 %v925
  %1282 = vmatpush1.bf16.msra.mxu0 %v924
  %1283 = vmatprep.subr.bf16.mxu0 %v921
  %1284 = vmatpush1.bf16.msra.mxu0 %v920
  %1285 = vmatprep.subr.bf16.mxu0 %v917
  %1286 = vmatpush1.bf16.msra.mxu0 %v916
  %1287 = vmatprep.subr.bf16.mxu0 %v913
  %1288 = vmatpush1.bf16.msra.mxu0 %v912
  %1289 = vmatprep.subr.bf16.mxu0 %v973
  %1290 = vmatpush2.bf16.msra.mxu0 %v972
  %1291 = vmatprep.subr.bf16.mxu0 %v969
  %1292 = vmatpush2.bf16.msra.mxu0 %v968
  %1293 = vmatprep.subr.bf16.mxu0 %v965
  %1294 = vmatpush2.bf16.msra.mxu0 %v964
  %1295 = vmatprep.subr.bf16.mxu0 %v961
  %1296 = vmatpush2.bf16.msra.mxu0 %v960
  %1297 = vmatprep.subr.bf16.mxu0 %v957
  %1298 = vmatpush2.bf16.msra.mxu0 %v956
  %1299 = vmatprep.subr.bf16.mxu0 %v953
  %1300 = vmatpush2.bf16.msra.mxu0 %v952
  %1301 = vmatprep.subr.bf16.mxu0 %v949
  %1302 = vmatpush2.bf16.msra.mxu0 %v948
  %1303 = vmatprep.subr.bf16.mxu0 %v945
  %1304 = vmatpush2.bf16.msra.mxu0 %v944
  %1305 = vmatprep.mubr.bf16.mxu0 %v257
  %1306 = vmatmul.mubr.bf16.gmra.mxu0 %v255
  %v1307 = vpop.f32.mrf.mxu0
  %v1308 = vadd.f32 %v1267, %v1307
  %v1309 = vpop.f32.mrf.mxu0
  %v1310 = vadd.f32 %v1269, %v1309
  %v1311 = vpop.f32.mrf.mxu0
  %v1312 = vpop.f32.mrf.mxu0
  %1313 = vdwg.mxu0
  %1314 = vmatprep.subr.bf16.mxu0 %v1005
  %1315 = vmatpush1.bf16.msra.mxu0 %v1004
  %1316 = vmatprep.subr.bf16.mxu0 %v1001
  %1317 = vmatpush1.bf16.msra.mxu0 %v1000
  %1318 = vmatprep.subr.bf16.mxu0 %v997
  %1319 = vmatpush1.bf16.msra.mxu0 %v996
  %1320 = vmatprep.subr.bf16.mxu0 %v993
  %1321 = vmatpush1.bf16.msra.mxu0 %v992
  %1322 = vmatprep.subr.bf16.mxu0 %v989
  %1323 = vmatpush1.bf16.msra.mxu0 %v988
  %1324 = vmatprep.subr.bf16.mxu0 %v985
  %1325 = vmatpush1.bf16.msra.mxu0 %v984
  %1326 = vmatprep.subr.bf16.mxu0 %v981
  %1327 = vmatpush1.bf16.msra.mxu0 %v980
  %1328 = vmatprep.subr.bf16.mxu0 %v977
  %1329 = vmatpush1.bf16.msra.mxu0 %v976
  %1330 = vmatprep.subr.bf16.mxu0 %v1037
  %1331 = vmatpush2.bf16.msra.mxu0 %v1036
  %1332 = vmatprep.subr.bf16.mxu0 %v1033
  %1333 = vmatpush2.bf16.msra.mxu0 %v1032
  %1334 = vmatprep.subr.bf16.mxu0 %v1029
  %1335 = vmatpush2.bf16.msra.mxu0 %v1028
  %1336 = vmatprep.subr.bf16.mxu0 %v1025
  %1337 = vmatpush2.bf16.msra.mxu0 %v1024
  %1338 = vmatprep.subr.bf16.mxu0 %v1021
  %1339 = vmatpush2.bf16.msra.mxu0 %v1020
  %1340 = vmatprep.subr.bf16.mxu0 %v1017
  %1341 = vmatpush2.bf16.msra.mxu0 %v1016
  %1342 = vmatprep.subr.bf16.mxu0 %v1013
  %1343 = vmatpush2.bf16.msra.mxu0 %v1012
  %1344 = vmatprep.subr.bf16.mxu0 %v1009
  %1345 = vmatpush2.bf16.msra.mxu0 %v1008
  %1346 = vmatprep.mubr.bf16.mxu0 %v265
  %1347 = vmatmul.mubr.bf16.gmra.mxu0 %v264
  %v1348 = vpop.f32.mrf.mxu0
  %v1349 = vadd.f32 %v1308, %v1348
  %v1350 = vpop.f32.mrf.mxu0
  %v1351 = vadd.f32 %v1310, %v1350
  %v1352 = vpop.f32.mrf.mxu0
  %v1353 = vpop.f32.mrf.mxu0
  %1354 = vdwg.mxu0
  %1355 = vmatprep.subr.bf16.mxu0 %v879
  %1356 = vmatpush1.bf16.msra.mxu0 %v878
  %1357 = vmatprep.subr.bf16.mxu0 %v875
  %1358 = vmatpush1.bf16.msra.mxu0 %v874
  %1359 = vmatprep.subr.bf16.mxu0 %v871
  %1360 = vmatpush1.bf16.msra.mxu0 %v870
  %1361 = vmatprep.subr.bf16.mxu0 %v867
  %1362 = vmatpush1.bf16.msra.mxu0 %v866
  %1363 = vmatprep.subr.bf16.mxu0 %v863
  %1364 = vmatpush1.bf16.msra.mxu0 %v862
  %1365 = vmatprep.subr.bf16.mxu0 %v859
  %1366 = vmatpush1.bf16.msra.mxu0 %v858
  %1367 = vmatprep.subr.bf16.mxu0 %v855
  %1368 = vmatpush1.bf16.msra.mxu0 %v854
  %1369 = vmatprep.subr.bf16.mxu0 %v851
  %1370 = vmatpush1.bf16.msra.mxu0 %v850
  %1371 = vmatprep.subr.bf16.mxu0 %v911
  %1372 = vmatpush2.bf16.msra.mxu0 %v910
  %1373 = vmatprep.subr.bf16.mxu0 %v907
  %1374 = vmatpush2.bf16.msra.mxu0 %v906
  %1375 = vmatprep.subr.bf16.mxu0 %v903
  %1376 = vmatpush2.bf16.msra.mxu0 %v902
  %1377 = vmatprep.subr.bf16.mxu0 %v899
  %1378 = vmatpush2.bf16.msra.mxu0 %v898
  %1379 = vmatprep.subr.bf16.mxu0 %v895
  %1380 = vmatpush2.bf16.msra.mxu0 %v894
  %1381 = vmatprep.subr.bf16.mxu0 %v891
  %1382 = vmatpush2.bf16.msra.mxu0 %v890
  %1383 = vmatprep.subr.bf16.mxu0 %v887
  %1384 = vmatpush2.bf16.msra.mxu0 %v886
  %1385 = vmatprep.subr.bf16.mxu0 %v883
  %1386 = vmatpush2.bf16.msra.mxu0 %v882
  %1387 = vmatprep.mubr.bf16.mxu0 %v256
  %1388 = vmatmul.mubr.bf16.gmra.mxu0 %v248
  %v1389 = vpop.f32.mrf.mxu0
  %v1390 = vadd.f32 %v230, %v1389
  %v1391 = vpop.f32.mrf.mxu0
  %v1392 = vadd.f32 %v234, %v1391
  %v1393 = vpop.f32.mrf.mxu0
  %v1394 = vpop.f32.mrf.mxu0
  %1395 = vdwg.mxu0
  %1396 = vmatprep.subr.bf16.mxu0 %v943
  %1397 = vmatpush1.bf16.msra.mxu0 %v942
  %1398 = vmatprep.subr.bf16.mxu0 %v939
  %1399 = vmatpush1.bf16.msra.mxu0 %v938
  %1400 = vmatprep.subr.bf16.mxu0 %v935
  %1401 = vmatpush1.bf16.msra.mxu0 %v934
  %1402 = vmatprep.subr.bf16.mxu0 %v931
  %1403 = vmatpush1.bf16.msra.mxu0 %v930
  %1404 = vmatprep.subr.bf16.mxu0 %v927
  %1405 = vmatpush1.bf16.msra.mxu0 %v926
  %1406 = vmatprep.subr.bf16.mxu0 %v923
  %1407 = vmatpush1.bf16.msra.mxu0 %v922
  %1408 = vmatprep.subr.bf16.mxu0 %v919
  %1409 = vmatpush1.bf16.msra.mxu0 %v918
  %1410 = vmatprep.subr.bf16.mxu0 %v915
  %1411 = vmatpush1.bf16.msra.mxu0 %v914
  %1412 = vmatprep.subr.bf16.mxu0 %v975
  %1413 = vmatpush2.bf16.msra.mxu0 %v974
  %1414 = vmatprep.subr.bf16.mxu0 %v971
  %1415 = vmatpush2.bf16.msra.mxu0 %v970
  %1416 = vmatprep.subr.bf16.mxu0 %v967
  %1417 = vmatpush2.bf16.msra.mxu0 %v966
  %1418 = vmatprep.subr.bf16.mxu0 %v963
  %1419 = vmatpush2.bf16.msra.mxu0 %v962
  %1420 = vmatprep.subr.bf16.mxu0 %v959
  %1421 = vmatpush2.bf16.msra.mxu0 %v958
  %1422 = vmatprep.subr.bf16.mxu0 %v955
  %1423 = vmatpush2.bf16.msra.mxu0 %v954
  %1424 = vmatprep.subr.bf16.mxu0 %v951
  %1425 = vmatpush2.bf16.msra.mxu0 %v950
  %1426 = vmatprep.subr.bf16.mxu0 %v947
  %1427 = vmatpush2.bf16.msra.mxu0 %v946
  %1428 = vmatprep.mubr.bf16.mxu0 %v257
  %1429 = vmatmul.mubr.bf16.gmra.mxu0 %v255
  %v1430 = vpop.f32.mrf.mxu0
  %v1431 = vadd.f32 %v1390, %v1430
  %v1432 = vpop.f32.mrf.mxu0
  %v1433 = vadd.f32 %v1392, %v1432
  %v1434 = vpop.f32.mrf.mxu0
  %v1435 = vpop.f32.mrf.mxu0
  %1436 = vdwg.mxu0
  %1437 = vmatprep.subr.bf16.mxu0 %v1007
  %1438 = vmatpush1.bf16.msra.mxu0 %v1006
  %1439 = vmatprep.subr.bf16.mxu0 %v1003
  %1440 = vmatpush1.bf16.msra.mxu0 %v1002
  %1441 = vmatprep.subr.bf16.mxu0 %v999
  %1442 = vmatpush1.bf16.msra.mxu0 %v998
  %1443 = vmatprep.subr.bf16.mxu0 %v995
  %1444 = vmatpush1.bf16.msra.mxu0 %v994
  %1445 = vmatprep.subr.bf16.mxu0 %v991
  %1446 = vmatpush1.bf16.msra.mxu0 %v990
  %1447 = vmatprep.subr.bf16.mxu0 %v987
  %1448 = vmatpush1.bf16.msra.mxu0 %v986
  %1449 = vmatprep.subr.bf16.mxu0 %v983
  %1450 = vmatpush1.bf16.msra.mxu0 %v982
  %1451 = vmatprep.subr.bf16.mxu0 %v979
  %1452 = vmatpush1.bf16.msra.mxu0 %v978
  %1453 = vmatprep.subr.bf16.mxu0 %v1039
  %1454 = vmatpush2.bf16.msra.mxu0 %v1038
  %1455 = vmatprep.subr.bf16.mxu0 %v1035
  %1456 = vmatpush2.bf16.msra.mxu0 %v1034
  %1457 = vmatprep.subr.bf16.mxu0 %v1031
  %1458 = vmatpush2.bf16.msra.mxu0 %v1030
  %1459 = vmatprep.subr.bf16.mxu0 %v1027
  %1460 = vmatpush2.bf16.msra.mxu0 %v1026
  %1461 = vmatprep.subr.bf16.mxu0 %v1023
  %1462 = vmatpush2.bf16.msra.mxu0 %v1022
  %1463 = vmatprep.subr.bf16.mxu0 %v1019
  %1464 = vmatpush2.bf16.msra.mxu0 %v1018
  %1465 = vmatprep.subr.bf16.mxu0 %v1015
  %1466 = vmatpush2.bf16.msra.mxu0 %v1014
  %1467 = vmatprep.subr.bf16.mxu0 %v1011
  %1468 = vmatpush2.bf16.msra.mxu0 %v1010
  %1469 = vmatprep.mubr.bf16.mxu0 %v265
  %1470 = vmatmul.mubr.bf16.gmra.mxu0 %v264
  %v1471 = vpop.f32.mrf.mxu0
  %v1472 = vadd.f32 %v1431, %v1471
  %v1473 = vpop.f32.mrf.mxu0
  %v1474 = vadd.f32 %v1433, %v1473
  %v1475 = vpop.f32.mrf.mxu0
  %v1476 = vpop.f32.mrf.mxu0
  %1477 = vdwg.mxu0
  %v1482 = vcombine.low %v1349, %v1351
  %v1483 = vcombine.low %v1472, %v1474
  %1486 = vst [vmem:[#allocation4] sm:$0xff] %v1482
  %1487 = vst [vmem:[#allocation4 + $0x8] sm:$0xff] %v1483
  %s1488 = scalar_lea.vmem %s0, 12
  %v1489 = vld [vmem:[%s1488] sm:$0xff]
  %v1490 = vld [vmem:[%s1488 + $0x8] sm:$0xf]
  %v1491 = vld [vmem:[%s1] sm:$0xff]
  %v1492 = vld [vmem:[%s1 + $0x8] sm:$0xff]
  %v1493 = vld [vmem:[%s1 + $0x10] sm:$0xff]
  %v1494 = vld [vmem:[%s1 + $0x18] sm:$0xff]
  %v1495 = vld [vmem:[%s1 + $0x20] sm:$0xff]
  %v1496 = vld [vmem:[%s1 + $0x28] sm:$0xff]
  %v1497 = vld [vmem:[%s1 + $0x30] sm:$0xff]
  %v1498 = vld [vmem:[%s1 + $0x38] sm:$0xff]
  %v1499 = vld [vmem:[%s1 + $0x40] sm:$0xff]
  %v1500 = vld [vmem:[%s1 + $0x48] sm:$0xff]
  %v1501 = vld [vmem:[%s1 + $0x50] sm:$0xff]
  %v1502 = vld [vmem:[%s1 + $0x58] sm:$0xff]
  %v1503 = vld [vmem:[%s1 + $0x60] sm:$0xff]
  %v1504 = vld [vmem:[%s1 + $0x68] sm:$0xff]
  %v1505 = vld [vmem:[%s1 + $0x70] sm:$0xff]
  %v1506 = vld [vmem:[%s1 + $0x78] sm:$0xff]
  %v1507 = vld [vmem:[%s1 + $0x80] sm:$0xff]
  %v1508 = vld [vmem:[%s1 + $0x88] sm:$0xff]
  %v1509 = vld [vmem:[%s1 + $0x90] sm:$0xff]
  %v1510 = vld [vmem:[%s1 + $0x98] sm:$0xff]
  %v1511 = vld [vmem:[%s1 + $0xa0] sm:$0xff]
  %v1512 = vld [vmem:[%s1 + $0xa8] sm:$0xff]
  %v1513 = vld [vmem:[%s1 + $0xb0] sm:$0xff]
  %v1514 = vld [vmem:[%s1 + $0xb8] sm:$0xff]
  %v1515 = vld [vmem:[%s1 + $0xc0] sm:$0xff]
  %v1516 = vld [vmem:[%s1 + $0xc8] sm:$0xff]
  %v1517 = vld [vmem:[%s1 + $0xd0] sm:$0xff]
  %v1518 = vld [vmem:[%s1 + $0xd8] sm:$0xff]
  %v1519 = vld [vmem:[%s1 + $0xe0] sm:$0xff]
  %v1520 = vld [vmem:[%s1 + $0xe8] sm:$0xff]
  %v1521 = vld [vmem:[%s1 + $0xf0] sm:$0xff]
  %v1522 = vld [vmem:[%s1 + $0xf8] sm:$0xff]
  %v1523 = vld [vmem:[%s1 + $0x100] sm:$0xff]
  %v1524 = vld [vmem:[%s1 + $0x108] sm:$0xff]
  %v1525 = vld [vmem:[%s1 + $0x110] sm:$0xff]
  %v1526 = vld [vmem:[%s1 + $0x118] sm:$0xff]
  %v1527 = vld [vmem:[%s1 + $0x120] sm:$0xff]
  %v1528 = vld [vmem:[%s1 + $0x128] sm:$0xff]
  %v1529 = vld [vmem:[%s1 + $0x130] sm:$0xff]
  %v1530 = vld [vmem:[%s1 + $0x138] sm:$0xff]
  %v1531 = vld [vmem:[%s1 + $0x140] sm:$0xff]
  %v1532 = vld [vmem:[%s1 + $0x148] sm:$0xff]
  %v1533 = vld [vmem:[%s1 + $0x150] sm:$0xff]
  %v1534 = vld [vmem:[%s1 + $0x158] sm:$0xff]
  %v1535 = vld [vmem:[%s1 + $0x160] sm:$0xff]
  %v1536 = vld [vmem:[%s1 + $0x168] sm:$0xff]
  %v1537 = vld [vmem:[%s1 + $0x170] sm:$0xff]
  %v1538 = vld [vmem:[%s1 + $0x178] sm:$0xff]
  %v1539 = vld [vmem:[%s1 + $0x180] sm:$0xff]
  %v1540 = vld [vmem:[%s1 + $0x188] sm:$0xff]
  %v1541 = vld [vmem:[%s1 + $0x190] sm:$0xff]
  %v1542 = vld [vmem:[%s1 + $0x198] sm:$0xff]
  %v1543 = vld [vmem:[%s1 + $0x1a0] sm:$0xff]
  %v1544 = vld [vmem:[%s1 + $0x1a8] sm:$0xff]
  %v1545 = vld [vmem:[%s1 + $0x1b0] sm:$0xff]
  %v1546 = vld [vmem:[%s1 + $0x1b8] sm:$0xff]
  %v1547 = vld [vmem:[%s1 + $0x1c0] sm:$0xff]
  %v1548 = vld [vmem:[%s1 + $0x1c8] sm:$0xff]
  %v1549 = vld [vmem:[%s1 + $0x1d0] sm:$0xff]
  %v1550 = vld [vmem:[%s1 + $0x1d8] sm:$0xff]
  %v1551 = vld [vmem:[%s1 + $0x1e0] sm:$0xff]
  %v1552 = vld [vmem:[%s1 + $0x1e8] sm:$0xff]
  %v1553 = vld [vmem:[%s1 + $0x1f0] sm:$0xff]
  %v1554 = vld [vmem:[%s1 + $0x1f8] sm:$0xff]
  %v1555 = vld [vmem:[%s1 + $0x200] sm:$0xff]
  %v1556 = vld [vmem:[%s1 + $0x208] sm:$0xff]
  %v1557 = vld [vmem:[%s1 + $0x210] sm:$0xff]
  %v1558 = vld [vmem:[%s1 + $0x218] sm:$0xff]
  %v1559 = vld [vmem:[%s1 + $0x220] sm:$0xff]
  %v1560 = vld [vmem:[%s1 + $0x228] sm:$0xff]
  %v1561 = vld [vmem:[%s1 + $0x230] sm:$0xff]
  %v1562 = vld [vmem:[%s1 + $0x238] sm:$0xff]
  %v1563 = vld [vmem:[%s1 + $0x240] sm:$0xff]
  %v1564 = vld [vmem:[%s1 + $0x248] sm:$0xff]
  %v1565 = vld [vmem:[%s1 + $0x250] sm:$0xff]
  %v1566 = vld [vmem:[%s1 + $0x258] sm:$0xff]
  %v1567 = vld [vmem:[%s1 + $0x260] sm:$0xff]
  %v1568 = vld [vmem:[%s1 + $0x268] sm:$0xff]
  %v1569 = vld [vmem:[%s1 + $0x270] sm:$0xff]
  %v1570 = vld [vmem:[%s1 + $0x278] sm:$0xff]
  %v1571 = vld [vmem:[%s1 + $0x280] sm:$0xff]
  %v1572 = vld [vmem:[%s1 + $0x288] sm:$0xff]
  %v1573 = vld [vmem:[%s1 + $0x290] sm:$0xff]
  %v1574 = vld [vmem:[%s1 + $0x298] sm:$0xff]
  %v1575 = vld [vmem:[%s1 + $0x2a0] sm:$0xff]
  %v1576 = vld [vmem:[%s1 + $0x2a8] sm:$0xff]
  %v1577 = vld [vmem:[%s1 + $0x2b0] sm:$0xff]
  %v1578 = vld [vmem:[%s1 + $0x2b8] sm:$0xff]
  %v1579 = vld [vmem:[%s1 + $0x2c0] sm:$0xff]
  %v1580 = vld [vmem:[%s1 + $0x2c8] sm:$0xff]
  %v1581 = vld [vmem:[%s1 + $0x2d0] sm:$0xff]
  %v1582 = vld [vmem:[%s1 + $0x2d8] sm:$0xff]
  %v1583 = vld [vmem:[%s1 + $0x2e0] sm:$0xff]
  %v1584 = vld [vmem:[%s1 + $0x2e8] sm:$0xff]
  %v1585 = vld [vmem:[%s1 + $0x2f0] sm:$0xff]
  %v1586 = vld [vmem:[%s1 + $0x2f8] sm:$0xff]
  %v1587 = vld [vmem:[%s1 + $0x300] sm:$0xff]
  %v1588 = vld [vmem:[%s1 + $0x308] sm:$0xff]
  %v1589 = vld [vmem:[%s1 + $0x310] sm:$0xff]
  %v1590 = vld [vmem:[%s1 + $0x318] sm:$0xff]
  %v1591 = vld [vmem:[%s1 + $0x320] sm:$0xff]
  %v1592 = vld [vmem:[%s1 + $0x328] sm:$0xff]
  %v1593 = vld [vmem:[%s1 + $0x330] sm:$0xff]
  %v1594 = vld [vmem:[%s1 + $0x338] sm:$0xff]
  %v1595 = vld [vmem:[%s1 + $0x340] sm:$0xff]
  %v1596 = vld [vmem:[%s1 + $0x348] sm:$0xff]
  %v1597 = vld [vmem:[%s1 + $0x350] sm:$0xff]
  %v1598 = vld [vmem:[%s1 + $0x358] sm:$0xff]
  %v1599 = vld [vmem:[%s1 + $0x360] sm:$0xff]
  %v1600 = vld [vmem:[%s1 + $0x368] sm:$0xff]
  %v1601 = vld [vmem:[%s1 + $0x370] sm:$0xff]
  %v1602 = vld [vmem:[%s1 + $0x378] sm:$0xff]
  %v1603 = vld [vmem:[%s1 + $0x380] sm:$0xff]
  %v1604 = vld [vmem:[%s1 + $0x388] sm:$0xff]
  %v1605 = vld [vmem:[%s1 + $0x390] sm:$0xff]
  %v1606 = vld [vmem:[%s1 + $0x398] sm:$0xff]
  %v1607 = vld [vmem:[%s1 + $0x3a0] sm:$0xff]
  %v1608 = vld [vmem:[%s1 + $0x3a8] sm:$0xff]
  %v1609 = vld [vmem:[%s1 + $0x3b0] sm:$0xff]
  %v1610 = vld [vmem:[%s1 + $0x3b8] sm:$0xff]
  %v1611 = vld [vmem:[%s1 + $0x3c0] sm:$0xff]
  %v1612 = vld [vmem:[%s1 + $0x3c8] sm:$0xff]
  %v1613 = vld [vmem:[%s1 + $0x3d0] sm:$0xff]
  %v1614 = vld [vmem:[%s1 + $0x3d8] sm:$0xff]
  %v1615 = vld [vmem:[%s1 + $0x3e0] sm:$0xff]
  %v1616 = vld [vmem:[%s1 + $0x3e8] sm:$0xff]
  %v1617 = vld [vmem:[%s1 + $0x3f0] sm:$0xff]
  %v1618 = vld [vmem:[%s1 + $0x3f8] sm:$0xff]
  %v1619 = vld [vmem:[%s1 + $0x400] sm:$0xff]
  %v1620 = vld [vmem:[%s1 + $0x408] sm:$0xff]
  %v1621 = vld [vmem:[%s1 + $0x410] sm:$0xff]
  %v1622 = vld [vmem:[%s1 + $0x418] sm:$0xff]
  %v1623 = vld [vmem:[%s1 + $0x420] sm:$0xff]
  %v1624 = vld [vmem:[%s1 + $0x428] sm:$0xff]
  %v1625 = vld [vmem:[%s1 + $0x430] sm:$0xff]
  %v1626 = vld [vmem:[%s1 + $0x438] sm:$0xff]
  %v1627 = vld [vmem:[%s1 + $0x440] sm:$0xff]
  %v1628 = vld [vmem:[%s1 + $0x448] sm:$0xff]
  %v1629 = vld [vmem:[%s1 + $0x450] sm:$0xff]
  %v1630 = vld [vmem:[%s1 + $0x458] sm:$0xff]
  %v1631 = vld [vmem:[%s1 + $0x460] sm:$0xff]
  %v1632 = vld [vmem:[%s1 + $0x468] sm:$0xff]
  %v1633 = vld [vmem:[%s1 + $0x470] sm:$0xff]
  %v1634 = vld [vmem:[%s1 + $0x478] sm:$0xff]
  %v1635 = vld [vmem:[%s1 + $0x480] sm:$0xff]
  %v1636 = vld [vmem:[%s1 + $0x488] sm:$0xff]
  %v1637 = vld [vmem:[%s1 + $0x490] sm:$0xff]
  %v1638 = vld [vmem:[%s1 + $0x498] sm:$0xff]
  %v1639 = vld [vmem:[%s1 + $0x4a0] sm:$0xff]
  %v1640 = vld [vmem:[%s1 + $0x4a8] sm:$0xff]
  %v1641 = vld [vmem:[%s1 + $0x4b0] sm:$0xff]
  %v1642 = vld [vmem:[%s1 + $0x4b8] sm:$0xff]
  %v1643 = vld [vmem:[%s1 + $0x4c0] sm:$0xff]
  %v1644 = vld [vmem:[%s1 + $0x4c8] sm:$0xff]
  %v1645 = vld [vmem:[%s1 + $0x4d0] sm:$0xff]
  %v1646 = vld [vmem:[%s1 + $0x4d8] sm:$0xff]
  %v1647 = vld [vmem:[%s1 + $0x4e0] sm:$0xff]
  %v1648 = vld [vmem:[%s1 + $0x4e8] sm:$0xff]
  %v1649 = vld [vmem:[%s1 + $0x4f0] sm:$0xff]
  %v1650 = vld [vmem:[%s1 + $0x4f8] sm:$0xff]
  %v1651 = vld [vmem:[%s1 + $0x500] sm:$0xff]
  %v1652 = vld [vmem:[%s1 + $0x508] sm:$0xff]
  %v1653 = vld [vmem:[%s1 + $0x510] sm:$0xff]
  %v1654 = vld [vmem:[%s1 + $0x518] sm:$0xff]
  %v1655 = vld [vmem:[%s1 + $0x520] sm:$0xff]
  %v1656 = vld [vmem:[%s1 + $0x528] sm:$0xff]
  %v1657 = vld [vmem:[%s1 + $0x530] sm:$0xff]
  %v1658 = vld [vmem:[%s1 + $0x538] sm:$0xff]
  %v1659 = vld [vmem:[%s1 + $0x540] sm:$0xff]
  %v1660 = vld [vmem:[%s1 + $0x548] sm:$0xff]
  %v1661 = vld [vmem:[%s1 + $0x550] sm:$0xff]
  %v1662 = vld [vmem:[%s1 + $0x558] sm:$0xff]
  %v1663 = vld [vmem:[%s1 + $0x560] sm:$0xff]
  %v1664 = vld [vmem:[%s1 + $0x568] sm:$0xff]
  %v1665 = vld [vmem:[%s1 + $0x570] sm:$0xff]
  %v1666 = vld [vmem:[%s1 + $0x578] sm:$0xff]
  %v1667 = vld [vmem:[%s1 + $0x580] sm:$0xff]
  %v1668 = vld [vmem:[%s1 + $0x588] sm:$0xff]
  %v1669 = vld [vmem:[%s1 + $0x590] sm:$0xff]
  %v1670 = vld [vmem:[%s1 + $0x598] sm:$0xff]
  %v1671 = vld [vmem:[%s1 + $0x5a0] sm:$0xff]
  %v1672 = vld [vmem:[%s1 + $0x5a8] sm:$0xff]
  %v1673 = vld [vmem:[%s1 + $0x5b0] sm:$0xff]
  %v1674 = vld [vmem:[%s1 + $0x5b8] sm:$0xff]
  %v1675 = vld [vmem:[%s1 + $0x5c0] sm:$0xff]
  %v1676 = vld [vmem:[%s1 + $0x5c8] sm:$0xff]
  %v1677 = vld [vmem:[%s1 + $0x5d0] sm:$0xff]
  %v1678 = vld [vmem:[%s1 + $0x5d8] sm:$0xff]
  %v1679 = vld [vmem:[%s1 + $0x5e0] sm:$0xff]
  %v1680 = vld [vmem:[%s1 + $0x5e8] sm:$0xff]
  %v1681 = vld [vmem:[%s1 + $0x5f0] sm:$0xff]
  %v1682 = vld [vmem:[%s1 + $0x5f8] sm:$0xff]
  %v1683 = vld [vmem:[%s3] sm:$0xf]
  %v1685 = vlaneseq
  %v1686 = vshrl.u32 %v1685, 7
  %v1687 = vsub.s32 0, %v1686
  %v1688 = vrot.slane %v1683, %v1687
  %v1689 = vlaneseq
  %v1690 = vshrl.u32 %v1689, 7
  %v1691 = vsub.s32 1, %v1690
  %v1692 = vrot.slane %v1683, %v1691
  %v1693 = vlaneseq
  %v1694 = vshrl.u32 %v1693, 7
  %v1695 = vsub.s32 2, %v1694
  %v1696 = vrot.slane %v1683, %v1695
  %v1697 = vlaneseq
  %v1698 = vshrl.u32 %v1697, 7
  %v1699 = vsub.s32 3, %v1698
  %v1700 = vrot.slane %v1683, %v1699
  %v1707 = vcombine.high %v1489, %v1489
  %v1709 = vunpack.c.l.s4 1983009808
  %v1710 = vunpack.c.0.s8 %v1709
  %v1711 = vlaneseq
  %v1712 = vshrl.u32 %v1711, 7
  %v1713 = vsub.s32 %v1710, %v1712
  %v1714 = vrot.slane %v1489, %v1713
  %v1716 = vunpack.c.l.s4 1983009808
  %v1717 = vunpack.c.0.s8 %v1716
  %v1718 = vlaneseq
  %v1719 = vshrl.u32 %v1718, 7
  %v1720 = vsub.s32 %v1717, %v1719
  %v1721 = vrot.slane %v1707, %v1720
  %v1722 = vcombine.high %v1714, %v1714
  %v1723 = vcombine.high %v1721, %v1721
  %v1725 = vunpack.c.l.s4 1983009808
  %v1726 = vunpack.c.0.s8 %v1725
  %v1727 = vlaneseq
  %v1728 = vshrl.u32 %v1727, 7
  %v1729 = vsub.s32 %v1726, %v1728
  %v1730 = vrot.slane %v1490, %v1729
  %v1731 = vcombine.high %v1730, %v1730
  %v1930 = vunpack.c.l.b16 %v1491
  %v1931 = vunpack.c.h.b16 %v1491
  %v1932 = vunpack.c.l.b16 %v1492
  %v1933 = vunpack.c.h.b16 %v1492
  %v1934 = vunpack.c.l.b16 %v1493
  %v1935 = vunpack.c.h.b16 %v1493
  %v1936 = vunpack.c.l.b16 %v1494
  %v1937 = vunpack.c.h.b16 %v1494
  %v1938 = vunpack.c.l.b16 %v1495
  %v1939 = vunpack.c.h.b16 %v1495
  %v1940 = vunpack.c.l.b16 %v1496
  %v1941 = vunpack.c.h.b16 %v1496
  %v1942 = vunpack.c.l.b16 %v1497
  %v1943 = vunpack.c.h.b16 %v1497
  %v1944 = vunpack.c.l.b16 %v1498
  %v1945 = vunpack.c.h.b16 %v1498
  %v1946 = vunpack.c.l.b16 %v1499
  %v1947 = vunpack.c.h.b16 %v1499
  %v1948 = vunpack.c.l.b16 %v1500
  %v1949 = vunpack.c.h.b16 %v1500
  %v1950 = vunpack.c.l.b16 %v1501
  %v1951 = vunpack.c.h.b16 %v1501
  %v1952 = vunpack.c.l.b16 %v1502
  %v1953 = vunpack.c.h.b16 %v1502
  %v1954 = vunpack.c.l.b16 %v1503
  %v1955 = vunpack.c.h.b16 %v1503
  %v1956 = vunpack.c.l.b16 %v1504
  %v1957 = vunpack.c.h.b16 %v1504
  %v1958 = vunpack.c.l.b16 %v1505
  %v1959 = vunpack.c.h.b16 %v1505
  %v1960 = vunpack.c.l.b16 %v1506
  %v1961 = vunpack.c.h.b16 %v1506
  %v1962 = vunpack.c.l.b16 %v1507
  %v1963 = vunpack.c.h.b16 %v1507
  %v1964 = vunpack.c.l.b16 %v1508
  %v1965 = vunpack.c.h.b16 %v1508
  %v1966 = vunpack.c.l.b16 %v1509
  %v1967 = vunpack.c.h.b16 %v1509
  %v1968 = vunpack.c.l.b16 %v1510
  %v1969 = vunpack.c.h.b16 %v1510
  %v1970 = vunpack.c.l.b16 %v1511
  %v1971 = vunpack.c.h.b16 %v1511
  %v1972 = vunpack.c.l.b16 %v1512
  %v1973 = vunpack.c.h.b16 %v1512
  %v1974 = vunpack.c.l.b16 %v1513
  %v1975 = vunpack.c.h.b16 %v1513
  %v1976 = vunpack.c.l.b16 %v1514
  %v1977 = vunpack.c.h.b16 %v1514
  %v1978 = vunpack.c.l.b16 %v1515
  %v1979 = vunpack.c.h.b16 %v1515
  %v1980 = vunpack.c.l.b16 %v1516
  %v1981 = vunpack.c.h.b16 %v1516
  %v1982 = vunpack.c.l.b16 %v1517
  %v1983 = vunpack.c.h.b16 %v1517
  %v1984 = vunpack.c.l.b16 %v1518
  %v1985 = vunpack.c.h.b16 %v1518
  %v1986 = vunpack.c.l.b16 %v1519
  %v1987 = vunpack.c.h.b16 %v1519
  %v1988 = vunpack.c.l.b16 %v1520
  %v1989 = vunpack.c.h.b16 %v1520
  %v1990 = vunpack.c.l.b16 %v1521
  %v1991 = vunpack.c.h.b16 %v1521
  %v1992 = vunpack.c.l.b16 %v1522
  %v1993 = vunpack.c.h.b16 %v1522
  %v1994 = vunpack.c.l.b16 %v1523
  %v1995 = vunpack.c.h.b16 %v1523
  %v1996 = vunpack.c.l.b16 %v1524
  %v1997 = vunpack.c.h.b16 %v1524
  %v1998 = vunpack.c.l.b16 %v1525
  %v1999 = vunpack.c.h.b16 %v1525
  %v2000 = vunpack.c.l.b16 %v1526
  %v2001 = vunpack.c.h.b16 %v1526
  %v2002 = vunpack.c.l.b16 %v1527
  %v2003 = vunpack.c.h.b16 %v1527
  %v2004 = vunpack.c.l.b16 %v1528
  %v2005 = vunpack.c.h.b16 %v1528
  %v2006 = vunpack.c.l.b16 %v1529
  %v2007 = vunpack.c.h.b16 %v1529
  %v2008 = vunpack.c.l.b16 %v1530
  %v2009 = vunpack.c.h.b16 %v1530
  %v2010 = vunpack.c.l.b16 %v1531
  %v2011 = vunpack.c.h.b16 %v1531
  %v2012 = vunpack.c.l.b16 %v1532
  %v2013 = vunpack.c.h.b16 %v1532
  %v2014 = vunpack.c.l.b16 %v1533
  %v2015 = vunpack.c.h.b16 %v1533
  %v2016 = vunpack.c.l.b16 %v1534
  %v2017 = vunpack.c.h.b16 %v1534
  %v2018 = vunpack.c.l.b16 %v1535
  %v2019 = vunpack.c.h.b16 %v1535
  %v2020 = vunpack.c.l.b16 %v1536
  %v2021 = vunpack.c.h.b16 %v1536
  %v2022 = vunpack.c.l.b16 %v1537
  %v2023 = vunpack.c.h.b16 %v1537
  %v2024 = vunpack.c.l.b16 %v1538
  %v2025 = vunpack.c.h.b16 %v1538
  %v2026 = vunpack.c.l.b16 %v1539
  %v2027 = vunpack.c.h.b16 %v1539
  %v2028 = vunpack.c.l.b16 %v1540
  %v2029 = vunpack.c.h.b16 %v1540
  %v2030 = vunpack.c.l.b16 %v1541
  %v2031 = vunpack.c.h.b16 %v1541
  %v2032 = vunpack.c.l.b16 %v1542
  %v2033 = vunpack.c.h.b16 %v1542
  %v2034 = vunpack.c.l.b16 %v1543
  %v2035 = vunpack.c.h.b16 %v1543
  %v2036 = vunpack.c.l.b16 %v1544
  %v2037 = vunpack.c.h.b16 %v1544
  %v2038 = vunpack.c.l.b16 %v1545
  %v2039 = vunpack.c.h.b16 %v1545
  %v2040 = vunpack.c.l.b16 %v1546
  %v2041 = vunpack.c.h.b16 %v1546
  %v2042 = vunpack.c.l.b16 %v1547
  %v2043 = vunpack.c.h.b16 %v1547
  %v2044 = vunpack.c.l.b16 %v1548
  %v2045 = vunpack.c.h.b16 %v1548
  %v2046 = vunpack.c.l.b16 %v1549
  %v2047 = vunpack.c.h.b16 %v1549
  %v2048 = vunpack.c.l.b16 %v1550
  %v2049 = vunpack.c.h.b16 %v1550
  %v2050 = vunpack.c.l.b16 %v1551
  %v2051 = vunpack.c.h.b16 %v1551
  %v2052 = vunpack.c.l.b16 %v1552
  %v2053 = vunpack.c.h.b16 %v1552
  %v2054 = vunpack.c.l.b16 %v1553
  %v2055 = vunpack.c.h.b16 %v1553
  %v2056 = vunpack.c.l.b16 %v1554
  %v2057 = vunpack.c.h.b16 %v1554
  %v2058 = vunpack.c.l.b16 %v1555
  %v2059 = vunpack.c.h.b16 %v1555
  %v2060 = vunpack.c.l.b16 %v1556
  %v2061 = vunpack.c.h.b16 %v1556
  %v2062 = vunpack.c.l.b16 %v1557
  %v2063 = vunpack.c.h.b16 %v1557
  %v2064 = vunpack.c.l.b16 %v1558
  %v2065 = vunpack.c.h.b16 %v1558
  %v2066 = vunpack.c.l.b16 %v1559
  %v2067 = vunpack.c.h.b16 %v1559
  %v2068 = vunpack.c.l.b16 %v1560
  %v2069 = vunpack.c.h.b16 %v1560
  %v2070 = vunpack.c.l.b16 %v1561
  %v2071 = vunpack.c.h.b16 %v1561
  %v2072 = vunpack.c.l.b16 %v1562
  %v2073 = vunpack.c.h.b16 %v1562
  %v2074 = vunpack.c.l.b16 %v1563
  %v2075 = vunpack.c.h.b16 %v1563
  %v2076 = vunpack.c.l.b16 %v1564
  %v2077 = vunpack.c.h.b16 %v1564
  %v2078 = vunpack.c.l.b16 %v1565
  %v2079 = vunpack.c.h.b16 %v1565
  %v2080 = vunpack.c.l.b16 %v1566
  %v2081 = vunpack.c.h.b16 %v1566
  %v2082 = vunpack.c.l.b16 %v1567
  %v2083 = vunpack.c.h.b16 %v1567
  %v2084 = vunpack.c.l.b16 %v1568
  %v2085 = vunpack.c.h.b16 %v1568
  %v2086 = vunpack.c.l.b16 %v1569
  %v2087 = vunpack.c.h.b16 %v1569
  %v2088 = vunpack.c.l.b16 %v1570
  %v2089 = vunpack.c.h.b16 %v1570
  %v2090 = vunpack.c.l.b16 %v1571
  %v2091 = vunpack.c.h.b16 %v1571
  %v2092 = vunpack.c.l.b16 %v1572
  %v2093 = vunpack.c.h.b16 %v1572
  %v2094 = vunpack.c.l.b16 %v1573
  %v2095 = vunpack.c.h.b16 %v1573
  %v2096 = vunpack.c.l.b16 %v1574
  %v2097 = vunpack.c.h.b16 %v1574
  %v2098 = vunpack.c.l.b16 %v1575
  %v2099 = vunpack.c.h.b16 %v1575
  %v2100 = vunpack.c.l.b16 %v1576
  %v2101 = vunpack.c.h.b16 %v1576
  %v2102 = vunpack.c.l.b16 %v1577
  %v2103 = vunpack.c.h.b16 %v1577
  %v2104 = vunpack.c.l.b16 %v1578
  %v2105 = vunpack.c.h.b16 %v1578
  %v2106 = vunpack.c.l.b16 %v1579
  %v2107 = vunpack.c.h.b16 %v1579
  %v2108 = vunpack.c.l.b16 %v1580
  %v2109 = vunpack.c.h.b16 %v1580
  %v2110 = vunpack.c.l.b16 %v1581
  %v2111 = vunpack.c.h.b16 %v1581
  %v2112 = vunpack.c.l.b16 %v1582
  %v2113 = vunpack.c.h.b16 %v1582
  %v2114 = vunpack.c.l.b16 %v1583
  %v2115 = vunpack.c.h.b16 %v1583
  %v2116 = vunpack.c.l.b16 %v1584
  %v2117 = vunpack.c.h.b16 %v1584
  %v2118 = vunpack.c.l.b16 %v1585
  %v2119 = vunpack.c.h.b16 %v1585
  %v2120 = vunpack.c.l.b16 %v1586
  %v2121 = vunpack.c.h.b16 %v1586
  %v2122 = vunpack.c.l.b16 %v1587
  %v2123 = vunpack.c.h.b16 %v1587
  %v2124 = vunpack.c.l.b16 %v1588
  %v2125 = vunpack.c.h.b16 %v1588
  %v2126 = vunpack.c.l.b16 %v1589
  %v2127 = vunpack.c.h.b16 %v1589
  %v2128 = vunpack.c.l.b16 %v1590
  %v2129 = vunpack.c.h.b16 %v1590
  %v2130 = vunpack.c.l.b16 %v1591
  %v2131 = vunpack.c.h.b16 %v1591
  %v2132 = vunpack.c.l.b16 %v1592
  %v2133 = vunpack.c.h.b16 %v1592
  %v2134 = vunpack.c.l.b16 %v1593
  %v2135 = vunpack.c.h.b16 %v1593
  %v2136 = vunpack.c.l.b16 %v1594
  %v2137 = vunpack.c.h.b16 %v1594
  %v2138 = vunpack.c.l.b16 %v1595
  %v2139 = vunpack.c.h.b16 %v1595
  %v2140 = vunpack.c.l.b16 %v1596
  %v2141 = vunpack.c.h.b16 %v1596
  %v2142 = vunpack.c.l.b16 %v1597
  %v2143 = vunpack.c.h.b16 %v1597
  %v2144 = vunpack.c.l.b16 %v1598
  %v2145 = vunpack.c.h.b16 %v1598
  %v2146 = vunpack.c.l.b16 %v1599
  %v2147 = vunpack.c.h.b16 %v1599
  %v2148 = vunpack.c.l.b16 %v1600
  %v2149 = vunpack.c.h.b16 %v1600
  %v2150 = vunpack.c.l.b16 %v1601
  %v2151 = vunpack.c.h.b16 %v1601
  %v2152 = vunpack.c.l.b16 %v1602
  %v2153 = vunpack.c.h.b16 %v1602
  %v2154 = vunpack.c.l.b16 %v1603
  %v2155 = vunpack.c.h.b16 %v1603
  %v2156 = vunpack.c.l.b16 %v1604
  %v2157 = vunpack.c.h.b16 %v1604
  %v2158 = vunpack.c.l.b16 %v1605
  %v2159 = vunpack.c.h.b16 %v1605
  %v2160 = vunpack.c.l.b16 %v1606
  %v2161 = vunpack.c.h.b16 %v1606
  %v2162 = vunpack.c.l.b16 %v1607
  %v2163 = vunpack.c.h.b16 %v1607
  %v2164 = vunpack.c.l.b16 %v1608
  %v2165 = vunpack.c.h.b16 %v1608
  %v2166 = vunpack.c.l.b16 %v1609
  %v2167 = vunpack.c.h.b16 %v1609
  %v2168 = vunpack.c.l.b16 %v1610
  %v2169 = vunpack.c.h.b16 %v1610
  %v2170 = vunpack.c.l.b16 %v1611
  %v2171 = vunpack.c.h.b16 %v1611
  %v2172 = vunpack.c.l.b16 %v1612
  %v2173 = vunpack.c.h.b16 %v1612
  %v2174 = vunpack.c.l.b16 %v1613
  %v2175 = vunpack.c.h.b16 %v1613
  %v2176 = vunpack.c.l.b16 %v1614
  %v2177 = vunpack.c.h.b16 %v1614
  %v2178 = vunpack.c.l.b16 %v1615
  %v2179 = vunpack.c.h.b16 %v1615
  %v2180 = vunpack.c.l.b16 %v1616
  %v2181 = vunpack.c.h.b16 %v1616
  %v2182 = vunpack.c.l.b16 %v1617
  %v2183 = vunpack.c.h.b16 %v1617
  %v2184 = vunpack.c.l.b16 %v1618
  %v2185 = vunpack.c.h.b16 %v1618
  %v2186 = vunpack.c.l.b16 %v1619
  %v2187 = vunpack.c.h.b16 %v1619
  %v2188 = vunpack.c.l.b16 %v1620
  %v2189 = vunpack.c.h.b16 %v1620
  %v2190 = vunpack.c.l.b16 %v1621
  %v2191 = vunpack.c.h.b16 %v1621
  %v2192 = vunpack.c.l.b16 %v1622
  %v2193 = vunpack.c.h.b16 %v1622
  %v2194 = vunpack.c.l.b16 %v1623
  %v2195 = vunpack.c.h.b16 %v1623
  %v2196 = vunpack.c.l.b16 %v1624
  %v2197 = vunpack.c.h.b16 %v1624
  %v2198 = vunpack.c.l.b16 %v1625
  %v2199 = vunpack.c.h.b16 %v1625
  %v2200 = vunpack.c.l.b16 %v1626
  %v2201 = vunpack.c.h.b16 %v1626
  %v2202 = vunpack.c.l.b16 %v1627
  %v2203 = vunpack.c.h.b16 %v1627
  %v2204 = vunpack.c.l.b16 %v1628
  %v2205 = vunpack.c.h.b16 %v1628
  %v2206 = vunpack.c.l.b16 %v1629
  %v2207 = vunpack.c.h.b16 %v1629
  %v2208 = vunpack.c.l.b16 %v1630
  %v2209 = vunpack.c.h.b16 %v1630
  %v2210 = vunpack.c.l.b16 %v1631
  %v2211 = vunpack.c.h.b16 %v1631
  %v2212 = vunpack.c.l.b16 %v1632
  %v2213 = vunpack.c.h.b16 %v1632
  %v2214 = vunpack.c.l.b16 %v1633
  %v2215 = vunpack.c.h.b16 %v1633
  %v2216 = vunpack.c.l.b16 %v1634
  %v2217 = vunpack.c.h.b16 %v1634
  %v2218 = vunpack.c.l.b16 %v1635
  %v2219 = vunpack.c.h.b16 %v1635
  %v2220 = vunpack.c.l.b16 %v1636
  %v2221 = vunpack.c.h.b16 %v1636
  %v2222 = vunpack.c.l.b16 %v1637
  %v2223 = vunpack.c.h.b16 %v1637
  %v2224 = vunpack.c.l.b16 %v1638
  %v2225 = vunpack.c.h.b16 %v1638
  %v2226 = vunpack.c.l.b16 %v1639
  %v2227 = vunpack.c.h.b16 %v1639
  %v2228 = vunpack.c.l.b16 %v1640
  %v2229 = vunpack.c.h.b16 %v1640
  %v2230 = vunpack.c.l.b16 %v1641
  %v2231 = vunpack.c.h.b16 %v1641
  %v2232 = vunpack.c.l.b16 %v1642
  %v2233 = vunpack.c.h.b16 %v1642
  %v2234 = vunpack.c.l.b16 %v1643
  %v2235 = vunpack.c.h.b16 %v1643
  %v2236 = vunpack.c.l.b16 %v1644
  %v2237 = vunpack.c.h.b16 %v1644
  %v2238 = vunpack.c.l.b16 %v1645
  %v2239 = vunpack.c.h.b16 %v1645
  %v2240 = vunpack.c.l.b16 %v1646
  %v2241 = vunpack.c.h.b16 %v1646
  %v2242 = vunpack.c.l.b16 %v1647
  %v2243 = vunpack.c.h.b16 %v1647
  %v2244 = vunpack.c.l.b16 %v1648
  %v2245 = vunpack.c.h.b16 %v1648
  %v2246 = vunpack.c.l.b16 %v1649
  %v2247 = vunpack.c.h.b16 %v1649
  %v2248 = vunpack.c.l.b16 %v1650
  %v2249 = vunpack.c.h.b16 %v1650
  %v2250 = vunpack.c.l.b16 %v1651
  %v2251 = vunpack.c.h.b16 %v1651
  %v2252 = vunpack.c.l.b16 %v1652
  %v2253 = vunpack.c.h.b16 %v1652
  %v2254 = vunpack.c.l.b16 %v1653
  %v2255 = vunpack.c.h.b16 %v1653
  %v2256 = vunpack.c.l.b16 %v1654
  %v2257 = vunpack.c.h.b16 %v1654
  %v2258 = vunpack.c.l.b16 %v1655
  %v2259 = vunpack.c.h.b16 %v1655
  %v2260 = vunpack.c.l.b16 %v1656
  %v2261 = vunpack.c.h.b16 %v1656
  %v2262 = vunpack.c.l.b16 %v1657
  %v2263 = vunpack.c.h.b16 %v1657
  %v2264 = vunpack.c.l.b16 %v1658
  %v2265 = vunpack.c.h.b16 %v1658
  %v2266 = vunpack.c.l.b16 %v1659
  %v2267 = vunpack.c.h.b16 %v1659
  %v2268 = vunpack.c.l.b16 %v1660
  %v2269 = vunpack.c.h.b16 %v1660
  %v2270 = vunpack.c.l.b16 %v1661
  %v2271 = vunpack.c.h.b16 %v1661
  %v2272 = vunpack.c.l.b16 %v1662
  %v2273 = vunpack.c.h.b16 %v1662
  %v2274 = vunpack.c.l.b16 %v1663
  %v2275 = vunpack.c.h.b16 %v1663
  %v2276 = vunpack.c.l.b16 %v1664
  %v2277 = vunpack.c.h.b16 %v1664
  %v2278 = vunpack.c.l.b16 %v1665
  %v2279 = vunpack.c.h.b16 %v1665
  %v2280 = vunpack.c.l.b16 %v1666
  %v2281 = vunpack.c.h.b16 %v1666
  %v2282 = vunpack.c.l.b16 %v1667
  %v2283 = vunpack.c.h.b16 %v1667
  %v2284 = vunpack.c.l.b16 %v1668
  %v2285 = vunpack.c.h.b16 %v1668
  %v2286 = vunpack.c.l.b16 %v1669
  %v2287 = vunpack.c.h.b16 %v1669
  %v2288 = vunpack.c.l.b16 %v1670
  %v2289 = vunpack.c.h.b16 %v1670
  %v2290 = vunpack.c.l.b16 %v1671
  %v2291 = vunpack.c.h.b16 %v1671
  %v2292 = vunpack.c.l.b16 %v1672
  %v2293 = vunpack.c.h.b16 %v1672
  %v2294 = vunpack.c.l.b16 %v1673
  %v2295 = vunpack.c.h.b16 %v1673
  %v2296 = vunpack.c.l.b16 %v1674
  %v2297 = vunpack.c.h.b16 %v1674
  %v2298 = vunpack.c.l.b16 %v1675
  %v2299 = vunpack.c.h.b16 %v1675
  %v2300 = vunpack.c.l.b16 %v1676
  %v2301 = vunpack.c.h.b16 %v1676
  %v2302 = vunpack.c.l.b16 %v1677
  %v2303 = vunpack.c.h.b16 %v1677
  %v2304 = vunpack.c.l.b16 %v1678
  %v2305 = vunpack.c.h.b16 %v1678
  %v2306 = vunpack.c.l.b16 %v1679
  %v2307 = vunpack.c.h.b16 %v1679
  %v2308 = vunpack.c.l.b16 %v1680
  %v2309 = vunpack.c.h.b16 %v1680
  %v2310 = vunpack.c.l.b16 %v1681
  %v2311 = vunpack.c.h.b16 %v1681
  %v2312 = vunpack.c.l.b16 %v1682
  %v2313 = vunpack.c.h.b16 %v1682
  %v2314 = vpack.c.b16 %v1934, %v1930
  %v2315 = vpack.c.b16 %v1935, %v1931
  %v2316 = vpack.c.b16 %v1936, %v1932
  %v2317 = vpack.c.b16 %v1937, %v1933
  %v2318 = vpack.c.b16 %v1942, %v1938
  %v2319 = vpack.c.b16 %v1943, %v1939
  %v2320 = vpack.c.b16 %v1944, %v1940
  %v2321 = vpack.c.b16 %v1945, %v1941
  %v2322 = vpack.c.b16 %v1950, %v1946
  %v2323 = vpack.c.b16 %v1951, %v1947
  %v2324 = vpack.c.b16 %v1952, %v1948
  %v2325 = vpack.c.b16 %v1953, %v1949
  %v2326 = vpack.c.b16 %v1958, %v1954
  %v2327 = vpack.c.b16 %v1959, %v1955
  %v2328 = vpack.c.b16 %v1960, %v1956
  %v2329 = vpack.c.b16 %v1961, %v1957
  %v2330 = vpack.c.b16 %v1966, %v1962
  %v2331 = vpack.c.b16 %v1967, %v1963
  %v2332 = vpack.c.b16 %v1968, %v1964
  %v2333 = vpack.c.b16 %v1969, %v1965
  %v2334 = vpack.c.b16 %v1974, %v1970
  %v2335 = vpack.c.b16 %v1975, %v1971
  %v2336 = vpack.c.b16 %v1976, %v1972
  %v2337 = vpack.c.b16 %v1977, %v1973
  %v2338 = vpack.c.b16 %v1982, %v1978
  %v2339 = vpack.c.b16 %v1983, %v1979
  %v2340 = vpack.c.b16 %v1984, %v1980
  %v2341 = vpack.c.b16 %v1985, %v1981
  %v2342 = vpack.c.b16 %v1990, %v1986
  %v2343 = vpack.c.b16 %v1991, %v1987
  %v2344 = vpack.c.b16 %v1992, %v1988
  %v2345 = vpack.c.b16 %v1993, %v1989
  %v2346 = vpack.c.b16 %v1998, %v1994
  %v2347 = vpack.c.b16 %v1999, %v1995
  %v2348 = vpack.c.b16 %v2000, %v1996
  %v2349 = vpack.c.b16 %v2001, %v1997
  %v2350 = vpack.c.b16 %v2006, %v2002
  %v2351 = vpack.c.b16 %v2007, %v2003
  %v2352 = vpack.c.b16 %v2008, %v2004
  %v2353 = vpack.c.b16 %v2009, %v2005
  %v2354 = vpack.c.b16 %v2014, %v2010
  %v2355 = vpack.c.b16 %v2015, %v2011
  %v2356 = vpack.c.b16 %v2016, %v2012
  %v2357 = vpack.c.b16 %v2017, %v2013
  %v2358 = vpack.c.b16 %v2022, %v2018
  %v2359 = vpack.c.b16 %v2023, %v2019
  %v2360 = vpack.c.b16 %v2024, %v2020
  %v2361 = vpack.c.b16 %v2025, %v2021
  %v2362 = vpack.c.b16 %v2030, %v2026
  %v2363 = vpack.c.b16 %v2031, %v2027
  %v2364 = vpack.c.b16 %v2032, %v2028
  %v2365 = vpack.c.b16 %v2033, %v2029
  %v2366 = vpack.c.b16 %v2038, %v2034
  %v2367 = vpack.c.b16 %v2039, %v2035
  %v2368 = vpack.c.b16 %v2040, %v2036
  %v2369 = vpack.c.b16 %v2041, %v2037
  %v2370 = vpack.c.b16 %v2046, %v2042
  %v2371 = vpack.c.b16 %v2047, %v2043
  %v2372 = vpack.c.b16 %v2048, %v2044
  %v2373 = vpack.c.b16 %v2049, %v2045
  %v2374 = vpack.c.b16 %v2054, %v2050
  %v2375 = vpack.c.b16 %v2055, %v2051
  %v2376 = vpack.c.b16 %v2056, %v2052
  %v2377 = vpack.c.b16 %v2057, %v2053
  %v2378 = vpack.c.b16 %v2062, %v2058
  %v2379 = vpack.c.b16 %v2063, %v2059
  %v2380 = vpack.c.b16 %v2064, %v2060
  %v2381 = vpack.c.b16 %v2065, %v2061
  %v2382 = vpack.c.b16 %v2070, %v2066
  %v2383 = vpack.c.b16 %v2071, %v2067
  %v2384 = vpack.c.b16 %v2072, %v2068
  %v2385 = vpack.c.b16 %v2073, %v2069
  %v2386 = vpack.c.b16 %v2078, %v2074
  %v2387 = vpack.c.b16 %v2079, %v2075
  %v2388 = vpack.c.b16 %v2080, %v2076
  %v2389 = vpack.c.b16 %v2081, %v2077
  %v2390 = vpack.c.b16 %v2086, %v2082
  %v2391 = vpack.c.b16 %v2087, %v2083
  %v2392 = vpack.c.b16 %v2088, %v2084
  %v2393 = vpack.c.b16 %v2089, %v2085
  %v2394 = vpack.c.b16 %v2094, %v2090
  %v2395 = vpack.c.b16 %v2095, %v2091
  %v2396 = vpack.c.b16 %v2096, %v2092
  %v2397 = vpack.c.b16 %v2097, %v2093
  %v2398 = vpack.c.b16 %v2102, %v2098
  %v2399 = vpack.c.b16 %v2103, %v2099
  %v2400 = vpack.c.b16 %v2104, %v2100
  %v2401 = vpack.c.b16 %v2105, %v2101
  %v2402 = vpack.c.b16 %v2110, %v2106
  %v2403 = vpack.c.b16 %v2111, %v2107
  %v2404 = vpack.c.b16 %v2112, %v2108
  %v2405 = vpack.c.b16 %v2113, %v2109
  %v2406 = vpack.c.b16 %v2118, %v2114
  %v2407 = vpack.c.b16 %v2119, %v2115
  %v2408 = vpack.c.b16 %v2120, %v2116
  %v2409 = vpack.c.b16 %v2121, %v2117
  %v2410 = vpack.c.b16 %v2126, %v2122
  %v2411 = vpack.c.b16 %v2127, %v2123
  %v2412 = vpack.c.b16 %v2128, %v2124
  %v2413 = vpack.c.b16 %v2129, %v2125
  %v2414 = vpack.c.b16 %v2134, %v2130
  %v2415 = vpack.c.b16 %v2135, %v2131
  %v2416 = vpack.c.b16 %v2136, %v2132
  %v2417 = vpack.c.b16 %v2137, %v2133
  %v2418 = vpack.c.b16 %v2142, %v2138
  %v2419 = vpack.c.b16 %v2143, %v2139
  %v2420 = vpack.c.b16 %v2144, %v2140
  %v2421 = vpack.c.b16 %v2145, %v2141
  %v2422 = vpack.c.b16 %v2150, %v2146
  %v2423 = vpack.c.b16 %v2151, %v2147
  %v2424 = vpack.c.b16 %v2152, %v2148
  %v2425 = vpack.c.b16 %v2153, %v2149
  %v2426 = vpack.c.b16 %v2158, %v2154
  %v2427 = vpack.c.b16 %v2159, %v2155
  %v2428 = vpack.c.b16 %v2160, %v2156
  %v2429 = vpack.c.b16 %v2161, %v2157
  %v2430 = vpack.c.b16 %v2166, %v2162
  %v2431 = vpack.c.b16 %v2167, %v2163
  %v2432 = vpack.c.b16 %v2168, %v2164
  %v2433 = vpack.c.b16 %v2169, %v2165
  %v2434 = vpack.c.b16 %v2174, %v2170
  %v2435 = vpack.c.b16 %v2175, %v2171
  %v2436 = vpack.c.b16 %v2176, %v2172
  %v2437 = vpack.c.b16 %v2177, %v2173
  %v2438 = vpack.c.b16 %v2182, %v2178
  %v2439 = vpack.c.b16 %v2183, %v2179
  %v2440 = vpack.c.b16 %v2184, %v2180
  %v2441 = vpack.c.b16 %v2185, %v2181
  %v2442 = vpack.c.b16 %v2190, %v2186
  %v2443 = vpack.c.b16 %v2191, %v2187
  %v2444 = vpack.c.b16 %v2192, %v2188
  %v2445 = vpack.c.b16 %v2193, %v2189
  %v2446 = vpack.c.b16 %v2198, %v2194
  %v2447 = vpack.c.b16 %v2199, %v2195
  %v2448 = vpack.c.b16 %v2200, %v2196
  %v2449 = vpack.c.b16 %v2201, %v2197
  %v2450 = vpack.c.b16 %v2206, %v2202
  %v2451 = vpack.c.b16 %v2207, %v2203
  %v2452 = vpack.c.b16 %v2208, %v2204
  %v2453 = vpack.c.b16 %v2209, %v2205
  %v2454 = vpack.c.b16 %v2214, %v2210
  %v2455 = vpack.c.b16 %v2215, %v2211
  %v2456 = vpack.c.b16 %v2216, %v2212
  %v2457 = vpack.c.b16 %v2217, %v2213
  %v2458 = vpack.c.b16 %v2222, %v2218
  %v2459 = vpack.c.b16 %v2223, %v2219
  %v2460 = vpack.c.b16 %v2224, %v2220
  %v2461 = vpack.c.b16 %v2225, %v2221
  %v2462 = vpack.c.b16 %v2230, %v2226
  %v2463 = vpack.c.b16 %v2231, %v2227
  %v2464 = vpack.c.b16 %v2232, %v2228
  %v2465 = vpack.c.b16 %v2233, %v2229
  %v2466 = vpack.c.b16 %v2238, %v2234
  %v2467 = vpack.c.b16 %v2239, %v2235
  %v2468 = vpack.c.b16 %v2240, %v2236
  %v2469 = vpack.c.b16 %v2241, %v2237
  %v2470 = vpack.c.b16 %v2246, %v2242
  %v2471 = vpack.c.b16 %v2247, %v2243
  %v2472 = vpack.c.b16 %v2248, %v2244
  %v2473 = vpack.c.b16 %v2249, %v2245
  %v2474 = vpack.c.b16 %v2254, %v2250
  %v2475 = vpack.c.b16 %v2255, %v2251
  %v2476 = vpack.c.b16 %v2256, %v2252
  %v2477 = vpack.c.b16 %v2257, %v2253
  %v2478 = vpack.c.b16 %v2262, %v2258
  %v2479 = vpack.c.b16 %v2263, %v2259
  %v2480 = vpack.c.b16 %v2264, %v2260
  %v2481 = vpack.c.b16 %v2265, %v2261
  %v2482 = vpack.c.b16 %v2270, %v2266
  %v2483 = vpack.c.b16 %v2271, %v2267
  %v2484 = vpack.c.b16 %v2272, %v2268
  %v2485 = vpack.c.b16 %v2273, %v2269
  %v2486 = vpack.c.b16 %v2278, %v2274
  %v2487 = vpack.c.b16 %v2279, %v2275
  %v2488 = vpack.c.b16 %v2280, %v2276
  %v2489 = vpack.c.b16 %v2281, %v2277
  %v2490 = vpack.c.b16 %v2286, %v2282
  %v2491 = vpack.c.b16 %v2287, %v2283
  %v2492 = vpack.c.b16 %v2288, %v2284
  %v2493 = vpack.c.b16 %v2289, %v2285
  %v2494 = vpack.c.b16 %v2294, %v2290
  %v2495 = vpack.c.b16 %v2295, %v2291
  %v2496 = vpack.c.b16 %v2296, %v2292
  %v2497 = vpack.c.b16 %v2297, %v2293
  %v2498 = vpack.c.b16 %v2302, %v2298
  %v2499 = vpack.c.b16 %v2303, %v2299
  %v2500 = vpack.c.b16 %v2304, %v2300
  %v2501 = vpack.c.b16 %v2305, %v2301
  %v2502 = vpack.c.b16 %v2310, %v2306
  %v2503 = vpack.c.b16 %v2311, %v2307
  %v2504 = vpack.c.b16 %v2312, %v2308
  %v2505 = vpack.c.b16 %v2313, %v2309
  %2698 = vmatprep.subr.bf16.mxu0 %v2343
  %2699 = vmatpush1.bf16.msra.mxu0 %v2342
  %2700 = vmatprep.subr.bf16.mxu0 %v2339
  %2701 = vmatpush1.bf16.msra.mxu0 %v2338
  %2702 = vmatprep.subr.bf16.mxu0 %v2335
  %2703 = vmatpush1.bf16.msra.mxu0 %v2334
  %2704 = vmatprep.subr.bf16.mxu0 %v2331
  %2705 = vmatpush1.bf16.msra.mxu0 %v2330
  %2706 = vmatprep.subr.bf16.mxu0 %v2327
  %2707 = vmatpush1.bf16.msra.mxu0 %v2326
  %2708 = vmatprep.subr.bf16.mxu0 %v2323
  %2709 = vmatpush1.bf16.msra.mxu0 %v2322
  %2710 = vmatprep.subr.bf16.mxu0 %v2319
  %2711 = vmatpush1.bf16.msra.mxu0 %v2318
  %2712 = vmatprep.subr.bf16.mxu0 %v2315
  %2713 = vmatpush1.bf16.msra.mxu0 %v2314
  %2714 = vmatprep.subr.bf16.mxu0 %v2375
  %2715 = vmatpush2.bf16.msra.mxu0 %v2374
  %2716 = vmatprep.subr.bf16.mxu0 %v2371
  %2717 = vmatpush2.bf16.msra.mxu0 %v2370
  %2718 = vmatprep.subr.bf16.mxu0 %v2367
  %2719 = vmatpush2.bf16.msra.mxu0 %v2366
  %2720 = vmatprep.subr.bf16.mxu0 %v2363
  %2721 = vmatpush2.bf16.msra.mxu0 %v2362
  %2722 = vmatprep.subr.bf16.mxu0 %v2359
  %2723 = vmatpush2.bf16.msra.mxu0 %v2358
  %2724 = vmatprep.subr.bf16.mxu0 %v2355
  %2725 = vmatpush2.bf16.msra.mxu0 %v2354
  %2726 = vmatprep.subr.bf16.mxu0 %v2351
  %2727 = vmatpush2.bf16.msra.mxu0 %v2350
  %2728 = vmatprep.subr.bf16.mxu0 %v2347
  %2729 = vmatpush2.bf16.msra.mxu0 %v2346
  %2730 = vmatprep.mubr.bf16.mxu0 %v1722
  %2731 = vmatmul.mubr.bf16.gmra.mxu0 %v1714
  %v2732 = vpop.f32.mrf.mxu0
  %v2733 = vadd.f32 %v1688, %v2732
  %v2734 = vpop.f32.mrf.mxu0
  %v2735 = vadd.f32 %v1692, %v2734
  %v2736 = vpop.f32.mrf.mxu0
  %v2737 = vpop.f32.mrf.mxu0
  %2738 = vdwg.mxu0
  %2739 = vmatprep.subr.bf16.mxu0 %v2407
  %2740 = vmatpush1.bf16.msra.mxu0 %v2406
  %2741 = vmatprep.subr.bf16.mxu0 %v2403
  %2742 = vmatpush1.bf16.msra.mxu0 %v2402
  %2743 = vmatprep.subr.bf16.mxu0 %v2399
  %2744 = vmatpush1.bf16.msra.mxu0 %v2398
  %2745 = vmatprep.subr.bf16.mxu0 %v2395
  %2746 = vmatpush1.bf16.msra.mxu0 %v2394
  %2747 = vmatprep.subr.bf16.mxu0 %v2391
  %2748 = vmatpush1.bf16.msra.mxu0 %v2390
  %2749 = vmatprep.subr.bf16.mxu0 %v2387
  %2750 = vmatpush1.bf16.msra.mxu0 %v2386
  %2751 = vmatprep.subr.bf16.mxu0 %v2383
  %2752 = vmatpush1.bf16.msra.mxu0 %v2382
  %2753 = vmatprep.subr.bf16.mxu0 %v2379
  %2754 = vmatpush1.bf16.msra.mxu0 %v2378
  %2755 = vmatprep.subr.bf16.mxu0 %v2439
  %2756 = vmatpush2.bf16.msra.mxu0 %v2438
  %2757 = vmatprep.subr.bf16.mxu0 %v2435
  %2758 = vmatpush2.bf16.msra.mxu0 %v2434
  %2759 = vmatprep.subr.bf16.mxu0 %v2431
  %2760 = vmatpush2.bf16.msra.mxu0 %v2430
  %2761 = vmatprep.subr.bf16.mxu0 %v2427
  %2762 = vmatpush2.bf16.msra.mxu0 %v2426
  %2763 = vmatprep.subr.bf16.mxu0 %v2423
  %2764 = vmatpush2.bf16.msra.mxu0 %v2422
  %2765 = vmatprep.subr.bf16.mxu0 %v2419
  %2766 = vmatpush2.bf16.msra.mxu0 %v2418
  %2767 = vmatprep.subr.bf16.mxu0 %v2415
  %2768 = vmatpush2.bf16.msra.mxu0 %v2414
  %2769 = vmatprep.subr.bf16.mxu0 %v2411
  %2770 = vmatpush2.bf16.msra.mxu0 %v2410
  %2771 = vmatprep.mubr.bf16.mxu0 %v1723
  %2772 = vmatmul.mubr.bf16.gmra.mxu0 %v1721
  %v2773 = vpop.f32.mrf.mxu0
  %v2774 = vadd.f32 %v2733, %v2773
  %v2775 = vpop.f32.mrf.mxu0
  %v2776 = vadd.f32 %v2735, %v2775
  %v2777 = vpop.f32.mrf.mxu0
  %v2778 = vpop.f32.mrf.mxu0
  %2779 = vdwg.mxu0
  %2780 = vmatprep.subr.bf16.mxu0 %v2471
  %2781 = vmatpush1.bf16.msra.mxu0 %v2470
  %2782 = vmatprep.subr.bf16.mxu0 %v2467
  %2783 = vmatpush1.bf16.msra.mxu0 %v2466
  %2784 = vmatprep.subr.bf16.mxu0 %v2463
  %2785 = vmatpush1.bf16.msra.mxu0 %v2462
  %2786 = vmatprep.subr.bf16.mxu0 %v2459
  %2787 = vmatpush1.bf16.msra.mxu0 %v2458
  %2788 = vmatprep.subr.bf16.mxu0 %v2455
  %2789 = vmatpush1.bf16.msra.mxu0 %v2454
  %2790 = vmatprep.subr.bf16.mxu0 %v2451
  %2791 = vmatpush1.bf16.msra.mxu0 %v2450
  %2792 = vmatprep.subr.bf16.mxu0 %v2447
  %2793 = vmatpush1.bf16.msra.mxu0 %v2446
  %2794 = vmatprep.subr.bf16.mxu0 %v2443
  %2795 = vmatpush1.bf16.msra.mxu0 %v2442
  %2796 = vmatprep.subr.bf16.mxu0 %v2503
  %2797 = vmatpush2.bf16.msra.mxu0 %v2502
  %2798 = vmatprep.subr.bf16.mxu0 %v2499
  %2799 = vmatpush2.bf16.msra.mxu0 %v2498
  %2800 = vmatprep.subr.bf16.mxu0 %v2495
  %2801 = vmatpush2.bf16.msra.mxu0 %v2494
  %2802 = vmatprep.subr.bf16.mxu0 %v2491
  %2803 = vmatpush2.bf16.msra.mxu0 %v2490
  %2804 = vmatprep.subr.bf16.mxu0 %v2487
  %2805 = vmatpush2.bf16.msra.mxu0 %v2486
  %2806 = vmatprep.subr.bf16.mxu0 %v2483
  %2807 = vmatpush2.bf16.msra.mxu0 %v2482
  %2808 = vmatprep.subr.bf16.mxu0 %v2479
  %2809 = vmatpush2.bf16.msra.mxu0 %v2478
  %2810 = vmatprep.subr.bf16.mxu0 %v2475
  %2811 = vmatpush2.bf16.msra.mxu0 %v2474
  %2812 = vmatprep.mubr.bf16.mxu0 %v1731
  %2813 = vmatmul.mubr.bf16.gmra.mxu0 %v1730
  %v2814 = vpop.f32.mrf.mxu0
  %v2815 = vadd.f32 %v2774, %v2814
  %v2816 = vpop.f32.mrf.mxu0
  %v2817 = vadd.f32 %v2776, %v2816
  %v2818 = vpop.f32.mrf.mxu0
  %v2819 = vpop.f32.mrf.mxu0
  %2820 = vdwg.mxu0
  %2821 = vmatprep.subr.bf16.mxu0 %v2345
  %2822 = vmatpush1.bf16.msra.mxu0 %v2344
  %2823 = vmatprep.subr.bf16.mxu0 %v2341
  %2824 = vmatpush1.bf16.msra.mxu0 %v2340
  %2825 = vmatprep.subr.bf16.mxu0 %v2337
  %2826 = vmatpush1.bf16.msra.mxu0 %v2336
  %2827 = vmatprep.subr.bf16.mxu0 %v2333
  %2828 = vmatpush1.bf16.msra.mxu0 %v2332
  %2829 = vmatprep.subr.bf16.mxu0 %v2329
  %2830 = vmatpush1.bf16.msra.mxu0 %v2328
  %2831 = vmatprep.subr.bf16.mxu0 %v2325
  %2832 = vmatpush1.bf16.msra.mxu0 %v2324
  %2833 = vmatprep.subr.bf16.mxu0 %v2321
  %2834 = vmatpush1.bf16.msra.mxu0 %v2320
  %2835 = vmatprep.subr.bf16.mxu0 %v2317
  %2836 = vmatpush1.bf16.msra.mxu0 %v2316
  %2837 = vmatprep.subr.bf16.mxu0 %v2377
  %2838 = vmatpush2.bf16.msra.mxu0 %v2376
  %2839 = vmatprep.subr.bf16.mxu0 %v2373
  %2840 = vmatpush2.bf16.msra.mxu0 %v2372
  %2841 = vmatprep.subr.bf16.mxu0 %v2369
  %2842 = vmatpush2.bf16.msra.mxu0 %v2368
  %2843 = vmatprep.subr.bf16.mxu0 %v2365
  %2844 = vmatpush2.bf16.msra.mxu0 %v2364
  %2845 = vmatprep.subr.bf16.mxu0 %v2361
  %2846 = vmatpush2.bf16.msra.mxu0 %v2360
  %2847 = vmatprep.subr.bf16.mxu0 %v2357
  %2848 = vmatpush2.bf16.msra.mxu0 %v2356
  %2849 = vmatprep.subr.bf16.mxu0 %v2353
  %2850 = vmatpush2.bf16.msra.mxu0 %v2352
  %2851 = vmatprep.subr.bf16.mxu0 %v2349
  %2852 = vmatpush2.bf16.msra.mxu0 %v2348
  %2853 = vmatprep.mubr.bf16.mxu0 %v1722
  %2854 = vmatmul.mubr.bf16.gmra.mxu0 %v1714
  %v2855 = vpop.f32.mrf.mxu0
  %v2856 = vadd.f32 %v1696, %v2855
  %v2857 = vpop.f32.mrf.mxu0
  %v2858 = vadd.f32 %v1700, %v2857
  %v2859 = vpop.f32.mrf.mxu0
  %v2860 = vpop.f32.mrf.mxu0
  %2861 = vdwg.mxu0
  %2862 = vmatprep.subr.bf16.mxu0 %v2409
  %2863 = vmatpush1.bf16.msra.mxu0 %v2408
  %2864 = vmatprep.subr.bf16.mxu0 %v2405
  %2865 = vmatpush1.bf16.msra.mxu0 %v2404
  %2866 = vmatprep.subr.bf16.mxu0 %v2401
  %2867 = vmatpush1.bf16.msra.mxu0 %v2400
  %2868 = vmatprep.subr.bf16.mxu0 %v2397
  %2869 = vmatpush1.bf16.msra.mxu0 %v2396
  %2870 = vmatprep.subr.bf16.mxu0 %v2393
  %2871 = vmatpush1.bf16.msra.mxu0 %v2392
  %2872 = vmatprep.subr.bf16.mxu0 %v2389
  %2873 = vmatpush1.bf16.msra.mxu0 %v2388
  %2874 = vmatprep.subr.bf16.mxu0 %v2385
  %2875 = vmatpush1.bf16.msra.mxu0 %v2384
  %2876 = vmatprep.subr.bf16.mxu0 %v2381
  %2877 = vmatpush1.bf16.msra.mxu0 %v2380
  %2878 = vmatprep.subr.bf16.mxu0 %v2441
  %2879 = vmatpush2.bf16.msra.mxu0 %v2440
  %2880 = vmatprep.subr.bf16.mxu0 %v2437
  %2881 = vmatpush2.bf16.msra.mxu0 %v2436
  %2882 = vmatprep.subr.bf16.mxu0 %v2433
  %2883 = vmatpush2.bf16.msra.mxu0 %v2432
  %2884 = vmatprep.subr.bf16.mxu0 %v2429
  %2885 = vmatpush2.bf16.msra.mxu0 %v2428
  %2886 = vmatprep.subr.bf16.mxu0 %v2425
  %2887 = vmatpush2.bf16.msra.mxu0 %v2424
  %2888 = vmatprep.subr.bf16.mxu0 %v2421
  %2889 = vmatpush2.bf16.msra.mxu0 %v2420
  %2890 = vmatprep.subr.bf16.mxu0 %v2417
  %2891 = vmatpush2.bf16.msra.mxu0 %v2416
  %2892 = vmatprep.subr.bf16.mxu0 %v2413
  %2893 = vmatpush2.bf16.msra.mxu0 %v2412
  %2894 = vmatprep.mubr.bf16.mxu0 %v1723
  %2895 = vmatmul.mubr.bf16.gmra.mxu0 %v1721
  %v2896 = vpop.f32.mrf.mxu0
  %v2897 = vadd.f32 %v2856, %v2896
  %v2898 = vpop.f32.mrf.mxu0
  %v2899 = vadd.f32 %v2858, %v2898
  %v2900 = vpop.f32.mrf.mxu0
  %v2901 = vpop.f32.mrf.mxu0
  %2902 = vdwg.mxu0
  %2903 = vmatprep.subr.bf16.mxu0 %v2473
  %2904 = vmatpush1.bf16.msra.mxu0 %v2472
  %2905 = vmatprep.subr.bf16.mxu0 %v2469
  %2906 = vmatpush1.bf16.msra.mxu0 %v2468
  %2907 = vmatprep.subr.bf16.mxu0 %v2465
  %2908 = vmatpush1.bf16.msra.mxu0 %v2464
  %2909 = vmatprep.subr.bf16.mxu0 %v2461
  %2910 = vmatpush1.bf16.msra.mxu0 %v2460
  %2911 = vmatprep.subr.bf16.mxu0 %v2457
  %2912 = vmatpush1.bf16.msra.mxu0 %v2456
  %2913 = vmatprep.subr.bf16.mxu0 %v2453
  %2914 = vmatpush1.bf16.msra.mxu0 %v2452
  %2915 = vmatprep.subr.bf16.mxu0 %v2449
  %2916 = vmatpush1.bf16.msra.mxu0 %v2448
  %2917 = vmatprep.subr.bf16.mxu0 %v2445
  %2918 = vmatpush1.bf16.msra.mxu0 %v2444
  %2919 = vmatprep.subr.bf16.mxu0 %v2505
  %2920 = vmatpush2.bf16.msra.mxu0 %v2504
  %2921 = vmatprep.subr.bf16.mxu0 %v2501
  %2922 = vmatpush2.bf16.msra.mxu0 %v2500
  %2923 = vmatprep.subr.bf16.mxu0 %v2497
  %2924 = vmatpush2.bf16.msra.mxu0 %v2496
  %2925 = vmatprep.subr.bf16.mxu0 %v2493
  %2926 = vmatpush2.bf16.msra.mxu0 %v2492
  %2927 = vmatprep.subr.bf16.mxu0 %v2489
  %2928 = vmatpush2.bf16.msra.mxu0 %v2488
  %2929 = vmatprep.subr.bf16.mxu0 %v2485
  %2930 = vmatpush2.bf16.msra.mxu0 %v2484
  %2931 = vmatprep.subr.bf16.mxu0 %v2481
  %2932 = vmatpush2.bf16.msra.mxu0 %v2480
  %2933 = vmatprep.subr.bf16.mxu0 %v2477
  %2934 = vmatpush2.bf16.msra.mxu0 %v2476
  %2935 = vmatprep.mubr.bf16.mxu0 %v1731
  %2936 = vmatmul.mubr.bf16.gmra.mxu0 %v1730
  %v2937 = vpop.f32.mrf.mxu0
  %v2938 = vadd.f32 %v2897, %v2937
  %v2939 = vpop.f32.mrf.mxu0
  %v2940 = vadd.f32 %v2899, %v2939
  %v2941 = vpop.f32.mrf.mxu0
  %v2942 = vpop.f32.mrf.mxu0
  %2943 = vdwg.mxu0
  %v2948 = vcombine.low %v2815, %v2817
  %v2949 = vcombine.low %v2938, %v2940
  %s2952 = scalar_lea.vmem [#allocation4], 16
  %2953 = vst [vmem:[%s2952] sm:$0xff] %v2948
  %2954 = vst [vmem:[%s2952 + $0x8] sm:$0xff] %v2949
  %v2955 = vld [vmem:[#allocation2] sm:$0x3]
  %v2956 = vld [vmem:[#allocation3] sm:$0x3]
  %v2957 = vld [vmem:[#allocation4] ss:$4 sm:$0xf]
  %s2958 = scalar_lea.vmem [#allocation4], 16
  %v2959 = vld [vmem:[%s2958] ss:$4 sm:$0xf]
  %v2960 = vld [vmem:[%s2] sm:$0xff]
  %v2961 = vld [vmem:[%s2 + $0x8] sm:$0xff]
  %v2962 = vld [vmem:[%s2 + $0x10] sm:$0xff]
  %v2963 = vld [vmem:[%s2 + $0x18] sm:$0xff]
  %v2964 = vld [vmem:[%s2 + $0x20] sm:$0xff]
  %v2965 = vld [vmem:[%s2 + $0x28] sm:$0xff]
  %v2966 = vld [vmem:[%s2 + $0x30] sm:$0xff]
  %v2967 = vld [vmem:[%s2 + $0x38] sm:$0xff]
  %v2968 = vld [vmem:[%s2 + $0x40] sm:$0xff]
  %v2969 = vld [vmem:[%s2 + $0x48] sm:$0xff]
  %v2970 = vld [vmem:[%s2 + $0x50] sm:$0xff]
  %v2971 = vld [vmem:[%s2 + $0x58] sm:$0xff]
  %v2972 = vld [vmem:[%s2 + $0x60] sm:$0xff]
  %v2973 = vld [vmem:[%s2 + $0x68] sm:$0xff]
  %v2974 = vld [vmem:[%s2 + $0x70] sm:$0xff]
  %v2975 = vld [vmem:[%s2 + $0x78] sm:$0xff]
  %v2976 = vld [vmem:[%s2 + $0x80] sm:$0xff]
  %v2977 = vld [vmem:[%s2 + $0x88] sm:$0xff]
  %v2978 = vld [vmem:[%s2 + $0x90] sm:$0xff]
  %v2979 = vld [vmem:[%s2 + $0x98] sm:$0xff]
  %v2980 = vld [vmem:[%s2 + $0xa0] sm:$0xff]
  %v2981 = vld [vmem:[%s2 + $0xa8] sm:$0xff]
  %v2982 = vld [vmem:[%s2 + $0xb0] sm:$0xff]
  %v2983 = vld [vmem:[%s2 + $0xb8] sm:$0xff]
  %v2984 = vld [vmem:[%s2 + $0xc0] sm:$0xff]
  %v2985 = vld [vmem:[%s2 + $0xc8] sm:$0xff]
  %v2986 = vld [vmem:[%s2 + $0xd0] sm:$0xff]
  %v2987 = vld [vmem:[%s2 + $0xd8] sm:$0xff]
  %v2988 = vld [vmem:[%s2 + $0xe0] sm:$0xff]
  %v2989 = vld [vmem:[%s2 + $0xe8] sm:$0xff]
  %v2990 = vld [vmem:[%s2 + $0xf0] sm:$0xff]
  %v2991 = vld [vmem:[%s2 + $0xf8] sm:$0xff]
  %v2992 = vld [vmem:[%s2 + $0x100] sm:$0xff]
  %v2993 = vld [vmem:[%s2 + $0x108] sm:$0xff]
  %v2994 = vld [vmem:[%s2 + $0x110] sm:$0xff]
  %v2995 = vld [vmem:[%s2 + $0x118] sm:$0xff]
  %v2996 = vld [vmem:[%s2 + $0x120] sm:$0xff]
  %v2997 = vld [vmem:[%s2 + $0x128] sm:$0xff]
  %v2998 = vld [vmem:[%s2 + $0x130] sm:$0xff]
  %v2999 = vld [vmem:[%s2 + $0x138] sm:$0xff]
  %v3000 = vld [vmem:[%s2 + $0x140] sm:$0xff]
  %v3001 = vld [vmem:[%s2 + $0x148] sm:$0xff]
  %v3002 = vld [vmem:[%s2 + $0x150] sm:$0xff]
  %v3003 = vld [vmem:[%s2 + $0x158] sm:$0xff]
  %v3004 = vld [vmem:[%s2 + $0x160] sm:$0xff]
  %v3005 = vld [vmem:[%s2 + $0x168] sm:$0xff]
  %v3006 = vld [vmem:[%s2 + $0x170] sm:$0xff]
  %v3007 = vld [vmem:[%s2 + $0x178] sm:$0xff]
  %v3008 = vld [vmem:[%s2 + $0x180] sm:$0xff]
  %v3009 = vld [vmem:[%s2 + $0x188] sm:$0xff]
  %v3010 = vld [vmem:[%s2 + $0x190] sm:$0xff]
  %v3011 = vld [vmem:[%s2 + $0x198] sm:$0xff]
  %v3012 = vld [vmem:[%s2 + $0x1a0] sm:$0xff]
  %v3013 = vld [vmem:[%s2 + $0x1a8] sm:$0xff]
  %v3014 = vld [vmem:[%s2 + $0x1b0] sm:$0xff]
  %v3015 = vld [vmem:[%s2 + $0x1b8] sm:$0xff]
  %v3016 = vld [vmem:[%s2 + $0x1c0] sm:$0xff]
  %v3017 = vld [vmem:[%s2 + $0x1c8] sm:$0xff]
  %v3018 = vld [vmem:[%s2 + $0x1d0] sm:$0xff]
  %v3019 = vld [vmem:[%s2 + $0x1d8] sm:$0xff]
  %v3020 = vld [vmem:[%s2 + $0x1e0] sm:$0xff]
  %v3021 = vld [vmem:[%s2 + $0x1e8] sm:$0xff]
  %v3022 = vld [vmem:[%s2 + $0x1f0] sm:$0xff]
  %v3023 = vld [vmem:[%s2 + $0x1f8] sm:$0xff]
  %3024 = vmatprep.subr.mxu0 %v3021
  %3025 = vmatpush1.msra.mxu0 %v3020
  %3026 = vmatprep.subr.mxu0 %v3017
  %3027 = vmatpush1.msra.mxu0 %v3016
  %3028 = vmatprep.subr.mxu0 %v3013
  %3029 = vmatpush1.msra.mxu0 %v3012
  %3030 = vmatprep.subr.mxu0 %v3009
  %3031 = vmatpush1.msra.mxu0 %v3008
  %3032 = vmatprep.subr.mxu0 %v3005
  %3033 = vmatpush1.msra.mxu0 %v3004
  %3034 = vmatprep.subr.mxu0 %v3001
  %3035 = vmatpush1.msra.mxu0 %v3000
  %3036 = vmatprep.subr.mxu0 %v2997
  %3037 = vmatpush1.msra.mxu0 %v2996
  %3038 = vmatprep.subr.mxu0 %v2993
  %3039 = vmatpush1.msra.mxu0 %v2992
  %3040 = vmatprep.subr.mxu0 %v2989
  %3041 = vmatpush1.msra.mxu0 %v2988
  %3042 = vmatprep.subr.mxu0 %v2985
  %3043 = vmatpush1.msra.mxu0 %v2984
  %3044 = vmatprep.subr.mxu0 %v2981
  %3045 = vmatpush1.msra.mxu0 %v2980
  %3046 = vmatprep.subr.mxu0 %v2977
  %3047 = vmatpush1.msra.mxu0 %v2976
  %3048 = vmatprep.subr.mxu0 %v2973
  %3049 = vmatpush1.msra.mxu0 %v2972
  %3050 = vmatprep.subr.mxu0 %v2969
  %3051 = vmatpush1.msra.mxu0 %v2968
  %3052 = vmatprep.subr.mxu0 %v2965
  %3053 = vmatpush1.msra.mxu0 %v2964
  %3054 = vmatprep.subr.mxu0 %v2961
  %3055 = vmatpush1.msra.mxu0 %v2960
  %3056 = vmatprep.subr.mxu0 0.0
  %3057 = vmatpush2.msra.mxu0 0.0
  %3058 = vmatprep.subr.mxu0 0.0
  %3059 = vmatpush2.msra.mxu0 0.0
  %3060 = vmatprep.subr.mxu0 0.0
  %3061 = vmatpush2.msra.mxu0 0.0
  %3062 = vmatprep.subr.mxu0 0.0
  %3063 = vmatpush2.msra.mxu0 0.0
  %3064 = vmatprep.subr.mxu0 0.0
  %3065 = vmatpush2.msra.mxu0 0.0
  %3066 = vmatprep.subr.mxu0 0.0
  %3067 = vmatpush2.msra.mxu0 0.0
  %3068 = vmatprep.subr.mxu0 0.0
  %3069 = vmatpush2.msra.mxu0 0.0
  %3070 = vmatprep.subr.mxu0 0.0
  %3071 = vmatpush2.msra.mxu0 0.0
  %3072 = vmatprep.subr.mxu0 0.0
  %3073 = vmatpush2.msra.mxu0 0.0
  %3074 = vmatprep.subr.mxu0 0.0
  %3075 = vmatpush2.msra.mxu0 0.0
  %3076 = vmatprep.subr.mxu0 0.0
  %3077 = vmatpush2.msra.mxu0 0.0
  %3078 = vmatprep.subr.mxu0 0.0
  %3079 = vmatpush2.msra.mxu0 0.0
  %3080 = vmatprep.subr.mxu0 0.0
  %3081 = vmatpush2.msra.mxu0 0.0
  %3082 = vmatprep.subr.mxu0 0.0
  %3083 = vmatpush2.msra.mxu0 0.0
  %3084 = vmatprep.subr.mxu0 0.0
  %3085 = vmatpush2.msra.mxu0 0.0
  %3086 = vmatprep.subr.mxu0 0.0
  %3087 = vmatpush2.msra.mxu0 0.0
  %3088 = vmatprep.mubr.f32.mxu0 0.0
  %3089 = vmatmul.mubr.f32.gmra.mxu0 %v2955
  %v3090 = vpop.f32.mrf.mxu0
  %v3091 = vadd.f32 0.0, %v3090
  %v3092 = vpop.f32.mrf.mxu0
  %v3093 = vadd.f32 0.0, %v3092
  %3094 = vdwg.mxu0
  %3095 = vmatprep.subr.mxu0 %v3023
  %3096 = vmatpush1.msra.mxu0 %v3022
  %3097 = vmatprep.subr.mxu0 %v3019
  %3098 = vmatpush1.msra.mxu0 %v3018
  %3099 = vmatprep.subr.mxu0 %v3015
  %3100 = vmatpush1.msra.mxu0 %v3014
  %3101 = vmatprep.subr.mxu0 %v3011
  %3102 = vmatpush1.msra.mxu0 %v3010
  %3103 = vmatprep.subr.mxu0 %v3007
  %3104 = vmatpush1.msra.mxu0 %v3006
  %3105 = vmatprep.subr.mxu0 %v3003
  %3106 = vmatpush1.msra.mxu0 %v3002
  %3107 = vmatprep.subr.mxu0 %v2999
  %3108 = vmatpush1.msra.mxu0 %v2998
  %3109 = vmatprep.subr.mxu0 %v2995
  %3110 = vmatpush1.msra.mxu0 %v2994
  %3111 = vmatprep.subr.mxu0 %v2991
  %3112 = vmatpush1.msra.mxu0 %v2990
  %3113 = vmatprep.subr.mxu0 %v2987
  %3114 = vmatpush1.msra.mxu0 %v2986
  %3115 = vmatprep.subr.mxu0 %v2983
  %3116 = vmatpush1.msra.mxu0 %v2982
  %3117 = vmatprep.subr.mxu0 %v2979
  %3118 = vmatpush1.msra.mxu0 %v2978
  %3119 = vmatprep.subr.mxu0 %v2975
  %3120 = vmatpush1.msra.mxu0 %v2974
  %3121 = vmatprep.subr.mxu0 %v2971
  %3122 = vmatpush1.msra.mxu0 %v2970
  %3123 = vmatprep.subr.mxu0 %v2967
  %3124 = vmatpush1.msra.mxu0 %v2966
  %3125 = vmatprep.subr.mxu0 %v2963
  %3126 = vmatpush1.msra.mxu0 %v2962
  %3127 = vmatprep.subr.mxu0 0.0
  %3128 = vmatpush2.msra.mxu0 0.0
  %3129 = vmatprep.subr.mxu0 0.0
  %3130 = vmatpush2.msra.mxu0 0.0
  %3131 = vmatprep.subr.mxu0 0.0
  %3132 = vmatpush2.msra.mxu0 0.0
  %3133 = vmatprep.subr.mxu0 0.0
  %3134 = vmatpush2.msra.mxu0 0.0
  %3135 = vmatprep.subr.mxu0 0.0
  %3136 = vmatpush2.msra.mxu0 0.0
  %3137 = vmatprep.subr.mxu0 0.0
  %3138 = vmatpush2.msra.mxu0 0.0
  %3139 = vmatprep.subr.mxu0 0.0
  %3140 = vmatpush2.msra.mxu0 0.0
  %3141 = vmatprep.subr.mxu0 0.0
  %3142 = vmatpush2.msra.mxu0 0.0
  %3143 = vmatprep.subr.mxu0 0.0
  %3144 = vmatpush2.msra.mxu0 0.0
  %3145 = vmatprep.subr.mxu0 0.0
  %3146 = vmatpush2.msra.mxu0 0.0
  %3147 = vmatprep.subr.mxu0 0.0
  %3148 = vmatpush2.msra.mxu0 0.0
  %3149 = vmatprep.subr.mxu0 0.0
  %3150 = vmatpush2.msra.mxu0 0.0
  %3151 = vmatprep.subr.mxu0 0.0
  %3152 = vmatpush2.msra.mxu0 0.0
  %3153 = vmatprep.subr.mxu0 0.0
  %3154 = vmatpush2.msra.mxu0 0.0
  %3155 = vmatprep.subr.mxu0 0.0
  %3156 = vmatpush2.msra.mxu0 0.0
  %3157 = vmatprep.subr.mxu0 0.0
  %3158 = vmatpush2.msra.mxu0 0.0
  %3159 = vmatprep.mubr.f32.mxu0 0.0
  %3160 = vmatmul.mubr.f32.gmra.mxu0 %v2955
  %v3161 = vpop.f32.mrf.mxu0
  %v3162 = vadd.f32 0.0, %v3161
  %v3163 = vpop.f32.mrf.mxu0
  %v3164 = vadd.f32 0.0, %v3163
  %3165 = vdwg.mxu0
  %v3170 = vcombine.low %v3091, %v3093
  %v3171 = vcombine.low %v3162, %v3164
  %v3173 = vunpack.c.l.s4 1966171168
  %v3174 = vunpack.c.0.s8 %v3173
  %v3175 = vlaneseq
  %v3176 = vshrl.u32 %v3175, 7
  %v3177 = vsub.s32 %v3174, %v3176
  %v3178 = vrot.slane %v3170, %v3177
  %v3180 = vunpack.c.l.s4 1966171168
  %v3181 = vunpack.c.0.s8 %v3180
  %v3182 = vlaneseq
  %v3183 = vshrl.u32 %v3182, 7
  %v3184 = vsub.s32 %v3181, %v3183
  %v3185 = vrot.slane %v3171, %v3184
  %v3186 = vcombine.low %v3178, %v3185
  %v3187 = vcombine.high %v3178, %v3185
  %v3189 = vunpack.c.l.s4 1966171168
  %v3190 = vunpack.c.0.s8 %v3189
  %v3191 = vlaneseq
  %v3192 = vshrl.u32 %v3191, 7
  %v3193 = vsub.s32 %v3190, %v3192
  %v3194 = vrot.slane %v3186, %v3193
  %v3196 = vunpack.c.l.s4 1966171168
  %v3197 = vunpack.c.0.s8 %v3196
  %v3198 = vlaneseq
  %v3199 = vshrl.u32 %v3198, 7
  %v3200 = vsub.s32 %v3197, %v3199
  %v3201 = vrot.slane %v3187, %v3200
  %v3204 = vadd.f32 %v2957, %v3194
  %v3205 = vadd.f32 %v2959, %v3201
  %v3206 = vxor.u32 %v3204, 2147483648
  %v3207 = vxor.u32 %v3205, 2147483648
  %v3208 = vmul.f32 %v3206, 1.442695
  %v3209 = vpow.pop %v3208
  %v3210 = vmul.f32 %v3207, 1.442695
  %v3211 = vpow.pop %v3210
  %v3212 = vadd.f32 %v3209, 1.0
  %v3213 = vadd.f32 %v3211, 1.0
  %v3214 = vrcp.pop %v3212
  %v3215 = vmul.f32 1.0, %v3214
  %v3216 = vrcp.pop %v3213
  %v3217 = vmul.f32 1.0, %v3216
  %v3220 = vrot.slane %v3204, 1
  %v3221 = vrot.slane %v3205, 1
  %v3224 = vxor.u32 %v3220, 2147483648
  %v3225 = vxor.u32 %v3221, 2147483648
  %v3226 = vmul.f32 %v3224, 1.442695
  %v3227 = vpow.pop %v3226
  %v3228 = vmul.f32 %v3225, 1.442695
  %v3229 = vpow.pop %v3228
  %v3230 = vadd.f32 %v3227, 1.0
  %v3231 = vadd.f32 %v3229, 1.0
  %v3232 = vrcp.pop %v3230
  %v3233 = vmul.f32 1.0, %v3232
  %v3234 = vrcp.pop %v3231
  %v3235 = vmul.f32 1.0, %v3234
  %v3236 = vrot.slane %v3204, 2
  %v3237 = vrot.slane %v3205, 2
  %v3240 = vtanh.pop %v3236
  %v3241 = vtanh.pop %v3237
  %v3242 = vrot.slane %v3204, 3
  %v3243 = vrot.slane %v3205, 3
  %v3246 = vxor.u32 %v3242, 2147483648
  %v3247 = vxor.u32 %v3243, 2147483648
  %v3248 = vmul.f32 %v3246, 1.442695
  %v3249 = vpow.pop %v3248
  %v3250 = vmul.f32 %v3247, 1.442695
  %v3251 = vpow.pop %v3250
  %v3252 = vadd.f32 %v3249, 1.0
  %v3253 = vadd.f32 %v3251, 1.0
  %v3254 = vrcp.pop %v3252
  %v3255 = vmul.f32 1.0, %v3254
  %v3256 = vrcp.pop %v3253
  %v3257 = vmul.f32 1.0, %v3256
  %v3260 = vunpack.c.l.s4 1966171168
  %v3261 = vunpack.c.0.s8 %v3260
  %v3262 = vlaneseq
  %v3263 = vshrl.u32 %v3262, 7
  %v3264 = vsub.s32 %v3261, %v3263
  %v3265 = vrot.slane %v2956, %v3264
  %v3266 = vcombine.high %v3265, %v3265
  %v3268 = vunpack.c.l.s4 1966171168
  %v3269 = vunpack.c.0.s8 %v3268
  %v3270 = vlaneseq
  %v3271 = vshrl.u32 %v3270, 7
  %v3272 = vsub.s32 %v3269, %v3271
  %v3273 = vrot.slane %v3265, %v3272
  %v3275 = vunpack.c.l.s4 1966171168
  %v3276 = vunpack.c.0.s8 %v3275
  %v3277 = vlaneseq
  %v3278 = vshrl.u32 %v3277, 7
  %v3279 = vsub.s32 %v3276, %v3278
  %v3280 = vrot.slane %v3266, %v3279
  %v3283 = vmul.f32 %v3233, %v3273
  %v3284 = vmul.f32 %v3235, %v3280
  %v3285 = vmul.f32 %v3215, %v3240
  %v3286 = vmul.f32 %v3217, %v3241
  %v3287 = vadd.f32 %v3283, %v3285
  %v3288 = vadd.f32 %v3284, %v3286
  %v3289 = vtanh.pop %v3287
  %v3290 = vtanh.pop %v3288
  %v3291 = vmul.f32 %v3255, %v3289
  %v3292 = vmul.f32 %v3257, %v3290
  %s3293 = scalar_lea.vmem [#allocation4], 1
  %v3294 = vld [vmem:[%s3293] ss:$4 sm:$0xf]
  %s3295 = scalar_lea.vmem [#allocation4], 17
  %v3296 = vld [vmem:[%s3295] ss:$4 sm:$0xf]
  %v3299 = vcombine.low %v3291, %v3292
  %v3301 = vunpack.c.l.s4 1966171168
  %v3302 = vunpack.c.0.s8 %v3301
  %v3303 = vlaneseq
  %v3304 = vshrl.u32 %v3303, 7
  %v3305 = vsub.s32 %v3302, %v3304
  %v3306 = vrot.slane %v3299, %v3305
  %v3308 = vunpack.c.l.s4 1966171168
  %v3309 = vunpack.c.0.s8 %v3308
  %v3310 = vlaneseq
  %v3311 = vshrl.u32 %v3310, 7
  %v3312 = vsub.s32 %v3309, %v3311
  %v3313 = vrot.slane %v3306, %v3312
  %3315 = vmatprep.subr.mxu0 %v3021
  %3316 = vmatpush1.msra.mxu0 %v3020
  %3317 = vmatprep.subr.mxu0 %v3017
  %3318 = vmatpush1.msra.mxu0 %v3016
  %3319 = vmatprep.subr.mxu0 %v3013
  %3320 = vmatpush1.msra.mxu0 %v3012
  %3321 = vmatprep.subr.mxu0 %v3009
  %3322 = vmatpush1.msra.mxu0 %v3008
  %3323 = vmatprep.subr.mxu0 %v3005
  %3324 = vmatpush1.msra.mxu0 %v3004
  %3325 = vmatprep.subr.mxu0 %v3001
  %3326 = vmatpush1.msra.mxu0 %v3000
  %3327 = vmatprep.subr.mxu0 %v2997
  %3328 = vmatpush1.msra.mxu0 %v2996
  %3329 = vmatprep.subr.mxu0 %v2993
  %3330 = vmatpush1.msra.mxu0 %v2992
  %3331 = vmatprep.subr.mxu0 %v2989
  %3332 = vmatpush1.msra.mxu0 %v2988
  %3333 = vmatprep.subr.mxu0 %v2985
  %3334 = vmatpush1.msra.mxu0 %v2984
  %3335 = vmatprep.subr.mxu0 %v2981
  %3336 = vmatpush1.msra.mxu0 %v2980
  %3337 = vmatprep.subr.mxu0 %v2977
  %3338 = vmatpush1.msra.mxu0 %v2976
  %3339 = vmatprep.subr.mxu0 %v2973
  %3340 = vmatpush1.msra.mxu0 %v2972
  %3341 = vmatprep.subr.mxu0 %v2969
  %3342 = vmatpush1.msra.mxu0 %v2968
  %3343 = vmatprep.subr.mxu0 %v2965
  %3344 = vmatpush1.msra.mxu0 %v2964
  %3345 = vmatprep.subr.mxu0 %v2961
  %3346 = vmatpush1.msra.mxu0 %v2960
  %3347 = vmatprep.subr.mxu0 0.0
  %3348 = vmatpush2.msra.mxu0 0.0
  %3349 = vmatprep.subr.mxu0 0.0
  %3350 = vmatpush2.msra.mxu0 0.0
  %3351 = vmatprep.subr.mxu0 0.0
  %3352 = vmatpush2.msra.mxu0 0.0
  %3353 = vmatprep.subr.mxu0 0.0
  %3354 = vmatpush2.msra.mxu0 0.0
  %3355 = vmatprep.subr.mxu0 0.0
  %3356 = vmatpush2.msra.mxu0 0.0
  %3357 = vmatprep.subr.mxu0 0.0
  %3358 = vmatpush2.msra.mxu0 0.0
  %3359 = vmatprep.subr.mxu0 0.0
  %3360 = vmatpush2.msra.mxu0 0.0
  %3361 = vmatprep.subr.mxu0 0.0
  %3362 = vmatpush2.msra.mxu0 0.0
  %3363 = vmatprep.subr.mxu0 0.0
  %3364 = vmatpush2.msra.mxu0 0.0
  %3365 = vmatprep.subr.mxu0 0.0
  %3366 = vmatpush2.msra.mxu0 0.0
  %3367 = vmatprep.subr.mxu0 0.0
  %3368 = vmatpush2.msra.mxu0 0.0
  %3369 = vmatprep.subr.mxu0 0.0
  %3370 = vmatpush2.msra.mxu0 0.0
  %3371 = vmatprep.subr.mxu0 0.0
  %3372 = vmatpush2.msra.mxu0 0.0
  %3373 = vmatprep.subr.mxu0 0.0
  %3374 = vmatpush2.msra.mxu0 0.0
  %3375 = vmatprep.subr.mxu0 0.0
  %3376 = vmatpush2.msra.mxu0 0.0
  %3377 = vmatprep.subr.mxu0 0.0
  %3378 = vmatpush2.msra.mxu0 0.0
  %3379 = vmatprep.mubr.f32.mxu0 0.0
  %3380 = vmatmul.mubr.f32.gmra.mxu0 %v3313
  %v3381 = vpop.f32.mrf.mxu0
  %v3382 = vadd.f32 0.0, %v3381
  %v3383 = vpop.f32.mrf.mxu0
  %v3384 = vadd.f32 0.0, %v3383
  %3385 = vdwg.mxu0
  %3386 = vmatprep.subr.mxu0 %v3023
  %3387 = vmatpush1.msra.mxu0 %v3022
  %3388 = vmatprep.subr.mxu0 %v3019
  %3389 = vmatpush1.msra.mxu0 %v3018
  %3390 = vmatprep.subr.mxu0 %v3015
  %3391 = vmatpush1.msra.mxu0 %v3014
  %3392 = vmatprep.subr.mxu0 %v3011
  %3393 = vmatpush1.msra.mxu0 %v3010
  %3394 = vmatprep.subr.mxu0 %v3007
  %3395 = vmatpush1.msra.mxu0 %v3006
  %3396 = vmatprep.subr.mxu0 %v3003
  %3397 = vmatpush1.msra.mxu0 %v3002
  %3398 = vmatprep.subr.mxu0 %v2999
  %3399 = vmatpush1.msra.mxu0 %v2998
  %3400 = vmatprep.subr.mxu0 %v2995
  %3401 = vmatpush1.msra.mxu0 %v2994
  %3402 = vmatprep.subr.mxu0 %v2991
  %3403 = vmatpush1.msra.mxu0 %v2990
  %3404 = vmatprep.subr.mxu0 %v2987
  %3405 = vmatpush1.msra.mxu0 %v2986
  %3406 = vmatprep.subr.mxu0 %v2983
  %3407 = vmatpush1.msra.mxu0 %v2982
  %3408 = vmatprep.subr.mxu0 %v2979
  %3409 = vmatpush1.msra.mxu0 %v2978
  %3410 = vmatprep.subr.mxu0 %v2975
  %3411 = vmatpush1.msra.mxu0 %v2974
  %3412 = vmatprep.subr.mxu0 %v2971
  %3413 = vmatpush1.msra.mxu0 %v2970
  %3414 = vmatprep.subr.mxu0 %v2967
  %3415 = vmatpush1.msra.mxu0 %v2966
  %3416 = vmatprep.subr.mxu0 %v2963
  %3417 = vmatpush1.msra.mxu0 %v2962
  %3418 = vmatprep.subr.mxu0 0.0
  %3419 = vmatpush2.msra.mxu0 0.0
  %3420 = vmatprep.subr.mxu0 0.0
  %3421 = vmatpush2.msra.mxu0 0.0
  %3422 = vmatprep.subr.mxu0 0.0
  %3423 = vmatpush2.msra.mxu0 0.0
  %3424 = vmatprep.subr.mxu0 0.0
  %3425 = vmatpush2.msra.mxu0 0.0
  %3426 = vmatprep.subr.mxu0 0.0
  %3427 = vmatpush2.msra.mxu0 0.0
  %3428 = vmatprep.subr.mxu0 0.0
  %3429 = vmatpush2.msra.mxu0 0.0
  %3430 = vmatprep.subr.mxu0 0.0
  %3431 = vmatpush2.msra.mxu0 0.0
  %3432 = vmatprep.subr.mxu0 0.0
  %3433 = vmatpush2.msra.mxu0 0.0
  %3434 = vmatprep.subr.mxu0 0.0
  %3435 = vmatpush2.msra.mxu0 0.0
  %3436 = vmatprep.subr.mxu0 0.0
  %3437 = vmatpush2.msra.mxu0 0.0
  %3438 = vmatprep.subr.mxu0 0.0
  %3439 = vmatpush2.msra.mxu0 0.0
  %3440 = vmatprep.subr.mxu0 0.0
  %3441 = vmatpush2.msra.mxu0 0.0
  %3442 = vmatprep.subr.mxu0 0.0
  %3443 = vmatpush2.msra.mxu0 0.0
  %3444 = vmatprep.subr.mxu0 0.0
  %3445 = vmatpush2.msra.mxu0 0.0
  %3446 = vmatprep.subr.mxu0 0.0
  %3447 = vmatpush2.msra.mxu0 0.0
  %3448 = vmatprep.subr.mxu0 0.0
  %3449 = vmatpush2.msra.mxu0 0.0
  %3450 = vmatprep.mubr.f32.mxu0 0.0
  %3451 = vmatmul.mubr.f32.gmra.mxu0 %v3313
  %v3452 = vpop.f32.mrf.mxu0
  %v3453 = vadd.f32 0.0, %v3452
  %v3454 = vpop.f32.mrf.mxu0
  %v3455 = vadd.f32 0.0, %v3454
  %3456 = vdwg.mxu0
  %v3461 = vcombine.low %v3382, %v3384
  %v3462 = vcombine.low %v3453, %v3455
  %v3464 = vunpack.c.l.s4 1966171168
  %v3465 = vunpack.c.0.s8 %v3464
  %v3466 = vlaneseq
  %v3467 = vshrl.u32 %v3466, 7
  %v3468 = vsub.s32 %v3465, %v3467
  %v3469 = vrot.slane %v3461, %v3468
  %v3471 = vunpack.c.l.s4 1966171168
  %v3472 = vunpack.c.0.s8 %v3471
  %v3473 = vlaneseq
  %v3474 = vshrl.u32 %v3473, 7
  %v3475 = vsub.s32 %v3472, %v3474
  %v3476 = vrot.slane %v3462, %v3475
  %v3477 = vcombine.low %v3469, %v3476
  %v3478 = vcombine.high %v3469, %v3476
  %v3480 = vunpack.c.l.s4 1966171168
  %v3481 = vunpack.c.0.s8 %v3480
  %v3482 = vlaneseq
  %v3483 = vshrl.u32 %v3482, 7
  %v3484 = vsub.s32 %v3481, %v3483
  %v3485 = vrot.slane %v3477, %v3484
  %v3487 = vunpack.c.l.s4 1966171168
  %v3488 = vunpack.c.0.s8 %v3487
  %v3489 = vlaneseq
  %v3490 = vshrl.u32 %v3489, 7
  %v3491 = vsub.s32 %v3488, %v3490
  %v3492 = vrot.slane %v3478, %v3491
  %v3495 = vadd.f32 %v3294, %v3485
  %v3496 = vadd.f32 %v3296, %v3492
  %v3497 = vxor.u32 %v3495, 2147483648
  %v3498 = vxor.u32 %v3496, 2147483648
  %v3499 = vmul.f32 %v3497, 1.442695
  %v3500 = vpow.pop %v3499
  %v3501 = vmul.f32 %v3498, 1.442695
  %v3502 = vpow.pop %v3501
  %v3503 = vadd.f32 %v3500, 1.0
  %v3504 = vadd.f32 %v3502, 1.0
  %v3505 = vrcp.pop %v3503
  %v3506 = vmul.f32 1.0, %v3505
  %v3507 = vrcp.pop %v3504
  %v3508 = vmul.f32 1.0, %v3507
  %v3511 = vrot.slane %v3495, 1
  %v3512 = vrot.slane %v3496, 1
  %v3515 = vxor.u32 %v3511, 2147483648
  %v3516 = vxor.u32 %v3512, 2147483648
  %v3517 = vmul.f32 %v3515, 1.442695
  %v3518 = vpow.pop %v3517
  %v3519 = vmul.f32 %v3516, 1.442695
  %v3520 = vpow.pop %v3519
  %v3521 = vadd.f32 %v3518, 1.0
  %v3522 = vadd.f32 %v3520, 1.0
  %v3523 = vrcp.pop %v3521
  %v3524 = vmul.f32 1.0, %v3523
  %v3525 = vrcp.pop %v3522
  %v3526 = vmul.f32 1.0, %v3525
  %v3527 = vrot.slane %v3495, 2
  %v3528 = vrot.slane %v3496, 2
  %v3531 = vtanh.pop %v3527
  %v3532 = vtanh.pop %v3528
  %v3533 = vrot.slane %v3495, 3
  %v3534 = vrot.slane %v3496, 3
  %v3537 = vxor.u32 %v3533, 2147483648
  %v3538 = vxor.u32 %v3534, 2147483648
  %v3539 = vmul.f32 %v3537, 1.442695
  %v3540 = vpow.pop %v3539
  %v3541 = vmul.f32 %v3538, 1.442695
  %v3542 = vpow.pop %v3541
  %v3543 = vadd.f32 %v3540, 1.0
  %v3544 = vadd.f32 %v3542, 1.0
  %v3545 = vrcp.pop %v3543
  %v3546 = vmul.f32 1.0, %v3545
  %v3547 = vrcp.pop %v3544
  %v3548 = vmul.f32 1.0, %v3547
  %v3549 = vmul.f32 %v3524, %v3287
  %v3550 = vmul.f32 %v3526, %v3288
  %v3551 = vmul.f32 %v3506, %v3531
  %v3552 = vmul.f32 %v3508, %v3532
  %v3553 = vadd.f32 %v3549, %v3551
  %v3554 = vadd.f32 %v3550, %v3552
  %v3555 = vtanh.pop %v3553
  %v3556 = vtanh.pop %v3554
  %v3557 = vmul.f32 %v3546, %v3555
  %v3558 = vmul.f32 %v3548, %v3556
  %s3559 = scalar_lea.vmem [#allocation4], 2
  %v3560 = vld [vmem:[%s3559] ss:$4 sm:$0xf]
  %s3561 = scalar_lea.vmem [#allocation4], 18
  %v3562 = vld [vmem:[%s3561] ss:$4 sm:$0xf]
  %v3565 = vcombine.low %v3557, %v3558
  %v3567 = vunpack.c.l.s4 1966171168
  %v3568 = vunpack.c.0.s8 %v3567
  %v3569 = vlaneseq
  %v3570 = vshrl.u32 %v3569, 7
  %v3571 = vsub.s32 %v3568, %v3570
  %v3572 = vrot.slane %v3565, %v3571
  %v3574 = vunpack.c.l.s4 1966171168
  %v3575 = vunpack.c.0.s8 %v3574
  %v3576 = vlaneseq
  %v3577 = vshrl.u32 %v3576, 7
  %v3578 = vsub.s32 %v3575, %v3577
  %v3579 = vrot.slane %v3572, %v3578
  %3581 = vmatprep.subr.mxu0 %v3021
  %3582 = vmatpush1.msra.mxu0 %v3020
  %3583 = vmatprep.subr.mxu0 %v3017
  %3584 = vmatpush1.msra.mxu0 %v3016
  %3585 = vmatprep.subr.mxu0 %v3013
  %3586 = vmatpush1.msra.mxu0 %v3012
  %3587 = vmatprep.subr.mxu0 %v3009
  %3588 = vmatpush1.msra.mxu0 %v3008
  %3589 = vmatprep.subr.mxu0 %v3005
  %3590 = vmatpush1.msra.mxu0 %v3004
  %3591 = vmatprep.subr.mxu0 %v3001
  %3592 = vmatpush1.msra.mxu0 %v3000
  %3593 = vmatprep.subr.mxu0 %v2997
  %3594 = vmatpush1.msra.mxu0 %v2996
  %3595 = vmatprep.subr.mxu0 %v2993
  %3596 = vmatpush1.msra.mxu0 %v2992
  %3597 = vmatprep.subr.mxu0 %v2989
  %3598 = vmatpush1.msra.mxu0 %v2988
  %3599 = vmatprep.subr.mxu0 %v2985
  %3600 = vmatpush1.msra.mxu0 %v2984
  %3601 = vmatprep.subr.mxu0 %v2981
  %3602 = vmatpush1.msra.mxu0 %v2980
  %3603 = vmatprep.subr.mxu0 %v2977
  %3604 = vmatpush1.msra.mxu0 %v2976
  %3605 = vmatprep.subr.mxu0 %v2973
  %3606 = vmatpush1.msra.mxu0 %v2972
  %3607 = vmatprep.subr.mxu0 %v2969
  %3608 = vmatpush1.msra.mxu0 %v2968
  %3609 = vmatprep.subr.mxu0 %v2965
  %3610 = vmatpush1.msra.mxu0 %v2964
  %3611 = vmatprep.subr.mxu0 %v2961
  %3612 = vmatpush1.msra.mxu0 %v2960
  %3613 = vmatprep.subr.mxu0 0.0
  %3614 = vmatpush2.msra.mxu0 0.0
  %3615 = vmatprep.subr.mxu0 0.0
  %3616 = vmatpush2.msra.mxu0 0.0
  %3617 = vmatprep.subr.mxu0 0.0
  %3618 = vmatpush2.msra.mxu0 0.0
  %3619 = vmatprep.subr.mxu0 0.0
  %3620 = vmatpush2.msra.mxu0 0.0
  %3621 = vmatprep.subr.mxu0 0.0
  %3622 = vmatpush2.msra.mxu0 0.0
  %3623 = vmatprep.subr.mxu0 0.0
  %3624 = vmatpush2.msra.mxu0 0.0
  %3625 = vmatprep.subr.mxu0 0.0
  %3626 = vmatpush2.msra.mxu0 0.0
  %3627 = vmatprep.subr.mxu0 0.0
  %3628 = vmatpush2.msra.mxu0 0.0
  %3629 = vmatprep.subr.mxu0 0.0
  %3630 = vmatpush2.msra.mxu0 0.0
  %3631 = vmatprep.subr.mxu0 0.0
  %3632 = vmatpush2.msra.mxu0 0.0
  %3633 = vmatprep.subr.mxu0 0.0
  %3634 = vmatpush2.msra.mxu0 0.0
  %3635 = vmatprep.subr.mxu0 0.0
  %3636 = vmatpush2.msra.mxu0 0.0
  %3637 = vmatprep.subr.mxu0 0.0
  %3638 = vmatpush2.msra.mxu0 0.0
  %3639 = vmatprep.subr.mxu0 0.0
  %3640 = vmatpush2.msra.mxu0 0.0
  %3641 = vmatprep.subr.mxu0 0.0
  %3642 = vmatpush2.msra.mxu0 0.0
  %3643 = vmatprep.subr.mxu0 0.0
  %3644 = vmatpush2.msra.mxu0 0.0
  %3645 = vmatprep.mubr.f32.mxu0 0.0
  %3646 = vmatmul.mubr.f32.gmra.mxu0 %v3579
  %v3647 = vpop.f32.mrf.mxu0
  %v3648 = vadd.f32 0.0, %v3647
  %v3649 = vpop.f32.mrf.mxu0
  %v3650 = vadd.f32 0.0, %v3649
  %3651 = vdwg.mxu0
  %3652 = vmatprep.subr.mxu0 %v3023
  %3653 = vmatpush1.msra.mxu0 %v3022
  %3654 = vmatprep.subr.mxu0 %v3019
  %3655 = vmatpush1.msra.mxu0 %v3018
  %3656 = vmatprep.subr.mxu0 %v3015
  %3657 = vmatpush1.msra.mxu0 %v3014
  %3658 = vmatprep.subr.mxu0 %v3011
  %3659 = vmatpush1.msra.mxu0 %v3010
  %3660 = vmatprep.subr.mxu0 %v3007
  %3661 = vmatpush1.msra.mxu0 %v3006
  %3662 = vmatprep.subr.mxu0 %v3003
  %3663 = vmatpush1.msra.mxu0 %v3002
  %3664 = vmatprep.subr.mxu0 %v2999
  %3665 = vmatpush1.msra.mxu0 %v2998
  %3666 = vmatprep.subr.mxu0 %v2995
  %3667 = vmatpush1.msra.mxu0 %v2994
  %3668 = vmatprep.subr.mxu0 %v2991
  %3669 = vmatpush1.msra.mxu0 %v2990
  %3670 = vmatprep.subr.mxu0 %v2987
  %3671 = vmatpush1.msra.mxu0 %v2986
  %3672 = vmatprep.subr.mxu0 %v2983
  %3673 = vmatpush1.msra.mxu0 %v2982
  %3674 = vmatprep.subr.mxu0 %v2979
  %3675 = vmatpush1.msra.mxu0 %v2978
  %3676 = vmatprep.subr.mxu0 %v2975
  %3677 = vmatpush1.msra.mxu0 %v2974
  %3678 = vmatprep.subr.mxu0 %v2971
  %3679 = vmatpush1.msra.mxu0 %v2970
  %3680 = vmatprep.subr.mxu0 %v2967
  %3681 = vmatpush1.msra.mxu0 %v2966
  %3682 = vmatprep.subr.mxu0 %v2963
  %3683 = vmatpush1.msra.mxu0 %v2962
  %3684 = vmatprep.subr.mxu0 0.0
  %3685 = vmatpush2.msra.mxu0 0.0
  %3686 = vmatprep.subr.mxu0 0.0
  %3687 = vmatpush2.msra.mxu0 0.0
  %3688 = vmatprep.subr.mxu0 0.0
  %3689 = vmatpush2.msra.mxu0 0.0
  %3690 = vmatprep.subr.mxu0 0.0
  %3691 = vmatpush2.msra.mxu0 0.0
  %3692 = vmatprep.subr.mxu0 0.0
  %3693 = vmatpush2.msra.mxu0 0.0
  %3694 = vmatprep.subr.mxu0 0.0
  %3695 = vmatpush2.msra.mxu0 0.0
  %3696 = vmatprep.subr.mxu0 0.0
  %3697 = vmatpush2.msra.mxu0 0.0
  %3698 = vmatprep.subr.mxu0 0.0
  %3699 = vmatpush2.msra.mxu0 0.0
  %3700 = vmatprep.subr.mxu0 0.0
  %3701 = vmatpush2.msra.mxu0 0.0
  %3702 = vmatprep.subr.mxu0 0.0
  %3703 = vmatpush2.msra.mxu0 0.0
  %3704 = vmatprep.subr.mxu0 0.0
  %3705 = vmatpush2.msra.mxu0 0.0
  %3706 = vmatprep.subr.mxu0 0.0
  %3707 = vmatpush2.msra.mxu0 0.0
  %3708 = vmatprep.subr.mxu0 0.0
  %3709 = vmatpush2.msra.mxu0 0.0
  %3710 = vmatprep.subr.mxu0 0.0
  %3711 = vmatpush2.msra.mxu0 0.0
  %3712 = vmatprep.subr.mxu0 0.0
  %3713 = vmatpush2.msra.mxu0 0.0
  %3714 = vmatprep.subr.mxu0 0.0
  %3715 = vmatpush2.msra.mxu0 0.0
  %3716 = vmatprep.mubr.f32.mxu0 0.0
  %3717 = vmatmul.mubr.f32.gmra.mxu0 %v3579
  %v3718 = vpop.f32.mrf.mxu0
  %v3719 = vadd.f32 0.0, %v3718
  %v3720 = vpop.f32.mrf.mxu0
  %v3721 = vadd.f32 0.0, %v3720
  %3722 = vdwg.mxu0
  %v3727 = vcombine.low %v3648, %v3650
  %v3728 = vcombine.low %v3719, %v3721
  %v3730 = vunpack.c.l.s4 1966171168
  %v3731 = vunpack.c.0.s8 %v3730
  %v3732 = vlaneseq
  %v3733 = vshrl.u32 %v3732, 7
  %v3734 = vsub.s32 %v3731, %v3733
  %v3735 = vrot.slane %v3727, %v3734
  %v3737 = vunpack.c.l.s4 1966171168
  %v3738 = vunpack.c.0.s8 %v3737
  %v3739 = vlaneseq
  %v3740 = vshrl.u32 %v3739, 7
  %v3741 = vsub.s32 %v3738, %v3740
  %v3742 = vrot.slane %v3728, %v3741
  %v3743 = vcombine.low %v3735, %v3742
  %v3744 = vcombine.high %v3735, %v3742
  %v3746 = vunpack.c.l.s4 1966171168
  %v3747 = vunpack.c.0.s8 %v3746
  %v3748 = vlaneseq
  %v3749 = vshrl.u32 %v3748, 7
  %v3750 = vsub.s32 %v3747, %v3749
  %v3751 = vrot.slane %v3743, %v3750
  %v3753 = vunpack.c.l.s4 1966171168
  %v3754 = vunpack.c.0.s8 %v3753
  %v3755 = vlaneseq
  %v3756 = vshrl.u32 %v3755, 7
  %v3757 = vsub.s32 %v3754, %v3756
  %v3758 = vrot.slane %v3744, %v3757
  %v3761 = vadd.f32 %v3560, %v3751
  %v3762 = vadd.f32 %v3562, %v3758
  %v3763 = vxor.u32 %v3761, 2147483648
  %v3764 = vxor.u32 %v3762, 2147483648
  %v3765 = vmul.f32 %v3763, 1.442695
  %v3766 = vpow.pop %v3765
  %v3767 = vmul.f32 %v3764, 1.442695
  %v3768 = vpow.pop %v3767
  %v3769 = vadd.f32 %v3766, 1.0
  %v3770 = vadd.f32 %v3768, 1.0
  %v3771 = vrcp.pop %v3769
  %v3772 = vmul.f32 1.0, %v3771
  %v3773 = vrcp.pop %v3770
  %v3774 = vmul.f32 1.0, %v3773
  %v3777 = vrot.slane %v3761, 1
  %v3778 = vrot.slane %v3762, 1
  %v3781 = vxor.u32 %v3777, 2147483648
  %v3782 = vxor.u32 %v3778, 2147483648
  %v3783 = vmul.f32 %v3781, 1.442695
  %v3784 = vpow.pop %v3783
  %v3785 = vmul.f32 %v3782, 1.442695
  %v3786 = vpow.pop %v3785
  %v3787 = vadd.f32 %v3784, 1.0
  %v3788 = vadd.f32 %v3786, 1.0
  %v3789 = vrcp.pop %v3787
  %v3790 = vmul.f32 1.0, %v3789
  %v3791 = vrcp.pop %v3788
  %v3792 = vmul.f32 1.0, %v3791
  %v3793 = vrot.slane %v3761, 2
  %v3794 = vrot.slane %v3762, 2
  %v3797 = vtanh.pop %v3793
  %v3798 = vtanh.pop %v3794
  %v3799 = vrot.slane %v3761, 3
  %v3800 = vrot.slane %v3762, 3
  %v3803 = vxor.u32 %v3799, 2147483648
  %v3804 = vxor.u32 %v3800, 2147483648
  %v3805 = vmul.f32 %v3803, 1.442695
  %v3806 = vpow.pop %v3805
  %v3807 = vmul.f32 %v3804, 1.442695
  %v3808 = vpow.pop %v3807
  %v3809 = vadd.f32 %v3806, 1.0
  %v3810 = vadd.f32 %v3808, 1.0
  %v3811 = vrcp.pop %v3809
  %v3812 = vmul.f32 1.0, %v3811
  %v3813 = vrcp.pop %v3810
  %v3814 = vmul.f32 1.0, %v3813
  %v3815 = vmul.f32 %v3790, %v3553
  %v3816 = vmul.f32 %v3792, %v3554
  %v3817 = vmul.f32 %v3772, %v3797
  %v3818 = vmul.f32 %v3774, %v3798
  %v3819 = vadd.f32 %v3815, %v3817
  %v3820 = vadd.f32 %v3816, %v3818
  %v3821 = vtanh.pop %v3819
  %v3822 = vtanh.pop %v3820
  %v3823 = vmul.f32 %v3812, %v3821
  %v3824 = vmul.f32 %v3814, %v3822
  %s3825 = scalar_lea.vmem [#allocation4], 3
  %v3826 = vld [vmem:[%s3825] ss:$4 sm:$0xf]
  %s3827 = scalar_lea.vmem [#allocation4], 19
  %v3828 = vld [vmem:[%s3827] ss:$4 sm:$0xf]
  %v3831 = vcombine.low %v3823, %v3824
  %v3833 = vunpack.c.l.s4 1966171168
  %v3834 = vunpack.c.0.s8 %v3833
  %v3835 = vlaneseq
  %v3836 = vshrl.u32 %v3835, 7
  %v3837 = vsub.s32 %v3834, %v3836
  %v3838 = vrot.slane %v3831, %v3837
  %v3840 = vunpack.c.l.s4 1966171168
  %v3841 = vunpack.c.0.s8 %v3840
  %v3842 = vlaneseq
  %v3843 = vshrl.u32 %v3842, 7
  %v3844 = vsub.s32 %v3841, %v3843
  %v3845 = vrot.slane %v3838, %v3844
  %3847 = vmatprep.subr.mxu0 %v3021
  %3848 = vmatpush1.msra.mxu0 %v3020
  %3849 = vmatprep.subr.mxu0 %v3017
  %3850 = vmatpush1.msra.mxu0 %v3016
  %3851 = vmatprep.subr.mxu0 %v3013
  %3852 = vmatpush1.msra.mxu0 %v3012
  %3853 = vmatprep.subr.mxu0 %v3009
  %3854 = vmatpush1.msra.mxu0 %v3008
  %3855 = vmatprep.subr.mxu0 %v3005
  %3856 = vmatpush1.msra.mxu0 %v3004
  %3857 = vmatprep.subr.mxu0 %v3001
  %3858 = vmatpush1.msra.mxu0 %v3000
  %3859 = vmatprep.subr.mxu0 %v2997
  %3860 = vmatpush1.msra.mxu0 %v2996
  %3861 = vmatprep.subr.mxu0 %v2993
  %3862 = vmatpush1.msra.mxu0 %v2992
  %3863 = vmatprep.subr.mxu0 %v2989
  %3864 = vmatpush1.msra.mxu0 %v2988
  %3865 = vmatprep.subr.mxu0 %v2985
  %3866 = vmatpush1.msra.mxu0 %v2984
  %3867 = vmatprep.subr.mxu0 %v2981
  %3868 = vmatpush1.msra.mxu0 %v2980
  %3869 = vmatprep.subr.mxu0 %v2977
  %3870 = vmatpush1.msra.mxu0 %v2976
  %3871 = vmatprep.subr.mxu0 %v2973
  %3872 = vmatpush1.msra.mxu0 %v2972
  %3873 = vmatprep.subr.mxu0 %v2969
  %3874 = vmatpush1.msra.mxu0 %v2968
  %3875 = vmatprep.subr.mxu0 %v2965
  %3876 = vmatpush1.msra.mxu0 %v2964
  %3877 = vmatprep.subr.mxu0 %v2961
  %3878 = vmatpush1.msra.mxu0 %v2960
  %3879 = vmatprep.subr.mxu0 0.0
  %3880 = vmatpush2.msra.mxu0 0.0
  %3881 = vmatprep.subr.mxu0 0.0
  %3882 = vmatpush2.msra.mxu0 0.0
  %3883 = vmatprep.subr.mxu0 0.0
  %3884 = vmatpush2.msra.mxu0 0.0
  %3885 = vmatprep.subr.mxu0 0.0
  %3886 = vmatpush2.msra.mxu0 0.0
  %3887 = vmatprep.subr.mxu0 0.0
  %3888 = vmatpush2.msra.mxu0 0.0
  %3889 = vmatprep.subr.mxu0 0.0
  %3890 = vmatpush2.msra.mxu0 0.0
  %3891 = vmatprep.subr.mxu0 0.0
  %3892 = vmatpush2.msra.mxu0 0.0
  %3893 = vmatprep.subr.mxu0 0.0
  %3894 = vmatpush2.msra.mxu0 0.0
  %3895 = vmatprep.subr.mxu0 0.0
  %3896 = vmatpush2.msra.mxu0 0.0
  %3897 = vmatprep.subr.mxu0 0.0
  %3898 = vmatpush2.msra.mxu0 0.0
  %3899 = vmatprep.subr.mxu0 0.0
  %3900 = vmatpush2.msra.mxu0 0.0
  %3901 = vmatprep.subr.mxu0 0.0
  %3902 = vmatpush2.msra.mxu0 0.0
  %3903 = vmatprep.subr.mxu0 0.0
  %3904 = vmatpush2.msra.mxu0 0.0
  %3905 = vmatprep.subr.mxu0 0.0
  %3906 = vmatpush2.msra.mxu0 0.0
  %3907 = vmatprep.subr.mxu0 0.0
  %3908 = vmatpush2.msra.mxu0 0.0
  %3909 = vmatprep.subr.mxu0 0.0
  %3910 = vmatpush2.msra.mxu0 0.0
  %3911 = vmatprep.mubr.f32.mxu0 0.0
  %3912 = vmatmul.mubr.f32.gmra.mxu0 %v3845
  %v3913 = vpop.f32.mrf.mxu0
  %v3914 = vadd.f32 0.0, %v3913
  %v3915 = vpop.f32.mrf.mxu0
  %v3916 = vadd.f32 0.0, %v3915
  %3917 = vdwg.mxu0
  %3918 = vmatprep.subr.mxu0 %v3023
  %3919 = vmatpush1.msra.mxu0 %v3022
  %3920 = vmatprep.subr.mxu0 %v3019
  %3921 = vmatpush1.msra.mxu0 %v3018
  %3922 = vmatprep.subr.mxu0 %v3015
  %3923 = vmatpush1.msra.mxu0 %v3014
  %3924 = vmatprep.subr.mxu0 %v3011
  %3925 = vmatpush1.msra.mxu0 %v3010
  %3926 = vmatprep.subr.mxu0 %v3007
  %3927 = vmatpush1.msra.mxu0 %v3006
  %3928 = vmatprep.subr.mxu0 %v3003
  %3929 = vmatpush1.msra.mxu0 %v3002
  %3930 = vmatprep.subr.mxu0 %v2999
  %3931 = vmatpush1.msra.mxu0 %v2998
  %3932 = vmatprep.subr.mxu0 %v2995
  %3933 = vmatpush1.msra.mxu0 %v2994
  %3934 = vmatprep.subr.mxu0 %v2991
  %3935 = vmatpush1.msra.mxu0 %v2990
  %3936 = vmatprep.subr.mxu0 %v2987
  %3937 = vmatpush1.msra.mxu0 %v2986
  %3938 = vmatprep.subr.mxu0 %v2983
  %3939 = vmatpush1.msra.mxu0 %v2982
  %3940 = vmatprep.subr.mxu0 %v2979
  %3941 = vmatpush1.msra.mxu0 %v2978
  %3942 = vmatprep.subr.mxu0 %v2975
  %3943 = vmatpush1.msra.mxu0 %v2974
  %3944 = vmatprep.subr.mxu0 %v2971
  %3945 = vmatpush1.msra.mxu0 %v2970
  %3946 = vmatprep.subr.mxu0 %v2967
  %3947 = vmatpush1.msra.mxu0 %v2966
  %3948 = vmatprep.subr.mxu0 %v2963
  %3949 = vmatpush1.msra.mxu0 %v2962
  %3950 = vmatprep.subr.mxu0 0.0
  %3951 = vmatpush2.msra.mxu0 0.0
  %3952 = vmatprep.subr.mxu0 0.0
  %3953 = vmatpush2.msra.mxu0 0.0
  %3954 = vmatprep.subr.mxu0 0.0
  %3955 = vmatpush2.msra.mxu0 0.0
  %3956 = vmatprep.subr.mxu0 0.0
  %3957 = vmatpush2.msra.mxu0 0.0
  %3958 = vmatprep.subr.mxu0 0.0
  %3959 = vmatpush2.msra.mxu0 0.0
  %3960 = vmatprep.subr.mxu0 0.0
  %3961 = vmatpush2.msra.mxu0 0.0
  %3962 = vmatprep.subr.mxu0 0.0
  %3963 = vmatpush2.msra.mxu0 0.0
  %3964 = vmatprep.subr.mxu0 0.0
  %3965 = vmatpush2.msra.mxu0 0.0
  %3966 = vmatprep.subr.mxu0 0.0
  %3967 = vmatpush2.msra.mxu0 0.0
  %3968 = vmatprep.subr.mxu0 0.0
  %3969 = vmatpush2.msra.mxu0 0.0
  %3970 = vmatprep.subr.mxu0 0.0
  %3971 = vmatpush2.msra.mxu0 0.0
  %3972 = vmatprep.subr.mxu0 0.0
  %3973 = vmatpush2.msra.mxu0 0.0
  %3974 = vmatprep.subr.mxu0 0.0
  %3975 = vmatpush2.msra.mxu0 0.0
  %3976 = vmatprep.subr.mxu0 0.0
  %3977 = vmatpush2.msra.mxu0 0.0
  %3978 = vmatprep.subr.mxu0 0.0
  %3979 = vmatpush2.msra.mxu0 0.0
  %3980 = vmatprep.subr.mxu0 0.0
  %3981 = vmatpush2.msra.mxu0 0.0
  %3982 = vmatprep.mubr.f32.mxu0 0.0
  %3983 = vmatmul.mubr.f32.gmra.mxu0 %v3845
  %v3984 = vpop.f32.mrf.mxu0
  %v3985 = vadd.f32 0.0, %v3984
  %v3986 = vpop.f32.mrf.mxu0
  %v3987 = vadd.f32 0.0, %v3986
  %3988 = vdwg.mxu0
  %v3993 = vcombine.low %v3914, %v3916
  %v3994 = vcombine.low %v3985, %v3987
  %v3996 = vunpack.c.l.s4 1966171168
  %v3997 = vunpack.c.0.s8 %v3996
  %v3998 = vlaneseq
  %v3999 = vshrl.u32 %v3998, 7
  %v4000 = vsub.s32 %v3997, %v3999
  %v4001 = vrot.slane %v3993, %v4000
  %v4003 = vunpack.c.l.s4 1966171168
  %v4004 = vunpack.c.0.s8 %v4003
  %v4005 = vlaneseq
  %v4006 = vshrl.u32 %v4005, 7
  %v4007 = vsub.s32 %v4004, %v4006
  %v4008 = vrot.slane %v3994, %v4007
  %v4009 = vcombine.low %v4001, %v4008
  %v4010 = vcombine.high %v4001, %v4008
  %v4012 = vunpack.c.l.s4 1966171168
  %v4013 = vunpack.c.0.s8 %v4012
  %v4014 = vlaneseq
  %v4015 = vshrl.u32 %v4014, 7
  %v4016 = vsub.s32 %v4013, %v4015
  %v4017 = vrot.slane %v4009, %v4016
  %v4019 = vunpack.c.l.s4 1966171168
  %v4020 = vunpack.c.0.s8 %v4019
  %v4021 = vlaneseq
  %v4022 = vshrl.u32 %v4021, 7
  %v4023 = vsub.s32 %v4020, %v4022
  %v4024 = vrot.slane %v4010, %v4023
  %v4027 = vadd.f32 %v3826, %v4017
  %v4028 = vadd.f32 %v3828, %v4024
  %v4029 = vxor.u32 %v4027, 2147483648
  %v4030 = vxor.u32 %v4028, 2147483648
  %v4031 = vmul.f32 %v4029, 1.442695
  %v4032 = vpow.pop %v4031
  %v4033 = vmul.f32 %v4030, 1.442695
  %v4034 = vpow.pop %v4033
  %v4035 = vadd.f32 %v4032, 1.0
  %v4036 = vadd.f32 %v4034, 1.0
  %v4037 = vrcp.pop %v4035
  %v4038 = vmul.f32 1.0, %v4037
  %v4039 = vrcp.pop %v4036
  %v4040 = vmul.f32 1.0, %v4039
  %v4043 = vrot.slane %v4027, 1
  %v4044 = vrot.slane %v4028, 1
  %v4047 = vxor.u32 %v4043, 2147483648
  %v4048 = vxor.u32 %v4044, 2147483648
  %v4049 = vmul.f32 %v4047, 1.442695
  %v4050 = vpow.pop %v4049
  %v4051 = vmul.f32 %v4048, 1.442695
  %v4052 = vpow.pop %v4051
  %v4053 = vadd.f32 %v4050, 1.0
  %v4054 = vadd.f32 %v4052, 1.0
  %v4055 = vrcp.pop %v4053
  %v4056 = vmul.f32 1.0, %v4055
  %v4057 = vrcp.pop %v4054
  %v4058 = vmul.f32 1.0, %v4057
  %v4059 = vrot.slane %v4027, 2
  %v4060 = vrot.slane %v4028, 2
  %v4063 = vtanh.pop %v4059
  %v4064 = vtanh.pop %v4060
  %v4065 = vrot.slane %v4027, 3
  %v4066 = vrot.slane %v4028, 3
  %v4069 = vxor.u32 %v4065, 2147483648
  %v4070 = vxor.u32 %v4066, 2147483648
  %v4071 = vmul.f32 %v4069, 1.442695
  %v4072 = vpow.pop %v4071
  %v4073 = vmul.f32 %v4070, 1.442695
  %v4074 = vpow.pop %v4073
  %v4075 = vadd.f32 %v4072, 1.0
  %v4076 = vadd.f32 %v4074, 1.0
  %v4077 = vrcp.pop %v4075
  %v4078 = vmul.f32 1.0, %v4077
  %v4079 = vrcp.pop %v4076
  %v4080 = vmul.f32 1.0, %v4079
  %v4081 = vmul.f32 %v4056, %v3819
  %v4082 = vmul.f32 %v4058, %v3820
  %v4083 = vmul.f32 %v4038, %v4063
  %v4084 = vmul.f32 %v4040, %v4064
  %v4085 = vadd.f32 %v4081, %v4083
  %v4086 = vadd.f32 %v4082, %v4084
  %v4087 = vtanh.pop %v4085
  %v4088 = vtanh.pop %v4086
  %v4089 = vmul.f32 %v4078, %v4087
  %v4090 = vmul.f32 %v4080, %v4088
  %v4093 = vcombine.low %v4089, %v4090
  %v4095 = vunpack.c.l.s4 1966171168
  %v4096 = vunpack.c.0.s8 %v4095
  %v4097 = vlaneseq
  %v4098 = vshrl.u32 %v4097, 7
  %v4099 = vsub.s32 %v4096, %v4098
  %v4100 = vrot.slane %v4093, %v4099
  %v4102 = vunpack.c.l.s4 1966171168
  %v4103 = vunpack.c.0.s8 %v4102
  %v4104 = vlaneseq
  %v4105 = vshrl.u32 %v4104, 7
  %v4106 = vsub.s32 %v4103, %v4105
  %v4107 = vrot.slane %v4100, %v4106
  %4109 = vst [vmem:[#allocation2] sm:$0x3] %v4107
  %v4112 = vcombine.low %v4085, %v4086
  %v4114 = vunpack.c.l.s4 1966171168
  %v4115 = vunpack.c.0.s8 %v4114
  %v4116 = vlaneseq
  %v4117 = vshrl.u32 %v4116, 7
  %v4118 = vsub.s32 %v4115, %v4117
  %v4119 = vrot.slane %v4112, %v4118
  %v4121 = vunpack.c.l.s4 1966171168
  %v4122 = vunpack.c.0.s8 %v4121
  %v4123 = vlaneseq
  %v4124 = vshrl.u32 %v4123, 7
  %v4125 = vsub.s32 %v4122, %v4124
  %v4126 = vrot.slane %v4119, %v4125
  %4128 = vst [vmem:[#allocation3] sm:$0x3] %v4126
  %4129 = vst [vmem:[%s4] sm:$0x3] %v4107
  // Predicated region
  $region22: #{eeg_dwt_cnn_lstm_forward.4} parent=0 // pred_check
    _
  $region23: #{eeg_dwt_cnn_lstm_forward.4} parent=0 // pred_check_branch
    %4131 = sbr.rel (0) target = $region25
  $region24: #{eeg_dwt_cnn_lstm_forward.4} parent=0 // pred_region
    _
  $region25: #{eeg_dwt_cnn_lstm_forward.4} parent=0 // pred_fallthru
    _
  // Predicated region
  $region26: #{eeg_dwt_cnn_lstm_forward.4} parent=0 // pred_check
    _
  $region27: #{eeg_dwt_cnn_lstm_forward.4} parent=0 // pred_check_branch
    %4133 = sbr.rel (0) target = $region29
  $region28: #{eeg_dwt_cnn_lstm_forward.4} parent=0 // pred_region
    _
  $region29: #{eeg_dwt_cnn_lstm_forward.4} parent=0 // pred_fallthru
    _

// kernel: eeg_dwt_cnn_lstm_forward.3
$region0: #{eeg_dwt_cnn_lstm_forward.3}
  #allocation0 [shape = 'u32[]', space=smem, size = 0x4, offset = 0x4, fixed_abs, tag = 'smem constant byte address 0x4 - core index']
  #allocation1 [shape = 'u32[144,128]{1,0:T(1,128)}', space=vmem, size = 0x12000, scoped, tag = 'internal scratch']
  #allocation2 [shape = 'bf16[4,36,23]{2,1,0:T(8,128)(2,1)}', space=vmem, size = 0xa000, scoped, tag = 'scratch operand']
  #allocation3 [shape = 'bf16[2,36,384]{2,1,0:T(8,128)(2,1)}', space=vmem, size = 0xf000, scoped, tag = 'scratch operand']
  %s0 = inlined_call_operand.vmem [shape: bf16[2,4,4,23], index: 0, kind: input, shape index: {}]
  %s1 = inlined_call_operand.hbm [shape: bf16[3,23,384], index: 1, kind: input, shape index: {}]
  %s2 = inlined_call_operand.hbm [shape: f32[1,384], index: 2, kind: input, shape index: {}]
  %s3 = inlined_call_operand.hbm [shape: f32[1,384], index: 3, kind: input, shape index: {}]
  %s4 = inlined_call_operand.hbm [shape: bf16[3,384,768], index: 4, kind: input, shape index: {}]
  %s5 = inlined_call_operand.hbm [shape: f32[1,768], index: 5, kind: input, shape index: {}]
  %s6 = inlined_call_operand.hbm [shape: f32[1,768], index: 6, kind: input, shape index: {}]
  %s7 = inlined_call_operand.vmem [shape: bf16[2,4,768], index: 7, kind: output, shape index: {}]
  %s8 = sld [smem:[#allocation0]]
  $region85: #{eeg_dwt_cnn_lstm_forward.3} parent=0
    _
  %s10 = ssub.s32 1, %s8
  %s11 = scalar_select 0, %s10, %s8
  $region1: #{eeg_dwt_cnn_lstm_forward.3} parent=0
    #allocation4 [shape = 'u8[55296]{0}', space=vmem, size = 0xd800, scoped, tag = 'input window, operand 1, single buffered']
    #allocation5 [shape = 's32[2]{0}', space=sflag, size = 0x8, scoped, tag = 'scoped memory for eeg_dwt_cnn_lstm_forward.3']
    #allocation6 [shape = 'u8[1536]{0}', space=vmem, size = 0x800, scoped, tag = 'input window, operand 2, single buffered']
    #allocation7 [shape = 's32[1]{0}', space=sflag, size = 0x4, scoped, tag = 'scoped memory for eeg_dwt_cnn_lstm_forward.3']
    #allocation8 [shape = 'u8[1536]{0}', space=vmem, size = 0x800, scoped, tag = 'input window, operand 3, single buffered']
    #allocation9 [shape = 'u8[1769472]{0}', space=vmem, size = 0x1b0000, scoped, tag = 'input window, operand 4, single buffered']
    #allocation10 [shape = 's32[1]{0}', space=sflag, size = 0x4, scoped, tag = 'scoped memory for eeg_dwt_cnn_lstm_forward.3']
    #allocation11 [shape = 'u8[3072]{0}', space=vmem, size = 0xc00, scoped, tag = 'input window, operand 5, single buffered']
    #allocation12 [shape = 'u8[3072]{0}', space=vmem, size = 0xc00, scoped, tag = 'input window, operand 6, single buffered']
    #allocation13 [shape = 's32[1]{0}', space=sflag, size = 0x4, scoped, tag = 'scoped memory for eeg_dwt_cnn_lstm_forward.3']
    %12 = vsyncpa [#allocation5], 0
    %13 = vsyncpa [#allocation7], 0
    %14 = vsyncpa [#allocation10], 0
    %15 = vsyncpa [#allocation13], 0
    loop: start=0, step=1, limit=4
    $region2: #{eeg_dwt_cnn_lstm_forward.3} parent=1 // loop_pre_header
      _
    $region3: #{eeg_dwt_cnn_lstm_forward.3} parent=1 // loop_header
      %s17 = sphi 0, %s21
      %p18 = scmp.ge.s32.totalorder %s17, 4
      %s27 = sphi 0, %s29
      %s30 = sphi 0, %s27
      %s31 = sphi 0, %s30
      %s47 = sphi 0, %s31
      %s51 = sphi 0, %s51
      %s53 = sphi 0, %s51
      %s54 = sphi 0, %s53
      %s68 = sphi 0, %s54
      %s72 = sphi 0, %s72
      %s74 = sphi 0, %s72
      %s75 = sphi 0, %s74
      %s89 = sphi 0, %s75
      %s93 = sphi 0, %s93
      %s95 = sphi 0, %s93
      %s96 = sphi 0, %s95
      %s110 = sphi 0, %s96
      %s114 = sphi 0, %s114
      %s116 = sphi 0, %s114
      %s117 = sphi 0, %s116
      %s131 = sphi 0, %s117
      %s135 = sphi 0, %s135
      %s137 = sphi 0, %s135
      %s138 = sphi 0, %s137
      %s152 = sphi 0, %s138
      %s156 = sphi 0, %s156
      %s158 = sphi 0, %s156
      %s159 = sphi 0, %s158
      %s173 = sphi 0, %s159
      %s179 = sphi 0, %s181
      %s182 = sphi 0, %s179
      %s183 = sphi 0, %s182
      %s199 = sphi 0, %s183
    $region4: #{eeg_dwt_cnn_lstm_forward.3} parent=1 // loop_header_branch
      %20 = sbr.rel (%p18) target = $region8
    $region5: #{eeg_dwt_cnn_lstm_forward.3} parent=1 // loop_body
      %s22 = ssub.s32 %s17, 1
      %s23 = ssub.s32 %s17, 2
      %s24 = sadd.s32 %s17, 1
      %s25 = ssub.s32 %s17, %s24
      %p26 = scmp.eq.s32.totalorder %s25, 0
      %s28 = sadd.s32 %s27, 1
      %s29 = scalar_select %p26, %s27, %s28
      %p32 = pneg %p26
      %p33 = scmp.eq.s32.totalorder %s17, 1
      %p34 = por %p32, %p33
      %p35 = scmp.ne.s32.totalorder %s27, %s30
      %p36 = scmp.eq.s32.totalorder %s17, 0
      %p37 = por %p35, %p36
      %p38 = scmp.ne.s32.totalorder %s27, %s30
      %p39 = scmp.eq.s32.totalorder %s22, 1
      %p40 = por %p38, %p39
      %p41 = scmp.ne.s32.totalorder %s30, %s31
      %p42 = scmp.eq.s32.totalorder %s22, 0
      %p43 = por %p41, %p42
      %p44 = scmp.ne.s32.totalorder %s30, %s31
      %p45 = scmp.eq.s32.totalorder %s23, 1
      %p46 = por %p44, %p45
      %p48 = scmp.ne.s32.totalorder %s31, %s47
      %p49 = scmp.eq.s32.totalorder %s23, 0
      %p50 = por %p48, %p49
      %s52 = sadd.s32 %s51, 1
      %p55 = scmp.eq.s32.totalorder %s17, 1
      %p56 = scmp.ne.s32.totalorder %s51, %s53
      %p57 = scmp.eq.s32.totalorder %s17, 0
      %p58 = por %p56, %p57
      %p59 = scmp.ne.s32.totalorder %s51, %s53
      %p60 = scmp.eq.s32.totalorder %s22, 1
      %p61 = por %p59, %p60
      %p62 = scmp.ne.s32.totalorder %s53, %s54
      %p63 = scmp.eq.s32.totalorder %s22, 0
      %p64 = por %p62, %p63
      %p65 = scmp.ne.s32.totalorder %s53, %s54
      %p66 = scmp.eq.s32.totalorder %s23, 1
      %p67 = por %p65, %p66
      %p69 = scmp.ne.s32.totalorder %s54, %s68
      %p70 = scmp.eq.s32.totalorder %s23, 0
      %p71 = por %p69, %p70
      %s73 = sadd.s32 %s72, 1
      %p76 = scmp.eq.s32.totalorder %s17, 1
      %p77 = scmp.ne.s32.totalorder %s72, %s74
      %p78 = scmp.eq.s32.totalorder %s17, 0
      %p79 = por %p77, %p78
      %p80 = scmp.ne.s32.totalorder %s72, %s74
      %p81 = scmp.eq.s32.totalorder %s22, 1
      %p82 = por %p80, %p81
      %p83 = scmp.ne.s32.totalorder %s74, %s75
      %p84 = scmp.eq.s32.totalorder %s22, 0
      %p85 = por %p83, %p84
      %p86 = scmp.ne.s32.totalorder %s74, %s75
      %p87 = scmp.eq.s32.totalorder %s23, 1
      %p88 = por %p86, %p87
      %p90 = scmp.ne.s32.totalorder %s75, %s89
      %p91 = scmp.eq.s32.totalorder %s23, 0
      %p92 = por %p90, %p91
      %s94 = sadd.s32 %s93, 1
      %p97 = scmp.eq.s32.totalorder %s17, 1
      %p98 = scmp.ne.s32.totalorder %s93, %s95
      %p99 = scmp.eq.s32.totalorder %s17, 0
      %p100 = por %p98, %p99
      %p101 = scmp.ne.s32.totalorder %s93, %s95
      %p102 = scmp.eq.s32.totalorder %s22, 1
      %p103 = por %p101, %p102
      %p104 = scmp.ne.s32.totalorder %s95, %s96
      %p105 = scmp.eq.s32.totalorder %s22, 0
      %p106 = por %p104, %p105
      %p107 = scmp.ne.s32.totalorder %s95, %s96
      %p108 = scmp.eq.s32.totalorder %s23, 1
      %p109 = por %p107, %p108
      %p111 = scmp.ne.s32.totalorder %s96, %s110
      %p112 = scmp.eq.s32.totalorder %s23, 0
      %p113 = por %p111, %p112
      %s115 = sadd.s32 %s114, 1
      %p118 = scmp.eq.s32.totalorder %s17, 1
      %p119 = scmp.ne.s32.totalorder %s114, %s116
      %p120 = scmp.eq.s32.totalorder %s17, 0
      %p121 = por %p119, %p120
      %p122 = scmp.ne.s32.totalorder %s114, %s116
      %p123 = scmp.eq.s32.totalorder %s22, 1
      %p124 = por %p122, %p123
      %p125 = scmp.ne.s32.totalorder %s116, %s117
      %p126 = scmp.eq.s32.totalorder %s22, 0
      %p127 = por %p125, %p126
      %p128 = scmp.ne.s32.totalorder %s116, %s117
      %p129 = scmp.eq.s32.totalorder %s23, 1
      %p130 = por %p128, %p129
      %p132 = scmp.ne.s32.totalorder %s117, %s131
      %p133 = scmp.eq.s32.totalorder %s23, 0
      %p134 = por %p132, %p133
      %s136 = sadd.s32 %s135, 1
      %p139 = scmp.eq.s32.totalorder %s17, 1
      %p140 = scmp.ne.s32.totalorder %s135, %s137
      %p141 = scmp.eq.s32.totalorder %s17, 0
      %p142 = por %p140, %p141
      %p143 = scmp.ne.s32.totalorder %s135, %s137
      %p144 = scmp.eq.s32.totalorder %s22, 1
      %p145 = por %p143, %p144
      %p146 = scmp.ne.s32.totalorder %s137, %s138
      %p147 = scmp.eq.s32.totalorder %s22, 0
      %p148 = por %p146, %p147
      %p149 = scmp.ne.s32.totalorder %s137, %s138
      %p150 = scmp.eq.s32.totalorder %s23, 1
      %p151 = por %p149, %p150
      %p153 = scmp.ne.s32.totalorder %s138, %s152
      %p154 = scmp.eq.s32.totalorder %s23, 0
      %p155 = por %p153, %p154
      %s157 = sadd.s32 %s156, 1
      %p160 = scmp.eq.s32.totalorder %s17, 1
      %p161 = scmp.ne.s32.totalorder %s156, %s158
      %p162 = scmp.eq.s32.totalorder %s17, 0
      %p163 = por %p161, %p162
      %p164 = scmp.ne.s32.totalorder %s156, %s158
      %p165 = scmp.eq.s32.totalorder %s22, 1
      %p166 = por %p164, %p165
      %p167 = scmp.ne.s32.totalorder %s158, %s159
      %p168 = scmp.eq.s32.totalorder %s22, 0
      %p169 = por %p167, %p168
      %p170 = scmp.ne.s32.totalorder %s158, %s159
      %p171 = scmp.eq.s32.totalorder %s23, 1
      %p172 = por %p170, %p171
      %p174 = scmp.ne.s32.totalorder %s159, %s173
      %p175 = scmp.eq.s32.totalorder %s23, 0
      %p176 = por %p174, %p175
      %s177 = ssub.s32 %s17, %s24
      %p178 = scmp.eq.s32.totalorder %s177, 0
      %s180 = sadd.s32 %s179, 1
      %s181 = scalar_select %p178, %s179, %s180
      %p184 = pneg %p178
      %p185 = scmp.eq.s32.totalorder %s17, 1
      %p186 = por %p184, %p185
      %p187 = scmp.ne.s32.totalorder %s179, %s182
      %p188 = scmp.eq.s32.totalorder %s17, 0
      %p189 = por %p187, %p188
      %p190 = scmp.ne.s32.totalorder %s179, %s182
      %p191 = scmp.eq.s32.totalorder %s22, 1
      %p192 = por %p190, %p191
      %p193 = scmp.ne.s32.totalorder %s182, %s183
      %p194 = scmp.eq.s32.totalorder %s22, 0
      %p195 = por %p193, %p194
      %p196 = scmp.ne.s32.totalorder %s182, %s183
      %p197 = scmp.eq.s32.totalorder %s23, 1
      %p198 = por %p196, %p197
      %p200 = scmp.ne.s32.totalorder %s183, %s199
      %p201 = scmp.eq.s32.totalorder %s23, 0
      %p202 = por %p200, %p201
      %p203 = scmp.le.s32.totalorder 1, %s17
      %p204 = scmp.lt.s32.totalorder %s17, 3
      %p205 = pnand %p203, %p204
      %p206 = pneg %p205
      // Predicated region
      $region9: #{eeg_dwt_cnn_lstm_forward.3} parent=5 // pred_check
        _
      $region10: #{eeg_dwt_cnn_lstm_forward.3} parent=5 // pred_check_branch
        %208 = sbr.rel (%p205) target = $region12
      $region11: #{eeg_dwt_cnn_lstm_forward.3} parent=5 // pred_region
        %s209 = ssub.s32 %s17, 1
        // Predicated region
        $region13: #{eeg_dwt_cnn_lstm_forward.3} parent=11 // pred_check
          %p210 = pneg %p64
        $region14: #{eeg_dwt_cnn_lstm_forward.3} parent=11 // pred_check_branch
          %212 = sbr.rel (%p210) target = $region16
        $region15: #{eeg_dwt_cnn_lstm_forward.3} parent=11 // pred_region
          %s214 = ssub.s32 1728, 1728
          %215 = vsyncadd [#allocation5], %s214
          %s216 = sshll.u32 [#allocation4], 4
          %s217 = int_to_ptr.vmem [resolvable:$true] %s216
          %222 = dma.hbm_to_vmem [thread:$0]  %s1, 1728, %s217, [#allocation5], 192, 192, 12
        $region16: #{eeg_dwt_cnn_lstm_forward.3} parent=11 // pred_fallthru
          _
        // Predicated region
        $region17: #{eeg_dwt_cnn_lstm_forward.3} parent=11 // pred_check
          %p223 = pneg %p85
        $region18: #{eeg_dwt_cnn_lstm_forward.3} parent=11 // pred_check_branch
          %225 = sbr.rel (%p223) target = $region20
        $region19: #{eeg_dwt_cnn_lstm_forward.3} parent=11 // pred_region
          %s227 = ssub.s32 48, 48
          %228 = vsyncadd [#allocation7], %s227
          %s230 = sshll.u32 [#allocation6], 4
          %s231 = int_to_ptr.vmem [resolvable:$true] %s230
          %233 = dma.hbm_to_vmem [thread:$0]  %s2, 48, %s231, [#allocation7]
        $region20: #{eeg_dwt_cnn_lstm_forward.3} parent=11 // pred_fallthru
          _
        // Predicated region
        $region21: #{eeg_dwt_cnn_lstm_forward.3} parent=11 // pred_check
          %p234 = pneg %p106
        $region22: #{eeg_dwt_cnn_lstm_forward.3} parent=11 // pred_check_branch
          %236 = sbr.rel (%p234) target = $region24
        $region23: #{eeg_dwt_cnn_lstm_forward.3} parent=11 // pred_region
          %s238 = ssub.s32 48, 48
          %239 = vsyncadd [#allocation7], %s238
          %s241 = sshll.u32 [#allocation8], 4
          %s242 = int_to_ptr.vmem [resolvable:$true] %s241
          %244 = dma.hbm_to_vmem [thread:$0]  %s3, 48, %s242, [#allocation7]
        $region24: #{eeg_dwt_cnn_lstm_forward.3} parent=11 // pred_fallthru
          _
        // Predicated region
        $region25: #{eeg_dwt_cnn_lstm_forward.3} parent=11 // pred_check
          %p245 = pneg %p127
        $region26: #{eeg_dwt_cnn_lstm_forward.3} parent=11 // pred_check_branch
          %247 = sbr.rel (%p245) target = $region28
        $region27: #{eeg_dwt_cnn_lstm_forward.3} parent=11 // pred_region
          %s249 = ssub.s32 55296, 55296
          %250 = vsyncadd [#allocation10], %s249
          %s251 = sshll.u32 [#allocation9], 4
          %s252 = int_to_ptr.vmem [resolvable:$true] %s251
          %257 = dma.hbm_to_vmem [thread:$0]  %s4, 55296, %s252, [#allocation10], 384, 384, 24
        $region28: #{eeg_dwt_cnn_lstm_forward.3} parent=11 // pred_fallthru
          _
        // Predicated region
        $region29: #{eeg_dwt_cnn_lstm_forward.3} parent=11 // pred_check
          %p258 = pneg %p148
        $region30: #{eeg_dwt_cnn_lstm_forward.3} parent=11 // pred_check_branch
          %260 = sbr.rel (%p258) target = $region32
        $region31: #{eeg_dwt_cnn_lstm_forward.3} parent=11 // pred_region
          %s262 = ssub.s32 96, 96
          %263 = vsyncadd [#allocation10], %s262
          %s265 = sshll.u32 [#allocation11], 4
          %s266 = int_to_ptr.vmem [resolvable:$true] %s265
          %268 = dma.hbm_to_vmem [thread:$0]  %s5, 96, %s266, [#allocation10]
        $region32: #{eeg_dwt_cnn_lstm_forward.3} parent=11 // pred_fallthru
          _
        // Predicated region
        $region33: #{eeg_dwt_cnn_lstm_forward.3} parent=11 // pred_check
          %p269 = pneg %p169
        $region34: #{eeg_dwt_cnn_lstm_forward.3} parent=11 // pred_check_branch
          %271 = sbr.rel (%p269) target = $region36
        $region35: #{eeg_dwt_cnn_lstm_forward.3} parent=11 // pred_region
          %s273 = ssub.s32 96, 96
          %274 = vsyncadd [#allocation13], %s273
          %s276 = sshll.u32 [#allocation12], 4
          %s277 = int_to_ptr.vmem [resolvable:$true] %s276
          %279 = dma.hbm_to_vmem [thread:$0]  %s6, 96, %s277, [#allocation13]
        $region36: #{eeg_dwt_cnn_lstm_forward.3} parent=11 // pred_fallthru
          _
      $region12: #{eeg_dwt_cnn_lstm_forward.3} parent=5 // pred_fallthru
        _
      %p280 = scmp.lt.s32.totalorder %s17, 2
      // Predicated region
      $region37: #{eeg_dwt_cnn_lstm_forward.3} parent=5 // pred_check
        %p281 = pneg %p280
      $region38: #{eeg_dwt_cnn_lstm_forward.3} parent=5 // pred_check_branch
        %283 = sbr.rel (%p281) target = $region40
      $region39: #{eeg_dwt_cnn_lstm_forward.3} parent=5 // pred_region
        // Predicated region
        $region41: #{eeg_dwt_cnn_lstm_forward.3} parent=39 // pred_check
          %p284 = pneg %p37
        $region42: #{eeg_dwt_cnn_lstm_forward.3} parent=39 // pred_check_branch
          %286 = sbr.rel (%p284) target = $region44
        $region43: #{eeg_dwt_cnn_lstm_forward.3} parent=39 // pred_region
          %p287 = scmp.lt.s32.totalorder %s17, 1
          %s288 = scalar_select %p287, %s17, 1
          %s289 = smul.addr %s288, 4
          %s290 = smul.addr %s289, 2
          %s291 = scalar_lea.vmem %s0, %s290
        $region44: #{eeg_dwt_cnn_lstm_forward.3} parent=39 // pred_fallthru
          _
      $region40: #{eeg_dwt_cnn_lstm_forward.3} parent=5 // pred_fallthru
        _
      %p292 = scmp.le.s32.totalorder 1, %s17
      %p293 = scmp.lt.s32.totalorder %s17, 3
      %p294 = pnand %p292, %p293
      %p295 = pneg %p294
      // Predicated region
      $region45: #{eeg_dwt_cnn_lstm_forward.3} parent=5 // pred_check
        _
      $region46: #{eeg_dwt_cnn_lstm_forward.3} parent=5 // pred_check_branch
        %297 = sbr.rel (%p294) target = $region48
      $region47: #{eeg_dwt_cnn_lstm_forward.3} parent=5 // pred_region
        %s298 = ssub.s32 %s17, 1
        // Predicated region
        $region49: #{eeg_dwt_cnn_lstm_forward.3} parent=47 // pred_check
          %p299 = pneg %p64
        $region50: #{eeg_dwt_cnn_lstm_forward.3} parent=47 // pred_check_branch
          %301 = sbr.rel (%p299) target = $region52
        $region51: #{eeg_dwt_cnn_lstm_forward.3} parent=47 // pred_region
          %302 = dma.done [#allocation5], 1728
        $region52: #{eeg_dwt_cnn_lstm_forward.3} parent=47 // pred_fallthru
          _
        // Predicated region
        $region53: #{eeg_dwt_cnn_lstm_forward.3} parent=47 // pred_check
          %p303 = pneg %p85
        $region54: #{eeg_dwt_cnn_lstm_forward.3} parent=47 // pred_check_branch
          %305 = sbr.rel (%p303) target = $region56
        $region55: #{eeg_dwt_cnn_lstm_forward.3} parent=47 // pred_region
          %306 = dma.done [#allocation7], 48
        $region56: #{eeg_dwt_cnn_lstm_forward.3} parent=47 // pred_fallthru
          _
        // Predicated region
        $region57: #{eeg_dwt_cnn_lstm_forward.3} parent=47 // pred_check
          %p307 = pneg %p106
        $region58: #{eeg_dwt_cnn_lstm_forward.3} parent=47 // pred_check_branch
          %309 = sbr.rel (%p307) target = $region60
        $region59: #{eeg_dwt_cnn_lstm_forward.3} parent=47 // pred_region
          %310 = dma.done [#allocation7], 48
        $region60: #{eeg_dwt_cnn_lstm_forward.3} parent=47 // pred_fallthru
          _
        // Predicated region
        $region61: #{eeg_dwt_cnn_lstm_forward.3} parent=47 // pred_check
          %p311 = pneg %p127
        $region62: #{eeg_dwt_cnn_lstm_forward.3} parent=47 // pred_check_branch
          %313 = sbr.rel (%p311) target = $region64
        $region63: #{eeg_dwt_cnn_lstm_forward.3} parent=47 // pred_region
          %314 = dma.done [#allocation10], 55296
        $region64: #{eeg_dwt_cnn_lstm_forward.3} parent=47 // pred_fallthru
          _
        // Predicated region
        $region65: #{eeg_dwt_cnn_lstm_forward.3} parent=47 // pred_check
          %p315 = pneg %p148
        $region66: #{eeg_dwt_cnn_lstm_forward.3} parent=47 // pred_check_branch
          %317 = sbr.rel (%p315) target = $region68
        $region67: #{eeg_dwt_cnn_lstm_forward.3} parent=47 // pred_region
          %318 = dma.done [#allocation10], 96
        $region68: #{eeg_dwt_cnn_lstm_forward.3} parent=47 // pred_fallthru
          _
        // Predicated region
        $region69: #{eeg_dwt_cnn_lstm_forward.3} parent=47 // pred_check
          %p319 = pneg %p169
        $region70: #{eeg_dwt_cnn_lstm_forward.3} parent=47 // pred_check_branch
          %321 = sbr.rel (%p319) target = $region72
        $region71: #{eeg_dwt_cnn_lstm_forward.3} parent=47 // pred_region
          %322 = dma.done [#allocation13], 96
        $region72: #{eeg_dwt_cnn_lstm_forward.3} parent=47 // pred_fallthru
          _
        %p323 = scmp.lt.s32.totalorder %s22, 1
        %s324 = scalar_select %p323, %s22, 1
        %s325 = smul.addr %s324, 4
        %s326 = smul.addr %s325, 2
        %s327 = scalar_lea.vmem %s0, %s326
        %p328 = pneg %p43
        %p329 = pneg %p40
        %p330 = pneg %p64
        %p331 = pneg %p61
        %p332 = pneg %p85
        %p333 = pneg %p82
        %p334 = pneg %p106
        %p335 = pneg %p103
        %p336 = pneg %p127
        %p337 = pneg %p124
        %p338 = pneg %p148
        %p339 = pneg %p145
        %p340 = pneg %p169
        %p341 = pneg %p166
        %p342 = pneg %p195
        %p343 = pneg %p192
        %p344 = scmp.lt.s32.totalorder %s22, 1
        %s345 = scalar_select %p344, %s22, 1
        %s346 = smul.addr %s345, 6
        %s347 = smul.addr %s346, 2
        %s348 = scalar_lea.vmem %s7, %s347
        %p349 = scmp.lt.s32.totalorder %s22, 1
        %s350 = scalar_select %p349, %s22, 1
        %s351 = smul.addr %s350, 4
        %s352 = smul.addr %s351, 2
        %s353 = scalar_lea.vmem %s0, %s352
        %p354 = scmp.lt.s32.totalorder %s22, 1
        %s355 = scalar_select %p354, %s22, 1
        %s356 = smul.addr %s355, 6
        %s357 = smul.addr %s356, 2
        %s358 = scalar_lea.vmem %s7, %s357
        %vm360 = vcmask 183299
        %vm361 = vsmask.f32 7950
        %vm362 = vmand %vm360, %vm361
        %v363 = vld [vmem:[#allocation2 + $0x4] sm:$0x8]
        %v364 = vsel %vm362, 0, %v363
        %365 = vst [vmem:[#allocation2 + $0x4] sm:$0x8] %v364
        %vm366 = vcmask 182274
        %vm367 = vsmask.f32 2304
        %vm368 = vmand %vm366, %vm367
        %v369 = vld [vmem:[#allocation2 + $0x8] sm:$0x4]
        %v370 = vsel %vm368, 0, %v369
        %371 = vst [vmem:[#allocation2 + $0x8] sm:$0x4] %v370
        %v372 = vld [vmem:[%s353] sm:$0x3]
        %vm373 = vcmask 181248
        %374 = vst.msk [vmem:[#allocation2 + $0x8] sm:$0x3] %vm373, %v372
        %s375 = scalar_lea.vmem [#allocation2], 20
        %v376 = vld [vmem:[%s375 + $0x4] sm:$0x8]
        %v377 = vsel %vm362, 0, %v376
        %378 = vst [vmem:[%s375 + $0x4] sm:$0x8] %v377
        %v379 = vld [vmem:[%s375 + $0x8] sm:$0x4]
        %v380 = vsel %vm368, 0, %v379
        %381 = vst [vmem:[%s375 + $0x8] sm:$0x4] %v380
        %s382 = scalar_lea.vmem %s353, 2
        %v383 = vld [vmem:[%s382] sm:$0x3]
        %384 = vst.msk [vmem:[%s375 + $0x8] sm:$0x3] %vm373, %v383
        %s385 = scalar_lea.vmem [#allocation2], 40
        %v386 = vld [vmem:[%s385 + $0x4] sm:$0x8]
        %v387 = vsel %vm362, 0, %v386
        %388 = vst [vmem:[%s385 + $0x4] sm:$0x8] %v387
        %v389 = vld [vmem:[%s385 + $0x8] sm:$0x4]
        %v390 = vsel %vm368, 0, %v389
        %391 = vst [vmem:[%s385 + $0x8] sm:$0x4] %v390
        %s392 = scalar_lea.vmem %s353, 4
        %v393 = vld [vmem:[%s392] sm:$0x3]
        %394 = vst.msk [vmem:[%s385 + $0x8] sm:$0x3] %vm373, %v393
        %s395 = scalar_lea.vmem [#allocation2], 60
        %v396 = vld [vmem:[%s395 + $0x4] sm:$0x8]
        %v397 = vsel %vm362, 0, %v396
        %398 = vst [vmem:[%s395 + $0x4] sm:$0x8] %v397
        %v399 = vld [vmem:[%s395 + $0x8] sm:$0x4]
        %v400 = vsel %vm368, 0, %v399
        %401 = vst [vmem:[%s395 + $0x8] sm:$0x4] %v400
        %s402 = scalar_lea.vmem %s353, 6
        %v403 = vld [vmem:[%s402] sm:$0x3]
        %404 = vst.msk [vmem:[%s395 + $0x8] sm:$0x3] %vm373, %v403
        %vm405 = vcmask 1043459
        %vm406 = vmand %vm405, %vm361
        %vm407 = vcmask 1047559
        %vm408 = vsmask.f32 7966
        %vm409 = vmand %vm407, %vm408
        %vm410 = vmor %vm409, %vm406
        %v411 = vld [vmem:[#allocation3 + $0xc] sm:$0x88]
        %v412 = vsel %vm410, 0, %v411
        %413 = vst [vmem:[#allocation3 + $0xc] sm:$0x88] %v412
        %v414 = vld [vmem:[#allocation3 + $0x14] sm:$0x8]
        %v415 = vsel %vm406, 0, %v414
        %416 = vst [vmem:[#allocation3 + $0x14] sm:$0x8] %v415
        %vm417 = vcmask 1042434
        %vm418 = vmand %vm417, %vm367
        %vm419 = vcmask 1046534
        %vm420 = vsmask.f32 6400
        %vm421 = vmand %vm419, %vm420
        %vm422 = vmor %vm421, %vm418
        %v423 = vld [vmem:[#allocation3 + $0x18] sm:$0x44]
        %v424 = vsel %vm422, 0, %v423
        %425 = vst [vmem:[#allocation3 + $0x18] sm:$0x44] %v424
        %v426 = vld [vmem:[#allocation3 + $0x20] sm:$0x4]
        %v427 = vsel %vm418, 0, %v426
        %428 = vst [vmem:[#allocation3 + $0x20] sm:$0x4] %v427
        %s429 = scalar_lea.vmem [#allocation3], 60
        %v430 = vld [vmem:[%s429 + $0xc] sm:$0x88]
        %v431 = vsel %vm410, 0, %v430
        %432 = vst [vmem:[%s429 + $0xc] sm:$0x88] %v431
        %v433 = vld [vmem:[%s429 + $0x14] sm:$0x8]
        %v434 = vsel %vm406, 0, %v433
        %435 = vst [vmem:[%s429 + $0x14] sm:$0x8] %v434
        %v436 = vld [vmem:[%s429 + $0x18] sm:$0x44]
        %v437 = vsel %vm422, 0, %v436
        %438 = vst [vmem:[%s429 + $0x18] sm:$0x44] %v437
        %v439 = vld [vmem:[%s429 + $0x20] sm:$0x4]
        %v440 = vsel %vm418, 0, %v439
        %441 = vst [vmem:[%s429 + $0x20] sm:$0x4] %v440
        %v442 = vld [vmem:[%s395 + $0x4] sm:$0x8]
        %v443 = vld [vmem:[%s395 + $0x8] sm:$0x3]
        %v444 = vld [vmem:[#allocation4] sm:$0xff]
        %v445 = vld [vmem:[#allocation4 + $0x8] sm:$0xf]
        %v446 = vld [vmem:[#allocation4 + $0xc] sm:$0xff]
        %v447 = vld [vmem:[#allocation4 + $0x14] sm:$0xf]
        %v448 = vld [vmem:[#allocation4 + $0x18] sm:$0xff]
        %v449 = vld [vmem:[#allocation4 + $0x20] sm:$0xf]
        %v450 = vld [vmem:[#allocation2 + $0x8] sm:$0x3]
        %s451 = scalar_lea.vmem [#allocation4], 36
        %v452 = vld [vmem:[%s451] sm:$0xff]
        %v453 = vld [vmem:[%s451 + $0x8] sm:$0xf]
        %v454 = vld [vmem:[%s451 + $0xc] sm:$0xff]
        %v455 = vld [vmem:[%s451 + $0x14] sm:$0xf]
        %v456 = vld [vmem:[%s451 + $0x18] sm:$0xff]
        %v457 = vld [vmem:[%s451 + $0x20] sm:$0xf]
        %v464 = vunpack.c.l.b16 %v452
        %v465 = vunpack.c.h.b16 %v452
        %v466 = vunpack.c.l.b16 %v453
        %v467 = vunpack.c.l.b16 %v454
        %v468 = vunpack.c.h.b16 %v454
        %v469 = vunpack.c.l.b16 %v455
        %v470 = vunpack.c.l.b16 %v456
        %v471 = vunpack.c.h.b16 %v456
        %v472 = vunpack.c.l.b16 %v457
        %v473 = vpack.c.b16 %v467, %v464
        %v474 = vpack.c.b16 %v468, %v465
        %v475 = vpack.c.b16 %v469, %v466
        %v476 = vpack.c.b16 %v470, %v470
        %v477 = vpack.c.b16 %v471, %v471
        %v478 = vpack.c.b16 %v472, %v472
        %vm482 = vcmask 187392
        %v484 = vsel %vm482, %v450, 0
        %vm486 = vcmask 1042432
        %vm487 = vcmask 1043456
        %v488 = vsel %vm486, 4294967295, 65535
        %v489 = vsel %vm487, %v488, 0
        %v491 = vand.u32 %v476, %v489
        %v494 = vand.u32 %v477, %v489
        %v497 = vand.u32 %v478, %v489
        %499 = vmatprep.subr.bf16.mxu0 0
        %500 = vmatpush1.bf16.msra.mxu0 0
        %501 = vmatprep.subr.bf16.mxu0 0
        %502 = vmatpush1.bf16.msra.mxu0 0
        %503 = vmatprep.subr.bf16.mxu0 0
        %504 = vmatpush1.bf16.msra.mxu0 0
        %505 = vmatprep.subr.bf16.mxu0 0
        %506 = vmatpush1.bf16.msra.mxu0 0
        %507 = vmatprep.subr.bf16.mxu0 0
        %508 = vmatpush1.bf16.msra.mxu0 0
        %509 = vmatprep.subr.bf16.mxu0 0
        %510 = vmatpush1.bf16.msra.mxu0 0
        %511 = vmatprep.subr.bf16.mxu0 %v494
        %512 = vmatpush1.bf16.msra.mxu0 %v491
        %513 = vmatprep.subr.bf16.mxu0 %v474
        %514 = vmatpush1.bf16.msra.mxu0 %v473
        %515 = vmatprep.subr.bf16.mxu0 0
        %516 = vmatpush2.bf16.msra.mxu0 0
        %517 = vmatprep.subr.bf16.mxu0 0
        %518 = vmatpush2.bf16.msra.mxu0 0
        %519 = vmatprep.subr.bf16.mxu0 0
        %520 = vmatpush2.bf16.msra.mxu0 0
        %521 = vmatprep.subr.bf16.mxu0 0
        %522 = vmatpush2.bf16.msra.mxu0 0
        %523 = vmatprep.subr.bf16.mxu0 0
        %524 = vmatpush2.bf16.msra.mxu0 0
        %525 = vmatprep.subr.bf16.mxu0 0
        %526 = vmatpush2.bf16.msra.mxu0 0
        %527 = vmatprep.subr.bf16.mxu0 0
        %528 = vmatpush2.bf16.msra.mxu0 0
        %529 = vmatprep.subr.bf16.mxu0 0
        %530 = vmatpush2.bf16.msra.mxu0 0
        %531 = vmatprep.mubr.bf16.mxu0 0
        %532 = vmatmul.mubr.bf16.gmra.mxu0 %v484
        %v533 = vpop.f32.mrf.mxu0
        %v534 = vadd.f32 0.0, %v533
        %v535 = vpop.f32.mrf.mxu0
        %v536 = vadd.f32 0.0, %v535
        %v537 = vpop.f32.mrf.mxu0
        %v538 = vpop.f32.mrf.mxu0
        %539 = vdwg.mxu0
        %540 = vmatprep.subr.bf16.mxu0 0
        %541 = vmatpush1.bf16.msra.mxu0 0
        %542 = vmatprep.subr.bf16.mxu0 0
        %543 = vmatpush1.bf16.msra.mxu0 0
        %544 = vmatprep.subr.bf16.mxu0 0
        %545 = vmatpush1.bf16.msra.mxu0 0
        %546 = vmatprep.subr.bf16.mxu0 0
        %547 = vmatpush1.bf16.msra.mxu0 0
        %548 = vmatprep.subr.bf16.mxu0 0
        %549 = vmatpush1.bf16.msra.mxu0 0
        %550 = vmatprep.subr.bf16.mxu0 0
        %551 = vmatpush1.bf16.msra.mxu0 0
        %552 = vmatprep.subr.bf16.mxu0 0
        %553 = vmatpush1.bf16.msra.mxu0 %v497
        %554 = vmatprep.subr.bf16.mxu0 0
        %555 = vmatpush1.bf16.msra.mxu0 %v475
        %556 = vmatprep.subr.bf16.mxu0 0
        %557 = vmatpush2.bf16.msra.mxu0 0
        %558 = vmatprep.subr.bf16.mxu0 0
        %559 = vmatpush2.bf16.msra.mxu0 0
        %560 = vmatprep.subr.bf16.mxu0 0
        %561 = vmatpush2.bf16.msra.mxu0 0
        %562 = vmatprep.subr.bf16.mxu0 0
        %563 = vmatpush2.bf16.msra.mxu0 0
        %564 = vmatprep.subr.bf16.mxu0 0
        %565 = vmatpush2.bf16.msra.mxu0 0
        %566 = vmatprep.subr.bf16.mxu0 0
        %567 = vmatpush2.bf16.msra.mxu0 0
        %568 = vmatprep.subr.bf16.mxu0 0
        %569 = vmatpush2.bf16.msra.mxu0 0
        %570 = vmatprep.subr.bf16.mxu0 0
        %571 = vmatpush2.bf16.msra.mxu0 0
        %572 = vmatprep.mubr.bf16.mxu0 0
        %573 = vmatmul.mubr.bf16.gmra.mxu0 %v484
        %v574 = vpop.f32.mrf.mxu0
        %v575 = vadd.f32 0.0, %v574
        %v576 = vpop.f32.mrf.mxu0
        %v577 = vpop.f32.mrf.mxu0
        %v578 = vpop.f32.mrf.mxu0
        %579 = vdwg.mxu0
        %v582 = vunpack.c.l.b16 %v442
        %v583 = vunpack.c.l.b16 %v443
        %v584 = vpack.c.b16 %v583, %v582
        %v586 = vshrl.u32 %v584, 16
        %v588 = vrot.slane %v586, 3
        %v589 = vshll.u32 %v584, 16
        %v591 = vrot.slane %v589, 4
        %v592 = vor.u32 %v588, %v591
        %v599 = vunpack.c.l.b16 %v444
        %v600 = vunpack.c.h.b16 %v444
        %v601 = vunpack.c.l.b16 %v445
        %v602 = vunpack.c.l.b16 %v446
        %v603 = vunpack.c.h.b16 %v446
        %v604 = vunpack.c.l.b16 %v447
        %v605 = vunpack.c.l.b16 %v448
        %v606 = vunpack.c.h.b16 %v448
        %v607 = vunpack.c.l.b16 %v449
        %v608 = vpack.c.b16 %v602, %v599
        %v609 = vpack.c.b16 %v603, %v600
        %v610 = vpack.c.b16 %v604, %v601
        %v611 = vpack.c.b16 %v605, %v605
        %v612 = vpack.c.b16 %v606, %v606
        %v613 = vpack.c.b16 %v607, %v607
        %v618 = vsel %vm482, %v592, 0
        %v621 = vand.u32 %v611, %v489
        %v624 = vand.u32 %v612, %v489
        %v627 = vand.u32 %v613, %v489
        %629 = vmatprep.subr.bf16.mxu0 0
        %630 = vmatpush1.bf16.msra.mxu0 0
        %631 = vmatprep.subr.bf16.mxu0 0
        %632 = vmatpush1.bf16.msra.mxu0 0
        %633 = vmatprep.subr.bf16.mxu0 0
        %634 = vmatpush1.bf16.msra.mxu0 0
        %635 = vmatprep.subr.bf16.mxu0 0
        %636 = vmatpush1.bf16.msra.mxu0 0
        %637 = vmatprep.subr.bf16.mxu0 0
        %638 = vmatpush1.bf16.msra.mxu0 0
        %639 = vmatprep.subr.bf16.mxu0 0
        %640 = vmatpush1.bf16.msra.mxu0 0
        %641 = vmatprep.subr.bf16.mxu0 %v624
        %642 = vmatpush1.bf16.msra.mxu0 %v621
        %643 = vmatprep.subr.bf16.mxu0 %v609
        %644 = vmatpush1.bf16.msra.mxu0 %v608
        %645 = vmatprep.subr.bf16.mxu0 0
        %646 = vmatpush2.bf16.msra.mxu0 0
        %647 = vmatprep.subr.bf16.mxu0 0
        %648 = vmatpush2.bf16.msra.mxu0 0
        %649 = vmatprep.subr.bf16.mxu0 0
        %650 = vmatpush2.bf16.msra.mxu0 0
        %651 = vmatprep.subr.bf16.mxu0 0
        %652 = vmatpush2.bf16.msra.mxu0 0
        %653 = vmatprep.subr.bf16.mxu0 0
        %654 = vmatpush2.bf16.msra.mxu0 0
        %655 = vmatprep.subr.bf16.mxu0 0
        %656 = vmatpush2.bf16.msra.mxu0 0
        %657 = vmatprep.subr.bf16.mxu0 0
        %658 = vmatpush2.bf16.msra.mxu0 0
        %659 = vmatprep.subr.bf16.mxu0 0
        %660 = vmatpush2.bf16.msra.mxu0 0
        %661 = vmatprep.mubr.bf16.mxu0 0
        %662 = vmatmul.mubr.bf16.gmra.mxu0 %v618
        %v663 = vpop.f32.mrf.mxu0
        %v664 = vadd.f32 %v534, %v663
        %v665 = vpop.f32.mrf.mxu0
        %v666 = vadd.f32 %v536, %v665
        %v667 = vpop.f32.mrf.mxu0
        %v668 = vpop.f32.mrf.mxu0
        %669 = vdwg.mxu0
        %670 = vmatprep.subr.bf16.mxu0 0
        %671 = vmatpush1.bf16.msra.mxu0 0
        %672 = vmatprep.subr.bf16.mxu0 0
        %673 = vmatpush1.bf16.msra.mxu0 0
        %674 = vmatprep.subr.bf16.mxu0 0
        %675 = vmatpush1.bf16.msra.mxu0 0
        %676 = vmatprep.subr.bf16.mxu0 0
        %677 = vmatpush1.bf16.msra.mxu0 0
        %678 = vmatprep.subr.bf16.mxu0 0
        %679 = vmatpush1.bf16.msra.mxu0 0
        %680 = vmatprep.subr.bf16.mxu0 0
        %681 = vmatpush1.bf16.msra.mxu0 0
        %682 = vmatprep.subr.bf16.mxu0 0
        %683 = vmatpush1.bf16.msra.mxu0 %v627
        %684 = vmatprep.subr.bf16.mxu0 0
        %685 = vmatpush1.bf16.msra.mxu0 %v610
        %686 = vmatprep.subr.bf16.mxu0 0
        %687 = vmatpush2.bf16.msra.mxu0 0
        %688 = vmatprep.subr.bf16.mxu0 0
        %689 = vmatpush2.bf16.msra.mxu0 0
        %690 = vmatprep.subr.bf16.mxu0 0
        %691 = vmatpush2.bf16.msra.mxu0 0
        %692 = vmatprep.subr.bf16.mxu0 0
        %693 = vmatpush2.bf16.msra.mxu0 0
        %694 = vmatprep.subr.bf16.mxu0 0
        %695 = vmatpush2.bf16.msra.mxu0 0
        %696 = vmatprep.subr.bf16.mxu0 0
        %697 = vmatpush2.bf16.msra.mxu0 0
        %698 = vmatprep.subr.bf16.mxu0 0
        %699 = vmatpush2.bf16.msra.mxu0 0
        %700 = vmatprep.subr.bf16.mxu0 0
        %701 = vmatpush2.bf16.msra.mxu0 0
        %702 = vmatprep.mubr.bf16.mxu0 0
        %703 = vmatmul.mubr.bf16.gmra.mxu0 %v618
        %v704 = vpop.f32.mrf.mxu0
        %v705 = vadd.f32 %v575, %v704
        %v706 = vpop.f32.mrf.mxu0
        %v707 = vpop.f32.mrf.mxu0
        %v708 = vpop.f32.mrf.mxu0
        %709 = vdwg.mxu0
        %v710 = vld [vmem:[%s375 + $0x8] sm:$0x3]
        %s711 = scalar_lea.vmem [#allocation4], 72
        %v712 = vld [vmem:[%s711] sm:$0xff]
        %v713 = vld [vmem:[%s711 + $0x8] sm:$0xf]
        %v714 = vld [vmem:[%s711 + $0xc] sm:$0xff]
        %v715 = vld [vmem:[%s711 + $0x14] sm:$0xf]
        %v716 = vld [vmem:[%s711 + $0x18] sm:$0xff]
        %v717 = vld [vmem:[%s711 + $0x20] sm:$0xf]
        %v724 = vunpack.c.l.b16 %v712
        %v725 = vunpack.c.h.b16 %v712
        %v726 = vunpack.c.l.b16 %v713
        %v727 = vunpack.c.l.b16 %v714
        %v728 = vunpack.c.h.b16 %v714
        %v729 = vunpack.c.l.b16 %v715
        %v730 = vunpack.c.l.b16 %v716
        %v731 = vunpack.c.h.b16 %v716
        %v732 = vunpack.c.l.b16 %v717
        %v733 = vpack.c.b16 %v727, %v724
        %v734 = vpack.c.b16 %v728, %v725
        %v735 = vpack.c.b16 %v729, %v726
        %v736 = vpack.c.b16 %v730, %v730
        %v737 = vpack.c.b16 %v731, %v731
        %v738 = vpack.c.b16 %v732, %v732
        %v743 = vsel %vm482, %v710, 0
        %v746 = vand.u32 %v736, %v489
        %v749 = vand.u32 %v737, %v489
        %v752 = vand.u32 %v738, %v489
        %754 = vmatprep.subr.bf16.mxu0 0
        %755 = vmatpush1.bf16.msra.mxu0 0
        %756 = vmatprep.subr.bf16.mxu0 0
        %757 = vmatpush1.bf16.msra.mxu0 0
        %758 = vmatprep.subr.bf16.mxu0 0
        %759 = vmatpush1.bf16.msra.mxu0 0
        %760 = vmatprep.subr.bf16.mxu0 0
        %761 = vmatpush1.bf16.msra.mxu0 0
        %762 = vmatprep.subr.bf16.mxu0 0
        %763 = vmatpush1.bf16.msra.mxu0 0
        %764 = vmatprep.subr.bf16.mxu0 0
        %765 = vmatpush1.bf16.msra.mxu0 0
        %766 = vmatprep.subr.bf16.mxu0 %v749
        %767 = vmatpush1.bf16.msra.mxu0 %v746
        %768 = vmatprep.subr.bf16.mxu0 %v734
        %769 = vmatpush1.bf16.msra.mxu0 %v733
        %770 = vmatprep.subr.bf16.mxu0 0
        %771 = vmatpush2.bf16.msra.mxu0 0
        %772 = vmatprep.subr.bf16.mxu0 0
        %773 = vmatpush2.bf16.msra.mxu0 0
        %774 = vmatprep.subr.bf16.mxu0 0
        %775 = vmatpush2.bf16.msra.mxu0 0
        %776 = vmatprep.subr.bf16.mxu0 0
        %777 = vmatpush2.bf16.msra.mxu0 0
        %778 = vmatprep.subr.bf16.mxu0 0
        %779 = vmatpush2.bf16.msra.mxu0 0
        %780 = vmatprep.subr.bf16.mxu0 0
        %781 = vmatpush2.bf16.msra.mxu0 0
        %782 = vmatprep.subr.bf16.mxu0 0
        %783 = vmatpush2.bf16.msra.mxu0 0
        %784 = vmatprep.subr.bf16.mxu0 0
        %785 = vmatpush2.bf16.msra.mxu0 0
        %786 = vmatprep.mubr.bf16.mxu0 0
        %787 = vmatmul.mubr.bf16.gmra.mxu0 %v743
        %v788 = vpop.f32.mrf.mxu0
        %v789 = vadd.f32 0.0, %v788
        %v790 = vpop.f32.mrf.mxu0
        %v791 = vadd.f32 0.0, %v790
        %v792 = vpop.f32.mrf.mxu0
        %v793 = vpop.f32.mrf.mxu0
        %794 = vdwg.mxu0
        %795 = vmatprep.subr.bf16.mxu0 0
        %796 = vmatpush1.bf16.msra.mxu0 0
        %797 = vmatprep.subr.bf16.mxu0 0
        %798 = vmatpush1.bf16.msra.mxu0 0
        %799 = vmatprep.subr.bf16.mxu0 0
        %800 = vmatpush1.bf16.msra.mxu0 0
        %801 = vmatprep.subr.bf16.mxu0 0
        %802 = vmatpush1.bf16.msra.mxu0 0
        %803 = vmatprep.subr.bf16.mxu0 0
        %804 = vmatpush1.bf16.msra.mxu0 0
        %805 = vmatprep.subr.bf16.mxu0 0
        %806 = vmatpush1.bf16.msra.mxu0 0
        %807 = vmatprep.subr.bf16.mxu0 0
        %808 = vmatpush1.bf16.msra.mxu0 %v752
        %809 = vmatprep.subr.bf16.mxu0 0
        %810 = vmatpush1.bf16.msra.mxu0 %v735
        %811 = vmatprep.subr.bf16.mxu0 0
        %812 = vmatpush2.bf16.msra.mxu0 0
        %813 = vmatprep.subr.bf16.mxu0 0
        %814 = vmatpush2.bf16.msra.mxu0 0
        %815 = vmatprep.subr.bf16.mxu0 0
        %816 = vmatpush2.bf16.msra.mxu0 0
        %817 = vmatprep.subr.bf16.mxu0 0
        %818 = vmatpush2.bf16.msra.mxu0 0
        %819 = vmatprep.subr.bf16.mxu0 0
        %820 = vmatpush2.bf16.msra.mxu0 0
        %821 = vmatprep.subr.bf16.mxu0 0
        %822 = vmatpush2.bf16.msra.mxu0 0
        %823 = vmatprep.subr.bf16.mxu0 0
        %824 = vmatpush2.bf16.msra.mxu0 0
        %825 = vmatprep.subr.bf16.mxu0 0
        %826 = vmatpush2.bf16.msra.mxu0 0
        %827 = vmatprep.mubr.bf16.mxu0 0
        %828 = vmatmul.mubr.bf16.gmra.mxu0 %v743
        %v829 = vpop.f32.mrf.mxu0
        %v830 = vadd.f32 0.0, %v829
        %v831 = vpop.f32.mrf.mxu0
        %v832 = vpop.f32.mrf.mxu0
        %v833 = vpop.f32.mrf.mxu0
        %834 = vdwg.mxu0
        %v835 = vadd.f32 %v664, %v789
        %v836 = vadd.f32 %v666, %v791
        %v837 = vadd.f32 %v705, %v830
        %v838 = vld [vmem:[#allocation6] sm:$0x7]
        %v840 = vlaneseq
        %v841 = vshrl.u32 %v840, 7
        %v842 = vsub.s32 0, %v841
        %v843 = vrot.slane %v838, %v842
        %v844 = vlaneseq
        %v845 = vshrl.u32 %v844, 7
        %v846 = vsub.s32 1, %v845
        %v847 = vrot.slane %v838, %v846
        %v848 = vlaneseq
        %v849 = vshrl.u32 %v848, 7
        %v850 = vsub.s32 2, %v849
        %v851 = vrot.slane %v838, %v850
        %v855 = vmul.f32 %v835, %v843
        %v856 = vmul.f32 %v836, %v847
        %v857 = vmul.f32 %v837, %v851
        %v858 = vld [vmem:[#allocation8] sm:$0x7]
        %v860 = vlaneseq
        %v861 = vshrl.u32 %v860, 7
        %v862 = vsub.s32 0, %v861
        %v863 = vrot.slane %v858, %v862
        %v864 = vlaneseq
        %v865 = vshrl.u32 %v864, 7
        %v866 = vsub.s32 1, %v865
        %v867 = vrot.slane %v858, %v866
        %v868 = vlaneseq
        %v869 = vshrl.u32 %v868, 7
        %v870 = vsub.s32 2, %v869
        %v871 = vrot.slane %v858, %v870
        %v875 = vadd.f32 %v855, %v863
        %v876 = vadd.f32 %v856, %v867
        %v877 = vadd.f32 %v857, %v871
        %v878 = vmax.f32 %v875, 0.0
        %v879 = vmax.f32 %v876, 0.0
        %v880 = vmax.f32 %v877, 0.0
        %881 = vmatprep.subr.bf16.mxu0 0
        %882 = vmatpush1.bf16.msra.mxu0 0
        %883 = vmatprep.subr.bf16.mxu0 0
        %884 = vmatpush1.bf16.msra.mxu0 0
        %885 = vmatprep.subr.bf16.mxu0 0
        %886 = vmatpush1.bf16.msra.mxu0 0
        %887 = vmatprep.subr.bf16.mxu0 0
        %888 = vmatpush1.bf16.msra.mxu0 0
        %889 = vmatprep.subr.bf16.mxu0 0
        %890 = vmatpush1.bf16.msra.mxu0 0
        %891 = vmatprep.subr.bf16.mxu0 0
        %892 = vmatpush1.bf16.msra.mxu0 0
        %893 = vmatprep.subr.bf16.mxu0 %v494
        %894 = vmatpush1.bf16.msra.mxu0 %v491
        %895 = vmatprep.subr.bf16.mxu0 %v474
        %896 = vmatpush1.bf16.msra.mxu0 %v473
        %897 = vmatprep.subr.bf16.mxu0 0
        %898 = vmatpush2.bf16.msra.mxu0 0
        %899 = vmatprep.subr.bf16.mxu0 0
        %900 = vmatpush2.bf16.msra.mxu0 0
        %901 = vmatprep.subr.bf16.mxu0 0
        %902 = vmatpush2.bf16.msra.mxu0 0
        %903 = vmatprep.subr.bf16.mxu0 0
        %904 = vmatpush2.bf16.msra.mxu0 0
        %905 = vmatprep.subr.bf16.mxu0 0
        %906 = vmatpush2.bf16.msra.mxu0 0
        %907 = vmatprep.subr.bf16.mxu0 0
        %908 = vmatpush2.bf16.msra.mxu0 0
        %909 = vmatprep.subr.bf16.mxu0 0
        %910 = vmatpush2.bf16.msra.mxu0 0
        %911 = vmatprep.subr.bf16.mxu0 0
        %912 = vmatpush2.bf16.msra.mxu0 0
        %913 = vmatprep.mubr.bf16.mxu0 0
        %914 = vmatmul.mubr.bf16.gmra.mxu0 %v743
        %v915 = vpop.f32.mrf.mxu0
        %v916 = vadd.f32 0.0, %v915
        %v917 = vpop.f32.mrf.mxu0
        %v918 = vadd.f32 0.0, %v917
        %v919 = vpop.f32.mrf.mxu0
        %v920 = vpop.f32.mrf.mxu0
        %921 = vdwg.mxu0
        %922 = vmatprep.subr.bf16.mxu0 0
        %923 = vmatpush1.bf16.msra.mxu0 0
        %924 = vmatprep.subr.bf16.mxu0 0
        %925 = vmatpush1.bf16.msra.mxu0 0
        %926 = vmatprep.subr.bf16.mxu0 0
        %927 = vmatpush1.bf16.msra.mxu0 0
        %928 = vmatprep.subr.bf16.mxu0 0
        %929 = vmatpush1.bf16.msra.mxu0 0
        %930 = vmatprep.subr.bf16.mxu0 0
        %931 = vmatpush1.bf16.msra.mxu0 0
        %932 = vmatprep.subr.bf16.mxu0 0
        %933 = vmatpush1.bf16.msra.mxu0 0
        %934 = vmatprep.subr.bf16.mxu0 0
        %935 = vmatpush1.bf16.msra.mxu0 %v497
        %936 = vmatprep.subr.bf16.mxu0 0
        %937 = vmatpush1.bf16.msra.mxu0 %v475
        %938 = vmatprep.subr.bf16.mxu0 0
        %939 = vmatpush2.bf16.msra.mxu0 0
        %940 = vmatprep.subr.bf16.mxu0 0
        %941 = vmatpush2.bf16.msra.mxu0 0
        %942 = vmatprep.subr.bf16.mxu0 0
        %943 = vmatpush2.bf16.msra.mxu0 0
        %944 = vmatprep.subr.bf16.mxu0 0
        %945 = vmatpush2.bf16.msra.mxu0 0
        %946 = vmatprep.subr.bf16.mxu0 0
        %947 = vmatpush2.bf16.msra.mxu0 0
        %948 = vmatprep.subr.bf16.mxu0 0
        %949 = vmatpush2.bf16.msra.mxu0 0
        %950 = vmatprep.subr.bf16.mxu0 0
        %951 = vmatpush2.bf16.msra.mxu0 0
        %952 = vmatprep.subr.bf16.mxu0 0
        %953 = vmatpush2.bf16.msra.mxu0 0
        %954 = vmatprep.mubr.bf16.mxu0 0
        %955 = vmatmul.mubr.bf16.gmra.mxu0 %v743
        %v956 = vpop.f32.mrf.mxu0
        %v957 = vadd.f32 0.0, %v956
        %v958 = vpop.f32.mrf.mxu0
        %v959 = vpop.f32.mrf.mxu0
        %v960 = vpop.f32.mrf.mxu0
        %961 = vdwg.mxu0
        %962 = vmatprep.subr.bf16.mxu0 0
        %963 = vmatpush1.bf16.msra.mxu0 0
        %964 = vmatprep.subr.bf16.mxu0 0
        %965 = vmatpush1.bf16.msra.mxu0 0
        %966 = vmatprep.subr.bf16.mxu0 0
        %967 = vmatpush1.bf16.msra.mxu0 0
        %968 = vmatprep.subr.bf16.mxu0 0
        %969 = vmatpush1.bf16.msra.mxu0 0
        %970 = vmatprep.subr.bf16.mxu0 0
        %971 = vmatpush1.bf16.msra.mxu0 0
        %972 = vmatprep.subr.bf16.mxu0 0
        %973 = vmatpush1.bf16.msra.mxu0 0
        %974 = vmatprep.subr.bf16.mxu0 %v624
        %975 = vmatpush1.bf16.msra.mxu0 %v621
        %976 = vmatprep.subr.bf16.mxu0 %v609
        %977 = vmatpush1.bf16.msra.mxu0 %v608
        %978 = vmatprep.subr.bf16.mxu0 0
        %979 = vmatpush2.bf16.msra.mxu0 0
        %980 = vmatprep.subr.bf16.mxu0 0
        %981 = vmatpush2.bf16.msra.mxu0 0
        %982 = vmatprep.subr.bf16.mxu0 0
        %983 = vmatpush2.bf16.msra.mxu0 0
        %984 = vmatprep.subr.bf16.mxu0 0
        %985 = vmatpush2.bf16.msra.mxu0 0
        %986 = vmatprep.subr.bf16.mxu0 0
        %987 = vmatpush2.bf16.msra.mxu0 0
        %988 = vmatprep.subr.bf16.mxu0 0
        %989 = vmatpush2.bf16.msra.mxu0 0
        %990 = vmatprep.subr.bf16.mxu0 0
        %991 = vmatpush2.bf16.msra.mxu0 0
        %992 = vmatprep.subr.bf16.mxu0 0
        %993 = vmatpush2.bf16.msra.mxu0 0
        %994 = vmatprep.mubr.bf16.mxu0 0
        %995 = vmatmul.mubr.bf16.gmra.mxu0 %v484
        %v996 = vpop.f32.mrf.mxu0
        %v997 = vadd.f32 %v916, %v996
        %v998 = vpop.f32.mrf.mxu0
        %v999 = vadd.f32 %v918, %v998
        %v1000 = vpop.f32.mrf.mxu0
        %v1001 = vpop.f32.mrf.mxu0
        %1002 = vdwg.mxu0
        %1003 = vmatprep.subr.bf16.mxu0 0
        %1004 = vmatpush1.bf16.msra.mxu0 0
        %1005 = vmatprep.subr.bf16.mxu0 0
        %1006 = vmatpush1.bf16.msra.mxu0 0
        %1007 = vmatprep.subr.bf16.mxu0 0
        %1008 = vmatpush1.bf16.msra.mxu0 0
        %1009 = vmatprep.subr.bf16.mxu0 0
        %1010 = vmatpush1.bf16.msra.mxu0 0
        %1011 = vmatprep.subr.bf16.mxu0 0
        %1012 = vmatpush1.bf16.msra.mxu0 0
        %1013 = vmatprep.subr.bf16.mxu0 0
        %1014 = vmatpush1.bf16.msra.mxu0 0
        %1015 = vmatprep.subr.bf16.mxu0 0
        %1016 = vmatpush1.bf16.msra.mxu0 %v627
        %1017 = vmatprep.subr.bf16.mxu0 0
        %1018 = vmatpush1.bf16.msra.mxu0 %v610
        %1019 = vmatprep.subr.bf16.mxu0 0
        %1020 = vmatpush2.bf16.msra.mxu0 0
        %1021 = vmatprep.subr.bf16.mxu0 0
        %1022 = vmatpush2.bf16.msra.mxu0 0
        %1023 = vmatprep.subr.bf16.mxu0 0
        %1024 = vmatpush2.bf16.msra.mxu0 0
        %1025 = vmatprep.subr.bf16.mxu0 0
        %1026 = vmatpush2.bf16.msra.mxu0 0
        %1027 = vmatprep.subr.bf16.mxu0 0
        %1028 = vmatpush2.bf16.msra.mxu0 0
        %1029 = vmatprep.subr.bf16.mxu0 0
        %1030 = vmatpush2.bf16.msra.mxu0 0
        %1031 = vmatprep.subr.bf16.mxu0 0
        %1032 = vmatpush2.bf16.msra.mxu0 0
        %1033 = vmatprep.subr.bf16.mxu0 0
        %1034 = vmatpush2.bf16.msra.mxu0 0
        %1035 = vmatprep.mubr.bf16.mxu0 0
        %1036 = vmatmul.mubr.bf16.gmra.mxu0 %v484
        %v1037 = vpop.f32.mrf.mxu0
        %v1038 = vadd.f32 %v957, %v1037
        %v1039 = vpop.f32.mrf.mxu0
        %v1040 = vpop.f32.mrf.mxu0
        %v1041 = vpop.f32.mrf.mxu0
        %1042 = vdwg.mxu0
        %v1043 = vld [vmem:[%s385 + $0x8] sm:$0x3]
        %v1045 = vsel %vm482, %v1043, 0
        %1047 = vmatprep.subr.bf16.mxu0 0
        %1048 = vmatpush1.bf16.msra.mxu0 0
        %1049 = vmatprep.subr.bf16.mxu0 0
        %1050 = vmatpush1.bf16.msra.mxu0 0
        %1051 = vmatprep.subr.bf16.mxu0 0
        %1052 = vmatpush1.bf16.msra.mxu0 0
        %1053 = vmatprep.subr.bf16.mxu0 0
        %1054 = vmatpush1.bf16.msra.mxu0 0
        %1055 = vmatprep.subr.bf16.mxu0 0
        %1056 = vmatpush1.bf16.msra.mxu0 0
        %1057 = vmatprep.subr.bf16.mxu0 0
        %1058 = vmatpush1.bf16.msra.mxu0 0
        %1059 = vmatprep.subr.bf16.mxu0 %v749
        %1060 = vmatpush1.bf16.msra.mxu0 %v746
        %1061 = vmatprep.subr.bf16.mxu0 %v734
        %1062 = vmatpush1.bf16.msra.mxu0 %v733
        %1063 = vmatprep.subr.bf16.mxu0 0
        %1064 = vmatpush2.bf16.msra.mxu0 0
        %1065 = vmatprep.subr.bf16.mxu0 0
        %1066 = vmatpush2.bf16.msra.mxu0 0
        %1067 = vmatprep.subr.bf16.mxu0 0
        %1068 = vmatpush2.bf16.msra.mxu0 0
        %1069 = vmatprep.subr.bf16.mxu0 0
        %1070 = vmatpush2.bf16.msra.mxu0 0
        %1071 = vmatprep.subr.bf16.mxu0 0
        %1072 = vmatpush2.bf16.msra.mxu0 0
        %1073 = vmatprep.subr.bf16.mxu0 0
        %1074 = vmatpush2.bf16.msra.mxu0 0
        %1075 = vmatprep.subr.bf16.mxu0 0
        %1076 = vmatpush2.bf16.msra.mxu0 0
        %1077 = vmatprep.subr.bf16.mxu0 0
        %1078 = vmatpush2.bf16.msra.mxu0 0
        %1079 = vmatprep.mubr.bf16.mxu0 0
        %1080 = vmatmul.mubr.bf16.gmra.mxu0 %v1045
        %v1081 = vpop.f32.mrf.mxu0
        %v1082 = vadd.f32 0.0, %v1081
        %v1083 = vpop.f32.mrf.mxu0
        %v1084 = vadd.f32 0.0, %v1083
        %v1085 = vpop.f32.mrf.mxu0
        %v1086 = vpop.f32.mrf.mxu0
        %1087 = vdwg.mxu0
        %1088 = vmatprep.subr.bf16.mxu0 0
        %1089 = vmatpush1.bf16.msra.mxu0 0
        %1090 = vmatprep.subr.bf16.mxu0 0
        %1091 = vmatpush1.bf16.msra.mxu0 0
        %1092 = vmatprep.subr.bf16.mxu0 0
        %1093 = vmatpush1.bf16.msra.mxu0 0
        %1094 = vmatprep.subr.bf16.mxu0 0
        %1095 = vmatpush1.bf16.msra.mxu0 0
        %1096 = vmatprep.subr.bf16.mxu0 0
        %1097 = vmatpush1.bf16.msra.mxu0 0
        %1098 = vmatprep.subr.bf16.mxu0 0
        %1099 = vmatpush1.bf16.msra.mxu0 0
        %1100 = vmatprep.subr.bf16.mxu0 0
        %1101 = vmatpush1.bf16.msra.mxu0 %v752
        %1102 = vmatprep.subr.bf16.mxu0 0
        %1103 = vmatpush1.bf16.msra.mxu0 %v735
        %1104 = vmatprep.subr.bf16.mxu0 0
        %1105 = vmatpush2.bf16.msra.mxu0 0
        %1106 = vmatprep.subr.bf16.mxu0 0
        %1107 = vmatpush2.bf16.msra.mxu0 0
        %1108 = vmatprep.subr.bf16.mxu0 0
        %1109 = vmatpush2.bf16.msra.mxu0 0
        %1110 = vmatprep.subr.bf16.mxu0 0
        %1111 = vmatpush2.bf16.msra.mxu0 0
        %1112 = vmatprep.subr.bf16.mxu0 0
        %1113 = vmatpush2.bf16.msra.mxu0 0
        %1114 = vmatprep.subr.bf16.mxu0 0
        %1115 = vmatpush2.bf16.msra.mxu0 0
        %1116 = vmatprep.subr.bf16.mxu0 0
        %1117 = vmatpush2.bf16.msra.mxu0 0
        %1118 = vmatprep.subr.bf16.mxu0 0
        %1119 = vmatpush2.bf16.msra.mxu0 0
        %1120 = vmatprep.mubr.bf16.mxu0 0
        %1121 = vmatmul.mubr.bf16.gmra.mxu0 %v1045
        %v1122 = vpop.f32.mrf.mxu0
        %v1123 = vadd.f32 0.0, %v1122
        %v1124 = vpop.f32.mrf.mxu0
        %v1125 = vpop.f32.mrf.mxu0
        %v1126 = vpop.f32.mrf.mxu0
        %1127 = vdwg.mxu0
        %v1128 = vadd.f32 %v997, %v1082
        %v1129 = vadd.f32 %v999, %v1084
        %v1130 = vadd.f32 %v1038, %v1123
        %v1131 = vmul.f32 %v1128, %v843
        %v1132 = vmul.f32 %v1129, %v847
        %v1133 = vmul.f32 %v1130, %v851
        %v1134 = vadd.f32 %v1131, %v863
        %v1135 = vadd.f32 %v1132, %v867
        %v1136 = vadd.f32 %v1133, %v871
        %v1137 = vmax.f32 %v1134, 0.0
        %v1138 = vmax.f32 %v1135, 0.0
        %v1139 = vmax.f32 %v1136, 0.0
        %v1140 = vmax.f32 %v878, %v1137
        %v1141 = vmax.f32 %v879, %v1138
        %v1142 = vmax.f32 %v880, %v1139
        %v1143 = vpack.c.bf16 %v1140, %v1140
        %v1144 = vpack.c.bf16 %v1141, %v1141
        %v1145 = vpack.c.bf16 %v1142, %v1142
        %v1149 = vunpack.c.l.b16 %v1143
        %v1150 = vunpack.c.l.b16 %v1144
        %v1151 = vunpack.c.l.b16 %v1145
        %v1152 = vpack.c.b16 %v1150, %v1149
        %v1153 = vpack.c.b16 %v1151, %v1151
        %1156 = vst [vmem:[#allocation3 + $0x18] sm:$0x33] %v1152
        %1157 = vst [vmem:[#allocation3 + $0x20] sm:$0x3] %v1153
        %v1158 = vld [vmem:[%s375 + $0x8] sm:$0x3]
        %v1159 = vld [vmem:[#allocation4] sm:$0xff]
        %v1160 = vld [vmem:[#allocation4 + $0x8] sm:$0xf]
        %v1161 = vld [vmem:[#allocation4 + $0xc] sm:$0xff]
        %v1162 = vld [vmem:[#allocation4 + $0x14] sm:$0xf]
        %v1163 = vld [vmem:[#allocation4 + $0x18] sm:$0xff]
        %v1164 = vld [vmem:[#allocation4 + $0x20] sm:$0xf]
        %v1165 = vld [vmem:[%s385 + $0x8] sm:$0x3]
        %v1166 = vld [vmem:[%s451] sm:$0xff]
        %v1167 = vld [vmem:[%s451 + $0x8] sm:$0xf]
        %v1168 = vld [vmem:[%s451 + $0xc] sm:$0xff]
        %v1169 = vld [vmem:[%s451 + $0x14] sm:$0xf]
        %v1170 = vld [vmem:[%s451 + $0x18] sm:$0xff]
        %v1171 = vld [vmem:[%s451 + $0x20] sm:$0xf]
        %v1178 = vunpack.c.l.b16 %v1166
        %v1179 = vunpack.c.h.b16 %v1166
        %v1180 = vunpack.c.l.b16 %v1167
        %v1181 = vunpack.c.l.b16 %v1168
        %v1182 = vunpack.c.h.b16 %v1168
        %v1183 = vunpack.c.l.b16 %v1169
        %v1184 = vunpack.c.l.b16 %v1170
        %v1185 = vunpack.c.h.b16 %v1170
        %v1186 = vunpack.c.l.b16 %v1171
        %v1187 = vpack.c.b16 %v1181, %v1178
        %v1188 = vpack.c.b16 %v1182, %v1179
        %v1189 = vpack.c.b16 %v1183, %v1180
        %v1190 = vpack.c.b16 %v1184, %v1184
        %v1191 = vpack.c.b16 %v1185, %v1185
        %v1192 = vpack.c.b16 %v1186, %v1186
        %v1197 = vsel %vm482, %v1165, 0
        %v1200 = vand.u32 %v1190, %v489
        %v1203 = vand.u32 %v1191, %v489
        %v1206 = vand.u32 %v1192, %v489
        %1208 = vmatprep.subr.bf16.mxu0 0
        %1209 = vmatpush1.bf16.msra.mxu0 0
        %1210 = vmatprep.subr.bf16.mxu0 0
        %1211 = vmatpush1.bf16.msra.mxu0 0
        %1212 = vmatprep.subr.bf16.mxu0 0
        %1213 = vmatpush1.bf16.msra.mxu0 0
        %1214 = vmatprep.subr.bf16.mxu0 0
        %1215 = vmatpush1.bf16.msra.mxu0 0
        %1216 = vmatprep.subr.bf16.mxu0 0
        %1217 = vmatpush1.bf16.msra.mxu0 0
        %1218 = vmatprep.subr.bf16.mxu0 0
        %1219 = vmatpush1.bf16.msra.mxu0 0
        %1220 = vmatprep.subr.bf16.mxu0 %v1203
        %1221 = vmatpush1.bf16.msra.mxu0 %v1200
        %1222 = vmatprep.subr.bf16.mxu0 %v1188
        %1223 = vmatpush1.bf16.msra.mxu0 %v1187
        %1224 = vmatprep.subr.bf16.mxu0 0
        %1225 = vmatpush2.bf16.msra.mxu0 0
        %1226 = vmatprep.subr.bf16.mxu0 0
        %1227 = vmatpush2.bf16.msra.mxu0 0
        %1228 = vmatprep.subr.bf16.mxu0 0
        %1229 = vmatpush2.bf16.msra.mxu0 0
        %1230 = vmatprep.subr.bf16.mxu0 0
        %1231 = vmatpush2.bf16.msra.mxu0 0
        %1232 = vmatprep.subr.bf16.mxu0 0
        %1233 = vmatpush2.bf16.msra.mxu0 0
        %1234 = vmatprep.subr.bf16.mxu0 0
        %1235 = vmatpush2.bf16.msra.mxu0 0
        %1236 = vmatprep.subr.bf16.mxu0 0
        %1237 = vmatpush2.bf16.msra.mxu0 0
        %1238 = vmatprep.subr.bf16.mxu0 0
        %1239 = vmatpush2.bf16.msra.mxu0 0
        %1240 = vmatprep.mubr.bf16.mxu0 0
        %1241 = vmatmul.mubr.bf16.gmra.mxu0 %v1197
        %v1242 = vpop.f32.mrf.mxu0
        %v1243 = vadd.f32 0.0, %v1242
        %v1244 = vpop.f32.mrf.mxu0
        %v1245 = vadd.f32 0.0, %v1244
        %v1246 = vpop.f32.mrf.mxu0
        %v1247 = vpop.f32.mrf.mxu0
        %1248 = vdwg.mxu0
        %1249 = vmatprep.subr.bf16.mxu0 0
        %1250 = vmatpush1.bf16.msra.mxu0 0
        %1251 = vmatprep.subr.bf16.mxu0 0
        %1252 = vmatpush1.bf16.msra.mxu0 0
        %1253 = vmatprep.subr.bf16.mxu0 0
        %1254 = vmatpush1.bf16.msra.mxu0 0
        %1255 = vmatprep.subr.bf16.mxu0 0
        %1256 = vmatpush1.bf16.msra.mxu0 0
        %1257 = vmatprep.subr.bf16.mxu0 0
        %1258 = vmatpush1.bf16.msra.mxu0 0
        %1259 = vmatprep.subr.bf16.mxu0 0
        %1260 = vmatpush1.bf16.msra.mxu0 0
        %1261 = vmatprep.subr.bf16.mxu0 0
        %1262 = vmatpush1.bf16.msra.mxu0 %v1206
        %1263 = vmatprep.subr.bf16.mxu0 0
        %1264 = vmatpush1.bf16.msra.mxu0 %v1189
        %1265 = vmatprep.subr.bf16.mxu0 0
        %1266 = vmatpush2.bf16.msra.mxu0 0
        %1267 = vmatprep.subr.bf16.mxu0 0
        %1268 = vmatpush2.bf16.msra.mxu0 0
        %1269 = vmatprep.subr.bf16.mxu0 0
        %1270 = vmatpush2.bf16.msra.mxu0 0
        %1271 = vmatprep.subr.bf16.mxu0 0
        %1272 = vmatpush2.bf16.msra.mxu0 0
        %1273 = vmatprep.subr.bf16.mxu0 0
        %1274 = vmatpush2.bf16.msra.mxu0 0
        %1275 = vmatprep.subr.bf16.mxu0 0
        %1276 = vmatpush2.bf16.msra.mxu0 0
        %1277 = vmatprep.subr.bf16.mxu0 0
        %1278 = vmatpush2.bf16.msra.mxu0 0
        %1279 = vmatprep.subr.bf16.mxu0 0
        %1280 = vmatpush2.bf16.msra.mxu0 0
        %1281 = vmatprep.mubr.bf16.mxu0 0
        %1282 = vmatmul.mubr.bf16.gmra.mxu0 %v1197
        %v1283 = vpop.f32.mrf.mxu0
        %v1284 = vadd.f32 0.0, %v1283
        %v1285 = vpop.f32.mrf.mxu0
        %v1286 = vpop.f32.mrf.mxu0
        %v1287 = vpop.f32.mrf.mxu0
        %1288 = vdwg.mxu0
        %v1295 = vunpack.c.l.b16 %v1159
        %v1296 = vunpack.c.h.b16 %v1159
        %v1297 = vunpack.c.l.b16 %v1160
        %v1298 = vunpack.c.l.b16 %v1161
        %v1299 = vunpack.c.h.b16 %v1161
        %v1300 = vunpack.c.l.b16 %v1162
        %v1301 = vunpack.c.l.b16 %v1163
        %v1302 = vunpack.c.h.b16 %v1163
        %v1303 = vunpack.c.l.b16 %v1164
        %v1304 = vpack.c.b16 %v1298, %v1295
        %v1305 = vpack.c.b16 %v1299, %v1296
        %v1306 = vpack.c.b16 %v1300, %v1297
        %v1307 = vpack.c.b16 %v1301, %v1301
        %v1308 = vpack.c.b16 %v1302, %v1302
        %v1309 = vpack.c.b16 %v1303, %v1303
        %v1314 = vsel %vm482, %v1158, 0
        %v1317 = vand.u32 %v1307, %v489
        %v1320 = vand.u32 %v1308, %v489
        %v1323 = vand.u32 %v1309, %v489
        %1325 = vmatprep.subr.bf16.mxu0 0
        %1326 = vmatpush1.bf16.msra.mxu0 0
        %1327 = vmatprep.subr.bf16.mxu0 0
        %1328 = vmatpush1.bf16.msra.mxu0 0
        %1329 = vmatprep.subr.bf16.mxu0 0
        %1330 = vmatpush1.bf16.msra.mxu0 0
        %1331 = vmatprep.subr.bf16.mxu0 0
        %1332 = vmatpush1.bf16.msra.mxu0 0
        %1333 = vmatprep.subr.bf16.mxu0 0
        %1334 = vmatpush1.bf16.msra.mxu0 0
        %1335 = vmatprep.subr.bf16.mxu0 0
        %1336 = vmatpush1.bf16.msra.mxu0 0
        %1337 = vmatprep.subr.bf16.mxu0 %v1320
        %1338 = vmatpush1.bf16.msra.mxu0 %v1317
        %1339 = vmatprep.subr.bf16.mxu0 %v1305
        %1340 = vmatpush1.bf16.msra.mxu0 %v1304
        %1341 = vmatprep.subr.bf16.mxu0 0
        %1342 = vmatpush2.bf16.msra.mxu0 0
        %1343 = vmatprep.subr.bf16.mxu0 0
        %1344 = vmatpush2.bf16.msra.mxu0 0
        %1345 = vmatprep.subr.bf16.mxu0 0
        %1346 = vmatpush2.bf16.msra.mxu0 0
        %1347 = vmatprep.subr.bf16.mxu0 0
        %1348 = vmatpush2.bf16.msra.mxu0 0
        %1349 = vmatprep.subr.bf16.mxu0 0
        %1350 = vmatpush2.bf16.msra.mxu0 0
        %1351 = vmatprep.subr.bf16.mxu0 0
        %1352 = vmatpush2.bf16.msra.mxu0 0
        %1353 = vmatprep.subr.bf16.mxu0 0
        %1354 = vmatpush2.bf16.msra.mxu0 0
        %1355 = vmatprep.subr.bf16.mxu0 0
        %1356 = vmatpush2.bf16.msra.mxu0 0
        %1357 = vmatprep.mubr.bf16.mxu0 0
        %1358 = vmatmul.mubr.bf16.gmra.mxu0 %v1314
        %v1359 = vpop.f32.mrf.mxu0
        %v1360 = vadd.f32 %v1243, %v1359
        %v1361 = vpop.f32.mrf.mxu0
        %v1362 = vadd.f32 %v1245, %v1361
        %v1363 = vpop.f32.mrf.mxu0
        %v1364 = vpop.f32.mrf.mxu0
        %1365 = vdwg.mxu0
        %1366 = vmatprep.subr.bf16.mxu0 0
        %1367 = vmatpush1.bf16.msra.mxu0 0
        %1368 = vmatprep.subr.bf16.mxu0 0
        %1369 = vmatpush1.bf16.msra.mxu0 0
        %1370 = vmatprep.subr.bf16.mxu0 0
        %1371 = vmatpush1.bf16.msra.mxu0 0
        %1372 = vmatprep.subr.bf16.mxu0 0
        %1373 = vmatpush1.bf16.msra.mxu0 0
        %1374 = vmatprep.subr.bf16.mxu0 0
        %1375 = vmatpush1.bf16.msra.mxu0 0
        %1376 = vmatprep.subr.bf16.mxu0 0
        %1377 = vmatpush1.bf16.msra.mxu0 0
        %1378 = vmatprep.subr.bf16.mxu0 0
        %1379 = vmatpush1.bf16.msra.mxu0 %v1323
        %1380 = vmatprep.subr.bf16.mxu0 0
        %1381 = vmatpush1.bf16.msra.mxu0 %v1306
        %1382 = vmatprep.subr.bf16.mxu0 0
        %1383 = vmatpush2.bf16.msra.mxu0 0
        %1384 = vmatprep.subr.bf16.mxu0 0
        %1385 = vmatpush2.bf16.msra.mxu0 0
        %1386 = vmatprep.subr.bf16.mxu0 0
        %1387 = vmatpush2.bf16.msra.mxu0 0
        %1388 = vmatprep.subr.bf16.mxu0 0
        %1389 = vmatpush2.bf16.msra.mxu0 0
        %1390 = vmatprep.subr.bf16.mxu0 0
        %1391 = vmatpush2.bf16.msra.mxu0 0
        %1392 = vmatprep.subr.bf16.mxu0 0
        %1393 = vmatpush2.bf16.msra.mxu0 0
        %1394 = vmatprep.subr.bf16.mxu0 0
        %1395 = vmatpush2.bf16.msra.mxu0 0
        %1396 = vmatprep.subr.bf16.mxu0 0
        %1397 = vmatpush2.bf16.msra.mxu0 0
        %1398 = vmatprep.mubr.bf16.mxu0 0
        %1399 = vmatmul.mubr.bf16.gmra.mxu0 %v1314
        %v1400 = vpop.f32.mrf.mxu0
        %v1401 = vadd.f32 %v1284, %v1400
        %v1402 = vpop.f32.mrf.mxu0
        %v1403 = vpop.f32.mrf.mxu0
        %v1404 = vpop.f32.mrf.mxu0
        %1405 = vdwg.mxu0
        %v1406 = vld [vmem:[%s395 + $0x8] sm:$0x3]
        %v1407 = vld [vmem:[%s711] sm:$0xff]
        %v1408 = vld [vmem:[%s711 + $0x8] sm:$0xf]
        %v1409 = vld [vmem:[%s711 + $0xc] sm:$0xff]
        %v1410 = vld [vmem:[%s711 + $0x14] sm:$0xf]
        %v1411 = vld [vmem:[%s711 + $0x18] sm:$0xff]
        %v1412 = vld [vmem:[%s711 + $0x20] sm:$0xf]
        %v1419 = vunpack.c.l.b16 %v1407
        %v1420 = vunpack.c.h.b16 %v1407
        %v1421 = vunpack.c.l.b16 %v1408
        %v1422 = vunpack.c.l.b16 %v1409
        %v1423 = vunpack.c.h.b16 %v1409
        %v1424 = vunpack.c.l.b16 %v1410
        %v1425 = vunpack.c.l.b16 %v1411
        %v1426 = vunpack.c.h.b16 %v1411
        %v1427 = vunpack.c.l.b16 %v1412
        %v1428 = vpack.c.b16 %v1422, %v1419
        %v1429 = vpack.c.b16 %v1423, %v1420
        %v1430 = vpack.c.b16 %v1424, %v1421
        %v1431 = vpack.c.b16 %v1425, %v1425
        %v1432 = vpack.c.b16 %v1426, %v1426
        %v1433 = vpack.c.b16 %v1427, %v1427
        %v1438 = vsel %vm482, %v1406, 0
        %v1441 = vand.u32 %v1431, %v489
        %v1444 = vand.u32 %v1432, %v489
        %v1447 = vand.u32 %v1433, %v489
        %1449 = vmatprep.subr.bf16.mxu0 0
        %1450 = vmatpush1.bf16.msra.mxu0 0
        %1451 = vmatprep.subr.bf16.mxu0 0
        %1452 = vmatpush1.bf16.msra.mxu0 0
        %1453 = vmatprep.subr.bf16.mxu0 0
        %1454 = vmatpush1.bf16.msra.mxu0 0
        %1455 = vmatprep.subr.bf16.mxu0 0
        %1456 = vmatpush1.bf16.msra.mxu0 0
        %1457 = vmatprep.subr.bf16.mxu0 0
        %1458 = vmatpush1.bf16.msra.mxu0 0
        %1459 = vmatprep.subr.bf16.mxu0 0
        %1460 = vmatpush1.bf16.msra.mxu0 0
        %1461 = vmatprep.subr.bf16.mxu0 %v1444
        %1462 = vmatpush1.bf16.msra.mxu0 %v1441
        %1463 = vmatprep.subr.bf16.mxu0 %v1429
        %1464 = vmatpush1.bf16.msra.mxu0 %v1428
        %1465 = vmatprep.subr.bf16.mxu0 0
        %1466 = vmatpush2.bf16.msra.mxu0 0
        %1467 = vmatprep.subr.bf16.mxu0 0
        %1468 = vmatpush2.bf16.msra.mxu0 0
        %1469 = vmatprep.subr.bf16.mxu0 0
        %1470 = vmatpush2.bf16.msra.mxu0 0
        %1471 = vmatprep.subr.bf16.mxu0 0
        %1472 = vmatpush2.bf16.msra.mxu0 0
        %1473 = vmatprep.subr.bf16.mxu0 0
        %1474 = vmatpush2.bf16.msra.mxu0 0
        %1475 = vmatprep.subr.bf16.mxu0 0
        %1476 = vmatpush2.bf16.msra.mxu0 0
        %1477 = vmatprep.subr.bf16.mxu0 0
        %1478 = vmatpush2.bf16.msra.mxu0 0
        %1479 = vmatprep.subr.bf16.mxu0 0
        %1480 = vmatpush2.bf16.msra.mxu0 0
        %1481 = vmatprep.mubr.bf16.mxu0 0
        %1482 = vmatmul.mubr.bf16.gmra.mxu0 %v1438
        %v1483 = vpop.f32.mrf.mxu0
        %v1484 = vadd.f32 0.0, %v1483
        %v1485 = vpop.f32.mrf.mxu0
        %v1486 = vadd.f32 0.0, %v1485
        %v1487 = vpop.f32.mrf.mxu0
        %v1488 = vpop.f32.mrf.mxu0
        %1489 = vdwg.mxu0
        %1490 = vmatprep.subr.bf16.mxu0 0
        %1491 = vmatpush1.bf16.msra.mxu0 0
        %1492 = vmatprep.subr.bf16.mxu0 0
        %1493 = vmatpush1.bf16.msra.mxu0 0
        %1494 = vmatprep.subr.bf16.mxu0 0
        %1495 = vmatpush1.bf16.msra.mxu0 0
        %1496 = vmatprep.subr.bf16.mxu0 0
        %1497 = vmatpush1.bf16.msra.mxu0 0
        %1498 = vmatprep.subr.bf16.mxu0 0
        %1499 = vmatpush1.bf16.msra.mxu0 0
        %1500 = vmatprep.subr.bf16.mxu0 0
        %1501 = vmatpush1.bf16.msra.mxu0 0
        %1502 = vmatprep.subr.bf16.mxu0 0
        %1503 = vmatpush1.bf16.msra.mxu0 %v1447
        %1504 = vmatprep.subr.bf16.mxu0 0
        %1505 = vmatpush1.bf16.msra.mxu0 %v1430
        %1506 = vmatprep.subr.bf16.mxu0 0
        %1507 = vmatpush2.bf16.msra.mxu0 0
        %1508 = vmatprep.subr.bf16.mxu0 0
        %1509 = vmatpush2.bf16.msra.mxu0 0
        %1510 = vmatprep.subr.bf16.mxu0 0
        %1511 = vmatpush2.bf16.msra.mxu0 0
        %1512 = vmatprep.subr.bf16.mxu0 0
        %1513 = vmatpush2.bf16.msra.mxu0 0
        %1514 = vmatprep.subr.bf16.mxu0 0
        %1515 = vmatpush2.bf16.msra.mxu0 0
        %1516 = vmatprep.subr.bf16.mxu0 0
        %1517 = vmatpush2.bf16.msra.mxu0 0
        %1518 = vmatprep.subr.bf16.mxu0 0
        %1519 = vmatpush2.bf16.msra.mxu0 0
        %1520 = vmatprep.subr.bf16.mxu0 0
        %1521 = vmatpush2.bf16.msra.mxu0 0
        %1522 = vmatprep.mubr.bf16.mxu0 0
        %1523 = vmatmul.mubr.bf16.gmra.mxu0 %v1438
        %v1524 = vpop.f32.mrf.mxu0
        %v1525 = vadd.f32 0.0, %v1524
        %v1526 = vpop.f32.mrf.mxu0
        %v1527 = vpop.f32.mrf.mxu0
        %v1528 = vpop.f32.mrf.mxu0
        %1529 = vdwg.mxu0
        %v1530 = vadd.f32 %v1360, %v1484
        %v1531 = vadd.f32 %v1362, %v1486
        %v1532 = vadd.f32 %v1401, %v1525
        %v1533 = vld [vmem:[#allocation6] sm:$0x7]
        %v1535 = vlaneseq
        %v1536 = vshrl.u32 %v1535, 7
        %v1537 = vsub.s32 0, %v1536
        %v1538 = vrot.slane %v1533, %v1537
        %v1539 = vlaneseq
        %v1540 = vshrl.u32 %v1539, 7
        %v1541 = vsub.s32 1, %v1540
        %v1542 = vrot.slane %v1533, %v1541
        %v1543 = vlaneseq
        %v1544 = vshrl.u32 %v1543, 7
        %v1545 = vsub.s32 2, %v1544
        %v1546 = vrot.slane %v1533, %v1545
        %v1550 = vmul.f32 %v1530, %v1538
        %v1551 = vmul.f32 %v1531, %v1542
        %v1552 = vmul.f32 %v1532, %v1546
        %v1553 = vld [vmem:[#allocation8] sm:$0x7]
        %v1555 = vlaneseq
        %v1556 = vshrl.u32 %v1555, 7
        %v1557 = vsub.s32 0, %v1556
        %v1558 = vrot.slane %v1553, %v1557
        %v1559 = vlaneseq
        %v1560 = vshrl.u32 %v1559, 7
        %v1561 = vsub.s32 1, %v1560
        %v1562 = vrot.slane %v1553, %v1561
        %v1563 = vlaneseq
        %v1564 = vshrl.u32 %v1563, 7
        %v1565 = vsub.s32 2, %v1564
        %v1566 = vrot.slane %v1553, %v1565
        %v1570 = vadd.f32 %v1550, %v1558
        %v1571 = vadd.f32 %v1551, %v1562
        %v1572 = vadd.f32 %v1552, %v1566
        %v1573 = vmax.f32 %v1570, 0.0
        %v1574 = vmax.f32 %v1571, 0.0
        %v1575 = vmax.f32 %v1572, 0.0
        %1576 = vmatprep.subr.bf16.mxu0 0
        %1577 = vmatpush1.bf16.msra.mxu0 0
        %1578 = vmatprep.subr.bf16.mxu0 0
        %1579 = vmatpush1.bf16.msra.mxu0 0
        %1580 = vmatprep.subr.bf16.mxu0 0
        %1581 = vmatpush1.bf16.msra.mxu0 0
        %1582 = vmatprep.subr.bf16.mxu0 0
        %1583 = vmatpush1.bf16.msra.mxu0 0
        %1584 = vmatprep.subr.bf16.mxu0 0
        %1585 = vmatpush1.bf16.msra.mxu0 0
        %1586 = vmatprep.subr.bf16.mxu0 0
        %1587 = vmatpush1.bf16.msra.mxu0 0
        %1588 = vmatprep.subr.bf16.mxu0 %v1203
        %1589 = vmatpush1.bf16.msra.mxu0 %v1200
        %1590 = vmatprep.subr.bf16.mxu0 %v1188
        %1591 = vmatpush1.bf16.msra.mxu0 %v1187
        %1592 = vmatprep.subr.bf16.mxu0 0
        %1593 = vmatpush2.bf16.msra.mxu0 0
        %1594 = vmatprep.subr.bf16.mxu0 0
        %1595 = vmatpush2.bf16.msra.mxu0 0
        %1596 = vmatprep.subr.bf16.mxu0 0
        %1597 = vmatpush2.bf16.msra.mxu0 0
        %1598 = vmatprep.subr.bf16.mxu0 0
        %1599 = vmatpush2.bf16.msra.mxu0 0
        %1600 = vmatprep.subr.bf16.mxu0 0
        %1601 = vmatpush2.bf16.msra.mxu0 0
        %1602 = vmatprep.subr.bf16.mxu0 0
        %1603 = vmatpush2.bf16.msra.mxu0 0
        %1604 = vmatprep.subr.bf16.mxu0 0
        %1605 = vmatpush2.bf16.msra.mxu0 0
        %1606 = vmatprep.subr.bf16.mxu0 0
        %1607 = vmatpush2.bf16.msra.mxu0 0
        %1608 = vmatprep.mubr.bf16.mxu0 0
        %1609 = vmatmul.mubr.bf16.gmra.mxu0 %v1438
        %v1610 = vpop.f32.mrf.mxu0
        %v1611 = vadd.f32 0.0, %v1610
        %v1612 = vpop.f32.mrf.mxu0
        %v1613 = vadd.f32 0.0, %v1612
        %v1614 = vpop.f32.mrf.mxu0
        %v1615 = vpop.f32.mrf.mxu0
        %1616 = vdwg.mxu0
        %1617 = vmatprep.subr.bf16.mxu0 0
        %1618 = vmatpush1.bf16.msra.mxu0 0
        %1619 = vmatprep.subr.bf16.mxu0 0
        %1620 = vmatpush1.bf16.msra.mxu0 0
        %1621 = vmatprep.subr.bf16.mxu0 0
        %1622 = vmatpush1.bf16.msra.mxu0 0
        %1623 = vmatprep.subr.bf16.mxu0 0
        %1624 = vmatpush1.bf16.msra.mxu0 0
        %1625 = vmatprep.subr.bf16.mxu0 0
        %1626 = vmatpush1.bf16.msra.mxu0 0
        %1627 = vmatprep.subr.bf16.mxu0 0
        %1628 = vmatpush1.bf16.msra.mxu0 0
        %1629 = vmatprep.subr.bf16.mxu0 0
        %1630 = vmatpush1.bf16.msra.mxu0 %v1206
        %1631 = vmatprep.subr.bf16.mxu0 0
        %1632 = vmatpush1.bf16.msra.mxu0 %v1189
        %1633 = vmatprep.subr.bf16.mxu0 0
        %1634 = vmatpush2.bf16.msra.mxu0 0
        %1635 = vmatprep.subr.bf16.mxu0 0
        %1636 = vmatpush2.bf16.msra.mxu0 0
        %1637 = vmatprep.subr.bf16.mxu0 0
        %1638 = vmatpush2.bf16.msra.mxu0 0
        %1639 = vmatprep.subr.bf16.mxu0 0
        %1640 = vmatpush2.bf16.msra.mxu0 0
        %1641 = vmatprep.subr.bf16.mxu0 0
        %1642 = vmatpush2.bf16.msra.mxu0 0
        %1643 = vmatprep.subr.bf16.mxu0 0
        %1644 = vmatpush2.bf16.msra.mxu0 0
        %1645 = vmatprep.subr.bf16.mxu0 0
        %1646 = vmatpush2.bf16.msra.mxu0 0
        %1647 = vmatprep.subr.bf16.mxu0 0
        %1648 = vmatpush2.bf16.msra.mxu0 0
        %1649 = vmatprep.mubr.bf16.mxu0 0
        %1650 = vmatmul.mubr.bf16.gmra.mxu0 %v1438
        %v1651 = vpop.f32.mrf.mxu0
        %v1652 = vadd.f32 0.0, %v1651
        %v1653 = vpop.f32.mrf.mxu0
        %v1654 = vpop.f32.mrf.mxu0
        %v1655 = vpop.f32.mrf.mxu0
        %1656 = vdwg.mxu0
        %1657 = vmatprep.subr.bf16.mxu0 0
        %1658 = vmatpush1.bf16.msra.mxu0 0
        %1659 = vmatprep.subr.bf16.mxu0 0
        %1660 = vmatpush1.bf16.msra.mxu0 0
        %1661 = vmatprep.subr.bf16.mxu0 0
        %1662 = vmatpush1.bf16.msra.mxu0 0
        %1663 = vmatprep.subr.bf16.mxu0 0
        %1664 = vmatpush1.bf16.msra.mxu0 0
        %1665 = vmatprep.subr.bf16.mxu0 0
        %1666 = vmatpush1.bf16.msra.mxu0 0
        %1667 = vmatprep.subr.bf16.mxu0 0
        %1668 = vmatpush1.bf16.msra.mxu0 0
        %1669 = vmatprep.subr.bf16.mxu0 %v1320
        %1670 = vmatpush1.bf16.msra.mxu0 %v1317
        %1671 = vmatprep.subr.bf16.mxu0 %v1305
        %1672 = vmatpush1.bf16.msra.mxu0 %v1304
        %1673 = vmatprep.subr.bf16.mxu0 0
        %1674 = vmatpush2.bf16.msra.mxu0 0
        %1675 = vmatprep.subr.bf16.mxu0 0
        %1676 = vmatpush2.bf16.msra.mxu0 0
        %1677 = vmatprep.subr.bf16.mxu0 0
        %1678 = vmatpush2.bf16.msra.mxu0 0
        %1679 = vmatprep.subr.bf16.mxu0 0
        %1680 = vmatpush2.bf16.msra.mxu0 0
        %1681 = vmatprep.subr.bf16.mxu0 0
        %1682 = vmatpush2.bf16.msra.mxu0 0
        %1683 = vmatprep.subr.bf16.mxu0 0
        %1684 = vmatpush2.bf16.msra.mxu0 0
        %1685 = vmatprep.subr.bf16.mxu0 0
        %1686 = vmatpush2.bf16.msra.mxu0 0
        %1687 = vmatprep.subr.bf16.mxu0 0
        %1688 = vmatpush2.bf16.msra.mxu0 0
        %1689 = vmatprep.mubr.bf16.mxu0 0
        %1690 = vmatmul.mubr.bf16.gmra.mxu0 %v1197
        %v1691 = vpop.f32.mrf.mxu0
        %v1692 = vadd.f32 %v1611, %v1691
        %v1693 = vpop.f32.mrf.mxu0
        %v1694 = vadd.f32 %v1613, %v1693
        %v1695 = vpop.f32.mrf.mxu0
        %v1696 = vpop.f32.mrf.mxu0
        %1697 = vdwg.mxu0
        %1698 = vmatprep.subr.bf16.mxu0 0
        %1699 = vmatpush1.bf16.msra.mxu0 0
        %1700 = vmatprep.subr.bf16.mxu0 0
        %1701 = vmatpush1.bf16.msra.mxu0 0
        %1702 = vmatprep.subr.bf16.mxu0 0
        %1703 = vmatpush1.bf16.msra.mxu0 0
        %1704 = vmatprep.subr.bf16.mxu0 0
        %1705 = vmatpush1.bf16.msra.mxu0 0
        %1706 = vmatprep.subr.bf16.mxu0 0
        %1707 = vmatpush1.bf16.msra.mxu0 0
        %1708 = vmatprep.subr.bf16.mxu0 0
        %1709 = vmatpush1.bf16.msra.mxu0 0
        %1710 = vmatprep.subr.bf16.mxu0 0
        %1711 = vmatpush1.bf16.msra.mxu0 %v1323
        %1712 = vmatprep.subr.bf16.mxu0 0
        %1713 = vmatpush1.bf16.msra.mxu0 %v1306
        %1714 = vmatprep.subr.bf16.mxu0 0
        %1715 = vmatpush2.bf16.msra.mxu0 0
        %1716 = vmatprep.subr.bf16.mxu0 0
        %1717 = vmatpush2.bf16.msra.mxu0 0
        %1718 = vmatprep.subr.bf16.mxu0 0
        %1719 = vmatpush2.bf16.msra.mxu0 0
        %1720 = vmatprep.subr.bf16.mxu0 0
        %1721 = vmatpush2.bf16.msra.mxu0 0
        %1722 = vmatprep.subr.bf16.mxu0 0
        %1723 = vmatpush2.bf16.msra.mxu0 0
        %1724 = vmatprep.subr.bf16.mxu0 0
        %1725 = vmatpush2.bf16.msra.mxu0 0
        %1726 = vmatprep.subr.bf16.mxu0 0
        %1727 = vmatpush2.bf16.msra.mxu0 0
        %1728 = vmatprep.subr.bf16.mxu0 0
        %1729 = vmatpush2.bf16.msra.mxu0 0
        %1730 = vmatprep.mubr.bf16.mxu0 0
        %1731 = vmatmul.mubr.bf16.gmra.mxu0 %v1197
        %v1732 = vpop.f32.mrf.mxu0
        %v1733 = vadd.f32 %v1652, %v1732
        %v1734 = vpop.f32.mrf.mxu0
        %v1735 = vpop.f32.mrf.mxu0
        %v1736 = vpop.f32.mrf.mxu0
        %1737 = vdwg.mxu0
        %v1738 = vld [vmem:[#allocation2 + $0x8] sm:$0x7]
        %v1740 = vunpack.c.l.b16 %v1738
        %v1741 = vpack.c.b16 %v1740, %v1740
        %v1743 = vshrl.u32 %v1741, 16
        %v1745 = vshll.u32 %v1741, 16
        %v1747 = vrot.slane %v1745, 1
        %v1748 = vor.u32 %v1743, %v1747
        %v1750 = vsel %vm482, %v1748, 0
        %1752 = vmatprep.subr.bf16.mxu0 0
        %1753 = vmatpush1.bf16.msra.mxu0 0
        %1754 = vmatprep.subr.bf16.mxu0 0
        %1755 = vmatpush1.bf16.msra.mxu0 0
        %1756 = vmatprep.subr.bf16.mxu0 0
        %1757 = vmatpush1.bf16.msra.mxu0 0
        %1758 = vmatprep.subr.bf16.mxu0 0
        %1759 = vmatpush1.bf16.msra.mxu0 0
        %1760 = vmatprep.subr.bf16.mxu0 0
        %1761 = vmatpush1.bf16.msra.mxu0 0
        %1762 = vmatprep.subr.bf16.mxu0 0
        %1763 = vmatpush1.bf16.msra.mxu0 0
        %1764 = vmatprep.subr.bf16.mxu0 %v1444
        %1765 = vmatpush1.bf16.msra.mxu0 %v1441
        %1766 = vmatprep.subr.bf16.mxu0 %v1429
        %1767 = vmatpush1.bf16.msra.mxu0 %v1428
        %1768 = vmatprep.subr.bf16.mxu0 0
        %1769 = vmatpush2.bf16.msra.mxu0 0
        %1770 = vmatprep.subr.bf16.mxu0 0
        %1771 = vmatpush2.bf16.msra.mxu0 0
        %1772 = vmatprep.subr.bf16.mxu0 0
        %1773 = vmatpush2.bf16.msra.mxu0 0
        %1774 = vmatprep.subr.bf16.mxu0 0
        %1775 = vmatpush2.bf16.msra.mxu0 0
        %1776 = vmatprep.subr.bf16.mxu0 0
        %1777 = vmatpush2.bf16.msra.mxu0 0
        %1778 = vmatprep.subr.bf16.mxu0 0
        %1779 = vmatpush2.bf16.msra.mxu0 0
        %1780 = vmatprep.subr.bf16.mxu0 0
        %1781 = vmatpush2.bf16.msra.mxu0 0
        %1782 = vmatprep.subr.bf16.mxu0 0
        %1783 = vmatpush2.bf16.msra.mxu0 0
        %1784 = vmatprep.mubr.bf16.mxu0 0
        %1785 = vmatmul.mubr.bf16.gmra.mxu0 %v1750
        %v1786 = vpop.f32.mrf.mxu0
        %v1787 = vadd.f32 0.0, %v1786
        %v1788 = vpop.f32.mrf.mxu0
        %v1789 = vadd.f32 0.0, %v1788
        %v1790 = vpop.f32.mrf.mxu0
        %v1791 = vpop.f32.mrf.mxu0
        %1792 = vdwg.mxu0
        %1793 = vmatprep.subr.bf16.mxu0 0
        %1794 = vmatpush1.bf16.msra.mxu0 0
        %1795 = vmatprep.subr.bf16.mxu0 0
        %1796 = vmatpush1.bf16.msra.mxu0 0
        %1797 = vmatprep.subr.bf16.mxu0 0
        %1798 = vmatpush1.bf16.msra.mxu0 0
        %1799 = vmatprep.subr.bf16.mxu0 0
        %1800 = vmatpush1.bf16.msra.mxu0 0
        %1801 = vmatprep.subr.bf16.mxu0 0
        %1802 = vmatpush1.bf16.msra.mxu0 0
        %1803 = vmatprep.subr.bf16.mxu0 0
        %1804 = vmatpush1.bf16.msra.mxu0 0
        %1805 = vmatprep.subr.bf16.mxu0 0
        %1806 = vmatpush1.bf16.msra.mxu0 %v1447
        %1807 = vmatprep.subr.bf16.mxu0 0
        %1808 = vmatpush1.bf16.msra.mxu0 %v1430
        %1809 = vmatprep.subr.bf16.mxu0 0
        %1810 = vmatpush2.bf16.msra.mxu0 0
        %1811 = vmatprep.subr.bf16.mxu0 0
        %1812 = vmatpush2.bf16.msra.mxu0 0
        %1813 = vmatprep.subr.bf16.mxu0 0
        %1814 = vmatpush2.bf16.msra.mxu0 0
        %1815 = vmatprep.subr.bf16.mxu0 0
        %1816 = vmatpush2.bf16.msra.mxu0 0
        %1817 = vmatprep.subr.bf16.mxu0 0
        %1818 = vmatpush2.bf16.msra.mxu0 0
        %1819 = vmatprep.subr.bf16.mxu0 0
        %1820 = vmatpush2.bf16.msra.mxu0 0
        %1821 = vmatprep.subr.bf16.mxu0 0
        %1822 = vmatpush2.bf16.msra.mxu0 0
        %1823 = vmatprep.subr.bf16.mxu0 0
        %1824 = vmatpush2.bf16.msra.mxu0 0
        %1825 = vmatprep.mubr.bf16.mxu0 0
        %1826 = vmatmul.mubr.bf16.gmra.mxu0 %v1750
        %v1827 = vpop.f32.mrf.mxu0
        %v1828 = vadd.f32 0.0, %v1827
        %v1829 = vpop.f32.mrf.mxu0
        %v1830 = vpop.f32.mrf.mxu0
        %v1831 = vpop.f32.mrf.mxu0
        %1832 = vdwg.mxu0
        %v1833 = vadd.f32 %v1692, %v1787
        %v1834 = vadd.f32 %v1694, %v1789
        %v1835 = vadd.f32 %v1733, %v1828
        %v1836 = vmul.f32 %v1833, %v1538
        %v1837 = vmul.f32 %v1834, %v1542
        %v1838 = vmul.f32 %v1835, %v1546
        %v1839 = vadd.f32 %v1836, %v1558
        %v1840 = vadd.f32 %v1837, %v1562
        %v1841 = vadd.f32 %v1838, %v1566
        %v1842 = vmax.f32 %v1839, 0.0
        %v1843 = vmax.f32 %v1840, 0.0
        %v1844 = vmax.f32 %v1841, 0.0
        %v1845 = vmax.f32 %v1573, %v1842
        %v1846 = vmax.f32 %v1574, %v1843
        %v1847 = vmax.f32 %v1575, %v1844
        %v1848 = vpack.c.bf16 %v1845, %v1845
        %v1849 = vpack.c.bf16 %v1846, %v1846
        %v1850 = vpack.c.bf16 %v1847, %v1847
        %v1854 = vunpack.c.l.b16 %v1848
        %v1855 = vunpack.c.l.b16 %v1849
        %v1856 = vunpack.c.l.b16 %v1850
        %v1857 = vpack.c.b16 %v1855, %v1854
        %v1858 = vpack.c.b16 %v1856, %v1856
        %1861 = vst [vmem:[%s429 + $0x18] sm:$0x33] %v1857
        %1862 = vst [vmem:[%s429 + $0x20] sm:$0x3] %v1858
        %v1863 = vld [vmem:[%s429 + $0xc] sm:$0x88]
        %v1864 = vld [vmem:[%s429 + $0x14] sm:$0x8]
        %v1865 = vld [vmem:[%s429 + $0x18] sm:$0x33]
        %v1866 = vld [vmem:[%s429 + $0x20] sm:$0x3]
        %v1867 = vld [vmem:[#allocation9] sm:$0xff]
        %v1868 = vld [vmem:[#allocation9 + $0x8] sm:$0xff]
        %v1869 = vld [vmem:[#allocation9 + $0x10] sm:$0xff]
        %v1870 = vld [vmem:[#allocation9 + $0x18] sm:$0xff]
        %v1871 = vld [vmem:[#allocation9 + $0x20] sm:$0xff]
        %v1872 = vld [vmem:[#allocation9 + $0x28] sm:$0xff]
        %v1873 = vld [vmem:[#allocation9 + $0x30] sm:$0xff]
        %v1874 = vld [vmem:[#allocation9 + $0x38] sm:$0xff]
        %v1875 = vld [vmem:[#allocation9 + $0x40] sm:$0xff]
        %v1876 = vld [vmem:[#allocation9 + $0x48] sm:$0xff]
        %v1877 = vld [vmem:[#allocation9 + $0x50] sm:$0xff]
        %v1878 = vld [vmem:[#allocation9 + $0x58] sm:$0xff]
        %v1879 = vld [vmem:[#allocation9 + $0x60] sm:$0xff]
        %v1880 = vld [vmem:[#allocation9 + $0x68] sm:$0xff]
        %v1881 = vld [vmem:[#allocation9 + $0x70] sm:$0xff]
        %v1882 = vld [vmem:[#allocation9 + $0x78] sm:$0xff]
        %v1883 = vld [vmem:[#allocation9 + $0x80] sm:$0xff]
        %v1884 = vld [vmem:[#allocation9 + $0x88] sm:$0xff]
        %v1885 = vld [vmem:[#allocation9 + $0x90] sm:$0xff]
        %v1886 = vld [vmem:[#allocation9 + $0x98] sm:$0xff]
        %v1887 = vld [vmem:[#allocation9 + $0xa0] sm:$0xff]
        %v1888 = vld [vmem:[#allocation9 + $0xa8] sm:$0xff]
        %v1889 = vld [vmem:[#allocation9 + $0xb0] sm:$0xff]
        %v1890 = vld [vmem:[#allocation9 + $0xb8] sm:$0xff]
        %v1891 = vld [vmem:[#allocation9 + $0xc0] sm:$0xff]
        %v1892 = vld [vmem:[#allocation9 + $0xc8] sm:$0xff]
        %v1893 = vld [vmem:[#allocation9 + $0xd0] sm:$0xff]
        %v1894 = vld [vmem:[#allocation9 + $0xd8] sm:$0xff]
        %v1895 = vld [vmem:[#allocation9 + $0xe0] sm:$0xff]
        %v1896 = vld [vmem:[#allocation9 + $0xe8] sm:$0xff]
        %v1897 = vld [vmem:[#allocation9 + $0xf0] sm:$0xff]
        %v1898 = vld [vmem:[#allocation9 + $0xf8] sm:$0xff]
        %v1899 = vld [vmem:[#allocation9 + $0x100] sm:$0xff]
        %v1900 = vld [vmem:[#allocation9 + $0x108] sm:$0xff]
        %v1901 = vld [vmem:[#allocation9 + $0x110] sm:$0xff]
        %v1902 = vld [vmem:[#allocation9 + $0x118] sm:$0xff]
        %v1903 = vld [vmem:[#allocation9 + $0x120] sm:$0xff]
        %v1904 = vld [vmem:[#allocation9 + $0x128] sm:$0xff]
        %v1905 = vld [vmem:[#allocation9 + $0x130] sm:$0xff]
        %v1906 = vld [vmem:[#allocation9 + $0x138] sm:$0xff]
        %v1907 = vld [vmem:[#allocation9 + $0x140] sm:$0xff]
        %v1908 = vld [vmem:[#allocation9 + $0x148] sm:$0xff]
        %v1909 = vld [vmem:[#allocation9 + $0x150] sm:$0xff]
        %v1910 = vld [vmem:[#allocation9 + $0x158] sm:$0xff]
        %v1911 = vld [vmem:[#allocation9 + $0x160] sm:$0xff]
        %v1912 = vld [vmem:[#allocation9 + $0x168] sm:$0xff]
        %v1913 = vld [vmem:[#allocation9 + $0x170] sm:$0xff]
        %v1914 = vld [vmem:[#allocation9 + $0x178] sm:$0xff]
        %v1915 = vld [vmem:[#allocation9 + $0x180] sm:$0xff]
        %v1916 = vld [vmem:[#allocation9 + $0x188] sm:$0xff]
        %v1917 = vld [vmem:[#allocation9 + $0x190] sm:$0xff]
        %v1918 = vld [vmem:[#allocation9 + $0x198] sm:$0xff]
        %v1919 = vld [vmem:[#allocation9 + $0x1a0] sm:$0xff]
        %v1920 = vld [vmem:[#allocation9 + $0x1a8] sm:$0xff]
        %v1921 = vld [vmem:[#allocation9 + $0x1b0] sm:$0xff]
        %v1922 = vld [vmem:[#allocation9 + $0x1b8] sm:$0xff]
        %v1923 = vld [vmem:[#allocation9 + $0x1c0] sm:$0xff]
        %v1924 = vld [vmem:[#allocation9 + $0x1c8] sm:$0xff]
        %v1925 = vld [vmem:[#allocation9 + $0x1d0] sm:$0xff]
        %v1926 = vld [vmem:[#allocation9 + $0x1d8] sm:$0xff]
        %v1927 = vld [vmem:[#allocation9 + $0x1e0] sm:$0xff]
        %v1928 = vld [vmem:[#allocation9 + $0x1e8] sm:$0xff]
        %v1929 = vld [vmem:[#allocation9 + $0x1f0] sm:$0xff]
        %v1930 = vld [vmem:[#allocation9 + $0x1f8] sm:$0xff]
        %v1931 = vld [vmem:[#allocation9 + $0x200] sm:$0xff]
        %v1932 = vld [vmem:[#allocation9 + $0x208] sm:$0xff]
        %v1933 = vld [vmem:[#allocation9 + $0x210] sm:$0xff]
        %v1934 = vld [vmem:[#allocation9 + $0x218] sm:$0xff]
        %v1935 = vld [vmem:[#allocation9 + $0x220] sm:$0xff]
        %v1936 = vld [vmem:[#allocation9 + $0x228] sm:$0xff]
        %v1937 = vld [vmem:[#allocation9 + $0x230] sm:$0xff]
        %v1938 = vld [vmem:[#allocation9 + $0x238] sm:$0xff]
        %v1939 = vld [vmem:[#allocation9 + $0x240] sm:$0xff]
        %v1940 = vld [vmem:[#allocation9 + $0x248] sm:$0xff]
        %v1941 = vld [vmem:[#allocation9 + $0x250] sm:$0xff]
        %v1942 = vld [vmem:[#allocation9 + $0x258] sm:$0xff]
        %v1943 = vld [vmem:[#allocation9 + $0x260] sm:$0xff]
        %v1944 = vld [vmem:[#allocation9 + $0x268] sm:$0xff]
        %v1945 = vld [vmem:[#allocation9 + $0x270] sm:$0xff]
        %v1946 = vld [vmem:[#allocation9 + $0x278] sm:$0xff]
        %v1947 = vld [vmem:[#allocation9 + $0x280] sm:$0xff]
        %v1948 = vld [vmem:[#allocation9 + $0x288] sm:$0xff]
        %v1949 = vld [vmem:[#allocation9 + $0x290] sm:$0xff]
        %v1950 = vld [vmem:[#allocation9 + $0x298] sm:$0xff]
        %v1951 = vld [vmem:[#allocation9 + $0x2a0] sm:$0xff]
        %v1952 = vld [vmem:[#allocation9 + $0x2a8] sm:$0xff]
        %v1953 = vld [vmem:[#allocation9 + $0x2b0] sm:$0xff]
        %v1954 = vld [vmem:[#allocation9 + $0x2b8] sm:$0xff]
        %v1955 = vld [vmem:[#allocation9 + $0x2c0] sm:$0xff]
        %v1956 = vld [vmem:[#allocation9 + $0x2c8] sm:$0xff]
        %v1957 = vld [vmem:[#allocation9 + $0x2d0] sm:$0xff]
        %v1958 = vld [vmem:[#allocation9 + $0x2d8] sm:$0xff]
        %v1959 = vld [vmem:[#allocation9 + $0x2e0] sm:$0xff]
        %v1960 = vld [vmem:[#allocation9 + $0x2e8] sm:$0xff]
        %v1961 = vld [vmem:[#allocation9 + $0x2f0] sm:$0xff]
        %v1962 = vld [vmem:[#allocation9 + $0x2f8] sm:$0xff]
        %v1963 = vld [vmem:[#allocation9 + $0x300] sm:$0xff]
        %v1964 = vld [vmem:[#allocation9 + $0x308] sm:$0xff]
        %v1965 = vld [vmem:[#allocation9 + $0x310] sm:$0xff]
        %v1966 = vld [vmem:[#allocation9 + $0x318] sm:$0xff]
        %v1967 = vld [vmem:[#allocation9 + $0x320] sm:$0xff]
        %v1968 = vld [vmem:[#allocation9 + $0x328] sm:$0xff]
        %v1969 = vld [vmem:[#allocation9 + $0x330] sm:$0xff]
        %v1970 = vld [vmem:[#allocation9 + $0x338] sm:$0xff]
        %v1971 = vld [vmem:[#allocation9 + $0x340] sm:$0xff]
        %v1972 = vld [vmem:[#allocation9 + $0x348] sm:$0xff]
        %v1973 = vld [vmem:[#allocation9 + $0x350] sm:$0xff]
        %v1974 = vld [vmem:[#allocation9 + $0x358] sm:$0xff]
        %v1975 = vld [vmem:[#allocation9 + $0x360] sm:$0xff]
        %v1976 = vld [vmem:[#allocation9 + $0x368] sm:$0xff]
        %v1977 = vld [vmem:[#allocation9 + $0x370] sm:$0xff]
        %v1978 = vld [vmem:[#allocation9 + $0x378] sm:$0xff]
        %v1979 = vld [vmem:[#allocation9 + $0x380] sm:$0xff]
        %v1980 = vld [vmem:[#allocation9 + $0x388] sm:$0xff]
        %v1981 = vld [vmem:[#allocation9 + $0x390] sm:$0xff]
        %v1982 = vld [vmem:[#allocation9 + $0x398] sm:$0xff]
        %v1983 = vld [vmem:[#allocation9 + $0x3a0] sm:$0xff]
        %v1984 = vld [vmem:[#allocation9 + $0x3a8] sm:$0xff]
        %v1985 = vld [vmem:[#allocation9 + $0x3b0] sm:$0xff]
        %v1986 = vld [vmem:[#allocation9 + $0x3b8] sm:$0xff]
        %v1987 = vld [vmem:[#allocation9 + $0x3c0] sm:$0xff]
        %v1988 = vld [vmem:[#allocation9 + $0x3c8] sm:$0xff]
        %v1989 = vld [vmem:[#allocation9 + $0x3d0] sm:$0xff]
        %v1990 = vld [vmem:[#allocation9 + $0x3d8] sm:$0xff]
        %v1991 = vld [vmem:[#allocation9 + $0x3e0] sm:$0xff]
        %v1992 = vld [vmem:[#allocation9 + $0x3e8] sm:$0xff]
        %v1993 = vld [vmem:[#allocation9 + $0x3f0] sm:$0xff]
        %v1994 = vld [vmem:[#allocation9 + $0x3f8] sm:$0xff]
        %v1995 = vld [vmem:[#allocation9 + $0x400] sm:$0xff]
        %v1996 = vld [vmem:[#allocation9 + $0x408] sm:$0xff]
        %v1997 = vld [vmem:[#allocation9 + $0x410] sm:$0xff]
        %v1998 = vld [vmem:[#allocation9 + $0x418] sm:$0xff]
        %v1999 = vld [vmem:[#allocation9 + $0x420] sm:$0xff]
        %v2000 = vld [vmem:[#allocation9 + $0x428] sm:$0xff]
        %v2001 = vld [vmem:[#allocation9 + $0x430] sm:$0xff]
        %v2002 = vld [vmem:[#allocation9 + $0x438] sm:$0xff]
        %v2003 = vld [vmem:[#allocation9 + $0x440] sm:$0xff]
        %v2004 = vld [vmem:[#allocation9 + $0x448] sm:$0xff]
        %v2005 = vld [vmem:[#allocation9 + $0x450] sm:$0xff]
        %v2006 = vld [vmem:[#allocation9 + $0x458] sm:$0xff]
        %v2007 = vld [vmem:[#allocation9 + $0x460] sm:$0xff]
        %v2008 = vld [vmem:[#allocation9 + $0x468] sm:$0xff]
        %v2009 = vld [vmem:[#allocation9 + $0x470] sm:$0xff]
        %v2010 = vld [vmem:[#allocation9 + $0x478] sm:$0xff]
        %v2011 = vld [vmem:[#allocation3 + $0x18] sm:$0x33]
        %v2012 = vld [vmem:[#allocation3 + $0x20] sm:$0x3]
        %s2013 = scalar_lea.vmem [#allocation9], 1152
        %v2014 = vld [vmem:[%s2013] sm:$0xff]
        %v2015 = vld [vmem:[%s2013 + $0x8] sm:$0xff]
        %v2016 = vld [vmem:[%s2013 + $0x10] sm:$0xff]
        %v2017 = vld [vmem:[%s2013 + $0x18] sm:$0xff]
        %v2018 = vld [vmem:[%s2013 + $0x20] sm:$0xff]
        %v2019 = vld [vmem:[%s2013 + $0x28] sm:$0xff]
        %v2020 = vld [vmem:[%s2013 + $0x30] sm:$0xff]
        %v2021 = vld [vmem:[%s2013 + $0x38] sm:$0xff]
        %v2022 = vld [vmem:[%s2013 + $0x40] sm:$0xff]
        %v2023 = vld [vmem:[%s2013 + $0x48] sm:$0xff]
        %v2024 = vld [vmem:[%s2013 + $0x50] sm:$0xff]
        %v2025 = vld [vmem:[%s2013 + $0x58] sm:$0xff]
        %v2026 = vld [vmem:[%s2013 + $0x60] sm:$0xff]
        %v2027 = vld [vmem:[%s2013 + $0x68] sm:$0xff]
        %v2028 = vld [vmem:[%s2013 + $0x70] sm:$0xff]
        %v2029 = vld [vmem:[%s2013 + $0x78] sm:$0xff]
        %v2030 = vld [vmem:[%s2013 + $0x80] sm:$0xff]
        %v2031 = vld [vmem:[%s2013 + $0x88] sm:$0xff]
        %v2032 = vld [vmem:[%s2013 + $0x90] sm:$0xff]
        %v2033 = vld [vmem:[%s2013 + $0x98] sm:$0xff]
        %v2034 = vld [vmem:[%s2013 + $0xa0] sm:$0xff]
        %v2035 = vld [vmem:[%s2013 + $0xa8] sm:$0xff]
        %v2036 = vld [vmem:[%s2013 + $0xb0] sm:$0xff]
        %v2037 = vld [vmem:[%s2013 + $0xb8] sm:$0xff]
        %v2038 = vld [vmem:[%s2013 + $0xc0] sm:$0xff]
        %v2039 = vld [vmem:[%s2013 + $0xc8] sm:$0xff]
        %v2040 = vld [vmem:[%s2013 + $0xd0] sm:$0xff]
        %v2041 = vld [vmem:[%s2013 + $0xd8] sm:$0xff]
        %v2042 = vld [vmem:[%s2013 + $0xe0] sm:$0xff]
        %v2043 = vld [vmem:[%s2013 + $0xe8] sm:$0xff]
        %v2044 = vld [vmem:[%s2013 + $0xf0] sm:$0xff]
        %v2045 = vld [vmem:[%s2013 + $0xf8] sm:$0xff]
        %v2046 = vld [vmem:[%s2013 + $0x100] sm:$0xff]
        %v2047 = vld [vmem:[%s2013 + $0x108] sm:$0xff]
        %v2048 = vld [vmem:[%s2013 + $0x110] sm:$0xff]
        %v2049 = vld [vmem:[%s2013 + $0x118] sm:$0xff]
        %v2050 = vld [vmem:[%s2013 + $0x120] sm:$0xff]
        %v2051 = vld [vmem:[%s2013 + $0x128] sm:$0xff]
        %v2052 = vld [vmem:[%s2013 + $0x130] sm:$0xff]
        %v2053 = vld [vmem:[%s2013 + $0x138] sm:$0xff]
        %v2054 = vld [vmem:[%s2013 + $0x140] sm:$0xff]
        %v2055 = vld [vmem:[%s2013 + $0x148] sm:$0xff]
        %v2056 = vld [vmem:[%s2013 + $0x150] sm:$0xff]
        %v2057 = vld [vmem:[%s2013 + $0x158] sm:$0xff]
        %v2058 = vld [vmem:[%s2013 + $0x160] sm:$0xff]
        %v2059 = vld [vmem:[%s2013 + $0x168] sm:$0xff]
        %v2060 = vld [vmem:[%s2013 + $0x170] sm:$0xff]
        %v2061 = vld [vmem:[%s2013 + $0x178] sm:$0xff]
        %v2062 = vld [vmem:[%s2013 + $0x180] sm:$0xff]
        %v2063 = vld [vmem:[%s2013 + $0x188] sm:$0xff]
        %v2064 = vld [vmem:[%s2013 + $0x190] sm:$0xff]
        %v2065 = vld [vmem:[%s2013 + $0x198] sm:$0xff]
        %v2066 = vld [vmem:[%s2013 + $0x1a0] sm:$0xff]
        %v2067 = vld [vmem:[%s2013 + $0x1a8] sm:$0xff]
        %v2068 = vld [vmem:[%s2013 + $0x1b0] sm:$0xff]
        %v2069 = vld [vmem:[%s2013 + $0x1b8] sm:$0xff]
        %v2070 = vld [vmem:[%s2013 + $0x1c0] sm:$0xff]
        %v2071 = vld [vmem:[%s2013 + $0x1c8] sm:$0xff]
        %v2072 = vld [vmem:[%s2013 + $0x1d0] sm:$0xff]
        %v2073 = vld [vmem:[%s2013 + $0x1d8] sm:$0xff]
        %v2074 = vld [vmem:[%s2013 + $0x1e0] sm:$0xff]
        %v2075 = vld [vmem:[%s2013 + $0x1e8] sm:$0xff]
        %v2076 = vld [vmem:[%s2013 + $0x1f0] sm:$0xff]
        %v2077 = vld [vmem:[%s2013 + $0x1f8] sm:$0xff]
        %v2078 = vld [vmem:[%s2013 + $0x200] sm:$0xff]
        %v2079 = vld [vmem:[%s2013 + $0x208] sm:$0xff]
        %v2080 = vld [vmem:[%s2013 + $0x210] sm:$0xff]
        %v2081 = vld [vmem:[%s2013 + $0x218] sm:$0xff]
        %v2082 = vld [vmem:[%s2013 + $0x220] sm:$0xff]
        %v2083 = vld [vmem:[%s2013 + $0x228] sm:$0xff]
        %v2084 = vld [vmem:[%s2013 + $0x230] sm:$0xff]
        %v2085 = vld [vmem:[%s2013 + $0x238] sm:$0xff]
        %v2086 = vld [vmem:[%s2013 + $0x240] sm:$0xff]
        %v2087 = vld [vmem:[%s2013 + $0x248] sm:$0xff]
        %v2088 = vld [vmem:[%s2013 + $0x250] sm:$0xff]
        %v2089 = vld [vmem:[%s2013 + $0x258] sm:$0xff]
        %v2090 = vld [vmem:[%s2013 + $0x260] sm:$0xff]
        %v2091 = vld [vmem:[%s2013 + $0x268] sm:$0xff]
        %v2092 = vld [vmem:[%s2013 + $0x270] sm:$0xff]
        %v2093 = vld [vmem:[%s2013 + $0x278] sm:$0xff]
        %v2094 = vld [vmem:[%s2013 + $0x280] sm:$0xff]
        %v2095 = vld [vmem:[%s2013 + $0x288] sm:$0xff]
        %v2096 = vld [vmem:[%s2013 + $0x290] sm:$0xff]
        %v2097 = vld [vmem:[%s2013 + $0x298] sm:$0xff]
        %v2098 = vld [vmem:[%s2013 + $0x2a0] sm:$0xff]
        %v2099 = vld [vmem:[%s2013 + $0x2a8] sm:$0xff]
        %v2100 = vld [vmem:[%s2013 + $0x2b0] sm:$0xff]
        %v2101 = vld [vmem:[%s2013 + $0x2b8] sm:$0xff]
        %v2102 = vld [vmem:[%s2013 + $0x2c0] sm:$0xff]
        %v2103 = vld [vmem:[%s2013 + $0x2c8] sm:$0xff]
        %v2104 = vld [vmem:[%s2013 + $0x2d0] sm:$0xff]
        %v2105 = vld [vmem:[%s2013 + $0x2d8] sm:$0xff]
        %v2106 = vld [vmem:[%s2013 + $0x2e0] sm:$0xff]
        %v2107 = vld [vmem:[%s2013 + $0x2e8] sm:$0xff]
        %v2108 = vld [vmem:[%s2013 + $0x2f0] sm:$0xff]
        %v2109 = vld [vmem:[%s2013 + $0x2f8] sm:$0xff]
        %v2110 = vld [vmem:[%s2013 + $0x300] sm:$0xff]
        %v2111 = vld [vmem:[%s2013 + $0x308] sm:$0xff]
        %v2112 = vld [vmem:[%s2013 + $0x310] sm:$0xff]
        %v2113 = vld [vmem:[%s2013 + $0x318] sm:$0xff]
        %v2114 = vld [vmem:[%s2013 + $0x320] sm:$0xff]
        %v2115 = vld [vmem:[%s2013 + $0x328] sm:$0xff]
        %v2116 = vld [vmem:[%s2013 + $0x330] sm:$0xff]
        %v2117 = vld [vmem:[%s2013 + $0x338] sm:$0xff]
        %v2118 = vld [vmem:[%s2013 + $0x340] sm:$0xff]
        %v2119 = vld [vmem:[%s2013 + $0x348] sm:$0xff]
        %v2120 = vld [vmem:[%s2013 + $0x350] sm:$0xff]
        %v2121 = vld [vmem:[%s2013 + $0x358] sm:$0xff]
        %v2122 = vld [vmem:[%s2013 + $0x360] sm:$0xff]
        %v2123 = vld [vmem:[%s2013 + $0x368] sm:$0xff]
        %v2124 = vld [vmem:[%s2013 + $0x370] sm:$0xff]
        %v2125 = vld [vmem:[%s2013 + $0x378] sm:$0xff]
        %v2126 = vld [vmem:[%s2013 + $0x380] sm:$0xff]
        %v2127 = vld [vmem:[%s2013 + $0x388] sm:$0xff]
        %v2128 = vld [vmem:[%s2013 + $0x390] sm:$0xff]
        %v2129 = vld [vmem:[%s2013 + $0x398] sm:$0xff]
        %v2130 = vld [vmem:[%s2013 + $0x3a0] sm:$0xff]
        %v2131 = vld [vmem:[%s2013 + $0x3a8] sm:$0xff]
        %v2132 = vld [vmem:[%s2013 + $0x3b0] sm:$0xff]
        %v2133 = vld [vmem:[%s2013 + $0x3b8] sm:$0xff]
        %v2134 = vld [vmem:[%s2013 + $0x3c0] sm:$0xff]
        %v2135 = vld [vmem:[%s2013 + $0x3c8] sm:$0xff]
        %v2136 = vld [vmem:[%s2013 + $0x3d0] sm:$0xff]
        %v2137 = vld [vmem:[%s2013 + $0x3d8] sm:$0xff]
        %v2138 = vld [vmem:[%s2013 + $0x3e0] sm:$0xff]
        %v2139 = vld [vmem:[%s2013 + $0x3e8] sm:$0xff]
        %v2140 = vld [vmem:[%s2013 + $0x3f0] sm:$0xff]
        %v2141 = vld [vmem:[%s2013 + $0x3f8] sm:$0xff]
        %v2142 = vld [vmem:[%s2013 + $0x400] sm:$0xff]
        %v2143 = vld [vmem:[%s2013 + $0x408] sm:$0xff]
        %v2144 = vld [vmem:[%s2013 + $0x410] sm:$0xff]
        %v2145 = vld [vmem:[%s2013 + $0x418] sm:$0xff]
        %v2146 = vld [vmem:[%s2013 + $0x420] sm:$0xff]
        %v2147 = vld [vmem:[%s2013 + $0x428] sm:$0xff]
        %v2148 = vld [vmem:[%s2013 + $0x430] sm:$0xff]
        %v2149 = vld [vmem:[%s2013 + $0x438] sm:$0xff]
        %v2150 = vld [vmem:[%s2013 + $0x440] sm:$0xff]
        %v2151 = vld [vmem:[%s2013 + $0x448] sm:$0xff]
        %v2152 = vld [vmem:[%s2013 + $0x450] sm:$0xff]
        %v2153 = vld [vmem:[%s2013 + $0x458] sm:$0xff]
        %v2154 = vld [vmem:[%s2013 + $0x460] sm:$0xff]
        %v2155 = vld [vmem:[%s2013 + $0x468] sm:$0xff]
        %v2156 = vld [vmem:[%s2013 + $0x470] sm:$0xff]
        %v2157 = vld [vmem:[%s2013 + $0x478] sm:$0xff]
        %v2160 = vunpack.c.l.b16 %v2011
        %v2161 = vunpack.c.h.b16 %v2011
        %v2162 = vunpack.c.l.b16 %v2012
        %v2163 = vpack.c.b16 %v2160, %v2160
        %v2164 = vpack.c.b16 %v2161, %v2161
        %v2165 = vpack.c.b16 %v2162, %v2162
        %v2313 = vunpack.c.l.b16 %v2014
        %v2314 = vunpack.c.h.b16 %v2014
        %v2315 = vunpack.c.l.b16 %v2015
        %v2316 = vunpack.c.h.b16 %v2015
        %v2317 = vunpack.c.l.b16 %v2016
        %v2318 = vunpack.c.h.b16 %v2016
        %v2319 = vunpack.c.l.b16 %v2017
        %v2320 = vunpack.c.h.b16 %v2017
        %v2321 = vunpack.c.l.b16 %v2018
        %v2322 = vunpack.c.h.b16 %v2018
        %v2323 = vunpack.c.l.b16 %v2019
        %v2324 = vunpack.c.h.b16 %v2019
        %v2325 = vunpack.c.l.b16 %v2020
        %v2326 = vunpack.c.h.b16 %v2020
        %v2327 = vunpack.c.l.b16 %v2021
        %v2328 = vunpack.c.h.b16 %v2021
        %v2329 = vunpack.c.l.b16 %v2022
        %v2330 = vunpack.c.h.b16 %v2022
        %v2331 = vunpack.c.l.b16 %v2023
        %v2332 = vunpack.c.h.b16 %v2023
        %v2333 = vunpack.c.l.b16 %v2024
        %v2334 = vunpack.c.h.b16 %v2024
        %v2335 = vunpack.c.l.b16 %v2025
        %v2336 = vunpack.c.h.b16 %v2025
        %v2337 = vunpack.c.l.b16 %v2026
        %v2338 = vunpack.c.h.b16 %v2026
        %v2339 = vunpack.c.l.b16 %v2027
        %v2340 = vunpack.c.h.b16 %v2027
        %v2341 = vunpack.c.l.b16 %v2028
        %v2342 = vunpack.c.h.b16 %v2028
        %v2343 = vunpack.c.l.b16 %v2029
        %v2344 = vunpack.c.h.b16 %v2029
        %v2345 = vunpack.c.l.b16 %v2030
        %v2346 = vunpack.c.h.b16 %v2030
        %v2347 = vunpack.c.l.b16 %v2031
        %v2348 = vunpack.c.h.b16 %v2031
        %v2349 = vunpack.c.l.b16 %v2032
        %v2350 = vunpack.c.h.b16 %v2032
        %v2351 = vunpack.c.l.b16 %v2033
        %v2352 = vunpack.c.h.b16 %v2033
        %v2353 = vunpack.c.l.b16 %v2034
        %v2354 = vunpack.c.h.b16 %v2034
        %v2355 = vunpack.c.l.b16 %v2035
        %v2356 = vunpack.c.h.b16 %v2035
        %v2357 = vunpack.c.l.b16 %v2036
        %v2358 = vunpack.c.h.b16 %v2036
        %v2359 = vunpack.c.l.b16 %v2037
        %v2360 = vunpack.c.h.b16 %v2037
        %v2361 = vunpack.c.l.b16 %v2038
        %v2362 = vunpack.c.h.b16 %v2038
        %v2363 = vunpack.c.l.b16 %v2039
        %v2364 = vunpack.c.h.b16 %v2039
        %v2365 = vunpack.c.l.b16 %v2040
        %v2366 = vunpack.c.h.b16 %v2040
        %v2367 = vunpack.c.l.b16 %v2041
        %v2368 = vunpack.c.h.b16 %v2041
        %v2369 = vunpack.c.l.b16 %v2042
        %v2370 = vunpack.c.h.b16 %v2042
        %v2371 = vunpack.c.l.b16 %v2043
        %v2372 = vunpack.c.h.b16 %v2043
        %v2373 = vunpack.c.l.b16 %v2044
        %v2374 = vunpack.c.h.b16 %v2044
        %v2375 = vunpack.c.l.b16 %v2045
        %v2376 = vunpack.c.h.b16 %v2045
        %v2377 = vunpack.c.l.b16 %v2046
        %v2378 = vunpack.c.h.b16 %v2046
        %v2379 = vunpack.c.l.b16 %v2047
        %v2380 = vunpack.c.h.b16 %v2047
        %v2381 = vunpack.c.l.b16 %v2048
        %v2382 = vunpack.c.h.b16 %v2048
        %v2383 = vunpack.c.l.b16 %v2049
        %v2384 = vunpack.c.h.b16 %v2049
        %v2385 = vunpack.c.l.b16 %v2050
        %v2386 = vunpack.c.h.b16 %v2050
        %v2387 = vunpack.c.l.b16 %v2051
        %v2388 = vunpack.c.h.b16 %v2051
        %v2389 = vunpack.c.l.b16 %v2052
        %v2390 = vunpack.c.h.b16 %v2052
        %v2391 = vunpack.c.l.b16 %v2053
        %v2392 = vunpack.c.h.b16 %v2053
        %v2393 = vunpack.c.l.b16 %v2054
        %v2394 = vunpack.c.h.b16 %v2054
        %v2395 = vunpack.c.l.b16 %v2055
        %v2396 = vunpack.c.h.b16 %v2055
        %v2397 = vunpack.c.l.b16 %v2056
        %v2398 = vunpack.c.h.b16 %v2056
        %v2399 = vunpack.c.l.b16 %v2057
        %v2400 = vunpack.c.h.b16 %v2057
        %v2401 = vunpack.c.l.b16 %v2058
        %v2402 = vunpack.c.h.b16 %v2058
        %v2403 = vunpack.c.l.b16 %v2059
        %v2404 = vunpack.c.h.b16 %v2059
        %v2405 = vunpack.c.l.b16 %v2060
        %v2406 = vunpack.c.h.b16 %v2060
        %v2407 = vunpack.c.l.b16 %v2061
        %v2408 = vunpack.c.h.b16 %v2061
        %v2409 = vunpack.c.l.b16 %v2062
        %v2410 = vunpack.c.h.b16 %v2062
        %v2411 = vunpack.c.l.b16 %v2063
        %v2412 = vunpack.c.h.b16 %v2063
        %v2413 = vunpack.c.l.b16 %v2064
        %v2414 = vunpack.c.h.b16 %v2064
        %v2415 = vunpack.c.l.b16 %v2065
        %v2416 = vunpack.c.h.b16 %v2065
        %v2417 = vunpack.c.l.b16 %v2066
        %v2418 = vunpack.c.h.b16 %v2066
        %v2419 = vunpack.c.l.b16 %v2067
        %v2420 = vunpack.c.h.b16 %v2067
        %v2421 = vunpack.c.l.b16 %v2068
        %v2422 = vunpack.c.h.b16 %v2068
        %v2423 = vunpack.c.l.b16 %v2069
        %v2424 = vunpack.c.h.b16 %v2069
        %v2425 = vunpack.c.l.b16 %v2070
        %v2426 = vunpack.c.h.b16 %v2070
        %v2427 = vunpack.c.l.b16 %v2071
        %v2428 = vunpack.c.h.b16 %v2071
        %v2429 = vunpack.c.l.b16 %v2072
        %v2430 = vunpack.c.h.b16 %v2072
        %v2431 = vunpack.c.l.b16 %v2073
        %v2432 = vunpack.c.h.b16 %v2073
        %v2433 = vunpack.c.l.b16 %v2074
        %v2434 = vunpack.c.h.b16 %v2074
        %v2435 = vunpack.c.l.b16 %v2075
        %v2436 = vunpack.c.h.b16 %v2075
        %v2437 = vunpack.c.l.b16 %v2076
        %v2438 = vunpack.c.h.b16 %v2076
        %v2439 = vunpack.c.l.b16 %v2077
        %v2440 = vunpack.c.h.b16 %v2077
        %v2441 = vunpack.c.l.b16 %v2078
        %v2442 = vunpack.c.h.b16 %v2078
        %v2443 = vunpack.c.l.b16 %v2079
        %v2444 = vunpack.c.h.b16 %v2079
        %v2445 = vunpack.c.l.b16 %v2080
        %v2446 = vunpack.c.h.b16 %v2080
        %v2447 = vunpack.c.l.b16 %v2081
        %v2448 = vunpack.c.h.b16 %v2081
        %v2449 = vunpack.c.l.b16 %v2082
        %v2450 = vunpack.c.h.b16 %v2082
        %v2451 = vunpack.c.l.b16 %v2083
        %v2452 = vunpack.c.h.b16 %v2083
        %v2453 = vunpack.c.l.b16 %v2084
        %v2454 = vunpack.c.h.b16 %v2084
        %v2455 = vunpack.c.l.b16 %v2085
        %v2456 = vunpack.c.h.b16 %v2085
        %v2457 = vunpack.c.l.b16 %v2086
        %v2458 = vunpack.c.h.b16 %v2086
        %v2459 = vunpack.c.l.b16 %v2087
        %v2460 = vunpack.c.h.b16 %v2087
        %v2461 = vunpack.c.l.b16 %v2088
        %v2462 = vunpack.c.h.b16 %v2088
        %v2463 = vunpack.c.l.b16 %v2089
        %v2464 = vunpack.c.h.b16 %v2089
        %v2465 = vunpack.c.l.b16 %v2090
        %v2466 = vunpack.c.h.b16 %v2090
        %v2467 = vunpack.c.l.b16 %v2091
        %v2468 = vunpack.c.h.b16 %v2091
        %v2469 = vunpack.c.l.b16 %v2092
        %v2470 = vunpack.c.h.b16 %v2092
        %v2471 = vunpack.c.l.b16 %v2093
        %v2472 = vunpack.c.h.b16 %v2093
        %v2473 = vunpack.c.l.b16 %v2094
        %v2474 = vunpack.c.h.b16 %v2094
        %v2475 = vunpack.c.l.b16 %v2095
        %v2476 = vunpack.c.h.b16 %v2095
        %v2477 = vunpack.c.l.b16 %v2096
        %v2478 = vunpack.c.h.b16 %v2096
        %v2479 = vunpack.c.l.b16 %v2097
        %v2480 = vunpack.c.h.b16 %v2097
        %v2481 = vunpack.c.l.b16 %v2098
        %v2482 = vunpack.c.h.b16 %v2098
        %v2483 = vunpack.c.l.b16 %v2099
        %v2484 = vunpack.c.h.b16 %v2099
        %v2485 = vunpack.c.l.b16 %v2100
        %v2486 = vunpack.c.h.b16 %v2100
        %v2487 = vunpack.c.l.b16 %v2101
        %v2488 = vunpack.c.h.b16 %v2101
        %v2489 = vunpack.c.l.b16 %v2102
        %v2490 = vunpack.c.h.b16 %v2102
        %v2491 = vunpack.c.l.b16 %v2103
        %v2492 = vunpack.c.h.b16 %v2103
        %v2493 = vunpack.c.l.b16 %v2104
        %v2494 = vunpack.c.h.b16 %v2104
        %v2495 = vunpack.c.l.b16 %v2105
        %v2496 = vunpack.c.h.b16 %v2105
        %v2497 = vunpack.c.l.b16 %v2106
        %v2498 = vunpack.c.h.b16 %v2106
        %v2499 = vunpack.c.l.b16 %v2107
        %v2500 = vunpack.c.h.b16 %v2107
        %v2501 = vunpack.c.l.b16 %v2108
        %v2502 = vunpack.c.h.b16 %v2108
        %v2503 = vunpack.c.l.b16 %v2109
        %v2504 = vunpack.c.h.b16 %v2109
        %v2505 = vunpack.c.l.b16 %v2110
        %v2506 = vunpack.c.h.b16 %v2110
        %v2507 = vunpack.c.l.b16 %v2111
        %v2508 = vunpack.c.h.b16 %v2111
        %v2509 = vunpack.c.l.b16 %v2112
        %v2510 = vunpack.c.h.b16 %v2112
        %v2511 = vunpack.c.l.b16 %v2113
        %v2512 = vunpack.c.h.b16 %v2113
        %v2513 = vunpack.c.l.b16 %v2114
        %v2514 = vunpack.c.h.b16 %v2114
        %v2515 = vunpack.c.l.b16 %v2115
        %v2516 = vunpack.c.h.b16 %v2115
        %v2517 = vunpack.c.l.b16 %v2116
        %v2518 = vunpack.c.h.b16 %v2116
        %v2519 = vunpack.c.l.b16 %v2117
        %v2520 = vunpack.c.h.b16 %v2117
        %v2521 = vunpack.c.l.b16 %v2118
        %v2522 = vunpack.c.h.b16 %v2118
        %v2523 = vunpack.c.l.b16 %v2119
        %v2524 = vunpack.c.h.b16 %v2119
        %v2525 = vunpack.c.l.b16 %v2120
        %v2526 = vunpack.c.h.b16 %v2120
        %v2527 = vunpack.c.l.b16 %v2121
        %v2528 = vunpack.c.h.b16 %v2121
        %v2529 = vunpack.c.l.b16 %v2122
        %v2530 = vunpack.c.h.b16 %v2122
        %v2531 = vunpack.c.l.b16 %v2123
        %v2532 = vunpack.c.h.b16 %v2123
        %v2533 = vunpack.c.l.b16 %v2124
        %v2534 = vunpack.c.h.b16 %v2124
        %v2535 = vunpack.c.l.b16 %v2125
        %v2536 = vunpack.c.h.b16 %v2125
        %v2537 = vunpack.c.l.b16 %v2126
        %v2538 = vunpack.c.h.b16 %v2126
        %v2539 = vunpack.c.l.b16 %v2127
        %v2540 = vunpack.c.h.b16 %v2127
        %v2541 = vunpack.c.l.b16 %v2128
        %v2542 = vunpack.c.h.b16 %v2128
        %v2543 = vunpack.c.l.b16 %v2129
        %v2544 = vunpack.c.h.b16 %v2129
        %v2545 = vunpack.c.l.b16 %v2130
        %v2546 = vunpack.c.h.b16 %v2130
        %v2547 = vunpack.c.l.b16 %v2131
        %v2548 = vunpack.c.h.b16 %v2131
        %v2549 = vunpack.c.l.b16 %v2132
        %v2550 = vunpack.c.h.b16 %v2132
        %v2551 = vunpack.c.l.b16 %v2133
        %v2552 = vunpack.c.h.b16 %v2133
        %v2553 = vunpack.c.l.b16 %v2134
        %v2554 = vunpack.c.h.b16 %v2134
        %v2555 = vunpack.c.l.b16 %v2135
        %v2556 = vunpack.c.h.b16 %v2135
        %v2557 = vunpack.c.l.b16 %v2136
        %v2558 = vunpack.c.h.b16 %v2136
        %v2559 = vunpack.c.l.b16 %v2137
        %v2560 = vunpack.c.h.b16 %v2137
        %v2561 = vunpack.c.l.b16 %v2138
        %v2562 = vunpack.c.h.b16 %v2138
        %v2563 = vunpack.c.l.b16 %v2139
        %v2564 = vunpack.c.h.b16 %v2139
        %v2565 = vunpack.c.l.b16 %v2140
        %v2566 = vunpack.c.h.b16 %v2140
        %v2567 = vunpack.c.l.b16 %v2141
        %v2568 = vunpack.c.h.b16 %v2141
        %v2569 = vunpack.c.l.b16 %v2142
        %v2570 = vunpack.c.h.b16 %v2142
        %v2571 = vunpack.c.l.b16 %v2143
        %v2572 = vunpack.c.h.b16 %v2143
        %v2573 = vunpack.c.l.b16 %v2144
        %v2574 = vunpack.c.h.b16 %v2144
        %v2575 = vunpack.c.l.b16 %v2145
        %v2576 = vunpack.c.h.b16 %v2145
        %v2577 = vunpack.c.l.b16 %v2146
        %v2578 = vunpack.c.h.b16 %v2146
        %v2579 = vunpack.c.l.b16 %v2147
        %v2580 = vunpack.c.h.b16 %v2147
        %v2581 = vunpack.c.l.b16 %v2148
        %v2582 = vunpack.c.h.b16 %v2148
        %v2583 = vunpack.c.l.b16 %v2149
        %v2584 = vunpack.c.h.b16 %v2149
        %v2585 = vunpack.c.l.b16 %v2150
        %v2586 = vunpack.c.h.b16 %v2150
        %v2587 = vunpack.c.l.b16 %v2151
        %v2588 = vunpack.c.h.b16 %v2151
        %v2589 = vunpack.c.l.b16 %v2152
        %v2590 = vunpack.c.h.b16 %v2152
        %v2591 = vunpack.c.l.b16 %v2153
        %v2592 = vunpack.c.h.b16 %v2153
        %v2593 = vunpack.c.l.b16 %v2154
        %v2594 = vunpack.c.h.b16 %v2154
        %v2595 = vunpack.c.l.b16 %v2155
        %v2596 = vunpack.c.h.b16 %v2155
        %v2597 = vunpack.c.l.b16 %v2156
        %v2598 = vunpack.c.h.b16 %v2156
        %v2599 = vunpack.c.l.b16 %v2157
        %v2600 = vunpack.c.h.b16 %v2157
        %v2601 = vpack.c.b16 %v2319, %v2313
        %v2602 = vpack.c.b16 %v2320, %v2314
        %v2603 = vpack.c.b16 %v2321, %v2315
        %v2604 = vpack.c.b16 %v2322, %v2316
        %v2605 = vpack.c.b16 %v2323, %v2317
        %v2606 = vpack.c.b16 %v2324, %v2318
        %v2607 = vpack.c.b16 %v2331, %v2325
        %v2608 = vpack.c.b16 %v2332, %v2326
        %v2609 = vpack.c.b16 %v2333, %v2327
        %v2610 = vpack.c.b16 %v2334, %v2328
        %v2611 = vpack.c.b16 %v2335, %v2329
        %v2612 = vpack.c.b16 %v2336, %v2330
        %v2613 = vpack.c.b16 %v2343, %v2337
        %v2614 = vpack.c.b16 %v2344, %v2338
        %v2615 = vpack.c.b16 %v2345, %v2339
        %v2616 = vpack.c.b16 %v2346, %v2340
        %v2617 = vpack.c.b16 %v2347, %v2341
        %v2618 = vpack.c.b16 %v2348, %v2342
        %v2619 = vpack.c.b16 %v2355, %v2349
        %v2620 = vpack.c.b16 %v2356, %v2350
        %v2621 = vpack.c.b16 %v2357, %v2351
        %v2622 = vpack.c.b16 %v2358, %v2352
        %v2623 = vpack.c.b16 %v2359, %v2353
        %v2624 = vpack.c.b16 %v2360, %v2354
        %v2625 = vpack.c.b16 %v2367, %v2361
        %v2626 = vpack.c.b16 %v2368, %v2362
        %v2627 = vpack.c.b16 %v2369, %v2363
        %v2628 = vpack.c.b16 %v2370, %v2364
        %v2629 = vpack.c.b16 %v2371, %v2365
        %v2630 = vpack.c.b16 %v2372, %v2366
        %v2631 = vpack.c.b16 %v2379, %v2373
        %v2632 = vpack.c.b16 %v2380, %v2374
        %v2633 = vpack.c.b16 %v2381, %v2375
        %v2634 = vpack.c.b16 %v2382, %v2376
        %v2635 = vpack.c.b16 %v2383, %v2377
        %v2636 = vpack.c.b16 %v2384, %v2378
        %v2637 = vpack.c.b16 %v2391, %v2385
        %v2638 = vpack.c.b16 %v2392, %v2386
        %v2639 = vpack.c.b16 %v2393, %v2387
        %v2640 = vpack.c.b16 %v2394, %v2388
        %v2641 = vpack.c.b16 %v2395, %v2389
        %v2642 = vpack.c.b16 %v2396, %v2390
        %v2643 = vpack.c.b16 %v2403, %v2397
        %v2644 = vpack.c.b16 %v2404, %v2398
        %v2645 = vpack.c.b16 %v2405, %v2399
        %v2646 = vpack.c.b16 %v2406, %v2400
        %v2647 = vpack.c.b16 %v2407, %v2401
        %v2648 = vpack.c.b16 %v2408, %v2402
        %v2649 = vpack.c.b16 %v2415, %v2409
        %v2650 = vpack.c.b16 %v2416, %v2410
        %v2651 = vpack.c.b16 %v2417, %v2411
        %v2652 = vpack.c.b16 %v2418, %v2412
        %v2653 = vpack.c.b16 %v2419, %v2413
        %v2654 = vpack.c.b16 %v2420, %v2414
        %v2655 = vpack.c.b16 %v2427, %v2421
        %v2656 = vpack.c.b16 %v2428, %v2422
        %v2657 = vpack.c.b16 %v2429, %v2423
        %v2658 = vpack.c.b16 %v2430, %v2424
        %v2659 = vpack.c.b16 %v2431, %v2425
        %v2660 = vpack.c.b16 %v2432, %v2426
        %v2661 = vpack.c.b16 %v2439, %v2433
        %v2662 = vpack.c.b16 %v2440, %v2434
        %v2663 = vpack.c.b16 %v2441, %v2435
        %v2664 = vpack.c.b16 %v2442, %v2436
        %v2665 = vpack.c.b16 %v2443, %v2437
        %v2666 = vpack.c.b16 %v2444, %v2438
        %v2667 = vpack.c.b16 %v2451, %v2445
        %v2668 = vpack.c.b16 %v2452, %v2446
        %v2669 = vpack.c.b16 %v2453, %v2447
        %v2670 = vpack.c.b16 %v2454, %v2448
        %v2671 = vpack.c.b16 %v2455, %v2449
        %v2672 = vpack.c.b16 %v2456, %v2450
        %v2673 = vpack.c.b16 %v2463, %v2457
        %v2674 = vpack.c.b16 %v2464, %v2458
        %v2675 = vpack.c.b16 %v2465, %v2459
        %v2676 = vpack.c.b16 %v2466, %v2460
        %v2677 = vpack.c.b16 %v2467, %v2461
        %v2678 = vpack.c.b16 %v2468, %v2462
        %v2679 = vpack.c.b16 %v2475, %v2469
        %v2680 = vpack.c.b16 %v2476, %v2470
        %v2681 = vpack.c.b16 %v2477, %v2471
        %v2682 = vpack.c.b16 %v2478, %v2472
        %v2683 = vpack.c.b16 %v2479, %v2473
        %v2684 = vpack.c.b16 %v2480, %v2474
        %v2685 = vpack.c.b16 %v2487, %v2481
        %v2686 = vpack.c.b16 %v2488, %v2482
        %v2687 = vpack.c.b16 %v2489, %v2483
        %v2688 = vpack.c.b16 %v2490, %v2484
        %v2689 = vpack.c.b16 %v2491, %v2485
        %v2690 = vpack.c.b16 %v2492, %v2486
        %v2691 = vpack.c.b16 %v2499, %v2493
        %v2692 = vpack.c.b16 %v2500, %v2494
        %v2693 = vpack.c.b16 %v2501, %v2495
        %v2694 = vpack.c.b16 %v2502, %v2496
        %v2695 = vpack.c.b16 %v2503, %v2497
        %v2696 = vpack.c.b16 %v2504, %v2498
        %v2697 = vpack.c.b16 %v2511, %v2505
        %v2698 = vpack.c.b16 %v2512, %v2506
        %v2699 = vpack.c.b16 %v2513, %v2507
        %v2700 = vpack.c.b16 %v2514, %v2508
        %v2701 = vpack.c.b16 %v2515, %v2509
        %v2702 = vpack.c.b16 %v2516, %v2510
        %v2703 = vpack.c.b16 %v2523, %v2517
        %v2704 = vpack.c.b16 %v2524, %v2518
        %v2705 = vpack.c.b16 %v2525, %v2519
        %v2706 = vpack.c.b16 %v2526, %v2520
        %v2707 = vpack.c.b16 %v2527, %v2521
        %v2708 = vpack.c.b16 %v2528, %v2522
        %v2709 = vpack.c.b16 %v2535, %v2529
        %v2710 = vpack.c.b16 %v2536, %v2530
        %v2711 = vpack.c.b16 %v2537, %v2531
        %v2712 = vpack.c.b16 %v2538, %v2532
        %v2713 = vpack.c.b16 %v2539, %v2533
        %v2714 = vpack.c.b16 %v2540, %v2534
        %v2715 = vpack.c.b16 %v2547, %v2541
        %v2716 = vpack.c.b16 %v2548, %v2542
        %v2717 = vpack.c.b16 %v2549, %v2543
        %v2718 = vpack.c.b16 %v2550, %v2544
        %v2719 = vpack.c.b16 %v2551, %v2545
        %v2720 = vpack.c.b16 %v2552, %v2546
        %v2721 = vpack.c.b16 %v2559, %v2553
        %v2722 = vpack.c.b16 %v2560, %v2554
        %v2723 = vpack.c.b16 %v2561, %v2555
        %v2724 = vpack.c.b16 %v2562, %v2556
        %v2725 = vpack.c.b16 %v2563, %v2557
        %v2726 = vpack.c.b16 %v2564, %v2558
        %v2727 = vpack.c.b16 %v2571, %v2565
        %v2728 = vpack.c.b16 %v2572, %v2566
        %v2729 = vpack.c.b16 %v2573, %v2567
        %v2730 = vpack.c.b16 %v2574, %v2568
        %v2731 = vpack.c.b16 %v2575, %v2569
        %v2732 = vpack.c.b16 %v2576, %v2570
        %v2733 = vpack.c.b16 %v2583, %v2577
        %v2734 = vpack.c.b16 %v2584, %v2578
        %v2735 = vpack.c.b16 %v2585, %v2579
        %v2736 = vpack.c.b16 %v2586, %v2580
        %v2737 = vpack.c.b16 %v2587, %v2581
        %v2738 = vpack.c.b16 %v2588, %v2582
        %v2739 = vpack.c.b16 %v2595, %v2589
        %v2740 = vpack.c.b16 %v2596, %v2590
        %v2741 = vpack.c.b16 %v2597, %v2591
        %v2742 = vpack.c.b16 %v2598, %v2592
        %v2743 = vpack.c.b16 %v2599, %v2593
        %v2744 = vpack.c.b16 %v2600, %v2594
        %2889 = vmatprep.subr.bf16.mxu0 %v2644
        %2890 = vmatpush1.bf16.msra.mxu0 %v2643
        %2891 = vmatprep.subr.bf16.mxu0 %v2638
        %2892 = vmatpush1.bf16.msra.mxu0 %v2637
        %2893 = vmatprep.subr.bf16.mxu0 %v2632
        %2894 = vmatpush1.bf16.msra.mxu0 %v2631
        %2895 = vmatprep.subr.bf16.mxu0 %v2626
        %2896 = vmatpush1.bf16.msra.mxu0 %v2625
        %2897 = vmatprep.subr.bf16.mxu0 %v2620
        %2898 = vmatpush1.bf16.msra.mxu0 %v2619
        %2899 = vmatprep.subr.bf16.mxu0 %v2614
        %2900 = vmatpush1.bf16.msra.mxu0 %v2613
        %2901 = vmatprep.subr.bf16.mxu0 %v2608
        %2902 = vmatpush1.bf16.msra.mxu0 %v2607
        %2903 = vmatprep.subr.bf16.mxu0 %v2602
        %2904 = vmatpush1.bf16.msra.mxu0 %v2601
        %2905 = vmatprep.subr.bf16.mxu0 %v2692
        %2906 = vmatpush2.bf16.msra.mxu0 %v2691
        %2907 = vmatprep.subr.bf16.mxu0 %v2686
        %2908 = vmatpush2.bf16.msra.mxu0 %v2685
        %2909 = vmatprep.subr.bf16.mxu0 %v2680
        %2910 = vmatpush2.bf16.msra.mxu0 %v2679
        %2911 = vmatprep.subr.bf16.mxu0 %v2674
        %2912 = vmatpush2.bf16.msra.mxu0 %v2673
        %2913 = vmatprep.subr.bf16.mxu0 %v2668
        %2914 = vmatpush2.bf16.msra.mxu0 %v2667
        %2915 = vmatprep.subr.bf16.mxu0 %v2662
        %2916 = vmatpush2.bf16.msra.mxu0 %v2661
        %2917 = vmatprep.subr.bf16.mxu0 %v2656
        %2918 = vmatpush2.bf16.msra.mxu0 %v2655
        %2919 = vmatprep.subr.bf16.mxu0 %v2650
        %2920 = vmatpush2.bf16.msra.mxu0 %v2649
        %2921 = vmatprep.mubr.bf16.mxu0 %v2164
        %2922 = vmatmul.mubr.bf16.gmra.mxu0 %v2163
        %v2923 = vpop.f32.mrf.mxu0
        %v2924 = vadd.f32 0.0, %v2923
        %v2925 = vpop.f32.mrf.mxu0
        %v2926 = vadd.f32 0.0, %v2925
        %v2927 = vpop.f32.mrf.mxu0
        %v2928 = vpop.f32.mrf.mxu0
        %2929 = vdwg.mxu0
        %2930 = vmatprep.subr.bf16.mxu0 %v2740
        %2931 = vmatpush1.bf16.msra.mxu0 %v2739
        %2932 = vmatprep.subr.bf16.mxu0 %v2734
        %2933 = vmatpush1.bf16.msra.mxu0 %v2733
        %2934 = vmatprep.subr.bf16.mxu0 %v2728
        %2935 = vmatpush1.bf16.msra.mxu0 %v2727
        %2936 = vmatprep.subr.bf16.mxu0 %v2722
        %2937 = vmatpush1.bf16.msra.mxu0 %v2721
        %2938 = vmatprep.subr.bf16.mxu0 %v2716
        %2939 = vmatpush1.bf16.msra.mxu0 %v2715
        %2940 = vmatprep.subr.bf16.mxu0 %v2710
        %2941 = vmatpush1.bf16.msra.mxu0 %v2709
        %2942 = vmatprep.subr.bf16.mxu0 %v2704
        %2943 = vmatpush1.bf16.msra.mxu0 %v2703
        %2944 = vmatprep.subr.bf16.mxu0 %v2698
        %2945 = vmatpush1.bf16.msra.mxu0 %v2697
        %2946 = vmatprep.subr.bf16.mxu0 0
        %2947 = vmatpush2.bf16.msra.mxu0 0
        %2948 = vmatprep.subr.bf16.mxu0 0
        %2949 = vmatpush2.bf16.msra.mxu0 0
        %2950 = vmatprep.subr.bf16.mxu0 0
        %2951 = vmatpush2.bf16.msra.mxu0 0
        %2952 = vmatprep.subr.bf16.mxu0 0
        %2953 = vmatpush2.bf16.msra.mxu0 0
        %2954 = vmatprep.subr.bf16.mxu0 0
        %2955 = vmatpush2.bf16.msra.mxu0 0
        %2956 = vmatprep.subr.bf16.mxu0 0
        %2957 = vmatpush2.bf16.msra.mxu0 0
        %2958 = vmatprep.subr.bf16.mxu0 0
        %2959 = vmatpush2.bf16.msra.mxu0 0
        %2960 = vmatprep.subr.bf16.mxu0 0
        %2961 = vmatpush2.bf16.msra.mxu0 0
        %2962 = vmatprep.mubr.bf16.mxu0 0
        %2963 = vmatmul.mubr.bf16.gmra.mxu0 %v2165
        %v2964 = vpop.f32.mrf.mxu0
        %v2965 = vadd.f32 %v2924, %v2964
        %v2966 = vpop.f32.mrf.mxu0
        %v2967 = vadd.f32 %v2926, %v2966
        %v2968 = vpop.f32.mrf.mxu0
        %v2969 = vpop.f32.mrf.mxu0
        %2970 = vdwg.mxu0
        %2971 = vmatprep.subr.bf16.mxu0 %v2646
        %2972 = vmatpush1.bf16.msra.mxu0 %v2645
        %2973 = vmatprep.subr.bf16.mxu0 %v2640
        %2974 = vmatpush1.bf16.msra.mxu0 %v2639
        %2975 = vmatprep.subr.bf16.mxu0 %v2634
        %2976 = vmatpush1.bf16.msra.mxu0 %v2633
        %2977 = vmatprep.subr.bf16.mxu0 %v2628
        %2978 = vmatpush1.bf16.msra.mxu0 %v2627
        %2979 = vmatprep.subr.bf16.mxu0 %v2622
        %2980 = vmatpush1.bf16.msra.mxu0 %v2621
        %2981 = vmatprep.subr.bf16.mxu0 %v2616
        %2982 = vmatpush1.bf16.msra.mxu0 %v2615
        %2983 = vmatprep.subr.bf16.mxu0 %v2610
        %2984 = vmatpush1.bf16.msra.mxu0 %v2609
        %2985 = vmatprep.subr.bf16.mxu0 %v2604
        %2986 = vmatpush1.bf16.msra.mxu0 %v2603
        %2987 = vmatprep.subr.bf16.mxu0 %v2694
        %2988 = vmatpush2.bf16.msra.mxu0 %v2693
        %2989 = vmatprep.subr.bf16.mxu0 %v2688
        %2990 = vmatpush2.bf16.msra.mxu0 %v2687
        %2991 = vmatprep.subr.bf16.mxu0 %v2682
        %2992 = vmatpush2.bf16.msra.mxu0 %v2681
        %2993 = vmatprep.subr.bf16.mxu0 %v2676
        %2994 = vmatpush2.bf16.msra.mxu0 %v2675
        %2995 = vmatprep.subr.bf16.mxu0 %v2670
        %2996 = vmatpush2.bf16.msra.mxu0 %v2669
        %2997 = vmatprep.subr.bf16.mxu0 %v2664
        %2998 = vmatpush2.bf16.msra.mxu0 %v2663
        %2999 = vmatprep.subr.bf16.mxu0 %v2658
        %3000 = vmatpush2.bf16.msra.mxu0 %v2657
        %3001 = vmatprep.subr.bf16.mxu0 %v2652
        %3002 = vmatpush2.bf16.msra.mxu0 %v2651
        %3003 = vmatprep.mubr.bf16.mxu0 %v2164
        %3004 = vmatmul.mubr.bf16.gmra.mxu0 %v2163
        %v3005 = vpop.f32.mrf.mxu0
        %v3006 = vadd.f32 0.0, %v3005
        %v3007 = vpop.f32.mrf.mxu0
        %v3008 = vadd.f32 0.0, %v3007
        %v3009 = vpop.f32.mrf.mxu0
        %v3010 = vpop.f32.mrf.mxu0
        %3011 = vdwg.mxu0
        %3012 = vmatprep.subr.bf16.mxu0 %v2742
        %3013 = vmatpush1.bf16.msra.mxu0 %v2741
        %3014 = vmatprep.subr.bf16.mxu0 %v2736
        %3015 = vmatpush1.bf16.msra.mxu0 %v2735
        %3016 = vmatprep.subr.bf16.mxu0 %v2730
        %3017 = vmatpush1.bf16.msra.mxu0 %v2729
        %3018 = vmatprep.subr.bf16.mxu0 %v2724
        %3019 = vmatpush1.bf16.msra.mxu0 %v2723
        %3020 = vmatprep.subr.bf16.mxu0 %v2718
        %3021 = vmatpush1.bf16.msra.mxu0 %v2717
        %3022 = vmatprep.subr.bf16.mxu0 %v2712
        %3023 = vmatpush1.bf16.msra.mxu0 %v2711
        %3024 = vmatprep.subr.bf16.mxu0 %v2706
        %3025 = vmatpush1.bf16.msra.mxu0 %v2705
        %3026 = vmatprep.subr.bf16.mxu0 %v2700
        %3027 = vmatpush1.bf16.msra.mxu0 %v2699
        %3028 = vmatprep.subr.bf16.mxu0 0
        %3029 = vmatpush2.bf16.msra.mxu0 0
        %3030 = vmatprep.subr.bf16.mxu0 0
        %3031 = vmatpush2.bf16.msra.mxu0 0
        %3032 = vmatprep.subr.bf16.mxu0 0
        %3033 = vmatpush2.bf16.msra.mxu0 0
        %3034 = vmatprep.subr.bf16.mxu0 0
        %3035 = vmatpush2.bf16.msra.mxu0 0
        %3036 = vmatprep.subr.bf16.mxu0 0
        %3037 = vmatpush2.bf16.msra.mxu0 0
        %3038 = vmatprep.subr.bf16.mxu0 0
        %3039 = vmatpush2.bf16.msra.mxu0 0
        %3040 = vmatprep.subr.bf16.mxu0 0
        %3041 = vmatpush2.bf16.msra.mxu0 0
        %3042 = vmatprep.subr.bf16.mxu0 0
        %3043 = vmatpush2.bf16.msra.mxu0 0
        %3044 = vmatprep.mubr.bf16.mxu0 0
        %3045 = vmatmul.mubr.bf16.gmra.mxu0 %v2165
        %v3046 = vpop.f32.mrf.mxu0
        %v3047 = vadd.f32 %v3006, %v3046
        %v3048 = vpop.f32.mrf.mxu0
        %v3049 = vadd.f32 %v3008, %v3048
        %v3050 = vpop.f32.mrf.mxu0
        %v3051 = vpop.f32.mrf.mxu0
        %3052 = vdwg.mxu0
        %3053 = vmatprep.subr.bf16.mxu0 %v2648
        %3054 = vmatpush1.bf16.msra.mxu0 %v2647
        %3055 = vmatprep.subr.bf16.mxu0 %v2642
        %3056 = vmatpush1.bf16.msra.mxu0 %v2641
        %3057 = vmatprep.subr.bf16.mxu0 %v2636
        %3058 = vmatpush1.bf16.msra.mxu0 %v2635
        %3059 = vmatprep.subr.bf16.mxu0 %v2630
        %3060 = vmatpush1.bf16.msra.mxu0 %v2629
        %3061 = vmatprep.subr.bf16.mxu0 %v2624
        %3062 = vmatpush1.bf16.msra.mxu0 %v2623
        %3063 = vmatprep.subr.bf16.mxu0 %v2618
        %3064 = vmatpush1.bf16.msra.mxu0 %v2617
        %3065 = vmatprep.subr.bf16.mxu0 %v2612
        %3066 = vmatpush1.bf16.msra.mxu0 %v2611
        %3067 = vmatprep.subr.bf16.mxu0 %v2606
        %3068 = vmatpush1.bf16.msra.mxu0 %v2605
        %3069 = vmatprep.subr.bf16.mxu0 %v2696
        %3070 = vmatpush2.bf16.msra.mxu0 %v2695
        %3071 = vmatprep.subr.bf16.mxu0 %v2690
        %3072 = vmatpush2.bf16.msra.mxu0 %v2689
        %3073 = vmatprep.subr.bf16.mxu0 %v2684
        %3074 = vmatpush2.bf16.msra.mxu0 %v2683
        %3075 = vmatprep.subr.bf16.mxu0 %v2678
        %3076 = vmatpush2.bf16.msra.mxu0 %v2677
        %3077 = vmatprep.subr.bf16.mxu0 %v2672
        %3078 = vmatpush2.bf16.msra.mxu0 %v2671
        %3079 = vmatprep.subr.bf16.mxu0 %v2666
        %3080 = vmatpush2.bf16.msra.mxu0 %v2665
        %3081 = vmatprep.subr.bf16.mxu0 %v2660
        %3082 = vmatpush2.bf16.msra.mxu0 %v2659
        %3083 = vmatprep.subr.bf16.mxu0 %v2654
        %3084 = vmatpush2.bf16.msra.mxu0 %v2653
        %3085 = vmatprep.mubr.bf16.mxu0 %v2164
        %3086 = vmatmul.mubr.bf16.gmra.mxu0 %v2163
        %v3087 = vpop.f32.mrf.mxu0
        %v3088 = vadd.f32 0.0, %v3087
        %v3089 = vpop.f32.mrf.mxu0
        %v3090 = vadd.f32 0.0, %v3089
        %v3091 = vpop.f32.mrf.mxu0
        %v3092 = vpop.f32.mrf.mxu0
        %3093 = vdwg.mxu0
        %3094 = vmatprep.subr.bf16.mxu0 %v2744
        %3095 = vmatpush1.bf16.msra.mxu0 %v2743
        %3096 = vmatprep.subr.bf16.mxu0 %v2738
        %3097 = vmatpush1.bf16.msra.mxu0 %v2737
        %3098 = vmatprep.subr.bf16.mxu0 %v2732
        %3099 = vmatpush1.bf16.msra.mxu0 %v2731
        %3100 = vmatprep.subr.bf16.mxu0 %v2726
        %3101 = vmatpush1.bf16.msra.mxu0 %v2725
        %3102 = vmatprep.subr.bf16.mxu0 %v2720
        %3103 = vmatpush1.bf16.msra.mxu0 %v2719
        %3104 = vmatprep.subr.bf16.mxu0 %v2714
        %3105 = vmatpush1.bf16.msra.mxu0 %v2713
        %3106 = vmatprep.subr.bf16.mxu0 %v2708
        %3107 = vmatpush1.bf16.msra.mxu0 %v2707
        %3108 = vmatprep.subr.bf16.mxu0 %v2702
        %3109 = vmatpush1.bf16.msra.mxu0 %v2701
        %3110 = vmatprep.subr.bf16.mxu0 0
        %3111 = vmatpush2.bf16.msra.mxu0 0
        %3112 = vmatprep.subr.bf16.mxu0 0
        %3113 = vmatpush2.bf16.msra.mxu0 0
        %3114 = vmatprep.subr.bf16.mxu0 0
        %3115 = vmatpush2.bf16.msra.mxu0 0
        %3116 = vmatprep.subr.bf16.mxu0 0
        %3117 = vmatpush2.bf16.msra.mxu0 0
        %3118 = vmatprep.subr.bf16.mxu0 0
        %3119 = vmatpush2.bf16.msra.mxu0 0
        %3120 = vmatprep.subr.bf16.mxu0 0
        %3121 = vmatpush2.bf16.msra.mxu0 0
        %3122 = vmatprep.subr.bf16.mxu0 0
        %3123 = vmatpush2.bf16.msra.mxu0 0
        %3124 = vmatprep.subr.bf16.mxu0 0
        %3125 = vmatpush2.bf16.msra.mxu0 0
        %3126 = vmatprep.mubr.bf16.mxu0 0
        %3127 = vmatmul.mubr.bf16.gmra.mxu0 %v2165
        %v3128 = vpop.f32.mrf.mxu0
        %v3129 = vadd.f32 %v3088, %v3128
        %v3130 = vpop.f32.mrf.mxu0
        %v3131 = vadd.f32 %v3090, %v3130
        %v3132 = vpop.f32.mrf.mxu0
        %v3133 = vpop.f32.mrf.mxu0
        %3134 = vdwg.mxu0
        %v3139 = vunpack.c.l.b16 %v1863
        %v3140 = vunpack.c.h.b16 %v1863
        %v3141 = vunpack.c.l.b16 %v1864
        %v3142 = vunpack.c.l.b16 %v1865
        %v3143 = vunpack.c.h.b16 %v1865
        %v3144 = vunpack.c.l.b16 %v1866
        %v3145 = vpack.c.b16 %v3142, %v3139
        %v3146 = vpack.c.b16 %v3143, %v3140
        %v3147 = vpack.c.b16 %v3144, %v3141
        %v3149 = vshrl.u32 %v3145, 16
        %v3151 = vrot.slane %v3149, 3
        %v3152 = vshll.u32 %v3145, 16
        %v3154 = vrot.slane %v3152, 4
        %v3155 = vor.u32 %v3151, %v3154
        %v3157 = vshrl.u32 %v3146, 16
        %v3159 = vrot.slane %v3157, 3
        %v3160 = vshll.u32 %v3146, 16
        %v3162 = vrot.slane %v3160, 4
        %v3163 = vor.u32 %v3159, %v3162
        %v3165 = vshrl.u32 %v3147, 16
        %v3167 = vrot.slane %v3165, 3
        %v3168 = vshll.u32 %v3147, 16
        %v3170 = vrot.slane %v3168, 4
        %v3171 = vor.u32 %v3167, %v3170
        %v3319 = vunpack.c.l.b16 %v1867
        %v3320 = vunpack.c.h.b16 %v1867
        %v3321 = vunpack.c.l.b16 %v1868
        %v3322 = vunpack.c.h.b16 %v1868
        %v3323 = vunpack.c.l.b16 %v1869
        %v3324 = vunpack.c.h.b16 %v1869
        %v3325 = vunpack.c.l.b16 %v1870
        %v3326 = vunpack.c.h.b16 %v1870
        %v3327 = vunpack.c.l.b16 %v1871
        %v3328 = vunpack.c.h.b16 %v1871
        %v3329 = vunpack.c.l.b16 %v1872
        %v3330 = vunpack.c.h.b16 %v1872
        %v3331 = vunpack.c.l.b16 %v1873
        %v3332 = vunpack.c.h.b16 %v1873
        %v3333 = vunpack.c.l.b16 %v1874
        %v3334 = vunpack.c.h.b16 %v1874
        %v3335 = vunpack.c.l.b16 %v1875
        %v3336 = vunpack.c.h.b16 %v1875
        %v3337 = vunpack.c.l.b16 %v1876
        %v3338 = vunpack.c.h.b16 %v1876
        %v3339 = vunpack.c.l.b16 %v1877
        %v3340 = vunpack.c.h.b16 %v1877
        %v3341 = vunpack.c.l.b16 %v1878
        %v3342 = vunpack.c.h.b16 %v1878
        %v3343 = vunpack.c.l.b16 %v1879
        %v3344 = vunpack.c.h.b16 %v1879
        %v3345 = vunpack.c.l.b16 %v1880
        %v3346 = vunpack.c.h.b16 %v1880
        %v3347 = vunpack.c.l.b16 %v1881
        %v3348 = vunpack.c.h.b16 %v1881
        %v3349 = vunpack.c.l.b16 %v1882
        %v3350 = vunpack.c.h.b16 %v1882
        %v3351 = vunpack.c.l.b16 %v1883
        %v3352 = vunpack.c.h.b16 %v1883
        %v3353 = vunpack.c.l.b16 %v1884
        %v3354 = vunpack.c.h.b16 %v1884
        %v3355 = vunpack.c.l.b16 %v1885
        %v3356 = vunpack.c.h.b16 %v1885
        %v3357 = vunpack.c.l.b16 %v1886
        %v3358 = vunpack.c.h.b16 %v1886
        %v3359 = vunpack.c.l.b16 %v1887
        %v3360 = vunpack.c.h.b16 %v1887
        %v3361 = vunpack.c.l.b16 %v1888
        %v3362 = vunpack.c.h.b16 %v1888
        %v3363 = vunpack.c.l.b16 %v1889
        %v3364 = vunpack.c.h.b16 %v1889
        %v3365 = vunpack.c.l.b16 %v1890
        %v3366 = vunpack.c.h.b16 %v1890
        %v3367 = vunpack.c.l.b16 %v1891
        %v3368 = vunpack.c.h.b16 %v1891
        %v3369 = vunpack.c.l.b16 %v1892
        %v3370 = vunpack.c.h.b16 %v1892
        %v3371 = vunpack.c.l.b16 %v1893
        %v3372 = vunpack.c.h.b16 %v1893
        %v3373 = vunpack.c.l.b16 %v1894
        %v3374 = vunpack.c.h.b16 %v1894
        %v3375 = vunpack.c.l.b16 %v1895
        %v3376 = vunpack.c.h.b16 %v1895
        %v3377 = vunpack.c.l.b16 %v1896
        %v3378 = vunpack.c.h.b16 %v1896
        %v3379 = vunpack.c.l.b16 %v1897
        %v3380 = vunpack.c.h.b16 %v1897
        %v3381 = vunpack.c.l.b16 %v1898
        %v3382 = vunpack.c.h.b16 %v1898
        %v3383 = vunpack.c.l.b16 %v1899
        %v3384 = vunpack.c.h.b16 %v1899
        %v3385 = vunpack.c.l.b16 %v1900
        %v3386 = vunpack.c.h.b16 %v1900
        %v3387 = vunpack.c.l.b16 %v1901
        %v3388 = vunpack.c.h.b16 %v1901
        %v3389 = vunpack.c.l.b16 %v1902
        %v3390 = vunpack.c.h.b16 %v1902
        %v3391 = vunpack.c.l.b16 %v1903
        %v3392 = vunpack.c.h.b16 %v1903
        %v3393 = vunpack.c.l.b16 %v1904
        %v3394 = vunpack.c.h.b16 %v1904
        %v3395 = vunpack.c.l.b16 %v1905
        %v3396 = vunpack.c.h.b16 %v1905
        %v3397 = vunpack.c.l.b16 %v1906
        %v3398 = vunpack.c.h.b16 %v1906
        %v3399 = vunpack.c.l.b16 %v1907
        %v3400 = vunpack.c.h.b16 %v1907
        %v3401 = vunpack.c.l.b16 %v1908
        %v3402 = vunpack.c.h.b16 %v1908
        %v3403 = vunpack.c.l.b16 %v1909
        %v3404 = vunpack.c.h.b16 %v1909
        %v3405 = vunpack.c.l.b16 %v1910
        %v3406 = vunpack.c.h.b16 %v1910
        %v3407 = vunpack.c.l.b16 %v1911
        %v3408 = vunpack.c.h.b16 %v1911
        %v3409 = vunpack.c.l.b16 %v1912
        %v3410 = vunpack.c.h.b16 %v1912
        %v3411 = vunpack.c.l.b16 %v1913
        %v3412 = vunpack.c.h.b16 %v1913
        %v3413 = vunpack.c.l.b16 %v1914
        %v3414 = vunpack.c.h.b16 %v1914
        %v3415 = vunpack.c.l.b16 %v1915
        %v3416 = vunpack.c.h.b16 %v1915
        %v3417 = vunpack.c.l.b16 %v1916
        %v3418 = vunpack.c.h.b16 %v1916
        %v3419 = vunpack.c.l.b16 %v1917
        %v3420 = vunpack.c.h.b16 %v1917
        %v3421 = vunpack.c.l.b16 %v1918
        %v3422 = vunpack.c.h.b16 %v1918
        %v3423 = vunpack.c.l.b16 %v1919
        %v3424 = vunpack.c.h.b16 %v1919
        %v3425 = vunpack.c.l.b16 %v1920
        %v3426 = vunpack.c.h.b16 %v1920
        %v3427 = vunpack.c.l.b16 %v1921
        %v3428 = vunpack.c.h.b16 %v1921
        %v3429 = vunpack.c.l.b16 %v1922
        %v3430 = vunpack.c.h.b16 %v1922
        %v3431 = vunpack.c.l.b16 %v1923
        %v3432 = vunpack.c.h.b16 %v1923
        %v3433 = vunpack.c.l.b16 %v1924
        %v3434 = vunpack.c.h.b16 %v1924
        %v3435 = vunpack.c.l.b16 %v1925
        %v3436 = vunpack.c.h.b16 %v1925
        %v3437 = vunpack.c.l.b16 %v1926
        %v3438 = vunpack.c.h.b16 %v1926
        %v3439 = vunpack.c.l.b16 %v1927
        %v3440 = vunpack.c.h.b16 %v1927
        %v3441 = vunpack.c.l.b16 %v1928
        %v3442 = vunpack.c.h.b16 %v1928
        %v3443 = vunpack.c.l.b16 %v1929
        %v3444 = vunpack.c.h.b16 %v1929
        %v3445 = vunpack.c.l.b16 %v1930
        %v3446 = vunpack.c.h.b16 %v1930
        %v3447 = vunpack.c.l.b16 %v1931
        %v3448 = vunpack.c.h.b16 %v1931
        %v3449 = vunpack.c.l.b16 %v1932
        %v3450 = vunpack.c.h.b16 %v1932
        %v3451 = vunpack.c.l.b16 %v1933
        %v3452 = vunpack.c.h.b16 %v1933
        %v3453 = vunpack.c.l.b16 %v1934
        %v3454 = vunpack.c.h.b16 %v1934
        %v3455 = vunpack.c.l.b16 %v1935
        %v3456 = vunpack.c.h.b16 %v1935
        %v3457 = vunpack.c.l.b16 %v1936
        %v3458 = vunpack.c.h.b16 %v1936
        %v3459 = vunpack.c.l.b16 %v1937
        %v3460 = vunpack.c.h.b16 %v1937
        %v3461 = vunpack.c.l.b16 %v1938
        %v3462 = vunpack.c.h.b16 %v1938
        %v3463 = vunpack.c.l.b16 %v1939
        %v3464 = vunpack.c.h.b16 %v1939
        %v3465 = vunpack.c.l.b16 %v1940
        %v3466 = vunpack.c.h.b16 %v1940
        %v3467 = vunpack.c.l.b16 %v1941
        %v3468 = vunpack.c.h.b16 %v1941
        %v3469 = vunpack.c.l.b16 %v1942
        %v3470 = vunpack.c.h.b16 %v1942
        %v3471 = vunpack.c.l.b16 %v1943
        %v3472 = vunpack.c.h.b16 %v1943
        %v3473 = vunpack.c.l.b16 %v1944
        %v3474 = vunpack.c.h.b16 %v1944
        %v3475 = vunpack.c.l.b16 %v1945
        %v3476 = vunpack.c.h.b16 %v1945
        %v3477 = vunpack.c.l.b16 %v1946
        %v3478 = vunpack.c.h.b16 %v1946
        %v3479 = vunpack.c.l.b16 %v1947
        %v3480 = vunpack.c.h.b16 %v1947
        %v3481 = vunpack.c.l.b16 %v1948
        %v3482 = vunpack.c.h.b16 %v1948
        %v3483 = vunpack.c.l.b16 %v1949
        %v3484 = vunpack.c.h.b16 %v1949
        %v3485 = vunpack.c.l.b16 %v1950
        %v3486 = vunpack.c.h.b16 %v1950
        %v3487 = vunpack.c.l.b16 %v1951
        %v3488 = vunpack.c.h.b16 %v1951
        %v3489 = vunpack.c.l.b16 %v1952
        %v3490 = vunpack.c.h.b16 %v1952
        %v3491 = vunpack.c.l.b16 %v1953
        %v3492 = vunpack.c.h.b16 %v1953
        %v3493 = vunpack.c.l.b16 %v1954
        %v3494 = vunpack.c.h.b16 %v1954
        %v3495 = vunpack.c.l.b16 %v1955
        %v3496 = vunpack.c.h.b16 %v1955
        %v3497 = vunpack.c.l.b16 %v1956
        %v3498 = vunpack.c.h.b16 %v1956
        %v3499 = vunpack.c.l.b16 %v1957
        %v3500 = vunpack.c.h.b16 %v1957
        %v3501 = vunpack.c.l.b16 %v1958
        %v3502 = vunpack.c.h.b16 %v1958
        %v3503 = vunpack.c.l.b16 %v1959
        %v3504 = vunpack.c.h.b16 %v1959
        %v3505 = vunpack.c.l.b16 %v1960
        %v3506 = vunpack.c.h.b16 %v1960
        %v3507 = vunpack.c.l.b16 %v1961
        %v3508 = vunpack.c.h.b16 %v1961
        %v3509 = vunpack.c.l.b16 %v1962
        %v3510 = vunpack.c.h.b16 %v1962
        %v3511 = vunpack.c.l.b16 %v1963
        %v3512 = vunpack.c.h.b16 %v1963
        %v3513 = vunpack.c.l.b16 %v1964
        %v3514 = vunpack.c.h.b16 %v1964
        %v3515 = vunpack.c.l.b16 %v1965
        %v3516 = vunpack.c.h.b16 %v1965
        %v3517 = vunpack.c.l.b16 %v1966
        %v3518 = vunpack.c.h.b16 %v1966
        %v3519 = vunpack.c.l.b16 %v1967
        %v3520 = vunpack.c.h.b16 %v1967
        %v3521 = vunpack.c.l.b16 %v1968
        %v3522 = vunpack.c.h.b16 %v1968
        %v3523 = vunpack.c.l.b16 %v1969
        %v3524 = vunpack.c.h.b16 %v1969
        %v3525 = vunpack.c.l.b16 %v1970
        %v3526 = vunpack.c.h.b16 %v1970
        %v3527 = vunpack.c.l.b16 %v1971
        %v3528 = vunpack.c.h.b16 %v1971
        %v3529 = vunpack.c.l.b16 %v1972
        %v3530 = vunpack.c.h.b16 %v1972
        %v3531 = vunpack.c.l.b16 %v1973
        %v3532 = vunpack.c.h.b16 %v1973
        %v3533 = vunpack.c.l.b16 %v1974
        %v3534 = vunpack.c.h.b16 %v1974
        %v3535 = vunpack.c.l.b16 %v1975
        %v3536 = vunpack.c.h.b16 %v1975
        %v3537 = vunpack.c.l.b16 %v1976
        %v3538 = vunpack.c.h.b16 %v1976
        %v3539 = vunpack.c.l.b16 %v1977
        %v3540 = vunpack.c.h.b16 %v1977
        %v3541 = vunpack.c.l.b16 %v1978
        %v3542 = vunpack.c.h.b16 %v1978
        %v3543 = vunpack.c.l.b16 %v1979
        %v3544 = vunpack.c.h.b16 %v1979
        %v3545 = vunpack.c.l.b16 %v1980
        %v3546 = vunpack.c.h.b16 %v1980
        %v3547 = vunpack.c.l.b16 %v1981
        %v3548 = vunpack.c.h.b16 %v1981
        %v3549 = vunpack.c.l.b16 %v1982
        %v3550 = vunpack.c.h.b16 %v1982
        %v3551 = vunpack.c.l.b16 %v1983
        %v3552 = vunpack.c.h.b16 %v1983
        %v3553 = vunpack.c.l.b16 %v1984
        %v3554 = vunpack.c.h.b16 %v1984
        %v3555 = vunpack.c.l.b16 %v1985
        %v3556 = vunpack.c.h.b16 %v1985
        %v3557 = vunpack.c.l.b16 %v1986
        %v3558 = vunpack.c.h.b16 %v1986
        %v3559 = vunpack.c.l.b16 %v1987
        %v3560 = vunpack.c.h.b16 %v1987
        %v3561 = vunpack.c.l.b16 %v1988
        %v3562 = vunpack.c.h.b16 %v1988
        %v3563 = vunpack.c.l.b16 %v1989
        %v3564 = vunpack.c.h.b16 %v1989
        %v3565 = vunpack.c.l.b16 %v1990
        %v3566 = vunpack.c.h.b16 %v1990
        %v3567 = vunpack.c.l.b16 %v1991
        %v3568 = vunpack.c.h.b16 %v1991
        %v3569 = vunpack.c.l.b16 %v1992
        %v3570 = vunpack.c.h.b16 %v1992
        %v3571 = vunpack.c.l.b16 %v1993
        %v3572 = vunpack.c.h.b16 %v1993
        %v3573 = vunpack.c.l.b16 %v1994
        %v3574 = vunpack.c.h.b16 %v1994
        %v3575 = vunpack.c.l.b16 %v1995
        %v3576 = vunpack.c.h.b16 %v1995
        %v3577 = vunpack.c.l.b16 %v1996
        %v3578 = vunpack.c.h.b16 %v1996
        %v3579 = vunpack.c.l.b16 %v1997
        %v3580 = vunpack.c.h.b16 %v1997
        %v3581 = vunpack.c.l.b16 %v1998
        %v3582 = vunpack.c.h.b16 %v1998
        %v3583 = vunpack.c.l.b16 %v1999
        %v3584 = vunpack.c.h.b16 %v1999
        %v3585 = vunpack.c.l.b16 %v2000
        %v3586 = vunpack.c.h.b16 %v2000
        %v3587 = vunpack.c.l.b16 %v2001
        %v3588 = vunpack.c.h.b16 %v2001
        %v3589 = vunpack.c.l.b16 %v2002
        %v3590 = vunpack.c.h.b16 %v2002
        %v3591 = vunpack.c.l.b16 %v2003
        %v3592 = vunpack.c.h.b16 %v2003
        %v3593 = vunpack.c.l.b16 %v2004
        %v3594 = vunpack.c.h.b16 %v2004
        %v3595 = vunpack.c.l.b16 %v2005
        %v3596 = vunpack.c.h.b16 %v2005
        %v3597 = vunpack.c.l.b16 %v2006
        %v3598 = vunpack.c.h.b16 %v2006
        %v3599 = vunpack.c.l.b16 %v2007
        %v3600 = vunpack.c.h.b16 %v2007
        %v3601 = vunpack.c.l.b16 %v2008
        %v3602 = vunpack.c.h.b16 %v2008
        %v3603 = vunpack.c.l.b16 %v2009
        %v3604 = vunpack.c.h.b16 %v2009
        %v3605 = vunpack.c.l.b16 %v2010
        %v3606 = vunpack.c.h.b16 %v2010
        %v3607 = vpack.c.b16 %v3325, %v3319
        %v3608 = vpack.c.b16 %v3326, %v3320
        %v3609 = vpack.c.b16 %v3327, %v3321
        %v3610 = vpack.c.b16 %v3328, %v3322
        %v3611 = vpack.c.b16 %v3329, %v3323
        %v3612 = vpack.c.b16 %v3330, %v3324
        %v3613 = vpack.c.b16 %v3337, %v3331
        %v3614 = vpack.c.b16 %v3338, %v3332
        %v3615 = vpack.c.b16 %v3339, %v3333
        %v3616 = vpack.c.b16 %v3340, %v3334
        %v3617 = vpack.c.b16 %v3341, %v3335
        %v3618 = vpack.c.b16 %v3342, %v3336
        %v3619 = vpack.c.b16 %v3349, %v3343
        %v3620 = vpack.c.b16 %v3350, %v3344
        %v3621 = vpack.c.b16 %v3351, %v3345
        %v3622 = vpack.c.b16 %v3352, %v3346
        %v3623 = vpack.c.b16 %v3353, %v3347
        %v3624 = vpack.c.b16 %v3354, %v3348
        %v3625 = vpack.c.b16 %v3361, %v3355
        %v3626 = vpack.c.b16 %v3362, %v3356
        %v3627 = vpack.c.b16 %v3363, %v3357
        %v3628 = vpack.c.b16 %v3364, %v3358
        %v3629 = vpack.c.b16 %v3365, %v3359
        %v3630 = vpack.c.b16 %v3366, %v3360
        %v3631 = vpack.c.b16 %v3373, %v3367
        %v3632 = vpack.c.b16 %v3374, %v3368
        %v3633 = vpack.c.b16 %v3375, %v3369
        %v3634 = vpack.c.b16 %v3376, %v3370
        %v3635 = vpack.c.b16 %v3377, %v3371
        %v3636 = vpack.c.b16 %v3378, %v3372
        %v3637 = vpack.c.b16 %v3385, %v3379
        %v3638 = vpack.c.b16 %v3386, %v3380
        %v3639 = vpack.c.b16 %v3387, %v3381
        %v3640 = vpack.c.b16 %v3388, %v3382
        %v3641 = vpack.c.b16 %v3389, %v3383
        %v3642 = vpack.c.b16 %v3390, %v3384
        %v3643 = vpack.c.b16 %v3397, %v3391
        %v3644 = vpack.c.b16 %v3398, %v3392
        %v3645 = vpack.c.b16 %v3399, %v3393
        %v3646 = vpack.c.b16 %v3400, %v3394
        %v3647 = vpack.c.b16 %v3401, %v3395
        %v3648 = vpack.c.b16 %v3402, %v3396
        %v3649 = vpack.c.b16 %v3409, %v3403
        %v3650 = vpack.c.b16 %v3410, %v3404
        %v3651 = vpack.c.b16 %v3411, %v3405
        %v3652 = vpack.c.b16 %v3412, %v3406
        %v3653 = vpack.c.b16 %v3413, %v3407
        %v3654 = vpack.c.b16 %v3414, %v3408
        %v3655 = vpack.c.b16 %v3421, %v3415
        %v3656 = vpack.c.b16 %v3422, %v3416
        %v3657 = vpack.c.b16 %v3423, %v3417
        %v3658 = vpack.c.b16 %v3424, %v3418
        %v3659 = vpack.c.b16 %v3425, %v3419
        %v3660 = vpack.c.b16 %v3426, %v3420
        %v3661 = vpack.c.b16 %v3433, %v3427
        %v3662 = vpack.c.b16 %v3434, %v3428
        %v3663 = vpack.c.b16 %v3435, %v3429
        %v3664 = vpack.c.b16 %v3436, %v3430
        %v3665 = vpack.c.b16 %v3437, %v3431
        %v3666 = vpack.c.b16 %v3438, %v3432
        %v3667 = vpack.c.b16 %v3445, %v3439
        %v3668 = vpack.c.b16 %v3446, %v3440
        %v3669 = vpack.c.b16 %v3447, %v3441
        %v3670 = vpack.c.b16 %v3448, %v3442
        %v3671 = vpack.c.b16 %v3449, %v3443
        %v3672 = vpack.c.b16 %v3450, %v3444
        %v3673 = vpack.c.b16 %v3457, %v3451
        %v3674 = vpack.c.b16 %v3458, %v3452
        %v3675 = vpack.c.b16 %v3459, %v3453
        %v3676 = vpack.c.b16 %v3460, %v3454
        %v3677 = vpack.c.b16 %v3461, %v3455
        %v3678 = vpack.c.b16 %v3462, %v3456
        %v3679 = vpack.c.b16 %v3469, %v3463
        %v3680 = vpack.c.b16 %v3470, %v3464
        %v3681 = vpack.c.b16 %v3471, %v3465
        %v3682 = vpack.c.b16 %v3472, %v3466
        %v3683 = vpack.c.b16 %v3473, %v3467
        %v3684 = vpack.c.b16 %v3474, %v3468
        %v3685 = vpack.c.b16 %v3481, %v3475
        %v3686 = vpack.c.b16 %v3482, %v3476
        %v3687 = vpack.c.b16 %v3483, %v3477
        %v3688 = vpack.c.b16 %v3484, %v3478
        %v3689 = vpack.c.b16 %v3485, %v3479
        %v3690 = vpack.c.b16 %v3486, %v3480
        %v3691 = vpack.c.b16 %v3493, %v3487
        %v3692 = vpack.c.b16 %v3494, %v3488
        %v3693 = vpack.c.b16 %v3495, %v3489
        %v3694 = vpack.c.b16 %v3496, %v3490
        %v3695 = vpack.c.b16 %v3497, %v3491
        %v3696 = vpack.c.b16 %v3498, %v3492
        %v3697 = vpack.c.b16 %v3505, %v3499
        %v3698 = vpack.c.b16 %v3506, %v3500
        %v3699 = vpack.c.b16 %v3507, %v3501
        %v3700 = vpack.c.b16 %v3508, %v3502
        %v3701 = vpack.c.b16 %v3509, %v3503
        %v3702 = vpack.c.b16 %v3510, %v3504
        %v3703 = vpack.c.b16 %v3517, %v3511
        %v3704 = vpack.c.b16 %v3518, %v3512
        %v3705 = vpack.c.b16 %v3519, %v3513
        %v3706 = vpack.c.b16 %v3520, %v3514
        %v3707 = vpack.c.b16 %v3521, %v3515
        %v3708 = vpack.c.b16 %v3522, %v3516
        %v3709 = vpack.c.b16 %v3529, %v3523
        %v3710 = vpack.c.b16 %v3530, %v3524
        %v3711 = vpack.c.b16 %v3531, %v3525
        %v3712 = vpack.c.b16 %v3532, %v3526
        %v3713 = vpack.c.b16 %v3533, %v3527
        %v3714 = vpack.c.b16 %v3534, %v3528
        %v3715 = vpack.c.b16 %v3541, %v3535
        %v3716 = vpack.c.b16 %v3542, %v3536
        %v3717 = vpack.c.b16 %v3543, %v3537
        %v3718 = vpack.c.b16 %v3544, %v3538
        %v3719 = vpack.c.b16 %v3545, %v3539
        %v3720 = vpack.c.b16 %v3546, %v3540
        %v3721 = vpack.c.b16 %v3553, %v3547
        %v3722 = vpack.c.b16 %v3554, %v3548
        %v3723 = vpack.c.b16 %v3555, %v3549
        %v3724 = vpack.c.b16 %v3556, %v3550
        %v3725 = vpack.c.b16 %v3557, %v3551
        %v3726 = vpack.c.b16 %v3558, %v3552
        %v3727 = vpack.c.b16 %v3565, %v3559
        %v3728 = vpack.c.b16 %v3566, %v3560
        %v3729 = vpack.c.b16 %v3567, %v3561
        %v3730 = vpack.c.b16 %v3568, %v3562
        %v3731 = vpack.c.b16 %v3569, %v3563
        %v3732 = vpack.c.b16 %v3570, %v3564
        %v3733 = vpack.c.b16 %v3577, %v3571
        %v3734 = vpack.c.b16 %v3578, %v3572
        %v3735 = vpack.c.b16 %v3579, %v3573
        %v3736 = vpack.c.b16 %v3580, %v3574
        %v3737 = vpack.c.b16 %v3581, %v3575
        %v3738 = vpack.c.b16 %v3582, %v3576
        %v3739 = vpack.c.b16 %v3589, %v3583
        %v3740 = vpack.c.b16 %v3590, %v3584
        %v3741 = vpack.c.b16 %v3591, %v3585
        %v3742 = vpack.c.b16 %v3592, %v3586
        %v3743 = vpack.c.b16 %v3593, %v3587
        %v3744 = vpack.c.b16 %v3594, %v3588
        %v3745 = vpack.c.b16 %v3601, %v3595
        %v3746 = vpack.c.b16 %v3602, %v3596
        %v3747 = vpack.c.b16 %v3603, %v3597
        %v3748 = vpack.c.b16 %v3604, %v3598
        %v3749 = vpack.c.b16 %v3605, %v3599
        %v3750 = vpack.c.b16 %v3606, %v3600
        %3895 = vmatprep.subr.bf16.mxu0 %v3650
        %3896 = vmatpush1.bf16.msra.mxu0 %v3649
        %3897 = vmatprep.subr.bf16.mxu0 %v3644
        %3898 = vmatpush1.bf16.msra.mxu0 %v3643
        %3899 = vmatprep.subr.bf16.mxu0 %v3638
        %3900 = vmatpush1.bf16.msra.mxu0 %v3637
        %3901 = vmatprep.subr.bf16.mxu0 %v3632
        %3902 = vmatpush1.bf16.msra.mxu0 %v3631
        %3903 = vmatprep.subr.bf16.mxu0 %v3626
        %3904 = vmatpush1.bf16.msra.mxu0 %v3625
        %3905 = vmatprep.subr.bf16.mxu0 %v3620
        %3906 = vmatpush1.bf16.msra.mxu0 %v3619
        %3907 = vmatprep.subr.bf16.mxu0 %v3614
        %3908 = vmatpush1.bf16.msra.mxu0 %v3613
        %3909 = vmatprep.subr.bf16.mxu0 %v3608
        %3910 = vmatpush1.bf16.msra.mxu0 %v3607
        %3911 = vmatprep.subr.bf16.mxu0 %v3698
        %3912 = vmatpush2.bf16.msra.mxu0 %v3697
        %3913 = vmatprep.subr.bf16.mxu0 %v3692
        %3914 = vmatpush2.bf16.msra.mxu0 %v3691
        %3915 = vmatprep.subr.bf16.mxu0 %v3686
        %3916 = vmatpush2.bf16.msra.mxu0 %v3685
        %3917 = vmatprep.subr.bf16.mxu0 %v3680
        %3918 = vmatpush2.bf16.msra.mxu0 %v3679
        %3919 = vmatprep.subr.bf16.mxu0 %v3674
        %3920 = vmatpush2.bf16.msra.mxu0 %v3673
        %3921 = vmatprep.subr.bf16.mxu0 %v3668
        %3922 = vmatpush2.bf16.msra.mxu0 %v3667
        %3923 = vmatprep.subr.bf16.mxu0 %v3662
        %3924 = vmatpush2.bf16.msra.mxu0 %v3661
        %3925 = vmatprep.subr.bf16.mxu0 %v3656
        %3926 = vmatpush2.bf16.msra.mxu0 %v3655
        %3927 = vmatprep.mubr.bf16.mxu0 %v3163
        %3928 = vmatmul.mubr.bf16.gmra.mxu0 %v3155
        %v3929 = vpop.f32.mrf.mxu0
        %v3930 = vadd.f32 %v2965, %v3929
        %v3931 = vpop.f32.mrf.mxu0
        %v3932 = vadd.f32 %v2967, %v3931
        %v3933 = vpop.f32.mrf.mxu0
        %v3934 = vpop.f32.mrf.mxu0
        %3935 = vdwg.mxu0
        %3936 = vmatprep.subr.bf16.mxu0 %v3746
        %3937 = vmatpush1.bf16.msra.mxu0 %v3745
        %3938 = vmatprep.subr.bf16.mxu0 %v3740
        %3939 = vmatpush1.bf16.msra.mxu0 %v3739
        %3940 = vmatprep.subr.bf16.mxu0 %v3734
        %3941 = vmatpush1.bf16.msra.mxu0 %v3733
        %3942 = vmatprep.subr.bf16.mxu0 %v3728
        %3943 = vmatpush1.bf16.msra.mxu0 %v3727
        %3944 = vmatprep.subr.bf16.mxu0 %v3722
        %3945 = vmatpush1.bf16.msra.mxu0 %v3721
        %3946 = vmatprep.subr.bf16.mxu0 %v3716
        %3947 = vmatpush1.bf16.msra.mxu0 %v3715
        %3948 = vmatprep.subr.bf16.mxu0 %v3710
        %3949 = vmatpush1.bf16.msra.mxu0 %v3709
        %3950 = vmatprep.subr.bf16.mxu0 %v3704
        %3951 = vmatpush1.bf16.msra.mxu0 %v3703
        %3952 = vmatprep.subr.bf16.mxu0 0
        %3953 = vmatpush2.bf16.msra.mxu0 0
        %3954 = vmatprep.subr.bf16.mxu0 0
        %3955 = vmatpush2.bf16.msra.mxu0 0
        %3956 = vmatprep.subr.bf16.mxu0 0
        %3957 = vmatpush2.bf16.msra.mxu0 0
        %3958 = vmatprep.subr.bf16.mxu0 0
        %3959 = vmatpush2.bf16.msra.mxu0 0
        %3960 = vmatprep.subr.bf16.mxu0 0
        %3961 = vmatpush2.bf16.msra.mxu0 0
        %3962 = vmatprep.subr.bf16.mxu0 0
        %3963 = vmatpush2.bf16.msra.mxu0 0
        %3964 = vmatprep.subr.bf16.mxu0 0
        %3965 = vmatpush2.bf16.msra.mxu0 0
        %3966 = vmatprep.subr.bf16.mxu0 0
        %3967 = vmatpush2.bf16.msra.mxu0 0
        %3968 = vmatprep.mubr.bf16.mxu0 0
        %3969 = vmatmul.mubr.bf16.gmra.mxu0 %v3171
        %v3970 = vpop.f32.mrf.mxu0
        %v3971 = vadd.f32 %v3930, %v3970
        %v3972 = vpop.f32.mrf.mxu0
        %v3973 = vadd.f32 %v3932, %v3972
        %v3974 = vpop.f32.mrf.mxu0
        %v3975 = vpop.f32.mrf.mxu0
        %3976 = vdwg.mxu0
        %3977 = vmatprep.subr.bf16.mxu0 %v3652
        %3978 = vmatpush1.bf16.msra.mxu0 %v3651
        %3979 = vmatprep.subr.bf16.mxu0 %v3646
        %3980 = vmatpush1.bf16.msra.mxu0 %v3645
        %3981 = vmatprep.subr.bf16.mxu0 %v3640
        %3982 = vmatpush1.bf16.msra.mxu0 %v3639
        %3983 = vmatprep.subr.bf16.mxu0 %v3634
        %3984 = vmatpush1.bf16.msra.mxu0 %v3633
        %3985 = vmatprep.subr.bf16.mxu0 %v3628
        %3986 = vmatpush1.bf16.msra.mxu0 %v3627
        %3987 = vmatprep.subr.bf16.mxu0 %v3622
        %3988 = vmatpush1.bf16.msra.mxu0 %v3621
        %3989 = vmatprep.subr.bf16.mxu0 %v3616
        %3990 = vmatpush1.bf16.msra.mxu0 %v3615
        %3991 = vmatprep.subr.bf16.mxu0 %v3610
        %3992 = vmatpush1.bf16.msra.mxu0 %v3609
        %3993 = vmatprep.subr.bf16.mxu0 %v3700
        %3994 = vmatpush2.bf16.msra.mxu0 %v3699
        %3995 = vmatprep.subr.bf16.mxu0 %v3694
        %3996 = vmatpush2.bf16.msra.mxu0 %v3693
        %3997 = vmatprep.subr.bf16.mxu0 %v3688
        %3998 = vmatpush2.bf16.msra.mxu0 %v3687
        %3999 = vmatprep.subr.bf16.mxu0 %v3682
        %4000 = vmatpush2.bf16.msra.mxu0 %v3681
        %4001 = vmatprep.subr.bf16.mxu0 %v3676
        %4002 = vmatpush2.bf16.msra.mxu0 %v3675
        %4003 = vmatprep.subr.bf16.mxu0 %v3670
        %4004 = vmatpush2.bf16.msra.mxu0 %v3669
        %4005 = vmatprep.subr.bf16.mxu0 %v3664
        %4006 = vmatpush2.bf16.msra.mxu0 %v3663
        %4007 = vmatprep.subr.bf16.mxu0 %v3658
        %4008 = vmatpush2.bf16.msra.mxu0 %v3657
        %4009 = vmatprep.mubr.bf16.mxu0 %v3163
        %4010 = vmatmul.mubr.bf16.gmra.mxu0 %v3155
        %v4011 = vpop.f32.mrf.mxu0
        %v4012 = vadd.f32 %v3047, %v4011
        %v4013 = vpop.f32.mrf.mxu0
        %v4014 = vadd.f32 %v3049, %v4013
        %v4015 = vpop.f32.mrf.mxu0
        %v4016 = vpop.f32.mrf.mxu0
        %4017 = vdwg.mxu0
        %4018 = vmatprep.subr.bf16.mxu0 %v3748
        %4019 = vmatpush1.bf16.msra.mxu0 %v3747
        %4020 = vmatprep.subr.bf16.mxu0 %v3742
        %4021 = vmatpush1.bf16.msra.mxu0 %v3741
        %4022 = vmatprep.subr.bf16.mxu0 %v3736
        %4023 = vmatpush1.bf16.msra.mxu0 %v3735
        %4024 = vmatprep.subr.bf16.mxu0 %v3730
        %4025 = vmatpush1.bf16.msra.mxu0 %v3729
        %4026 = vmatprep.subr.bf16.mxu0 %v3724
        %4027 = vmatpush1.bf16.msra.mxu0 %v3723
        %4028 = vmatprep.subr.bf16.mxu0 %v3718
        %4029 = vmatpush1.bf16.msra.mxu0 %v3717
        %4030 = vmatprep.subr.bf16.mxu0 %v3712
        %4031 = vmatpush1.bf16.msra.mxu0 %v3711
        %4032 = vmatprep.subr.bf16.mxu0 %v3706
        %4033 = vmatpush1.bf16.msra.mxu0 %v3705
        %4034 = vmatprep.subr.bf16.mxu0 0
        %4035 = vmatpush2.bf16.msra.mxu0 0
        %4036 = vmatprep.subr.bf16.mxu0 0
        %4037 = vmatpush2.bf16.msra.mxu0 0
        %4038 = vmatprep.subr.bf16.mxu0 0
        %4039 = vmatpush2.bf16.msra.mxu0 0
        %4040 = vmatprep.subr.bf16.mxu0 0
        %4041 = vmatpush2.bf16.msra.mxu0 0
        %4042 = vmatprep.subr.bf16.mxu0 0
        %4043 = vmatpush2.bf16.msra.mxu0 0
        %4044 = vmatprep.subr.bf16.mxu0 0
        %4045 = vmatpush2.bf16.msra.mxu0 0
        %4046 = vmatprep.subr.bf16.mxu0 0
        %4047 = vmatpush2.bf16.msra.mxu0 0
        %4048 = vmatprep.subr.bf16.mxu0 0
        %4049 = vmatpush2.bf16.msra.mxu0 0
        %4050 = vmatprep.mubr.bf16.mxu0 0
        %4051 = vmatmul.mubr.bf16.gmra.mxu0 %v3171
        %v4052 = vpop.f32.mrf.mxu0
        %v4053 = vadd.f32 %v4012, %v4052
        %v4054 = vpop.f32.mrf.mxu0
        %v4055 = vadd.f32 %v4014, %v4054
        %v4056 = vpop.f32.mrf.mxu0
        %v4057 = vpop.f32.mrf.mxu0
        %4058 = vdwg.mxu0
        %4059 = vmatprep.subr.bf16.mxu0 %v3654
        %4060 = vmatpush1.bf16.msra.mxu0 %v3653
        %4061 = vmatprep.subr.bf16.mxu0 %v3648
        %4062 = vmatpush1.bf16.msra.mxu0 %v3647
        %4063 = vmatprep.subr.bf16.mxu0 %v3642
        %4064 = vmatpush1.bf16.msra.mxu0 %v3641
        %4065 = vmatprep.subr.bf16.mxu0 %v3636
        %4066 = vmatpush1.bf16.msra.mxu0 %v3635
        %4067 = vmatprep.subr.bf16.mxu0 %v3630
        %4068 = vmatpush1.bf16.msra.mxu0 %v3629
        %4069 = vmatprep.subr.bf16.mxu0 %v3624
        %4070 = vmatpush1.bf16.msra.mxu0 %v3623
        %4071 = vmatprep.subr.bf16.mxu0 %v3618
        %4072 = vmatpush1.bf16.msra.mxu0 %v3617
        %4073 = vmatprep.subr.bf16.mxu0 %v3612
        %4074 = vmatpush1.bf16.msra.mxu0 %v3611
        %4075 = vmatprep.subr.bf16.mxu0 %v3702
        %4076 = vmatpush2.bf16.msra.mxu0 %v3701
        %4077 = vmatprep.subr.bf16.mxu0 %v3696
        %4078 = vmatpush2.bf16.msra.mxu0 %v3695
        %4079 = vmatprep.subr.bf16.mxu0 %v3690
        %4080 = vmatpush2.bf16.msra.mxu0 %v3689
        %4081 = vmatprep.subr.bf16.mxu0 %v3684
        %4082 = vmatpush2.bf16.msra.mxu0 %v3683
        %4083 = vmatprep.subr.bf16.mxu0 %v3678
        %4084 = vmatpush2.bf16.msra.mxu0 %v3677
        %4085 = vmatprep.subr.bf16.mxu0 %v3672
        %4086 = vmatpush2.bf16.msra.mxu0 %v3671
        %4087 = vmatprep.subr.bf16.mxu0 %v3666
        %4088 = vmatpush2.bf16.msra.mxu0 %v3665
        %4089 = vmatprep.subr.bf16.mxu0 %v3660
        %4090 = vmatpush2.bf16.msra.mxu0 %v3659
        %4091 = vmatprep.mubr.bf16.mxu0 %v3163
        %4092 = vmatmul.mubr.bf16.gmra.mxu0 %v3155
        %v4093 = vpop.f32.mrf.mxu0
        %v4094 = vadd.f32 %v3129, %v4093
        %v4095 = vpop.f32.mrf.mxu0
        %v4096 = vadd.f32 %v3131, %v4095
        %v4097 = vpop.f32.mrf.mxu0
        %v4098 = vpop.f32.mrf.mxu0
        %4099 = vdwg.mxu0
        %4100 = vmatprep.subr.bf16.mxu0 %v3750
        %4101 = vmatpush1.bf16.msra.mxu0 %v3749
        %4102 = vmatprep.subr.bf16.mxu0 %v3744
        %4103 = vmatpush1.bf16.msra.mxu0 %v3743
        %4104 = vmatprep.subr.bf16.mxu0 %v3738
        %4105 = vmatpush1.bf16.msra.mxu0 %v3737
        %4106 = vmatprep.subr.bf16.mxu0 %v3732
        %4107 = vmatpush1.bf16.msra.mxu0 %v3731
        %4108 = vmatprep.subr.bf16.mxu0 %v3726
        %4109 = vmatpush1.bf16.msra.mxu0 %v3725
        %4110 = vmatprep.subr.bf16.mxu0 %v3720
        %4111 = vmatpush1.bf16.msra.mxu0 %v3719
        %4112 = vmatprep.subr.bf16.mxu0 %v3714
        %4113 = vmatpush1.bf16.msra.mxu0 %v3713
        %4114 = vmatprep.subr.bf16.mxu0 %v3708
        %4115 = vmatpush1.bf16.msra.mxu0 %v3707
        %4116 = vmatprep.subr.bf16.mxu0 0
        %4117 = vmatpush2.bf16.msra.mxu0 0
        %4118 = vmatprep.subr.bf16.mxu0 0
        %4119 = vmatpush2.bf16.msra.mxu0 0
        %4120 = vmatprep.subr.bf16.mxu0 0
        %4121 = vmatpush2.bf16.msra.mxu0 0
        %4122 = vmatprep.subr.bf16.mxu0 0
        %4123 = vmatpush2.bf16.msra.mxu0 0
        %4124 = vmatprep.subr.bf16.mxu0 0
        %4125 = vmatpush2.bf16.msra.mxu0 0
        %4126 = vmatprep.subr.bf16.mxu0 0
        %4127 = vmatpush2.bf16.msra.mxu0 0
        %4128 = vmatprep.subr.bf16.mxu0 0
        %4129 = vmatpush2.bf16.msra.mxu0 0
        %4130 = vmatprep.subr.bf16.mxu0 0
        %4131 = vmatpush2.bf16.msra.mxu0 0
        %4132 = vmatprep.mubr.bf16.mxu0 0
        %4133 = vmatmul.mubr.bf16.gmra.mxu0 %v3171
        %v4134 = vpop.f32.mrf.mxu0
        %v4135 = vadd.f32 %v4094, %v4134
        %v4136 = vpop.f32.mrf.mxu0
        %v4137 = vadd.f32 %v4096, %v4136
        %v4138 = vpop.f32.mrf.mxu0
        %v4139 = vpop.f32.mrf.mxu0
        %4140 = vdwg.mxu0
        %s4141 = scalar_lea.vmem [#allocation9], 2304
        %v4142 = vld [vmem:[%s4141] sm:$0xff]
        %v4143 = vld [vmem:[%s4141 + $0x8] sm:$0xff]
        %v4144 = vld [vmem:[%s4141 + $0x10] sm:$0xff]
        %v4145 = vld [vmem:[%s4141 + $0x18] sm:$0xff]
        %v4146 = vld [vmem:[%s4141 + $0x20] sm:$0xff]
        %v4147 = vld [vmem:[%s4141 + $0x28] sm:$0xff]
        %v4148 = vld [vmem:[%s4141 + $0x30] sm:$0xff]
        %v4149 = vld [vmem:[%s4141 + $0x38] sm:$0xff]
        %v4150 = vld [vmem:[%s4141 + $0x40] sm:$0xff]
        %v4151 = vld [vmem:[%s4141 + $0x48] sm:$0xff]
        %v4152 = vld [vmem:[%s4141 + $0x50] sm:$0xff]
        %v4153 = vld [vmem:[%s4141 + $0x58] sm:$0xff]
        %v4154 = vld [vmem:[%s4141 + $0x60] sm:$0xff]
        %v4155 = vld [vmem:[%s4141 + $0x68] sm:$0xff]
        %v4156 = vld [vmem:[%s4141 + $0x70] sm:$0xff]
        %v4157 = vld [vmem:[%s4141 + $0x78] sm:$0xff]
        %v4158 = vld [vmem:[%s4141 + $0x80] sm:$0xff]
        %v4159 = vld [vmem:[%s4141 + $0x88] sm:$0xff]
        %v4160 = vld [vmem:[%s4141 + $0x90] sm:$0xff]
        %v4161 = vld [vmem:[%s4141 + $0x98] sm:$0xff]
        %v4162 = vld [vmem:[%s4141 + $0xa0] sm:$0xff]
        %v4163 = vld [vmem:[%s4141 + $0xa8] sm:$0xff]
        %v4164 = vld [vmem:[%s4141 + $0xb0] sm:$0xff]
        %v4165 = vld [vmem:[%s4141 + $0xb8] sm:$0xff]
        %v4166 = vld [vmem:[%s4141 + $0xc0] sm:$0xff]
        %v4167 = vld [vmem:[%s4141 + $0xc8] sm:$0xff]
        %v4168 = vld [vmem:[%s4141 + $0xd0] sm:$0xff]
        %v4169 = vld [vmem:[%s4141 + $0xd8] sm:$0xff]
        %v4170 = vld [vmem:[%s4141 + $0xe0] sm:$0xff]
        %v4171 = vld [vmem:[%s4141 + $0xe8] sm:$0xff]
        %v4172 = vld [vmem:[%s4141 + $0xf0] sm:$0xff]
        %v4173 = vld [vmem:[%s4141 + $0xf8] sm:$0xff]
        %v4174 = vld [vmem:[%s4141 + $0x100] sm:$0xff]
        %v4175 = vld [vmem:[%s4141 + $0x108] sm:$0xff]
        %v4176 = vld [vmem:[%s4141 + $0x110] sm:$0xff]
        %v4177 = vld [vmem:[%s4141 + $0x118] sm:$0xff]
        %v4178 = vld [vmem:[%s4141 + $0x120] sm:$0xff]
        %v4179 = vld [vmem:[%s4141 + $0x128] sm:$0xff]
        %v4180 = vld [vmem:[%s4141 + $0x130] sm:$0xff]
        %v4181 = vld [vmem:[%s4141 + $0x138] sm:$0xff]
        %v4182 = vld [vmem:[%s4141 + $0x140] sm:$0xff]
        %v4183 = vld [vmem:[%s4141 + $0x148] sm:$0xff]
        %v4184 = vld [vmem:[%s4141 + $0x150] sm:$0xff]
        %v4185 = vld [vmem:[%s4141 + $0x158] sm:$0xff]
        %v4186 = vld [vmem:[%s4141 + $0x160] sm:$0xff]
        %v4187 = vld [vmem:[%s4141 + $0x168] sm:$0xff]
        %v4188 = vld [vmem:[%s4141 + $0x170] sm:$0xff]
        %v4189 = vld [vmem:[%s4141 + $0x178] sm:$0xff]
        %v4190 = vld [vmem:[%s4141 + $0x180] sm:$0xff]
        %v4191 = vld [vmem:[%s4141 + $0x188] sm:$0xff]
        %v4192 = vld [vmem:[%s4141 + $0x190] sm:$0xff]
        %v4193 = vld [vmem:[%s4141 + $0x198] sm:$0xff]
        %v4194 = vld [vmem:[%s4141 + $0x1a0] sm:$0xff]
        %v4195 = vld [vmem:[%s4141 + $0x1a8] sm:$0xff]
        %v4196 = vld [vmem:[%s4141 + $0x1b0] sm:$0xff]
        %v4197 = vld [vmem:[%s4141 + $0x1b8] sm:$0xff]
        %v4198 = vld [vmem:[%s4141 + $0x1c0] sm:$0xff]
        %v4199 = vld [vmem:[%s4141 + $0x1c8] sm:$0xff]
        %v4200 = vld [vmem:[%s4141 + $0x1d0] sm:$0xff]
        %v4201 = vld [vmem:[%s4141 + $0x1d8] sm:$0xff]
        %v4202 = vld [vmem:[%s4141 + $0x1e0] sm:$0xff]
        %v4203 = vld [vmem:[%s4141 + $0x1e8] sm:$0xff]
        %v4204 = vld [vmem:[%s4141 + $0x1f0] sm:$0xff]
        %v4205 = vld [vmem:[%s4141 + $0x1f8] sm:$0xff]
        %v4206 = vld [vmem:[%s4141 + $0x200] sm:$0xff]
        %v4207 = vld [vmem:[%s4141 + $0x208] sm:$0xff]
        %v4208 = vld [vmem:[%s4141 + $0x210] sm:$0xff]
        %v4209 = vld [vmem:[%s4141 + $0x218] sm:$0xff]
        %v4210 = vld [vmem:[%s4141 + $0x220] sm:$0xff]
        %v4211 = vld [vmem:[%s4141 + $0x228] sm:$0xff]
        %v4212 = vld [vmem:[%s4141 + $0x230] sm:$0xff]
        %v4213 = vld [vmem:[%s4141 + $0x238] sm:$0xff]
        %v4214 = vld [vmem:[%s4141 + $0x240] sm:$0xff]
        %v4215 = vld [vmem:[%s4141 + $0x248] sm:$0xff]
        %v4216 = vld [vmem:[%s4141 + $0x250] sm:$0xff]
        %v4217 = vld [vmem:[%s4141 + $0x258] sm:$0xff]
        %v4218 = vld [vmem:[%s4141 + $0x260] sm:$0xff]
        %v4219 = vld [vmem:[%s4141 + $0x268] sm:$0xff]
        %v4220 = vld [vmem:[%s4141 + $0x270] sm:$0xff]
        %v4221 = vld [vmem:[%s4141 + $0x278] sm:$0xff]
        %v4222 = vld [vmem:[%s4141 + $0x280] sm:$0xff]
        %v4223 = vld [vmem:[%s4141 + $0x288] sm:$0xff]
        %v4224 = vld [vmem:[%s4141 + $0x290] sm:$0xff]
        %v4225 = vld [vmem:[%s4141 + $0x298] sm:$0xff]
        %v4226 = vld [vmem:[%s4141 + $0x2a0] sm:$0xff]
        %v4227 = vld [vmem:[%s4141 + $0x2a8] sm:$0xff]
        %v4228 = vld [vmem:[%s4141 + $0x2b0] sm:$0xff]
        %v4229 = vld [vmem:[%s4141 + $0x2b8] sm:$0xff]
        %v4230 = vld [vmem:[%s4141 + $0x2c0] sm:$0xff]
        %v4231 = vld [vmem:[%s4141 + $0x2c8] sm:$0xff]
        %v4232 = vld [vmem:[%s4141 + $0x2d0] sm:$0xff]
        %v4233 = vld [vmem:[%s4141 + $0x2d8] sm:$0xff]
        %v4234 = vld [vmem:[%s4141 + $0x2e0] sm:$0xff]
        %v4235 = vld [vmem:[%s4141 + $0x2e8] sm:$0xff]
        %v4236 = vld [vmem:[%s4141 + $0x2f0] sm:$0xff]
        %v4237 = vld [vmem:[%s4141 + $0x2f8] sm:$0xff]
        %v4238 = vld [vmem:[%s4141 + $0x300] sm:$0xff]
        %v4239 = vld [vmem:[%s4141 + $0x308] sm:$0xff]
        %v4240 = vld [vmem:[%s4141 + $0x310] sm:$0xff]
        %v4241 = vld [vmem:[%s4141 + $0x318] sm:$0xff]
        %v4242 = vld [vmem:[%s4141 + $0x320] sm:$0xff]
        %v4243 = vld [vmem:[%s4141 + $0x328] sm:$0xff]
        %v4244 = vld [vmem:[%s4141 + $0x330] sm:$0xff]
        %v4245 = vld [vmem:[%s4141 + $0x338] sm:$0xff]
        %v4246 = vld [vmem:[%s4141 + $0x340] sm:$0xff]
        %v4247 = vld [vmem:[%s4141 + $0x348] sm:$0xff]
        %v4248 = vld [vmem:[%s4141 + $0x350] sm:$0xff]
        %v4249 = vld [vmem:[%s4141 + $0x358] sm:$0xff]
        %v4250 = vld [vmem:[%s4141 + $0x360] sm:$0xff]
        %v4251 = vld [vmem:[%s4141 + $0x368] sm:$0xff]
        %v4252 = vld [vmem:[%s4141 + $0x370] sm:$0xff]
        %v4253 = vld [vmem:[%s4141 + $0x378] sm:$0xff]
        %v4254 = vld [vmem:[%s4141 + $0x380] sm:$0xff]
        %v4255 = vld [vmem:[%s4141 + $0x388] sm:$0xff]
        %v4256 = vld [vmem:[%s4141 + $0x390] sm:$0xff]
        %v4257 = vld [vmem:[%s4141 + $0x398] sm:$0xff]
        %v4258 = vld [vmem:[%s4141 + $0x3a0] sm:$0xff]
        %v4259 = vld [vmem:[%s4141 + $0x3a8] sm:$0xff]
        %v4260 = vld [vmem:[%s4141 + $0x3b0] sm:$0xff]
        %v4261 = vld [vmem:[%s4141 + $0x3b8] sm:$0xff]
        %v4262 = vld [vmem:[%s4141 + $0x3c0] sm:$0xff]
        %v4263 = vld [vmem:[%s4141 + $0x3c8] sm:$0xff]
        %v4264 = vld [vmem:[%s4141 + $0x3d0] sm:$0xff]
        %v4265 = vld [vmem:[%s4141 + $0x3d8] sm:$0xff]
        %v4266 = vld [vmem:[%s4141 + $0x3e0] sm:$0xff]
        %v4267 = vld [vmem:[%s4141 + $0x3e8] sm:$0xff]
        %v4268 = vld [vmem:[%s4141 + $0x3f0] sm:$0xff]
        %v4269 = vld [vmem:[%s4141 + $0x3f8] sm:$0xff]
        %v4270 = vld [vmem:[%s4141 + $0x400] sm:$0xff]
        %v4271 = vld [vmem:[%s4141 + $0x408] sm:$0xff]
        %v4272 = vld [vmem:[%s4141 + $0x410] sm:$0xff]
        %v4273 = vld [vmem:[%s4141 + $0x418] sm:$0xff]
        %v4274 = vld [vmem:[%s4141 + $0x420] sm:$0xff]
        %v4275 = vld [vmem:[%s4141 + $0x428] sm:$0xff]
        %v4276 = vld [vmem:[%s4141 + $0x430] sm:$0xff]
        %v4277 = vld [vmem:[%s4141 + $0x438] sm:$0xff]
        %v4278 = vld [vmem:[%s4141 + $0x440] sm:$0xff]
        %v4279 = vld [vmem:[%s4141 + $0x448] sm:$0xff]
        %v4280 = vld [vmem:[%s4141 + $0x450] sm:$0xff]
        %v4281 = vld [vmem:[%s4141 + $0x458] sm:$0xff]
        %v4282 = vld [vmem:[%s4141 + $0x460] sm:$0xff]
        %v4283 = vld [vmem:[%s4141 + $0x468] sm:$0xff]
        %v4284 = vld [vmem:[%s4141 + $0x470] sm:$0xff]
        %v4285 = vld [vmem:[%s4141 + $0x478] sm:$0xff]
        %v4286 = vpack.c.b16 %v3142, %v3142
        %v4287 = vpack.c.b16 %v3143, %v3143
        %v4288 = vpack.c.b16 %v3144, %v3144
        %v4436 = vunpack.c.l.b16 %v4142
        %v4437 = vunpack.c.h.b16 %v4142
        %v4438 = vunpack.c.l.b16 %v4143
        %v4439 = vunpack.c.h.b16 %v4143
        %v4440 = vunpack.c.l.b16 %v4144
        %v4441 = vunpack.c.h.b16 %v4144
        %v4442 = vunpack.c.l.b16 %v4145
        %v4443 = vunpack.c.h.b16 %v4145
        %v4444 = vunpack.c.l.b16 %v4146
        %v4445 = vunpack.c.h.b16 %v4146
        %v4446 = vunpack.c.l.b16 %v4147
        %v4447 = vunpack.c.h.b16 %v4147
        %v4448 = vunpack.c.l.b16 %v4148
        %v4449 = vunpack.c.h.b16 %v4148
        %v4450 = vunpack.c.l.b16 %v4149
        %v4451 = vunpack.c.h.b16 %v4149
        %v4452 = vunpack.c.l.b16 %v4150
        %v4453 = vunpack.c.h.b16 %v4150
        %v4454 = vunpack.c.l.b16 %v4151
        %v4455 = vunpack.c.h.b16 %v4151
        %v4456 = vunpack.c.l.b16 %v4152
        %v4457 = vunpack.c.h.b16 %v4152
        %v4458 = vunpack.c.l.b16 %v4153
        %v4459 = vunpack.c.h.b16 %v4153
        %v4460 = vunpack.c.l.b16 %v4154
        %v4461 = vunpack.c.h.b16 %v4154
        %v4462 = vunpack.c.l.b16 %v4155
        %v4463 = vunpack.c.h.b16 %v4155
        %v4464 = vunpack.c.l.b16 %v4156
        %v4465 = vunpack.c.h.b16 %v4156
        %v4466 = vunpack.c.l.b16 %v4157
        %v4467 = vunpack.c.h.b16 %v4157
        %v4468 = vunpack.c.l.b16 %v4158
        %v4469 = vunpack.c.h.b16 %v4158
        %v4470 = vunpack.c.l.b16 %v4159
        %v4471 = vunpack.c.h.b16 %v4159
        %v4472 = vunpack.c.l.b16 %v4160
        %v4473 = vunpack.c.h.b16 %v4160
        %v4474 = vunpack.c.l.b16 %v4161
        %v4475 = vunpack.c.h.b16 %v4161
        %v4476 = vunpack.c.l.b16 %v4162
        %v4477 = vunpack.c.h.b16 %v4162
        %v4478 = vunpack.c.l.b16 %v4163
        %v4479 = vunpack.c.h.b16 %v4163
        %v4480 = vunpack.c.l.b16 %v4164
        %v4481 = vunpack.c.h.b16 %v4164
        %v4482 = vunpack.c.l.b16 %v4165
        %v4483 = vunpack.c.h.b16 %v4165
        %v4484 = vunpack.c.l.b16 %v4166
        %v4485 = vunpack.c.h.b16 %v4166
        %v4486 = vunpack.c.l.b16 %v4167
        %v4487 = vunpack.c.h.b16 %v4167
        %v4488 = vunpack.c.l.b16 %v4168
        %v4489 = vunpack.c.h.b16 %v4168
        %v4490 = vunpack.c.l.b16 %v4169
        %v4491 = vunpack.c.h.b16 %v4169
        %v4492 = vunpack.c.l.b16 %v4170
        %v4493 = vunpack.c.h.b16 %v4170
        %v4494 = vunpack.c.l.b16 %v4171
        %v4495 = vunpack.c.h.b16 %v4171
        %v4496 = vunpack.c.l.b16 %v4172
        %v4497 = vunpack.c.h.b16 %v4172
        %v4498 = vunpack.c.l.b16 %v4173
        %v4499 = vunpack.c.h.b16 %v4173
        %v4500 = vunpack.c.l.b16 %v4174
        %v4501 = vunpack.c.h.b16 %v4174
        %v4502 = vunpack.c.l.b16 %v4175
        %v4503 = vunpack.c.h.b16 %v4175
        %v4504 = vunpack.c.l.b16 %v4176
        %v4505 = vunpack.c.h.b16 %v4176
        %v4506 = vunpack.c.l.b16 %v4177
        %v4507 = vunpack.c.h.b16 %v4177
        %v4508 = vunpack.c.l.b16 %v4178
        %v4509 = vunpack.c.h.b16 %v4178
        %v4510 = vunpack.c.l.b16 %v4179
        %v4511 = vunpack.c.h.b16 %v4179
        %v4512 = vunpack.c.l.b16 %v4180
        %v4513 = vunpack.c.h.b16 %v4180
        %v4514 = vunpack.c.l.b16 %v4181
        %v4515 = vunpack.c.h.b16 %v4181
        %v4516 = vunpack.c.l.b16 %v4182
        %v4517 = vunpack.c.h.b16 %v4182
        %v4518 = vunpack.c.l.b16 %v4183
        %v4519 = vunpack.c.h.b16 %v4183
        %v4520 = vunpack.c.l.b16 %v4184
        %v4521 = vunpack.c.h.b16 %v4184
        %v4522 = vunpack.c.l.b16 %v4185
        %v4523 = vunpack.c.h.b16 %v4185
        %v4524 = vunpack.c.l.b16 %v4186
        %v4525 = vunpack.c.h.b16 %v4186
        %v4526 = vunpack.c.l.b16 %v4187
        %v4527 = vunpack.c.h.b16 %v4187
        %v4528 = vunpack.c.l.b16 %v4188
        %v4529 = vunpack.c.h.b16 %v4188
        %v4530 = vunpack.c.l.b16 %v4189
        %v4531 = vunpack.c.h.b16 %v4189
        %v4532 = vunpack.c.l.b16 %v4190
        %v4533 = vunpack.c.h.b16 %v4190
        %v4534 = vunpack.c.l.b16 %v4191
        %v4535 = vunpack.c.h.b16 %v4191
        %v4536 = vunpack.c.l.b16 %v4192
        %v4537 = vunpack.c.h.b16 %v4192
        %v4538 = vunpack.c.l.b16 %v4193
        %v4539 = vunpack.c.h.b16 %v4193
        %v4540 = vunpack.c.l.b16 %v4194
        %v4541 = vunpack.c.h.b16 %v4194
        %v4542 = vunpack.c.l.b16 %v4195
        %v4543 = vunpack.c.h.b16 %v4195
        %v4544 = vunpack.c.l.b16 %v4196
        %v4545 = vunpack.c.h.b16 %v4196
        %v4546 = vunpack.c.l.b16 %v4197
        %v4547 = vunpack.c.h.b16 %v4197
        %v4548 = vunpack.c.l.b16 %v4198
        %v4549 = vunpack.c.h.b16 %v4198
        %v4550 = vunpack.c.l.b16 %v4199
        %v4551 = vunpack.c.h.b16 %v4199
        %v4552 = vunpack.c.l.b16 %v4200
        %v4553 = vunpack.c.h.b16 %v4200
        %v4554 = vunpack.c.l.b16 %v4201
        %v4555 = vunpack.c.h.b16 %v4201
        %v4556 = vunpack.c.l.b16 %v4202
        %v4557 = vunpack.c.h.b16 %v4202
        %v4558 = vunpack.c.l.b16 %v4203
        %v4559 = vunpack.c.h.b16 %v4203
        %v4560 = vunpack.c.l.b16 %v4204
        %v4561 = vunpack.c.h.b16 %v4204
        %v4562 = vunpack.c.l.b16 %v4205
        %v4563 = vunpack.c.h.b16 %v4205
        %v4564 = vunpack.c.l.b16 %v4206
        %v4565 = vunpack.c.h.b16 %v4206
        %v4566 = vunpack.c.l.b16 %v4207
        %v4567 = vunpack.c.h.b16 %v4207
        %v4568 = vunpack.c.l.b16 %v4208
        %v4569 = vunpack.c.h.b16 %v4208
        %v4570 = vunpack.c.l.b16 %v4209
        %v4571 = vunpack.c.h.b16 %v4209
        %v4572 = vunpack.c.l.b16 %v4210
        %v4573 = vunpack.c.h.b16 %v4210
        %v4574 = vunpack.c.l.b16 %v4211
        %v4575 = vunpack.c.h.b16 %v4211
        %v4576 = vunpack.c.l.b16 %v4212
        %v4577 = vunpack.c.h.b16 %v4212
        %v4578 = vunpack.c.l.b16 %v4213
        %v4579 = vunpack.c.h.b16 %v4213
        %v4580 = vunpack.c.l.b16 %v4214
        %v4581 = vunpack.c.h.b16 %v4214
        %v4582 = vunpack.c.l.b16 %v4215
        %v4583 = vunpack.c.h.b16 %v4215
        %v4584 = vunpack.c.l.b16 %v4216
        %v4585 = vunpack.c.h.b16 %v4216
        %v4586 = vunpack.c.l.b16 %v4217
        %v4587 = vunpack.c.h.b16 %v4217
        %v4588 = vunpack.c.l.b16 %v4218
        %v4589 = vunpack.c.h.b16 %v4218
        %v4590 = vunpack.c.l.b16 %v4219
        %v4591 = vunpack.c.h.b16 %v4219
        %v4592 = vunpack.c.l.b16 %v4220
        %v4593 = vunpack.c.h.b16 %v4220
        %v4594 = vunpack.c.l.b16 %v4221
        %v4595 = vunpack.c.h.b16 %v4221
        %v4596 = vunpack.c.l.b16 %v4222
        %v4597 = vunpack.c.h.b16 %v4222
        %v4598 = vunpack.c.l.b16 %v4223
        %v4599 = vunpack.c.h.b16 %v4223
        %v4600 = vunpack.c.l.b16 %v4224
        %v4601 = vunpack.c.h.b16 %v4224
        %v4602 = vunpack.c.l.b16 %v4225
        %v4603 = vunpack.c.h.b16 %v4225
        %v4604 = vunpack.c.l.b16 %v4226
        %v4605 = vunpack.c.h.b16 %v4226
        %v4606 = vunpack.c.l.b16 %v4227
        %v4607 = vunpack.c.h.b16 %v4227
        %v4608 = vunpack.c.l.b16 %v4228
        %v4609 = vunpack.c.h.b16 %v4228
        %v4610 = vunpack.c.l.b16 %v4229
        %v4611 = vunpack.c.h.b16 %v4229
        %v4612 = vunpack.c.l.b16 %v4230
        %v4613 = vunpack.c.h.b16 %v4230
        %v4614 = vunpack.c.l.b16 %v4231
        %v4615 = vunpack.c.h.b16 %v4231
        %v4616 = vunpack.c.l.b16 %v4232
        %v4617 = vunpack.c.h.b16 %v4232
        %v4618 = vunpack.c.l.b16 %v4233
        %v4619 = vunpack.c.h.b16 %v4233
        %v4620 = vunpack.c.l.b16 %v4234
        %v4621 = vunpack.c.h.b16 %v4234
        %v4622 = vunpack.c.l.b16 %v4235
        %v4623 = vunpack.c.h.b16 %v4235
        %v4624 = vunpack.c.l.b16 %v4236
        %v4625 = vunpack.c.h.b16 %v4236
        %v4626 = vunpack.c.l.b16 %v4237
        %v4627 = vunpack.c.h.b16 %v4237
        %v4628 = vunpack.c.l.b16 %v4238
        %v4629 = vunpack.c.h.b16 %v4238
        %v4630 = vunpack.c.l.b16 %v4239
        %v4631 = vunpack.c.h.b16 %v4239
        %v4632 = vunpack.c.l.b16 %v4240
        %v4633 = vunpack.c.h.b16 %v4240
        %v4634 = vunpack.c.l.b16 %v4241
        %v4635 = vunpack.c.h.b16 %v4241
        %v4636 = vunpack.c.l.b16 %v4242
        %v4637 = vunpack.c.h.b16 %v4242
        %v4638 = vunpack.c.l.b16 %v4243
        %v4639 = vunpack.c.h.b16 %v4243
        %v4640 = vunpack.c.l.b16 %v4244
        %v4641 = vunpack.c.h.b16 %v4244
        %v4642 = vunpack.c.l.b16 %v4245
        %v4643 = vunpack.c.h.b16 %v4245
        %v4644 = vunpack.c.l.b16 %v4246
        %v4645 = vunpack.c.h.b16 %v4246
        %v4646 = vunpack.c.l.b16 %v4247
        %v4647 = vunpack.c.h.b16 %v4247
        %v4648 = vunpack.c.l.b16 %v4248
        %v4649 = vunpack.c.h.b16 %v4248
        %v4650 = vunpack.c.l.b16 %v4249
        %v4651 = vunpack.c.h.b16 %v4249
        %v4652 = vunpack.c.l.b16 %v4250
        %v4653 = vunpack.c.h.b16 %v4250
        %v4654 = vunpack.c.l.b16 %v4251
        %v4655 = vunpack.c.h.b16 %v4251
        %v4656 = vunpack.c.l.b16 %v4252
        %v4657 = vunpack.c.h.b16 %v4252
        %v4658 = vunpack.c.l.b16 %v4253
        %v4659 = vunpack.c.h.b16 %v4253
        %v4660 = vunpack.c.l.b16 %v4254
        %v4661 = vunpack.c.h.b16 %v4254
        %v4662 = vunpack.c.l.b16 %v4255
        %v4663 = vunpack.c.h.b16 %v4255
        %v4664 = vunpack.c.l.b16 %v4256
        %v4665 = vunpack.c.h.b16 %v4256
        %v4666 = vunpack.c.l.b16 %v4257
        %v4667 = vunpack.c.h.b16 %v4257
        %v4668 = vunpack.c.l.b16 %v4258
        %v4669 = vunpack.c.h.b16 %v4258
        %v4670 = vunpack.c.l.b16 %v4259
        %v4671 = vunpack.c.h.b16 %v4259
        %v4672 = vunpack.c.l.b16 %v4260
        %v4673 = vunpack.c.h.b16 %v4260
        %v4674 = vunpack.c.l.b16 %v4261
        %v4675 = vunpack.c.h.b16 %v4261
        %v4676 = vunpack.c.l.b16 %v4262
        %v4677 = vunpack.c.h.b16 %v4262
        %v4678 = vunpack.c.l.b16 %v4263
        %v4679 = vunpack.c.h.b16 %v4263
        %v4680 = vunpack.c.l.b16 %v4264
        %v4681 = vunpack.c.h.b16 %v4264
        %v4682 = vunpack.c.l.b16 %v4265
        %v4683 = vunpack.c.h.b16 %v4265
        %v4684 = vunpack.c.l.b16 %v4266
        %v4685 = vunpack.c.h.b16 %v4266
        %v4686 = vunpack.c.l.b16 %v4267
        %v4687 = vunpack.c.h.b16 %v4267
        %v4688 = vunpack.c.l.b16 %v4268
        %v4689 = vunpack.c.h.b16 %v4268
        %v4690 = vunpack.c.l.b16 %v4269
        %v4691 = vunpack.c.h.b16 %v4269
        %v4692 = vunpack.c.l.b16 %v4270
        %v4693 = vunpack.c.h.b16 %v4270
        %v4694 = vunpack.c.l.b16 %v4271
        %v4695 = vunpack.c.h.b16 %v4271
        %v4696 = vunpack.c.l.b16 %v4272
        %v4697 = vunpack.c.h.b16 %v4272
        %v4698 = vunpack.c.l.b16 %v4273
        %v4699 = vunpack.c.h.b16 %v4273
        %v4700 = vunpack.c.l.b16 %v4274
        %v4701 = vunpack.c.h.b16 %v4274
        %v4702 = vunpack.c.l.b16 %v4275
        %v4703 = vunpack.c.h.b16 %v4275
        %v4704 = vunpack.c.l.b16 %v4276
        %v4705 = vunpack.c.h.b16 %v4276
        %v4706 = vunpack.c.l.b16 %v4277
        %v4707 = vunpack.c.h.b16 %v4277
        %v4708 = vunpack.c.l.b16 %v4278
        %v4709 = vunpack.c.h.b16 %v4278
        %v4710 = vunpack.c.l.b16 %v4279
        %v4711 = vunpack.c.h.b16 %v4279
        %v4712 = vunpack.c.l.b16 %v4280
        %v4713 = vunpack.c.h.b16 %v4280
        %v4714 = vunpack.c.l.b16 %v4281
        %v4715 = vunpack.c.h.b16 %v4281
        %v4716 = vunpack.c.l.b16 %v4282
        %v4717 = vunpack.c.h.b16 %v4282
        %v4718 = vunpack.c.l.b16 %v4283
        %v4719 = vunpack.c.h.b16 %v4283
        %v4720 = vunpack.c.l.b16 %v4284
        %v4721 = vunpack.c.h.b16 %v4284
        %v4722 = vunpack.c.l.b16 %v4285
        %v4723 = vunpack.c.h.b16 %v4285
        %v4724 = vpack.c.b16 %v4442, %v4436
        %v4725 = vpack.c.b16 %v4443, %v4437
        %v4726 = vpack.c.b16 %v4444, %v4438
        %v4727 = vpack.c.b16 %v4445, %v4439
        %v4728 = vpack.c.b16 %v4446, %v4440
        %v4729 = vpack.c.b16 %v4447, %v4441
        %v4730 = vpack.c.b16 %v4454, %v4448
        %v4731 = vpack.c.b16 %v4455, %v4449
        %v4732 = vpack.c.b16 %v4456, %v4450
        %v4733 = vpack.c.b16 %v4457, %v4451
        %v4734 = vpack.c.b16 %v4458, %v4452
        %v4735 = vpack.c.b16 %v4459, %v4453
        %v4736 = vpack.c.b16 %v4466, %v4460
        %v4737 = vpack.c.b16 %v4467, %v4461
        %v4738 = vpack.c.b16 %v4468, %v4462
        %v4739 = vpack.c.b16 %v4469, %v4463
        %v4740 = vpack.c.b16 %v4470, %v4464
        %v4741 = vpack.c.b16 %v4471, %v4465
        %v4742 = vpack.c.b16 %v4478, %v4472
        %v4743 = vpack.c.b16 %v4479, %v4473
        %v4744 = vpack.c.b16 %v4480, %v4474
        %v4745 = vpack.c.b16 %v4481, %v4475
        %v4746 = vpack.c.b16 %v4482, %v4476
        %v4747 = vpack.c.b16 %v4483, %v4477
        %v4748 = vpack.c.b16 %v4490, %v4484
        %v4749 = vpack.c.b16 %v4491, %v4485
        %v4750 = vpack.c.b16 %v4492, %v4486
        %v4751 = vpack.c.b16 %v4493, %v4487
        %v4752 = vpack.c.b16 %v4494, %v4488
        %v4753 = vpack.c.b16 %v4495, %v4489
        %v4754 = vpack.c.b16 %v4502, %v4496
        %v4755 = vpack.c.b16 %v4503, %v4497
        %v4756 = vpack.c.b16 %v4504, %v4498
        %v4757 = vpack.c.b16 %v4505, %v4499
        %v4758 = vpack.c.b16 %v4506, %v4500
        %v4759 = vpack.c.b16 %v4507, %v4501
        %v4760 = vpack.c.b16 %v4514, %v4508
        %v4761 = vpack.c.b16 %v4515, %v4509
        %v4762 = vpack.c.b16 %v4516, %v4510
        %v4763 = vpack.c.b16 %v4517, %v4511
        %v4764 = vpack.c.b16 %v4518, %v4512
        %v4765 = vpack.c.b16 %v4519, %v4513
        %v4766 = vpack.c.b16 %v4526, %v4520
        %v4767 = vpack.c.b16 %v4527, %v4521
        %v4768 = vpack.c.b16 %v4528, %v4522
        %v4769 = vpack.c.b16 %v4529, %v4523
        %v4770 = vpack.c.b16 %v4530, %v4524
        %v4771 = vpack.c.b16 %v4531, %v4525
        %v4772 = vpack.c.b16 %v4538, %v4532
        %v4773 = vpack.c.b16 %v4539, %v4533
        %v4774 = vpack.c.b16 %v4540, %v4534
        %v4775 = vpack.c.b16 %v4541, %v4535
        %v4776 = vpack.c.b16 %v4542, %v4536
        %v4777 = vpack.c.b16 %v4543, %v4537
        %v4778 = vpack.c.b16 %v4550, %v4544
        %v4779 = vpack.c.b16 %v4551, %v4545
        %v4780 = vpack.c.b16 %v4552, %v4546
        %v4781 = vpack.c.b16 %v4553, %v4547
        %v4782 = vpack.c.b16 %v4554, %v4548
        %v4783 = vpack.c.b16 %v4555, %v4549
        %v4784 = vpack.c.b16 %v4562, %v4556
        %v4785 = vpack.c.b16 %v4563, %v4557
        %v4786 = vpack.c.b16 %v4564, %v4558
        %v4787 = vpack.c.b16 %v4565, %v4559
        %v4788 = vpack.c.b16 %v4566, %v4560
        %v4789 = vpack.c.b16 %v4567, %v4561
        %v4790 = vpack.c.b16 %v4574, %v4568
        %v4791 = vpack.c.b16 %v4575, %v4569
        %v4792 = vpack.c.b16 %v4576, %v4570
        %v4793 = vpack.c.b16 %v4577, %v4571
        %v4794 = vpack.c.b16 %v4578, %v4572
        %v4795 = vpack.c.b16 %v4579, %v4573
        %v4796 = vpack.c.b16 %v4586, %v4580
        %v4797 = vpack.c.b16 %v4587, %v4581
        %v4798 = vpack.c.b16 %v4588, %v4582
        %v4799 = vpack.c.b16 %v4589, %v4583
        %v4800 = vpack.c.b16 %v4590, %v4584
        %v4801 = vpack.c.b16 %v4591, %v4585
        %v4802 = vpack.c.b16 %v4598, %v4592
        %v4803 = vpack.c.b16 %v4599, %v4593
        %v4804 = vpack.c.b16 %v4600, %v4594
        %v4805 = vpack.c.b16 %v4601, %v4595
        %v4806 = vpack.c.b16 %v4602, %v4596
        %v4807 = vpack.c.b16 %v4603, %v4597
        %v4808 = vpack.c.b16 %v4610, %v4604
        %v4809 = vpack.c.b16 %v4611, %v4605
        %v4810 = vpack.c.b16 %v4612, %v4606
        %v4811 = vpack.c.b16 %v4613, %v4607
        %v4812 = vpack.c.b16 %v4614, %v4608
        %v4813 = vpack.c.b16 %v4615, %v4609
        %v4814 = vpack.c.b16 %v4622, %v4616
        %v4815 = vpack.c.b16 %v4623, %v4617
        %v4816 = vpack.c.b16 %v4624, %v4618
        %v4817 = vpack.c.b16 %v4625, %v4619
        %v4818 = vpack.c.b16 %v4626, %v4620
        %v4819 = vpack.c.b16 %v4627, %v4621
        %v4820 = vpack.c.b16 %v4634, %v4628
        %v4821 = vpack.c.b16 %v4635, %v4629
        %v4822 = vpack.c.b16 %v4636, %v4630
        %v4823 = vpack.c.b16 %v4637, %v4631
        %v4824 = vpack.c.b16 %v4638, %v4632
        %v4825 = vpack.c.b16 %v4639, %v4633
        %v4826 = vpack.c.b16 %v4646, %v4640
        %v4827 = vpack.c.b16 %v4647, %v4641
        %v4828 = vpack.c.b16 %v4648, %v4642
        %v4829 = vpack.c.b16 %v4649, %v4643
        %v4830 = vpack.c.b16 %v4650, %v4644
        %v4831 = vpack.c.b16 %v4651, %v4645
        %v4832 = vpack.c.b16 %v4658, %v4652
        %v4833 = vpack.c.b16 %v4659, %v4653
        %v4834 = vpack.c.b16 %v4660, %v4654
        %v4835 = vpack.c.b16 %v4661, %v4655
        %v4836 = vpack.c.b16 %v4662, %v4656
        %v4837 = vpack.c.b16 %v4663, %v4657
        %v4838 = vpack.c.b16 %v4670, %v4664
        %v4839 = vpack.c.b16 %v4671, %v4665
        %v4840 = vpack.c.b16 %v4672, %v4666
        %v4841 = vpack.c.b16 %v4673, %v4667
        %v4842 = vpack.c.b16 %v4674, %v4668
        %v4843 = vpack.c.b16 %v4675, %v4669
        %v4844 = vpack.c.b16 %v4682, %v4676
        %v4845 = vpack.c.b16 %v4683, %v4677
        %v4846 = vpack.c.b16 %v4684, %v4678
        %v4847 = vpack.c.b16 %v4685, %v4679
        %v4848 = vpack.c.b16 %v4686, %v4680
        %v4849 = vpack.c.b16 %v4687, %v4681
        %v4850 = vpack.c.b16 %v4694, %v4688
        %v4851 = vpack.c.b16 %v4695, %v4689
        %v4852 = vpack.c.b16 %v4696, %v4690
        %v4853 = vpack.c.b16 %v4697, %v4691
        %v4854 = vpack.c.b16 %v4698, %v4692
        %v4855 = vpack.c.b16 %v4699, %v4693
        %v4856 = vpack.c.b16 %v4706, %v4700
        %v4857 = vpack.c.b16 %v4707, %v4701
        %v4858 = vpack.c.b16 %v4708, %v4702
        %v4859 = vpack.c.b16 %v4709, %v4703
        %v4860 = vpack.c.b16 %v4710, %v4704
        %v4861 = vpack.c.b16 %v4711, %v4705
        %v4862 = vpack.c.b16 %v4718, %v4712
        %v4863 = vpack.c.b16 %v4719, %v4713
        %v4864 = vpack.c.b16 %v4720, %v4714
        %v4865 = vpack.c.b16 %v4721, %v4715
        %v4866 = vpack.c.b16 %v4722, %v4716
        %v4867 = vpack.c.b16 %v4723, %v4717
        %5012 = vmatprep.subr.bf16.mxu0 %v4767
        %5013 = vmatpush1.bf16.msra.mxu0 %v4766
        %5014 = vmatprep.subr.bf16.mxu0 %v4761
        %5015 = vmatpush1.bf16.msra.mxu0 %v4760
        %5016 = vmatprep.subr.bf16.mxu0 %v4755
        %5017 = vmatpush1.bf16.msra.mxu0 %v4754
        %5018 = vmatprep.subr.bf16.mxu0 %v4749
        %5019 = vmatpush1.bf16.msra.mxu0 %v4748
        %5020 = vmatprep.subr.bf16.mxu0 %v4743
        %5021 = vmatpush1.bf16.msra.mxu0 %v4742
        %5022 = vmatprep.subr.bf16.mxu0 %v4737
        %5023 = vmatpush1.bf16.msra.mxu0 %v4736
        %5024 = vmatprep.subr.bf16.mxu0 %v4731
        %5025 = vmatpush1.bf16.msra.mxu0 %v4730
        %5026 = vmatprep.subr.bf16.mxu0 %v4725
        %5027 = vmatpush1.bf16.msra.mxu0 %v4724
        %5028 = vmatprep.subr.bf16.mxu0 %v4815
        %5029 = vmatpush2.bf16.msra.mxu0 %v4814
        %5030 = vmatprep.subr.bf16.mxu0 %v4809
        %5031 = vmatpush2.bf16.msra.mxu0 %v4808
        %5032 = vmatprep.subr.bf16.mxu0 %v4803
        %5033 = vmatpush2.bf16.msra.mxu0 %v4802
        %5034 = vmatprep.subr.bf16.mxu0 %v4797
        %5035 = vmatpush2.bf16.msra.mxu0 %v4796
        %5036 = vmatprep.subr.bf16.mxu0 %v4791
        %5037 = vmatpush2.bf16.msra.mxu0 %v4790
        %5038 = vmatprep.subr.bf16.mxu0 %v4785
        %5039 = vmatpush2.bf16.msra.mxu0 %v4784
        %5040 = vmatprep.subr.bf16.mxu0 %v4779
        %5041 = vmatpush2.bf16.msra.mxu0 %v4778
        %5042 = vmatprep.subr.bf16.mxu0 %v4773
        %5043 = vmatpush2.bf16.msra.mxu0 %v4772
        %5044 = vmatprep.mubr.bf16.mxu0 %v4287
        %5045 = vmatmul.mubr.bf16.gmra.mxu0 %v4286
        %v5046 = vpop.f32.mrf.mxu0
        %v5047 = vadd.f32 0.0, %v5046
        %v5048 = vpop.f32.mrf.mxu0
        %v5049 = vadd.f32 0.0, %v5048
        %v5050 = vpop.f32.mrf.mxu0
        %v5051 = vpop.f32.mrf.mxu0
        %5052 = vdwg.mxu0
        %5053 = vmatprep.subr.bf16.mxu0 %v4863
        %5054 = vmatpush1.bf16.msra.mxu0 %v4862
        %5055 = vmatprep.subr.bf16.mxu0 %v4857
        %5056 = vmatpush1.bf16.msra.mxu0 %v4856
        %5057 = vmatprep.subr.bf16.mxu0 %v4851
        %5058 = vmatpush1.bf16.msra.mxu0 %v4850
        %5059 = vmatprep.subr.bf16.mxu0 %v4845
        %5060 = vmatpush1.bf16.msra.mxu0 %v4844
        %5061 = vmatprep.subr.bf16.mxu0 %v4839
        %5062 = vmatpush1.bf16.msra.mxu0 %v4838
        %5063 = vmatprep.subr.bf16.mxu0 %v4833
        %5064 = vmatpush1.bf16.msra.mxu0 %v4832
        %5065 = vmatprep.subr.bf16.mxu0 %v4827
        %5066 = vmatpush1.bf16.msra.mxu0 %v4826
        %5067 = vmatprep.subr.bf16.mxu0 %v4821
        %5068 = vmatpush1.bf16.msra.mxu0 %v4820
        %5069 = vmatprep.subr.bf16.mxu0 0
        %5070 = vmatpush2.bf16.msra.mxu0 0
        %5071 = vmatprep.subr.bf16.mxu0 0
        %5072 = vmatpush2.bf16.msra.mxu0 0
        %5073 = vmatprep.subr.bf16.mxu0 0
        %5074 = vmatpush2.bf16.msra.mxu0 0
        %5075 = vmatprep.subr.bf16.mxu0 0
        %5076 = vmatpush2.bf16.msra.mxu0 0
        %5077 = vmatprep.subr.bf16.mxu0 0
        %5078 = vmatpush2.bf16.msra.mxu0 0
        %5079 = vmatprep.subr.bf16.mxu0 0
        %5080 = vmatpush2.bf16.msra.mxu0 0
        %5081 = vmatprep.subr.bf16.mxu0 0
        %5082 = vmatpush2.bf16.msra.mxu0 0
        %5083 = vmatprep.subr.bf16.mxu0 0
        %5084 = vmatpush2.bf16.msra.mxu0 0
        %5085 = vmatprep.mubr.bf16.mxu0 0
        %5086 = vmatmul.mubr.bf16.gmra.mxu0 %v4288
        %v5087 = vpop.f32.mrf.mxu0
        %v5088 = vadd.f32 %v5047, %v5087
        %v5089 = vpop.f32.mrf.mxu0
        %v5090 = vadd.f32 %v5049, %v5089
        %v5091 = vpop.f32.mrf.mxu0
        %v5092 = vpop.f32.mrf.mxu0
        %5093 = vdwg.mxu0
        %5094 = vmatprep.subr.bf16.mxu0 %v4769
        %5095 = vmatpush1.bf16.msra.mxu0 %v4768
        %5096 = vmatprep.subr.bf16.mxu0 %v4763
        %5097 = vmatpush1.bf16.msra.mxu0 %v4762
        %5098 = vmatprep.subr.bf16.mxu0 %v4757
        %5099 = vmatpush1.bf16.msra.mxu0 %v4756
        %5100 = vmatprep.subr.bf16.mxu0 %v4751
        %5101 = vmatpush1.bf16.msra.mxu0 %v4750
        %5102 = vmatprep.subr.bf16.mxu0 %v4745
        %5103 = vmatpush1.bf16.msra.mxu0 %v4744
        %5104 = vmatprep.subr.bf16.mxu0 %v4739
        %5105 = vmatpush1.bf16.msra.mxu0 %v4738
        %5106 = vmatprep.subr.bf16.mxu0 %v4733
        %5107 = vmatpush1.bf16.msra.mxu0 %v4732
        %5108 = vmatprep.subr.bf16.mxu0 %v4727
        %5109 = vmatpush1.bf16.msra.mxu0 %v4726
        %5110 = vmatprep.subr.bf16.mxu0 %v4817
        %5111 = vmatpush2.bf16.msra.mxu0 %v4816
        %5112 = vmatprep.subr.bf16.mxu0 %v4811
        %5113 = vmatpush2.bf16.msra.mxu0 %v4810
        %5114 = vmatprep.subr.bf16.mxu0 %v4805
        %5115 = vmatpush2.bf16.msra.mxu0 %v4804
        %5116 = vmatprep.subr.bf16.mxu0 %v4799
        %5117 = vmatpush2.bf16.msra.mxu0 %v4798
        %5118 = vmatprep.subr.bf16.mxu0 %v4793
        %5119 = vmatpush2.bf16.msra.mxu0 %v4792
        %5120 = vmatprep.subr.bf16.mxu0 %v4787
        %5121 = vmatpush2.bf16.msra.mxu0 %v4786
        %5122 = vmatprep.subr.bf16.mxu0 %v4781
        %5123 = vmatpush2.bf16.msra.mxu0 %v4780
        %5124 = vmatprep.subr.bf16.mxu0 %v4775
        %5125 = vmatpush2.bf16.msra.mxu0 %v4774
        %5126 = vmatprep.mubr.bf16.mxu0 %v4287
        %5127 = vmatmul.mubr.bf16.gmra.mxu0 %v4286
        %v5128 = vpop.f32.mrf.mxu0
        %v5129 = vadd.f32 0.0, %v5128
        %v5130 = vpop.f32.mrf.mxu0
        %v5131 = vadd.f32 0.0, %v5130
        %v5132 = vpop.f32.mrf.mxu0
        %v5133 = vpop.f32.mrf.mxu0
        %5134 = vdwg.mxu0
        %5135 = vmatprep.subr.bf16.mxu0 %v4865
        %5136 = vmatpush1.bf16.msra.mxu0 %v4864
        %5137 = vmatprep.subr.bf16.mxu0 %v4859
        %5138 = vmatpush1.bf16.msra.mxu0 %v4858
        %5139 = vmatprep.subr.bf16.mxu0 %v4853
        %5140 = vmatpush1.bf16.msra.mxu0 %v4852
        %5141 = vmatprep.subr.bf16.mxu0 %v4847
        %5142 = vmatpush1.bf16.msra.mxu0 %v4846
        %5143 = vmatprep.subr.bf16.mxu0 %v4841
        %5144 = vmatpush1.bf16.msra.mxu0 %v4840
        %5145 = vmatprep.subr.bf16.mxu0 %v4835
        %5146 = vmatpush1.bf16.msra.mxu0 %v4834
        %5147 = vmatprep.subr.bf16.mxu0 %v4829
        %5148 = vmatpush1.bf16.msra.mxu0 %v4828
        %5149 = vmatprep.subr.bf16.mxu0 %v4823
        %5150 = vmatpush1.bf16.msra.mxu0 %v4822
        %5151 = vmatprep.subr.bf16.mxu0 0
        %5152 = vmatpush2.bf16.msra.mxu0 0
        %5153 = vmatprep.subr.bf16.mxu0 0
        %5154 = vmatpush2.bf16.msra.mxu0 0
        %5155 = vmatprep.subr.bf16.mxu0 0
        %5156 = vmatpush2.bf16.msra.mxu0 0
        %5157 = vmatprep.subr.bf16.mxu0 0
        %5158 = vmatpush2.bf16.msra.mxu0 0
        %5159 = vmatprep.subr.bf16.mxu0 0
        %5160 = vmatpush2.bf16.msra.mxu0 0
        %5161 = vmatprep.subr.bf16.mxu0 0
        %5162 = vmatpush2.bf16.msra.mxu0 0
        %5163 = vmatprep.subr.bf16.mxu0 0
        %5164 = vmatpush2.bf16.msra.mxu0 0
        %5165 = vmatprep.subr.bf16.mxu0 0
        %5166 = vmatpush2.bf16.msra.mxu0 0
        %5167 = vmatprep.mubr.bf16.mxu0 0
        %5168 = vmatmul.mubr.bf16.gmra.mxu0 %v4288
        %v5169 = vpop.f32.mrf.mxu0
        %v5170 = vadd.f32 %v5129, %v5169
        %v5171 = vpop.f32.mrf.mxu0
        %v5172 = vadd.f32 %v5131, %v5171
        %v5173 = vpop.f32.mrf.mxu0
        %v5174 = vpop.f32.mrf.mxu0
        %5175 = vdwg.mxu0
        %5176 = vmatprep.subr.bf16.mxu0 %v4771
        %5177 = vmatpush1.bf16.msra.mxu0 %v4770
        %5178 = vmatprep.subr.bf16.mxu0 %v4765
        %5179 = vmatpush1.bf16.msra.mxu0 %v4764
        %5180 = vmatprep.subr.bf16.mxu0 %v4759
        %5181 = vmatpush1.bf16.msra.mxu0 %v4758
        %5182 = vmatprep.subr.bf16.mxu0 %v4753
        %5183 = vmatpush1.bf16.msra.mxu0 %v4752
        %5184 = vmatprep.subr.bf16.mxu0 %v4747
        %5185 = vmatpush1.bf16.msra.mxu0 %v4746
        %5186 = vmatprep.subr.bf16.mxu0 %v4741
        %5187 = vmatpush1.bf16.msra.mxu0 %v4740
        %5188 = vmatprep.subr.bf16.mxu0 %v4735
        %5189 = vmatpush1.bf16.msra.mxu0 %v4734
        %5190 = vmatprep.subr.bf16.mxu0 %v4729
        %5191 = vmatpush1.bf16.msra.mxu0 %v4728
        %5192 = vmatprep.subr.bf16.mxu0 %v4819
        %5193 = vmatpush2.bf16.msra.mxu0 %v4818
        %5194 = vmatprep.subr.bf16.mxu0 %v4813
        %5195 = vmatpush2.bf16.msra.mxu0 %v4812
        %5196 = vmatprep.subr.bf16.mxu0 %v4807
        %5197 = vmatpush2.bf16.msra.mxu0 %v4806
        %5198 = vmatprep.subr.bf16.mxu0 %v4801
        %5199 = vmatpush2.bf16.msra.mxu0 %v4800
        %5200 = vmatprep.subr.bf16.mxu0 %v4795
        %5201 = vmatpush2.bf16.msra.mxu0 %v4794
        %5202 = vmatprep.subr.bf16.mxu0 %v4789
        %5203 = vmatpush2.bf16.msra.mxu0 %v4788
        %5204 = vmatprep.subr.bf16.mxu0 %v4783
        %5205 = vmatpush2.bf16.msra.mxu0 %v4782
        %5206 = vmatprep.subr.bf16.mxu0 %v4777
        %5207 = vmatpush2.bf16.msra.mxu0 %v4776
        %5208 = vmatprep.mubr.bf16.mxu0 %v4287
        %5209 = vmatmul.mubr.bf16.gmra.mxu0 %v4286
        %v5210 = vpop.f32.mrf.mxu0
        %v5211 = vadd.f32 0.0, %v5210
        %v5212 = vpop.f32.mrf.mxu0
        %v5213 = vadd.f32 0.0, %v5212
        %v5214 = vpop.f32.mrf.mxu0
        %v5215 = vpop.f32.mrf.mxu0
        %5216 = vdwg.mxu0
        %5217 = vmatprep.subr.bf16.mxu0 %v4867
        %5218 = vmatpush1.bf16.msra.mxu0 %v4866
        %5219 = vmatprep.subr.bf16.mxu0 %v4861
        %5220 = vmatpush1.bf16.msra.mxu0 %v4860
        %5221 = vmatprep.subr.bf16.mxu0 %v4855
        %5222 = vmatpush1.bf16.msra.mxu0 %v4854
        %5223 = vmatprep.subr.bf16.mxu0 %v4849
        %5224 = vmatpush1.bf16.msra.mxu0 %v4848
        %5225 = vmatprep.subr.bf16.mxu0 %v4843
        %5226 = vmatpush1.bf16.msra.mxu0 %v4842
        %5227 = vmatprep.subr.bf16.mxu0 %v4837
        %5228 = vmatpush1.bf16.msra.mxu0 %v4836
        %5229 = vmatprep.subr.bf16.mxu0 %v4831
        %5230 = vmatpush1.bf16.msra.mxu0 %v4830
        %5231 = vmatprep.subr.bf16.mxu0 %v4825
        %5232 = vmatpush1.bf16.msra.mxu0 %v4824
        %5233 = vmatprep.subr.bf16.mxu0 0
        %5234 = vmatpush2.bf16.msra.mxu0 0
        %5235 = vmatprep.subr.bf16.mxu0 0
        %5236 = vmatpush2.bf16.msra.mxu0 0
        %5237 = vmatprep.subr.bf16.mxu0 0
        %5238 = vmatpush2.bf16.msra.mxu0 0
        %5239 = vmatprep.subr.bf16.mxu0 0
        %5240 = vmatpush2.bf16.msra.mxu0 0
        %5241 = vmatprep.subr.bf16.mxu0 0
        %5242 = vmatpush2.bf16.msra.mxu0 0
        %5243 = vmatprep.subr.bf16.mxu0 0
        %5244 = vmatpush2.bf16.msra.mxu0 0
        %5245 = vmatprep.subr.bf16.mxu0 0
        %5246 = vmatpush2.bf16.msra.mxu0 0
        %5247 = vmatprep.subr.bf16.mxu0 0
        %5248 = vmatpush2.bf16.msra.mxu0 0
        %5249 = vmatprep.mubr.bf16.mxu0 0
        %5250 = vmatmul.mubr.bf16.gmra.mxu0 %v4288
        %v5251 = vpop.f32.mrf.mxu0
        %v5252 = vadd.f32 %v5211, %v5251
        %v5253 = vpop.f32.mrf.mxu0
        %v5254 = vadd.f32 %v5213, %v5253
        %v5255 = vpop.f32.mrf.mxu0
        %v5256 = vpop.f32.mrf.mxu0
        %5257 = vdwg.mxu0
        %v5258 = vadd.f32 %v3971, %v5088
        %v5259 = vadd.f32 %v3973, %v5090
        %v5260 = vadd.f32 %v4053, %v5170
        %v5261 = vadd.f32 %v4055, %v5172
        %v5262 = vadd.f32 %v4135, %v5252
        %v5263 = vadd.f32 %v4137, %v5254
        %v5264 = vld [vmem:[#allocation11] sm:$0x3f]
        %v5266 = vlaneseq
        %v5267 = vshrl.u32 %v5266, 7
        %v5268 = vsub.s32 0, %v5267
        %v5269 = vrot.slane %v5264, %v5268
        %v5270 = vlaneseq
        %v5271 = vshrl.u32 %v5270, 7
        %v5272 = vsub.s32 1, %v5271
        %v5273 = vrot.slane %v5264, %v5272
        %v5274 = vlaneseq
        %v5275 = vshrl.u32 %v5274, 7
        %v5276 = vsub.s32 2, %v5275
        %v5277 = vrot.slane %v5264, %v5276
        %v5278 = vlaneseq
        %v5279 = vshrl.u32 %v5278, 7
        %v5280 = vsub.s32 3, %v5279
        %v5281 = vrot.slane %v5264, %v5280
        %v5282 = vlaneseq
        %v5283 = vshrl.u32 %v5282, 7
        %v5284 = vsub.s32 4, %v5283
        %v5285 = vrot.slane %v5264, %v5284
        %v5286 = vlaneseq
        %v5287 = vshrl.u32 %v5286, 7
        %v5288 = vsub.s32 5, %v5287
        %v5289 = vrot.slane %v5264, %v5288
        %v5296 = vmul.f32 %v5258, %v5269
        %v5297 = vmul.f32 %v5259, %v5273
        %v5298 = vmul.f32 %v5260, %v5277
        %v5299 = vmul.f32 %v5261, %v5281
        %v5300 = vmul.f32 %v5262, %v5285
        %v5301 = vmul.f32 %v5263, %v5289
        %v5302 = vld [vmem:[#allocation12] sm:$0x3f]
        %v5304 = vlaneseq
        %v5305 = vshrl.u32 %v5304, 7
        %v5306 = vsub.s32 0, %v5305
        %v5307 = vrot.slane %v5302, %v5306
        %v5308 = vlaneseq
        %v5309 = vshrl.u32 %v5308, 7
        %v5310 = vsub.s32 1, %v5309
        %v5311 = vrot.slane %v5302, %v5310
        %v5312 = vlaneseq
        %v5313 = vshrl.u32 %v5312, 7
        %v5314 = vsub.s32 2, %v5313
        %v5315 = vrot.slane %v5302, %v5314
        %v5316 = vlaneseq
        %v5317 = vshrl.u32 %v5316, 7
        %v5318 = vsub.s32 3, %v5317
        %v5319 = vrot.slane %v5302, %v5318
        %v5320 = vlaneseq
        %v5321 = vshrl.u32 %v5320, 7
        %v5322 = vsub.s32 4, %v5321
        %v5323 = vrot.slane %v5302, %v5322
        %v5324 = vlaneseq
        %v5325 = vshrl.u32 %v5324, 7
        %v5326 = vsub.s32 5, %v5325
        %v5327 = vrot.slane %v5302, %v5326
        %v5334 = vadd.f32 %v5296, %v5307
        %v5335 = vadd.f32 %v5297, %v5311
        %v5336 = vadd.f32 %v5298, %v5315
        %v5337 = vadd.f32 %v5299, %v5319
        %v5338 = vadd.f32 %v5300, %v5323
        %v5339 = vadd.f32 %v5301, %v5327
        %v5340 = vmax.f32 %v5334, 0.0
        %v5341 = vmax.f32 %v5335, 0.0
        %v5342 = vmax.f32 %v5336, 0.0
        %v5343 = vmax.f32 %v5337, 0.0
        %v5344 = vmax.f32 %v5338, 0.0
        %v5345 = vmax.f32 %v5339, 0.0
        %5346 = vmatprep.subr.bf16.mxu0 %v2644
        %5347 = vmatpush1.bf16.msra.mxu0 %v2643
        %5348 = vmatprep.subr.bf16.mxu0 %v2638
        %5349 = vmatpush1.bf16.msra.mxu0 %v2637
        %5350 = vmatprep.subr.bf16.mxu0 %v2632
        %5351 = vmatpush1.bf16.msra.mxu0 %v2631
        %5352 = vmatprep.subr.bf16.mxu0 %v2626
        %5353 = vmatpush1.bf16.msra.mxu0 %v2625
        %5354 = vmatprep.subr.bf16.mxu0 %v2620
        %5355 = vmatpush1.bf16.msra.mxu0 %v2619
        %5356 = vmatprep.subr.bf16.mxu0 %v2614
        %5357 = vmatpush1.bf16.msra.mxu0 %v2613
        %5358 = vmatprep.subr.bf16.mxu0 %v2608
        %5359 = vmatpush1.bf16.msra.mxu0 %v2607
        %5360 = vmatprep.subr.bf16.mxu0 %v2602
        %5361 = vmatpush1.bf16.msra.mxu0 %v2601
        %5362 = vmatprep.subr.bf16.mxu0 %v2692
        %5363 = vmatpush2.bf16.msra.mxu0 %v2691
        %5364 = vmatprep.subr.bf16.mxu0 %v2686
        %5365 = vmatpush2.bf16.msra.mxu0 %v2685
        %5366 = vmatprep.subr.bf16.mxu0 %v2680
        %5367 = vmatpush2.bf16.msra.mxu0 %v2679
        %5368 = vmatprep.subr.bf16.mxu0 %v2674
        %5369 = vmatpush2.bf16.msra.mxu0 %v2673
        %5370 = vmatprep.subr.bf16.mxu0 %v2668
        %5371 = vmatpush2.bf16.msra.mxu0 %v2667
        %5372 = vmatprep.subr.bf16.mxu0 %v2662
        %5373 = vmatpush2.bf16.msra.mxu0 %v2661
        %5374 = vmatprep.subr.bf16.mxu0 %v2656
        %5375 = vmatpush2.bf16.msra.mxu0 %v2655
        %5376 = vmatprep.subr.bf16.mxu0 %v2650
        %5377 = vmatpush2.bf16.msra.mxu0 %v2649
        %5378 = vmatprep.mubr.bf16.mxu0 %v4287
        %5379 = vmatmul.mubr.bf16.gmra.mxu0 %v4286
        %v5380 = vpop.f32.mrf.mxu0
        %v5381 = vadd.f32 0.0, %v5380
        %v5382 = vpop.f32.mrf.mxu0
        %v5383 = vadd.f32 0.0, %v5382
        %v5384 = vpop.f32.mrf.mxu0
        %v5385 = vpop.f32.mrf.mxu0
        %5386 = vdwg.mxu0
        %5387 = vmatprep.subr.bf16.mxu0 %v2740
        %5388 = vmatpush1.bf16.msra.mxu0 %v2739
        %5389 = vmatprep.subr.bf16.mxu0 %v2734
        %5390 = vmatpush1.bf16.msra.mxu0 %v2733
        %5391 = vmatprep.subr.bf16.mxu0 %v2728
        %5392 = vmatpush1.bf16.msra.mxu0 %v2727
        %5393 = vmatprep.subr.bf16.mxu0 %v2722
        %5394 = vmatpush1.bf16.msra.mxu0 %v2721
        %5395 = vmatprep.subr.bf16.mxu0 %v2716
        %5396 = vmatpush1.bf16.msra.mxu0 %v2715
        %5397 = vmatprep.subr.bf16.mxu0 %v2710
        %5398 = vmatpush1.bf16.msra.mxu0 %v2709
        %5399 = vmatprep.subr.bf16.mxu0 %v2704
        %5400 = vmatpush1.bf16.msra.mxu0 %v2703
        %5401 = vmatprep.subr.bf16.mxu0 %v2698
        %5402 = vmatpush1.bf16.msra.mxu0 %v2697
        %5403 = vmatprep.subr.bf16.mxu0 0
        %5404 = vmatpush2.bf16.msra.mxu0 0
        %5405 = vmatprep.subr.bf16.mxu0 0
        %5406 = vmatpush2.bf16.msra.mxu0 0
        %5407 = vmatprep.subr.bf16.mxu0 0
        %5408 = vmatpush2.bf16.msra.mxu0 0
        %5409 = vmatprep.subr.bf16.mxu0 0
        %5410 = vmatpush2.bf16.msra.mxu0 0
        %5411 = vmatprep.subr.bf16.mxu0 0
        %5412 = vmatpush2.bf16.msra.mxu0 0
        %5413 = vmatprep.subr.bf16.mxu0 0
        %5414 = vmatpush2.bf16.msra.mxu0 0
        %5415 = vmatprep.subr.bf16.mxu0 0
        %5416 = vmatpush2.bf16.msra.mxu0 0
        %5417 = vmatprep.subr.bf16.mxu0 0
        %5418 = vmatpush2.bf16.msra.mxu0 0
        %5419 = vmatprep.mubr.bf16.mxu0 0
        %5420 = vmatmul.mubr.bf16.gmra.mxu0 %v4288
        %v5421 = vpop.f32.mrf.mxu0
        %v5422 = vadd.f32 %v5381, %v5421
        %v5423 = vpop.f32.mrf.mxu0
        %v5424 = vadd.f32 %v5383, %v5423
        %v5425 = vpop.f32.mrf.mxu0
        %v5426 = vpop.f32.mrf.mxu0
        %5427 = vdwg.mxu0
        %5428 = vmatprep.subr.bf16.mxu0 %v2646
        %5429 = vmatpush1.bf16.msra.mxu0 %v2645
        %5430 = vmatprep.subr.bf16.mxu0 %v2640
        %5431 = vmatpush1.bf16.msra.mxu0 %v2639
        %5432 = vmatprep.subr.bf16.mxu0 %v2634
        %5433 = vmatpush1.bf16.msra.mxu0 %v2633
        %5434 = vmatprep.subr.bf16.mxu0 %v2628
        %5435 = vmatpush1.bf16.msra.mxu0 %v2627
        %5436 = vmatprep.subr.bf16.mxu0 %v2622
        %5437 = vmatpush1.bf16.msra.mxu0 %v2621
        %5438 = vmatprep.subr.bf16.mxu0 %v2616
        %5439 = vmatpush1.bf16.msra.mxu0 %v2615
        %5440 = vmatprep.subr.bf16.mxu0 %v2610
        %5441 = vmatpush1.bf16.msra.mxu0 %v2609
        %5442 = vmatprep.subr.bf16.mxu0 %v2604
        %5443 = vmatpush1.bf16.msra.mxu0 %v2603
        %5444 = vmatprep.subr.bf16.mxu0 %v2694
        %5445 = vmatpush2.bf16.msra.mxu0 %v2693
        %5446 = vmatprep.subr.bf16.mxu0 %v2688
        %5447 = vmatpush2.bf16.msra.mxu0 %v2687
        %5448 = vmatprep.subr.bf16.mxu0 %v2682
        %5449 = vmatpush2.bf16.msra.mxu0 %v2681
        %5450 = vmatprep.subr.bf16.mxu0 %v2676
        %5451 = vmatpush2.bf16.msra.mxu0 %v2675
        %5452 = vmatprep.subr.bf16.mxu0 %v2670
        %5453 = vmatpush2.bf16.msra.mxu0 %v2669
        %5454 = vmatprep.subr.bf16.mxu0 %v2664
        %5455 = vmatpush2.bf16.msra.mxu0 %v2663
        %5456 = vmatprep.subr.bf16.mxu0 %v2658
        %5457 = vmatpush2.bf16.msra.mxu0 %v2657
        %5458 = vmatprep.subr.bf16.mxu0 %v2652
        %5459 = vmatpush2.bf16.msra.mxu0 %v2651
        %5460 = vmatprep.mubr.bf16.mxu0 %v4287
        %5461 = vmatmul.mubr.bf16.gmra.mxu0 %v4286
        %v5462 = vpop.f32.mrf.mxu0
        %v5463 = vadd.f32 0.0, %v5462
        %v5464 = vpop.f32.mrf.mxu0
        %v5465 = vadd.f32 0.0, %v5464
        %v5466 = vpop.f32.mrf.mxu0
        %v5467 = vpop.f32.mrf.mxu0
        %5468 = vdwg.mxu0
        %5469 = vmatprep.subr.bf16.mxu0 %v2742
        %5470 = vmatpush1.bf16.msra.mxu0 %v2741
        %5471 = vmatprep.subr.bf16.mxu0 %v2736
        %5472 = vmatpush1.bf16.msra.mxu0 %v2735
        %5473 = vmatprep.subr.bf16.mxu0 %v2730
        %5474 = vmatpush1.bf16.msra.mxu0 %v2729
        %5475 = vmatprep.subr.bf16.mxu0 %v2724
        %5476 = vmatpush1.bf16.msra.mxu0 %v2723
        %5477 = vmatprep.subr.bf16.mxu0 %v2718
        %5478 = vmatpush1.bf16.msra.mxu0 %v2717
        %5479 = vmatprep.subr.bf16.mxu0 %v2712
        %5480 = vmatpush1.bf16.msra.mxu0 %v2711
        %5481 = vmatprep.subr.bf16.mxu0 %v2706
        %5482 = vmatpush1.bf16.msra.mxu0 %v2705
        %5483 = vmatprep.subr.bf16.mxu0 %v2700
        %5484 = vmatpush1.bf16.msra.mxu0 %v2699
        %5485 = vmatprep.subr.bf16.mxu0 0
        %5486 = vmatpush2.bf16.msra.mxu0 0
        %5487 = vmatprep.subr.bf16.mxu0 0
        %5488 = vmatpush2.bf16.msra.mxu0 0
        %5489 = vmatprep.subr.bf16.mxu0 0
        %5490 = vmatpush2.bf16.msra.mxu0 0
        %5491 = vmatprep.subr.bf16.mxu0 0
        %5492 = vmatpush2.bf16.msra.mxu0 0
        %5493 = vmatprep.subr.bf16.mxu0 0
        %5494 = vmatpush2.bf16.msra.mxu0 0
        %5495 = vmatprep.subr.bf16.mxu0 0
        %5496 = vmatpush2.bf16.msra.mxu0 0
        %5497 = vmatprep.subr.bf16.mxu0 0
        %5498 = vmatpush2.bf16.msra.mxu0 0
        %5499 = vmatprep.subr.bf16.mxu0 0
        %5500 = vmatpush2.bf16.msra.mxu0 0
        %5501 = vmatprep.mubr.bf16.mxu0 0
        %5502 = vmatmul.mubr.bf16.gmra.mxu0 %v4288
        %v5503 = vpop.f32.mrf.mxu0
        %v5504 = vadd.f32 %v5463, %v5503
        %v5505 = vpop.f32.mrf.mxu0
        %v5506 = vadd.f32 %v5465, %v5505
        %v5507 = vpop.f32.mrf.mxu0
        %v5508 = vpop.f32.mrf.mxu0
        %5509 = vdwg.mxu0
        %5510 = vmatprep.subr.bf16.mxu0 %v2648
        %5511 = vmatpush1.bf16.msra.mxu0 %v2647
        %5512 = vmatprep.subr.bf16.mxu0 %v2642
        %5513 = vmatpush1.bf16.msra.mxu0 %v2641
        %5514 = vmatprep.subr.bf16.mxu0 %v2636
        %5515 = vmatpush1.bf16.msra.mxu0 %v2635
        %5516 = vmatprep.subr.bf16.mxu0 %v2630
        %5517 = vmatpush1.bf16.msra.mxu0 %v2629
        %5518 = vmatprep.subr.bf16.mxu0 %v2624
        %5519 = vmatpush1.bf16.msra.mxu0 %v2623
        %5520 = vmatprep.subr.bf16.mxu0 %v2618
        %5521 = vmatpush1.bf16.msra.mxu0 %v2617
        %5522 = vmatprep.subr.bf16.mxu0 %v2612
        %5523 = vmatpush1.bf16.msra.mxu0 %v2611
        %5524 = vmatprep.subr.bf16.mxu0 %v2606
        %5525 = vmatpush1.bf16.msra.mxu0 %v2605
        %5526 = vmatprep.subr.bf16.mxu0 %v2696
        %5527 = vmatpush2.bf16.msra.mxu0 %v2695
        %5528 = vmatprep.subr.bf16.mxu0 %v2690
        %5529 = vmatpush2.bf16.msra.mxu0 %v2689
        %5530 = vmatprep.subr.bf16.mxu0 %v2684
        %5531 = vmatpush2.bf16.msra.mxu0 %v2683
        %5532 = vmatprep.subr.bf16.mxu0 %v2678
        %5533 = vmatpush2.bf16.msra.mxu0 %v2677
        %5534 = vmatprep.subr.bf16.mxu0 %v2672
        %5535 = vmatpush2.bf16.msra.mxu0 %v2671
        %5536 = vmatprep.subr.bf16.mxu0 %v2666
        %5537 = vmatpush2.bf16.msra.mxu0 %v2665
        %5538 = vmatprep.subr.bf16.mxu0 %v2660
        %5539 = vmatpush2.bf16.msra.mxu0 %v2659
        %5540 = vmatprep.subr.bf16.mxu0 %v2654
        %5541 = vmatpush2.bf16.msra.mxu0 %v2653
        %5542 = vmatprep.mubr.bf16.mxu0 %v4287
        %5543 = vmatmul.mubr.bf16.gmra.mxu0 %v4286
        %v5544 = vpop.f32.mrf.mxu0
        %v5545 = vadd.f32 0.0, %v5544
        %v5546 = vpop.f32.mrf.mxu0
        %v5547 = vadd.f32 0.0, %v5546
        %v5548 = vpop.f32.mrf.mxu0
        %v5549 = vpop.f32.mrf.mxu0
        %5550 = vdwg.mxu0
        %5551 = vmatprep.subr.bf16.mxu0 %v2744
        %5552 = vmatpush1.bf16.msra.mxu0 %v2743
        %5553 = vmatprep.subr.bf16.mxu0 %v2738
        %5554 = vmatpush1.bf16.msra.mxu0 %v2737
        %5555 = vmatprep.subr.bf16.mxu0 %v2732
        %5556 = vmatpush1.bf16.msra.mxu0 %v2731
        %5557 = vmatprep.subr.bf16.mxu0 %v2726
        %5558 = vmatpush1.bf16.msra.mxu0 %v2725
        %5559 = vmatprep.subr.bf16.mxu0 %v2720
        %5560 = vmatpush1.bf16.msra.mxu0 %v2719
        %5561 = vmatprep.subr.bf16.mxu0 %v2714
        %5562 = vmatpush1.bf16.msra.mxu0 %v2713
        %5563 = vmatprep.subr.bf16.mxu0 %v2708
        %5564 = vmatpush1.bf16.msra.mxu0 %v2707
        %5565 = vmatprep.subr.bf16.mxu0 %v2702
        %5566 = vmatpush1.bf16.msra.mxu0 %v2701
        %5567 = vmatprep.subr.bf16.mxu0 0
        %5568 = vmatpush2.bf16.msra.mxu0 0
        %5569 = vmatprep.subr.bf16.mxu0 0
        %5570 = vmatpush2.bf16.msra.mxu0 0
        %5571 = vmatprep.subr.bf16.mxu0 0
        %5572 = vmatpush2.bf16.msra.mxu0 0
        %5573 = vmatprep.subr.bf16.mxu0 0
        %5574 = vmatpush2.bf16.msra.mxu0 0
        %5575 = vmatprep.subr.bf16.mxu0 0
        %5576 = vmatpush2.bf16.msra.mxu0 0
        %5577 = vmatprep.subr.bf16.mxu0 0
        %5578 = vmatpush2.bf16.msra.mxu0 0
        %5579 = vmatprep.subr.bf16.mxu0 0
        %5580 = vmatpush2.bf16.msra.mxu0 0
        %5581 = vmatprep.subr.bf16.mxu0 0
        %5582 = vmatpush2.bf16.msra.mxu0 0
        %5583 = vmatprep.mubr.bf16.mxu0 0
        %5584 = vmatmul.mubr.bf16.gmra.mxu0 %v4288
        %v5585 = vpop.f32.mrf.mxu0
        %v5586 = vadd.f32 %v5545, %v5585
        %v5587 = vpop.f32.mrf.mxu0
        %v5588 = vadd.f32 %v5547, %v5587
        %v5589 = vpop.f32.mrf.mxu0
        %v5590 = vpop.f32.mrf.mxu0
        %5591 = vdwg.mxu0
        %5592 = vmatprep.subr.bf16.mxu0 %v3650
        %5593 = vmatpush1.bf16.msra.mxu0 %v3649
        %5594 = vmatprep.subr.bf16.mxu0 %v3644
        %5595 = vmatpush1.bf16.msra.mxu0 %v3643
        %5596 = vmatprep.subr.bf16.mxu0 %v3638
        %5597 = vmatpush1.bf16.msra.mxu0 %v3637
        %5598 = vmatprep.subr.bf16.mxu0 %v3632
        %5599 = vmatpush1.bf16.msra.mxu0 %v3631
        %5600 = vmatprep.subr.bf16.mxu0 %v3626
        %5601 = vmatpush1.bf16.msra.mxu0 %v3625
        %5602 = vmatprep.subr.bf16.mxu0 %v3620
        %5603 = vmatpush1.bf16.msra.mxu0 %v3619
        %5604 = vmatprep.subr.bf16.mxu0 %v3614
        %5605 = vmatpush1.bf16.msra.mxu0 %v3613
        %5606 = vmatprep.subr.bf16.mxu0 %v3608
        %5607 = vmatpush1.bf16.msra.mxu0 %v3607
        %5608 = vmatprep.subr.bf16.mxu0 %v3698
        %5609 = vmatpush2.bf16.msra.mxu0 %v3697
        %5610 = vmatprep.subr.bf16.mxu0 %v3692
        %5611 = vmatpush2.bf16.msra.mxu0 %v3691
        %5612 = vmatprep.subr.bf16.mxu0 %v3686
        %5613 = vmatpush2.bf16.msra.mxu0 %v3685
        %5614 = vmatprep.subr.bf16.mxu0 %v3680
        %5615 = vmatpush2.bf16.msra.mxu0 %v3679
        %5616 = vmatprep.subr.bf16.mxu0 %v3674
        %5617 = vmatpush2.bf16.msra.mxu0 %v3673
        %5618 = vmatprep.subr.bf16.mxu0 %v3668
        %5619 = vmatpush2.bf16.msra.mxu0 %v3667
        %5620 = vmatprep.subr.bf16.mxu0 %v3662
        %5621 = vmatpush2.bf16.msra.mxu0 %v3661
        %5622 = vmatprep.subr.bf16.mxu0 %v3656
        %5623 = vmatpush2.bf16.msra.mxu0 %v3655
        %5624 = vmatprep.mubr.bf16.mxu0 %v2164
        %5625 = vmatmul.mubr.bf16.gmra.mxu0 %v2163
        %v5626 = vpop.f32.mrf.mxu0
        %v5627 = vadd.f32 %v5422, %v5626
        %v5628 = vpop.f32.mrf.mxu0
        %v5629 = vadd.f32 %v5424, %v5628
        %v5630 = vpop.f32.mrf.mxu0
        %v5631 = vpop.f32.mrf.mxu0
        %5632 = vdwg.mxu0
        %5633 = vmatprep.subr.bf16.mxu0 %v3746
        %5634 = vmatpush1.bf16.msra.mxu0 %v3745
        %5635 = vmatprep.subr.bf16.mxu0 %v3740
        %5636 = vmatpush1.bf16.msra.mxu0 %v3739
        %5637 = vmatprep.subr.bf16.mxu0 %v3734
        %5638 = vmatpush1.bf16.msra.mxu0 %v3733
        %5639 = vmatprep.subr.bf16.mxu0 %v3728
        %5640 = vmatpush1.bf16.msra.mxu0 %v3727
        %5641 = vmatprep.subr.bf16.mxu0 %v3722
        %5642 = vmatpush1.bf16.msra.mxu0 %v3721
        %5643 = vmatprep.subr.bf16.mxu0 %v3716
        %5644 = vmatpush1.bf16.msra.mxu0 %v3715
        %5645 = vmatprep.subr.bf16.mxu0 %v3710
        %5646 = vmatpush1.bf16.msra.mxu0 %v3709
        %5647 = vmatprep.subr.bf16.mxu0 %v3704
        %5648 = vmatpush1.bf16.msra.mxu0 %v3703
        %5649 = vmatprep.subr.bf16.mxu0 0
        %5650 = vmatpush2.bf16.msra.mxu0 0
        %5651 = vmatprep.subr.bf16.mxu0 0
        %5652 = vmatpush2.bf16.msra.mxu0 0
        %5653 = vmatprep.subr.bf16.mxu0 0
        %5654 = vmatpush2.bf16.msra.mxu0 0
        %5655 = vmatprep.subr.bf16.mxu0 0
        %5656 = vmatpush2.bf16.msra.mxu0 0
        %5657 = vmatprep.subr.bf16.mxu0 0
        %5658 = vmatpush2.bf16.msra.mxu0 0
        %5659 = vmatprep.subr.bf16.mxu0 0
        %5660 = vmatpush2.bf16.msra.mxu0 0
        %5661 = vmatprep.subr.bf16.mxu0 0
        %5662 = vmatpush2.bf16.msra.mxu0 0
        %5663 = vmatprep.subr.bf16.mxu0 0
        %5664 = vmatpush2.bf16.msra.mxu0 0
        %5665 = vmatprep.mubr.bf16.mxu0 0
        %5666 = vmatmul.mubr.bf16.gmra.mxu0 %v2165
        %v5667 = vpop.f32.mrf.mxu0
        %v5668 = vadd.f32 %v5627, %v5667
        %v5669 = vpop.f32.mrf.mxu0
        %v5670 = vadd.f32 %v5629, %v5669
        %v5671 = vpop.f32.mrf.mxu0
        %v5672 = vpop.f32.mrf.mxu0
        %5673 = vdwg.mxu0
        %5674 = vmatprep.subr.bf16.mxu0 %v3652
        %5675 = vmatpush1.bf16.msra.mxu0 %v3651
        %5676 = vmatprep.subr.bf16.mxu0 %v3646
        %5677 = vmatpush1.bf16.msra.mxu0 %v3645
        %5678 = vmatprep.subr.bf16.mxu0 %v3640
        %5679 = vmatpush1.bf16.msra.mxu0 %v3639
        %5680 = vmatprep.subr.bf16.mxu0 %v3634
        %5681 = vmatpush1.bf16.msra.mxu0 %v3633
        %5682 = vmatprep.subr.bf16.mxu0 %v3628
        %5683 = vmatpush1.bf16.msra.mxu0 %v3627
        %5684 = vmatprep.subr.bf16.mxu0 %v3622
        %5685 = vmatpush1.bf16.msra.mxu0 %v3621
        %5686 = vmatprep.subr.bf16.mxu0 %v3616
        %5687 = vmatpush1.bf16.msra.mxu0 %v3615
        %5688 = vmatprep.subr.bf16.mxu0 %v3610
        %5689 = vmatpush1.bf16.msra.mxu0 %v3609
        %5690 = vmatprep.subr.bf16.mxu0 %v3700
        %5691 = vmatpush2.bf16.msra.mxu0 %v3699
        %5692 = vmatprep.subr.bf16.mxu0 %v3694
        %5693 = vmatpush2.bf16.msra.mxu0 %v3693
        %5694 = vmatprep.subr.bf16.mxu0 %v3688
        %5695 = vmatpush2.bf16.msra.mxu0 %v3687
        %5696 = vmatprep.subr.bf16.mxu0 %v3682
        %5697 = vmatpush2.bf16.msra.mxu0 %v3681
        %5698 = vmatprep.subr.bf16.mxu0 %v3676
        %5699 = vmatpush2.bf16.msra.mxu0 %v3675
        %5700 = vmatprep.subr.bf16.mxu0 %v3670
        %5701 = vmatpush2.bf16.msra.mxu0 %v3669
        %5702 = vmatprep.subr.bf16.mxu0 %v3664
        %5703 = vmatpush2.bf16.msra.mxu0 %v3663
        %5704 = vmatprep.subr.bf16.mxu0 %v3658
        %5705 = vmatpush2.bf16.msra.mxu0 %v3657
        %5706 = vmatprep.mubr.bf16.mxu0 %v2164
        %5707 = vmatmul.mubr.bf16.gmra.mxu0 %v2163
        %v5708 = vpop.f32.mrf.mxu0
        %v5709 = vadd.f32 %v5504, %v5708
        %v5710 = vpop.f32.mrf.mxu0
        %v5711 = vadd.f32 %v5506, %v5710
        %v5712 = vpop.f32.mrf.mxu0
        %v5713 = vpop.f32.mrf.mxu0
        %5714 = vdwg.mxu0
        %5715 = vmatprep.subr.bf16.mxu0 %v3748
        %5716 = vmatpush1.bf16.msra.mxu0 %v3747
        %5717 = vmatprep.subr.bf16.mxu0 %v3742
        %5718 = vmatpush1.bf16.msra.mxu0 %v3741
        %5719 = vmatprep.subr.bf16.mxu0 %v3736
        %5720 = vmatpush1.bf16.msra.mxu0 %v3735
        %5721 = vmatprep.subr.bf16.mxu0 %v3730
        %5722 = vmatpush1.bf16.msra.mxu0 %v3729
        %5723 = vmatprep.subr.bf16.mxu0 %v3724
        %5724 = vmatpush1.bf16.msra.mxu0 %v3723
        %5725 = vmatprep.subr.bf16.mxu0 %v3718
        %5726 = vmatpush1.bf16.msra.mxu0 %v3717
        %5727 = vmatprep.subr.bf16.mxu0 %v3712
        %5728 = vmatpush1.bf16.msra.mxu0 %v3711
        %5729 = vmatprep.subr.bf16.mxu0 %v3706
        %5730 = vmatpush1.bf16.msra.mxu0 %v3705
        %5731 = vmatprep.subr.bf16.mxu0 0
        %5732 = vmatpush2.bf16.msra.mxu0 0
        %5733 = vmatprep.subr.bf16.mxu0 0
        %5734 = vmatpush2.bf16.msra.mxu0 0
        %5735 = vmatprep.subr.bf16.mxu0 0
        %5736 = vmatpush2.bf16.msra.mxu0 0
        %5737 = vmatprep.subr.bf16.mxu0 0
        %5738 = vmatpush2.bf16.msra.mxu0 0
        %5739 = vmatprep.subr.bf16.mxu0 0
        %5740 = vmatpush2.bf16.msra.mxu0 0
        %5741 = vmatprep.subr.bf16.mxu0 0
        %5742 = vmatpush2.bf16.msra.mxu0 0
        %5743 = vmatprep.subr.bf16.mxu0 0
        %5744 = vmatpush2.bf16.msra.mxu0 0
        %5745 = vmatprep.subr.bf16.mxu0 0
        %5746 = vmatpush2.bf16.msra.mxu0 0
        %5747 = vmatprep.mubr.bf16.mxu0 0
        %5748 = vmatmul.mubr.bf16.gmra.mxu0 %v2165
        %v5749 = vpop.f32.mrf.mxu0
        %v5750 = vadd.f32 %v5709, %v5749
        %v5751 = vpop.f32.mrf.mxu0
        %v5752 = vadd.f32 %v5711, %v5751
        %v5753 = vpop.f32.mrf.mxu0
        %v5754 = vpop.f32.mrf.mxu0
        %5755 = vdwg.mxu0
        %5756 = vmatprep.subr.bf16.mxu0 %v3654
        %5757 = vmatpush1.bf16.msra.mxu0 %v3653
        %5758 = vmatprep.subr.bf16.mxu0 %v3648
        %5759 = vmatpush1.bf16.msra.mxu0 %v3647
        %5760 = vmatprep.subr.bf16.mxu0 %v3642
        %5761 = vmatpush1.bf16.msra.mxu0 %v3641
        %5762 = vmatprep.subr.bf16.mxu0 %v3636
        %5763 = vmatpush1.bf16.msra.mxu0 %v3635
        %5764 = vmatprep.subr.bf16.mxu0 %v3630
        %5765 = vmatpush1.bf16.msra.mxu0 %v3629
        %5766 = vmatprep.subr.bf16.mxu0 %v3624
        %5767 = vmatpush1.bf16.msra.mxu0 %v3623
        %5768 = vmatprep.subr.bf16.mxu0 %v3618
        %5769 = vmatpush1.bf16.msra.mxu0 %v3617
        %5770 = vmatprep.subr.bf16.mxu0 %v3612
        %5771 = vmatpush1.bf16.msra.mxu0 %v3611
        %5772 = vmatprep.subr.bf16.mxu0 %v3702
        %5773 = vmatpush2.bf16.msra.mxu0 %v3701
        %5774 = vmatprep.subr.bf16.mxu0 %v3696
        %5775 = vmatpush2.bf16.msra.mxu0 %v3695
        %5776 = vmatprep.subr.bf16.mxu0 %v3690
        %5777 = vmatpush2.bf16.msra.mxu0 %v3689
        %5778 = vmatprep.subr.bf16.mxu0 %v3684
        %5779 = vmatpush2.bf16.msra.mxu0 %v3683
        %5780 = vmatprep.subr.bf16.mxu0 %v3678
        %5781 = vmatpush2.bf16.msra.mxu0 %v3677
        %5782 = vmatprep.subr.bf16.mxu0 %v3672
        %5783 = vmatpush2.bf16.msra.mxu0 %v3671
        %5784 = vmatprep.subr.bf16.mxu0 %v3666
        %5785 = vmatpush2.bf16.msra.mxu0 %v3665
        %5786 = vmatprep.subr.bf16.mxu0 %v3660
        %5787 = vmatpush2.bf16.msra.mxu0 %v3659
        %5788 = vmatprep.mubr.bf16.mxu0 %v2164
        %5789 = vmatmul.mubr.bf16.gmra.mxu0 %v2163
        %v5790 = vpop.f32.mrf.mxu0
        %v5791 = vadd.f32 %v5586, %v5790
        %v5792 = vpop.f32.mrf.mxu0
        %v5793 = vadd.f32 %v5588, %v5792
        %v5794 = vpop.f32.mrf.mxu0
        %v5795 = vpop.f32.mrf.mxu0
        %5796 = vdwg.mxu0
        %5797 = vmatprep.subr.bf16.mxu0 %v3750
        %5798 = vmatpush1.bf16.msra.mxu0 %v3749
        %5799 = vmatprep.subr.bf16.mxu0 %v3744
        %5800 = vmatpush1.bf16.msra.mxu0 %v3743
        %5801 = vmatprep.subr.bf16.mxu0 %v3738
        %5802 = vmatpush1.bf16.msra.mxu0 %v3737
        %5803 = vmatprep.subr.bf16.mxu0 %v3732
        %5804 = vmatpush1.bf16.msra.mxu0 %v3731
        %5805 = vmatprep.subr.bf16.mxu0 %v3726
        %5806 = vmatpush1.bf16.msra.mxu0 %v3725
        %5807 = vmatprep.subr.bf16.mxu0 %v3720
        %5808 = vmatpush1.bf16.msra.mxu0 %v3719
        %5809 = vmatprep.subr.bf16.mxu0 %v3714
        %5810 = vmatpush1.bf16.msra.mxu0 %v3713
        %5811 = vmatprep.subr.bf16.mxu0 %v3708
        %5812 = vmatpush1.bf16.msra.mxu0 %v3707
        %5813 = vmatprep.subr.bf16.mxu0 0
        %5814 = vmatpush2.bf16.msra.mxu0 0
        %5815 = vmatprep.subr.bf16.mxu0 0
        %5816 = vmatpush2.bf16.msra.mxu0 0
        %5817 = vmatprep.subr.bf16.mxu0 0
        %5818 = vmatpush2.bf16.msra.mxu0 0
        %5819 = vmatprep.subr.bf16.mxu0 0
        %5820 = vmatpush2.bf16.msra.mxu0 0
        %5821 = vmatprep.subr.bf16.mxu0 0
        %5822 = vmatpush2.bf16.msra.mxu0 0
        %5823 = vmatprep.subr.bf16.mxu0 0
        %5824 = vmatpush2.bf16.msra.mxu0 0
        %5825 = vmatprep.subr.bf16.mxu0 0
        %5826 = vmatpush2.bf16.msra.mxu0 0
        %5827 = vmatprep.subr.bf16.mxu0 0
        %5828 = vmatpush2.bf16.msra.mxu0 0
        %5829 = vmatprep.mubr.bf16.mxu0 0
        %5830 = vmatmul.mubr.bf16.gmra.mxu0 %v2165
        %v5831 = vpop.f32.mrf.mxu0
        %v5832 = vadd.f32 %v5791, %v5831
        %v5833 = vpop.f32.mrf.mxu0
        %v5834 = vadd.f32 %v5793, %v5833
        %v5835 = vpop.f32.mrf.mxu0
        %v5836 = vpop.f32.mrf.mxu0
        %5837 = vdwg.mxu0
        %v5838 = vld [vmem:[#allocation3 + $0x18] sm:$0x77]
        %v5839 = vld [vmem:[#allocation3 + $0x20] sm:$0x7]
        %v5842 = vunpack.c.l.b16 %v5838
        %v5843 = vunpack.c.h.b16 %v5838
        %v5844 = vunpack.c.l.b16 %v5839
        %v5845 = vpack.c.b16 %v5842, %v5842
        %v5846 = vpack.c.b16 %v5843, %v5843
        %v5847 = vpack.c.b16 %v5844, %v5844
        %v5849 = vshrl.u32 %v5845, 16
        %v5851 = vshll.u32 %v5845, 16
        %v5853 = vrot.slane %v5851, 1
        %v5854 = vor.u32 %v5849, %v5853
        %v5856 = vshrl.u32 %v5846, 16
        %v5858 = vshll.u32 %v5846, 16
        %v5860 = vrot.slane %v5858, 1
        %v5861 = vor.u32 %v5856, %v5860
        %v5863 = vshrl.u32 %v5847, 16
        %v5865 = vshll.u32 %v5847, 16
        %v5867 = vrot.slane %v5865, 1
        %v5868 = vor.u32 %v5863, %v5867
        %5872 = vmatprep.subr.bf16.mxu0 %v4767
        %5873 = vmatpush1.bf16.msra.mxu0 %v4766
        %5874 = vmatprep.subr.bf16.mxu0 %v4761
        %5875 = vmatpush1.bf16.msra.mxu0 %v4760
        %5876 = vmatprep.subr.bf16.mxu0 %v4755
        %5877 = vmatpush1.bf16.msra.mxu0 %v4754
        %5878 = vmatprep.subr.bf16.mxu0 %v4749
        %5879 = vmatpush1.bf16.msra.mxu0 %v4748
        %5880 = vmatprep.subr.bf16.mxu0 %v4743
        %5881 = vmatpush1.bf16.msra.mxu0 %v4742
        %5882 = vmatprep.subr.bf16.mxu0 %v4737
        %5883 = vmatpush1.bf16.msra.mxu0 %v4736
        %5884 = vmatprep.subr.bf16.mxu0 %v4731
        %5885 = vmatpush1.bf16.msra.mxu0 %v4730
        %5886 = vmatprep.subr.bf16.mxu0 %v4725
        %5887 = vmatpush1.bf16.msra.mxu0 %v4724
        %5888 = vmatprep.subr.bf16.mxu0 %v4815
        %5889 = vmatpush2.bf16.msra.mxu0 %v4814
        %5890 = vmatprep.subr.bf16.mxu0 %v4809
        %5891 = vmatpush2.bf16.msra.mxu0 %v4808
        %5892 = vmatprep.subr.bf16.mxu0 %v4803
        %5893 = vmatpush2.bf16.msra.mxu0 %v4802
        %5894 = vmatprep.subr.bf16.mxu0 %v4797
        %5895 = vmatpush2.bf16.msra.mxu0 %v4796
        %5896 = vmatprep.subr.bf16.mxu0 %v4791
        %5897 = vmatpush2.bf16.msra.mxu0 %v4790
        %5898 = vmatprep.subr.bf16.mxu0 %v4785
        %5899 = vmatpush2.bf16.msra.mxu0 %v4784
        %5900 = vmatprep.subr.bf16.mxu0 %v4779
        %5901 = vmatpush2.bf16.msra.mxu0 %v4778
        %5902 = vmatprep.subr.bf16.mxu0 %v4773
        %5903 = vmatpush2.bf16.msra.mxu0 %v4772
        %5904 = vmatprep.mubr.bf16.mxu0 %v5861
        %5905 = vmatmul.mubr.bf16.gmra.mxu0 %v5854
        %v5906 = vpop.f32.mrf.mxu0
        %v5907 = vadd.f32 0.0, %v5906
        %v5908 = vpop.f32.mrf.mxu0
        %v5909 = vadd.f32 0.0, %v5908
        %v5910 = vpop.f32.mrf.mxu0
        %v5911 = vpop.f32.mrf.mxu0
        %5912 = vdwg.mxu0
        %5913 = vmatprep.subr.bf16.mxu0 %v4863
        %5914 = vmatpush1.bf16.msra.mxu0 %v4862
        %5915 = vmatprep.subr.bf16.mxu0 %v4857
        %5916 = vmatpush1.bf16.msra.mxu0 %v4856
        %5917 = vmatprep.subr.bf16.mxu0 %v4851
        %5918 = vmatpush1.bf16.msra.mxu0 %v4850
        %5919 = vmatprep.subr.bf16.mxu0 %v4845
        %5920 = vmatpush1.bf16.msra.mxu0 %v4844
        %5921 = vmatprep.subr.bf16.mxu0 %v4839
        %5922 = vmatpush1.bf16.msra.mxu0 %v4838
        %5923 = vmatprep.subr.bf16.mxu0 %v4833
        %5924 = vmatpush1.bf16.msra.mxu0 %v4832
        %5925 = vmatprep.subr.bf16.mxu0 %v4827
        %5926 = vmatpush1.bf16.msra.mxu0 %v4826
        %5927 = vmatprep.subr.bf16.mxu0 %v4821
        %5928 = vmatpush1.bf16.msra.mxu0 %v4820
        %5929 = vmatprep.subr.bf16.mxu0 0
        %5930 = vmatpush2.bf16.msra.mxu0 0
        %5931 = vmatprep.subr.bf16.mxu0 0
        %5932 = vmatpush2.bf16.msra.mxu0 0
        %5933 = vmatprep.subr.bf16.mxu0 0
        %5934 = vmatpush2.bf16.msra.mxu0 0
        %5935 = vmatprep.subr.bf16.mxu0 0
        %5936 = vmatpush2.bf16.msra.mxu0 0
        %5937 = vmatprep.subr.bf16.mxu0 0
        %5938 = vmatpush2.bf16.msra.mxu0 0
        %5939 = vmatprep.subr.bf16.mxu0 0
        %5940 = vmatpush2.bf16.msra.mxu0 0
        %5941 = vmatprep.subr.bf16.mxu0 0
        %5942 = vmatpush2.bf16.msra.mxu0 0
        %5943 = vmatprep.subr.bf16.mxu0 0
        %5944 = vmatpush2.bf16.msra.mxu0 0
        %5945 = vmatprep.mubr.bf16.mxu0 0
        %5946 = vmatmul.mubr.bf16.gmra.mxu0 %v5868
        %v5947 = vpop.f32.mrf.mxu0
        %v5948 = vadd.f32 %v5907, %v5947
        %v5949 = vpop.f32.mrf.mxu0
        %v5950 = vadd.f32 %v5909, %v5949
        %v5951 = vpop.f32.mrf.mxu0
        %v5952 = vpop.f32.mrf.mxu0
        %5953 = vdwg.mxu0
        %5954 = vmatprep.subr.bf16.mxu0 %v4769
        %5955 = vmatpush1.bf16.msra.mxu0 %v4768
        %5956 = vmatprep.subr.bf16.mxu0 %v4763
        %5957 = vmatpush1.bf16.msra.mxu0 %v4762
        %5958 = vmatprep.subr.bf16.mxu0 %v4757
        %5959 = vmatpush1.bf16.msra.mxu0 %v4756
        %5960 = vmatprep.subr.bf16.mxu0 %v4751
        %5961 = vmatpush1.bf16.msra.mxu0 %v4750
        %5962 = vmatprep.subr.bf16.mxu0 %v4745
        %5963 = vmatpush1.bf16.msra.mxu0 %v4744
        %5964 = vmatprep.subr.bf16.mxu0 %v4739
        %5965 = vmatpush1.bf16.msra.mxu0 %v4738
        %5966 = vmatprep.subr.bf16.mxu0 %v4733
        %5967 = vmatpush1.bf16.msra.mxu0 %v4732
        %5968 = vmatprep.subr.bf16.mxu0 %v4727
        %5969 = vmatpush1.bf16.msra.mxu0 %v4726
        %5970 = vmatprep.subr.bf16.mxu0 %v4817
        %5971 = vmatpush2.bf16.msra.mxu0 %v4816
        %5972 = vmatprep.subr.bf16.mxu0 %v4811
        %5973 = vmatpush2.bf16.msra.mxu0 %v4810
        %5974 = vmatprep.subr.bf16.mxu0 %v4805
        %5975 = vmatpush2.bf16.msra.mxu0 %v4804
        %5976 = vmatprep.subr.bf16.mxu0 %v4799
        %5977 = vmatpush2.bf16.msra.mxu0 %v4798
        %5978 = vmatprep.subr.bf16.mxu0 %v4793
        %5979 = vmatpush2.bf16.msra.mxu0 %v4792
        %5980 = vmatprep.subr.bf16.mxu0 %v4787
        %5981 = vmatpush2.bf16.msra.mxu0 %v4786
        %5982 = vmatprep.subr.bf16.mxu0 %v4781
        %5983 = vmatpush2.bf16.msra.mxu0 %v4780
        %5984 = vmatprep.subr.bf16.mxu0 %v4775
        %5985 = vmatpush2.bf16.msra.mxu0 %v4774
        %5986 = vmatprep.mubr.bf16.mxu0 %v5861
        %5987 = vmatmul.mubr.bf16.gmra.mxu0 %v5854
        %v5988 = vpop.f32.mrf.mxu0
        %v5989 = vadd.f32 0.0, %v5988
        %v5990 = vpop.f32.mrf.mxu0
        %v5991 = vadd.f32 0.0, %v5990
        %v5992 = vpop.f32.mrf.mxu0
        %v5993 = vpop.f32.mrf.mxu0
        %5994 = vdwg.mxu0
        %5995 = vmatprep.subr.bf16.mxu0 %v4865
        %5996 = vmatpush1.bf16.msra.mxu0 %v4864
        %5997 = vmatprep.subr.bf16.mxu0 %v4859
        %5998 = vmatpush1.bf16.msra.mxu0 %v4858
        %5999 = vmatprep.subr.bf16.mxu0 %v4853
        %6000 = vmatpush1.bf16.msra.mxu0 %v4852
        %6001 = vmatprep.subr.bf16.mxu0 %v4847
        %6002 = vmatpush1.bf16.msra.mxu0 %v4846
        %6003 = vmatprep.subr.bf16.mxu0 %v4841
        %6004 = vmatpush1.bf16.msra.mxu0 %v4840
        %6005 = vmatprep.subr.bf16.mxu0 %v4835
        %6006 = vmatpush1.bf16.msra.mxu0 %v4834
        %6007 = vmatprep.subr.bf16.mxu0 %v4829
        %6008 = vmatpush1.bf16.msra.mxu0 %v4828
        %6009 = vmatprep.subr.bf16.mxu0 %v4823
        %6010 = vmatpush1.bf16.msra.mxu0 %v4822
        %6011 = vmatprep.subr.bf16.mxu0 0
        %6012 = vmatpush2.bf16.msra.mxu0 0
        %6013 = vmatprep.subr.bf16.mxu0 0
        %6014 = vmatpush2.bf16.msra.mxu0 0
        %6015 = vmatprep.subr.bf16.mxu0 0
        %6016 = vmatpush2.bf16.msra.mxu0 0
        %6017 = vmatprep.subr.bf16.mxu0 0
        %6018 = vmatpush2.bf16.msra.mxu0 0
        %6019 = vmatprep.subr.bf16.mxu0 0
        %6020 = vmatpush2.bf16.msra.mxu0 0
        %6021 = vmatprep.subr.bf16.mxu0 0
        %6022 = vmatpush2.bf16.msra.mxu0 0
        %6023 = vmatprep.subr.bf16.mxu0 0
        %6024 = vmatpush2.bf16.msra.mxu0 0
        %6025 = vmatprep.subr.bf16.mxu0 0
        %6026 = vmatpush2.bf16.msra.mxu0 0
        %6027 = vmatprep.mubr.bf16.mxu0 0
        %6028 = vmatmul.mubr.bf16.gmra.mxu0 %v5868
        %v6029 = vpop.f32.mrf.mxu0
        %v6030 = vadd.f32 %v5989, %v6029
        %v6031 = vpop.f32.mrf.mxu0
        %v6032 = vadd.f32 %v5991, %v6031
        %v6033 = vpop.f32.mrf.mxu0
        %v6034 = vpop.f32.mrf.mxu0
        %6035 = vdwg.mxu0
        %6036 = vmatprep.subr.bf16.mxu0 %v4771
        %6037 = vmatpush1.bf16.msra.mxu0 %v4770
        %6038 = vmatprep.subr.bf16.mxu0 %v4765
        %6039 = vmatpush1.bf16.msra.mxu0 %v4764
        %6040 = vmatprep.subr.bf16.mxu0 %v4759
        %6041 = vmatpush1.bf16.msra.mxu0 %v4758
        %6042 = vmatprep.subr.bf16.mxu0 %v4753
        %6043 = vmatpush1.bf16.msra.mxu0 %v4752
        %6044 = vmatprep.subr.bf16.mxu0 %v4747
        %6045 = vmatpush1.bf16.msra.mxu0 %v4746
        %6046 = vmatprep.subr.bf16.mxu0 %v4741
        %6047 = vmatpush1.bf16.msra.mxu0 %v4740
        %6048 = vmatprep.subr.bf16.mxu0 %v4735
        %6049 = vmatpush1.bf16.msra.mxu0 %v4734
        %6050 = vmatprep.subr.bf16.mxu0 %v4729
        %6051 = vmatpush1.bf16.msra.mxu0 %v4728
        %6052 = vmatprep.subr.bf16.mxu0 %v4819
        %6053 = vmatpush2.bf16.msra.mxu0 %v4818
        %6054 = vmatprep.subr.bf16.mxu0 %v4813
        %6055 = vmatpush2.bf16.msra.mxu0 %v4812
        %6056 = vmatprep.subr.bf16.mxu0 %v4807
        %6057 = vmatpush2.bf16.msra.mxu0 %v4806
        %6058 = vmatprep.subr.bf16.mxu0 %v4801
        %6059 = vmatpush2.bf16.msra.mxu0 %v4800
        %6060 = vmatprep.subr.bf16.mxu0 %v4795
        %6061 = vmatpush2.bf16.msra.mxu0 %v4794
        %6062 = vmatprep.subr.bf16.mxu0 %v4789
        %6063 = vmatpush2.bf16.msra.mxu0 %v4788
        %6064 = vmatprep.subr.bf16.mxu0 %v4783
        %6065 = vmatpush2.bf16.msra.mxu0 %v4782
        %6066 = vmatprep.subr.bf16.mxu0 %v4777
        %6067 = vmatpush2.bf16.msra.mxu0 %v4776
        %6068 = vmatprep.mubr.bf16.mxu0 %v5861
        %6069 = vmatmul.mubr.bf16.gmra.mxu0 %v5854
        %v6070 = vpop.f32.mrf.mxu0
        %v6071 = vadd.f32 0.0, %v6070
        %v6072 = vpop.f32.mrf.mxu0
        %v6073 = vadd.f32 0.0, %v6072
        %v6074 = vpop.f32.mrf.mxu0
        %v6075 = vpop.f32.mrf.mxu0
        %6076 = vdwg.mxu0
        %6077 = vmatprep.subr.bf16.mxu0 %v4867
        %6078 = vmatpush1.bf16.msra.mxu0 %v4866
        %6079 = vmatprep.subr.bf16.mxu0 %v4861
        %6080 = vmatpush1.bf16.msra.mxu0 %v4860
        %6081 = vmatprep.subr.bf16.mxu0 %v4855
        %6082 = vmatpush1.bf16.msra.mxu0 %v4854
        %6083 = vmatprep.subr.bf16.mxu0 %v4849
        %6084 = vmatpush1.bf16.msra.mxu0 %v4848
        %6085 = vmatprep.subr.bf16.mxu0 %v4843
        %6086 = vmatpush1.bf16.msra.mxu0 %v4842
        %6087 = vmatprep.subr.bf16.mxu0 %v4837
        %6088 = vmatpush1.bf16.msra.mxu0 %v4836
        %6089 = vmatprep.subr.bf16.mxu0 %v4831
        %6090 = vmatpush1.bf16.msra.mxu0 %v4830
        %6091 = vmatprep.subr.bf16.mxu0 %v4825
        %6092 = vmatpush1.bf16.msra.mxu0 %v4824
        %6093 = vmatprep.subr.bf16.mxu0 0
        %6094 = vmatpush2.bf16.msra.mxu0 0
        %6095 = vmatprep.subr.bf16.mxu0 0
        %6096 = vmatpush2.bf16.msra.mxu0 0
        %6097 = vmatprep.subr.bf16.mxu0 0
        %6098 = vmatpush2.bf16.msra.mxu0 0
        %6099 = vmatprep.subr.bf16.mxu0 0
        %6100 = vmatpush2.bf16.msra.mxu0 0
        %6101 = vmatprep.subr.bf16.mxu0 0
        %6102 = vmatpush2.bf16.msra.mxu0 0
        %6103 = vmatprep.subr.bf16.mxu0 0
        %6104 = vmatpush2.bf16.msra.mxu0 0
        %6105 = vmatprep.subr.bf16.mxu0 0
        %6106 = vmatpush2.bf16.msra.mxu0 0
        %6107 = vmatprep.subr.bf16.mxu0 0
        %6108 = vmatpush2.bf16.msra.mxu0 0
        %6109 = vmatprep.mubr.bf16.mxu0 0
        %6110 = vmatmul.mubr.bf16.gmra.mxu0 %v5868
        %v6111 = vpop.f32.mrf.mxu0
        %v6112 = vadd.f32 %v6071, %v6111
        %v6113 = vpop.f32.mrf.mxu0
        %v6114 = vadd.f32 %v6073, %v6113
        %v6115 = vpop.f32.mrf.mxu0
        %v6116 = vpop.f32.mrf.mxu0
        %6117 = vdwg.mxu0
        %v6118 = vadd.f32 %v5668, %v5948
        %v6119 = vadd.f32 %v5670, %v5950
        %v6120 = vadd.f32 %v5750, %v6030
        %v6121 = vadd.f32 %v5752, %v6032
        %v6122 = vadd.f32 %v5832, %v6112
        %v6123 = vadd.f32 %v5834, %v6114
        %v6124 = vmul.f32 %v6118, %v5269
        %v6125 = vmul.f32 %v6119, %v5273
        %v6126 = vmul.f32 %v6120, %v5277
        %v6127 = vmul.f32 %v6121, %v5281
        %v6128 = vmul.f32 %v6122, %v5285
        %v6129 = vmul.f32 %v6123, %v5289
        %v6130 = vadd.f32 %v6124, %v5307
        %v6131 = vadd.f32 %v6125, %v5311
        %v6132 = vadd.f32 %v6126, %v5315
        %v6133 = vadd.f32 %v6127, %v5319
        %v6134 = vadd.f32 %v6128, %v5323
        %v6135 = vadd.f32 %v6129, %v5327
        %v6136 = vmax.f32 %v6130, 0.0
        %v6137 = vmax.f32 %v6131, 0.0
        %v6138 = vmax.f32 %v6132, 0.0
        %v6139 = vmax.f32 %v6133, 0.0
        %v6140 = vmax.f32 %v6134, 0.0
        %v6141 = vmax.f32 %v6135, 0.0
        %v6142 = vmax.f32 %v5340, %v6136
        %v6143 = vmax.f32 %v5341, %v6137
        %v6144 = vmax.f32 %v5342, %v6138
        %v6145 = vmax.f32 %v5343, %v6139
        %v6146 = vmax.f32 %v5344, %v6140
        %v6147 = vmax.f32 %v5345, %v6141
        %v6148 = vpack.c.bf16 %v6142, %v6142
        %v6149 = vpack.c.bf16 %v6143, %v6143
        %v6150 = vpack.c.bf16 %v6144, %v6144
        %v6151 = vpack.c.bf16 %v6145, %v6145
        %v6152 = vpack.c.bf16 %v6146, %v6146
        %v6153 = vpack.c.bf16 %v6147, %v6147
        %v6160 = vcombine.low %v6148, %v6149
        %v6161 = vcombine.low %v6150, %v6151
        %v6163 = vunpack.c.l.s4 1983009808
        %v6164 = vunpack.c.0.s8 %v6163
        %v6165 = vlaneseq
        %v6166 = vshrl.u32 %v6165, 7
        %v6167 = vsub.s32 %v6164, %v6166
        %v6168 = vrot.slane %v6160, %v6167
        %v6170 = vunpack.c.l.s4 1983009808
        %v6171 = vunpack.c.0.s8 %v6170
        %v6172 = vlaneseq
        %v6173 = vshrl.u32 %v6172, 7
        %v6174 = vsub.s32 %v6171, %v6173
        %v6175 = vrot.slane %v6161, %v6174
        %v6176 = vcombine.low %v6168, %v6175
        %v6177 = vcombine.low %v6152, %v6153
        %v6179 = vunpack.c.l.s4 1983009808
        %v6180 = vunpack.c.0.s8 %v6179
        %v6181 = vlaneseq
        %v6182 = vshrl.u32 %v6181, 7
        %v6183 = vsub.s32 %v6180, %v6182
        %v6184 = vrot.slane %v6177, %v6183
        %6187 = vst [vmem:[%s358] sm:$0xff] %v6176
        %6188 = vst [vmem:[%s358 + $0x8] sm:$0xf] %v6184
        %p6189 = scmp.lt.s32.totalorder %s22, 1
        %s6190 = scalar_select %p6189, %s22, 1
        %s6191 = smul.addr %s6190, 6
        %s6192 = smul.addr %s6191, 2
        %s6193 = scalar_lea.vmem %s7, %s6192
        // Predicated region
        $region73: #{eeg_dwt_cnn_lstm_forward.3} parent=47 // pred_check
          %p6194 = pneg %p192
        $region74: #{eeg_dwt_cnn_lstm_forward.3} parent=47 // pred_check_branch
          %6196 = sbr.rel (%p6194) target = $region76
        $region75: #{eeg_dwt_cnn_lstm_forward.3} parent=47 // pred_region
          _
        $region76: #{eeg_dwt_cnn_lstm_forward.3} parent=47 // pred_fallthru
          _
      $region48: #{eeg_dwt_cnn_lstm_forward.3} parent=5 // pred_fallthru
        _
      %p6197 = scmp.le.s32.totalorder 2, %s17
      // Predicated region
      $region77: #{eeg_dwt_cnn_lstm_forward.3} parent=5 // pred_check
        %p6198 = pneg %p6197
      $region78: #{eeg_dwt_cnn_lstm_forward.3} parent=5 // pred_check_branch
        %6200 = sbr.rel (%p6198) target = $region80
      $region79: #{eeg_dwt_cnn_lstm_forward.3} parent=5 // pred_region
        %s6201 = ssub.s32 %s17, 2
        // Predicated region
        $region81: #{eeg_dwt_cnn_lstm_forward.3} parent=79 // pred_check
          %p6202 = pneg %p198
        $region82: #{eeg_dwt_cnn_lstm_forward.3} parent=79 // pred_check_branch
          %6204 = sbr.rel (%p6202) target = $region84
        $region83: #{eeg_dwt_cnn_lstm_forward.3} parent=79 // pred_region
          %p6205 = scmp.lt.s32.totalorder %s23, 1
          %s6206 = scalar_select %p6205, %s23, 1
          %s6207 = smul.addr %s6206, 6
          %s6208 = smul.addr %s6207, 2
          %s6209 = scalar_lea.vmem %s7, %s6208
        $region84: #{eeg_dwt_cnn_lstm_forward.3} parent=79 // pred_fallthru
          _
      $region80: #{eeg_dwt_cnn_lstm_forward.3} parent=5 // pred_fallthru
        _
    $region6: #{eeg_dwt_cnn_lstm_forward.3} parent=1 // loop_footer
      %s21 = sadd.s32 1, %s17
    $region7: #{eeg_dwt_cnn_lstm_forward.3} parent=1 // loop_footer_branch
      %16 = sbr.rel target = $region3
    $region8: #{eeg_dwt_cnn_lstm_forward.3} parent=1 // loop_exit
      _
    %6210 = vsyncpa [#allocation5], 1
    %s6211 = scalar_lea.sflag [#allocation5], 1
    %6212 = vsyncpa %s6211, 1
    %6213 = vsyncpa [#allocation7], 1
    %6214 = vsyncpa [#allocation10], 1
    %6215 = vsyncpa [#allocation13], 1

</llo_original>
